<compile_context>
chip_gen: v7x
topology: tpu7x:2x2x1
jax: 0.10.0
libtpu: 0.0.40
codegen_flags: <defaults>
</compile_context>

<pallas_src>
import functools

import jax
import jax.numpy as jnp
from jax.experimental import pallas as pl
from jax.experimental.pallas import tpu as pltpu

BF16 = jnp.bfloat16
P = 8  # padded batch rows per timestep block (sublane alignment)


# ----------------------------------------------------------------------------
# helpers
# ----------------------------------------------------------------------------
def _mm(a, b):
    """MXU matmul: bf16 operands, f32 accumulation."""
    return jnp.dot(a.astype(BF16), b.astype(BF16),
                   preferred_element_type=jnp.float32)


def _lstm_step(gates, c, H):
    """Fused-gate LSTM update. gates: (P, 4H) f32, PyTorch order i,f,g,o.
    One full-width sigmoid push + one full-width tanh push (+ tanh(c'))."""
    sig = jax.nn.sigmoid(gates)
    tnh = jnp.tanh(gates)
    i = sig[:, 0 * H:1 * H]
    f = sig[:, 1 * H:2 * H]
    g = tnh[:, 2 * H:3 * H]
    o = sig[:, 3 * H:4 * H]
    c2 = f * c + i * g
    h2 = o * jnp.tanh(c2)
    return h2, c2


# ----------------------------------------------------------------------------
# Fused Seq2Seq kernel (single invocation, everything VMEM-resident)
# ----------------------------------------------------------------------------
def make_seq2seq_kernel(B, Sq, Sa, H, E, V, Vp):
    G = 4 * H

    def kernel(q_ids, a_ids,                  # SMEM scalar prefetch (token ids, (t,b)-major)
               embed_ref,                     # (V, 1, E)   bf16 embedding table
               w256_ref,                      # (E+2H, 8H)  bf16 enc input-proj weights
               whh_ref,                       # (4H, 4H)    bf16 enc recurrent weights
               wlin_ref,                      # (8H, H)     bf16 enc Linear(8H->H).T
               wdece_ref,                     # (E+H, E)    bf16 dec proj weights
               wdecg_ref,                     # (E+3H, 4H)  bf16 dec LSTM weights
               wout_ref,                      # (H, Vp)     bf16 dec Linear(H->V).T (vocab-padded)
               b8h_ref,                       # (2, 8H)     f32 enc LSTM biases (layer0, layer1)
               bg_ref,                        # (2, 4H)     f32 dec LSTM biases (layer0, layer1)
               out_ref,                       # (Sa*P, Vp)  f32 log-probs, (t, padded-b)-major
               qbuf, abuf, of_ref, ob_ref, h1_ref):
        # ---- in-kernel embedding gather: SMEM ids -> VMEM table rows --------
        qbuf[...] = jnp.zeros_like(qbuf)
        abuf[...] = jnp.zeros_like(abuf)
        for t in range(Sq):
            for b in range(B):
                qbuf[pl.ds(t * P + b, 1), :] = embed_ref[q_ids[t * B + b]]
        for t in range(Sa):
            for b in range(B):
                abuf[pl.ds(t * P + b, 1), :] = embed_ref[a_ids[t * B + b]]

        # ---- static views into the packed encoder weights --------------------
        w_ih_l0 = w256_ref[0:E, :]            # (E, 8H) fwd|bwd fused
        w_ih_l1f = w256_ref[E:E + H, :]       # (H, 8H) multiplies layer-0 fwd outputs
        w_ih_l1b = w256_ref[E + H:E + 2 * H, :]  # (H, 8H) multiplies layer-0 bwd outputs
        hh_l0f = whh_ref[0 * H:1 * H, :]
        hh_l0b = whh_ref[1 * H:2 * H, :]
        hh_l1f = whh_ref[2 * H:3 * H, :]
        hh_l1b = whh_ref[3 * H:4 * H, :]
        b_l0 = b8h_ref[0:1, :]
        b_l1 = b8h_ref[1:2, :]

        zeros = jnp.zeros((P, H), jnp.float32)

        # ============================ Encoder ================================
        # hoisted layer-0 input projection (fwd+bwd fused -> 8H lanes, bias folded)
        xp0 = _mm(qbuf[...], w_ih_l0) + b_l0                     # (Sq*P, 8H)

        # layer 0, forward direction
        h, c = zeros, zeros
        for t in range(Sq):
            h, c = _lstm_step(xp0[t * P:(t + 1) * P, :G] + _mm(h, hh_l0f), c, H)
            of_ref[t * P:(t + 1) * P, :] = h
        hn0, cn0 = h, c

        # layer 0, backward direction
        h, c = zeros, zeros
        for t in reversed(range(Sq)):
            h, c = _lstm_step(xp0[t * P:(t + 1) * P, G:] + _mm(h, hh_l0b), c, H)
            ob_ref[t * P:(t + 1) * P, :] = h
        hn1, cn1 = h, c

        # hoisted layer-1 input projection (fwd-half / bwd-half weights)
        xp1 = _mm(of_ref[...], w_ih_l1f) + _mm(ob_ref[...], w_ih_l1b) + b_l1

        # layer 1, forward direction
        h, c = zeros, zeros
        for t in range(Sq):
            h, c = _lstm_step(xp1[t * P:(t + 1) * P, :G] + _mm(h, hh_l1f), c, H)
        hn2, cn2 = h, c

        # layer 1, backward direction
        h, c = zeros, zeros
        for t in reversed(range(Sq)):
            h, c = _lstm_step(xp1[t * P:(t + 1) * P, G:] + _mm(h, hh_l1b), c, H)
        hn3, cn3 = h, c

        # ---- PyTorch h_n.view(B,-1)/c_n.view(B,-1) raw reinterpretation +
        #      Linear(8H->H) as a single (B,8H)@(8H,H) matmul.  The raw view
        #      mixes batch rows for B>1 exactly as the reference code does. ----
        hn = [hn0, hn1, hn2, hn3]
        cn = [cn0, cn1, cn2, cn3]
        segs = []
        for k in range(8):
            states = hn if k < 4 else cn
            kk = k % 4
            rows = []
            for b in range(B):
                flat = 4 * b + kk              # position inside the (4,B,H) flat buffer
                d, r = flat // B, flat % B
                rows.append(states[d][r:r + 1, :])
            segs.append(jnp.concatenate(rows, axis=0))           # (B, H)
        features = jnp.concatenate(segs, axis=1)                 # (B, 8H)
        enc = _mm(features, wlin_ref[...])                        # (B, H); Linear bias fill_(0)
        if P > B:
            enc = jnp.concatenate(
                [enc, jnp.zeros((P - B, H), jnp.float32)], axis=0)  # (P, H), padded rows = 0

        # ============================ Decoder ================================
        wp_x = wdece_ref[0:E, :]                                  # (E, E) multiplies target emb
        wp_e = wdece_ref[E:E + H, :]                              # (H, E) multiplies enc output
        w_ih_d0 = wdecg_ref[0:E, :]                               # (E, 4H)
        w_hh_d0 = wdecg_ref[E:E + H, :]                           # (H, 4H)
        w_cat_d1 = wdecg_ref[E + H:E + 3 * H, :]                  # (2H, 4H) = [W_ih_l1; W_hh_l1]
        b_d0 = bg_ref[0:1, :]
        b_d1 = bg_ref[1:2, :]

        # hoisted, state-independent work:
        #   inp_t = proj(cat(emb_t, enc)) = emb_t @ Wp_x + enc @ Wp_e   (proj bias fill_(0))
        #   layer-0 gate input = inp_t @ W_ih_d0 + b_d0
        pe = _mm(enc, wp_e)                                       # (P, E), constant over t
        px = _mm(abuf[...], wp_x) + jnp.concatenate([pe] * Sa, axis=0)  # (Sa*P, E)
        g0_all = _mm(px, w_ih_d0) + b_d0                          # (Sa*P, 4H)

        # 2-layer LSTM recurrence; h0 = c0 = h1 = c1 = enc (PyTorch get_states)
        h0, c0, h1, c1 = enc, enc, enc, enc
        for t in range(Sa):
            h0, c0 = _lstm_step(
                g0_all[t * P:(t + 1) * P, :] + _mm(h0, w_hh_d0), c0, H)
            g1 = _mm(jnp.concatenate([h0, h1], axis=1), w_cat_d1) + b_d1
            h1, c1 = _lstm_step(g1, c1, H)
            h1_ref[t * P:(t + 1) * P, :] = h1

        # batched output projection + row-wise log_softmax (lane-dense, vocab
        # padded to Vp; pad lanes forced to -1e30 so they drop out of the sum)
        logits = _mm(h1_ref[...], wout_ref[...])                  # (Sa*P, Vp); bias fill_(0)
        lane = jax.lax.broadcasted_iota(jnp.int32, logits.shape, 1)
        logits = jnp.where(lane < V, logits, -1e30)
        m = jnp.max(logits, axis=1, keepdims=True)
        s = logits - m
        lse = jnp.log(jnp.sum(jnp.exp(s), axis=1, keepdims=True))
        out_ref[...] = s - lse

    return kernel


# ----------------------------------------------------------------------------
# Parameter construction (kernel-friendly packed layout, mirrors the module)
# ----------------------------------------------------------------------------
def init_params(key, vocab_size, hidden_size, emb_dim):
    V, H, E = vocab_size, hidden_size, emb_dim
    G = 4 * H
    Vp = ((V + 127) // 128) * 128
    keys = iter(jax.random.split(key, 32))

    def unif(shape, scale):
        return jax.random.uniform(next(keys), shape, jnp.float32, -scale, scale)

    def lstm_dir(in_dim):
        # PyTorch: w_ih (4H,in), w_hh (4H,H), b_ih/b_hh (4H,), gate order i,f,g,o
        s = 1.0 / (H ** 0.5)
        w_ih = unif((G, in_dim), s)
        w_hh = unif((G, H), s)
        b = unif((G,), s) + unif((G,), s)
        # fused kernel layout: (in, 4H), (H, 4H), (1, 4H)
        return w_ih.T, w_hh.T, b[None, :]

    embed = unif((V, E), 0.1)

    # ---------------- encoder: bidirectional 2-layer LSTM + Linear(8H->H) ----
    ih0f, hh0f, b0f = lstm_dir(E)
    ih0b, hh0b, b0b = lstm_dir(E)
    ih1f, hh1f, b1f = lstm_dir(2 * H)
    ih1b, hh1b, b1b = lstm_dir(2 * H)
    w_lin = unif((H, 8 * H), 0.1)                   # Linear(8H,H).weight; bias fill_(0)

    w256 = jnp.concatenate([
        jnp.concatenate([ih0f, ih0b], axis=1),                   # (E, 8H) layer-0 fwd|bwd
        jnp.concatenate([ih1f[:H], ih1b[:H]], axis=1),           # (H, 8H) x layer-0 fwd out
        jnp.concatenate([ih1f[H:], ih1b[H:]], axis=1),           # (H, 8H) x layer-0 bwd out
    ], axis=0).astype(BF16)
    whh = jnp.concatenate([hh0f, hh0b, hh1f, hh1b], axis=0).astype(BF16)   # (4H, 4H)
    b8h = jnp.concatenate([jnp.concatenate([b0f, b0b], axis=1),
                           jnp.concatenate([b1f, b1b], axis=1)], axis=0)   # (2, 8H)
    wlin_t = w_lin.T.astype(BF16)                                          # (8H, H)

    # ---------------- decoder: proj + 2-layer LSTM + Linear(H->V) -----------
    dih0, dhh0, db0 = lstm_dir(E)
    dih1, dhh1, db1 = lstm_dir(H)
    w_proj = unif((E, H + E), 0.1)                  # Linear(H+E,E).weight; bias fill_(0)
    w_out = unif((V, H), 0.1)                       # Linear(H,V).weight;  bias fill_(0)

    wdece = jnp.concatenate([w_proj[:, :E].T,       # (E, E): multiplies target emb
                             w_proj[:, E:].T],      # (H, E): multiplies enc output
                            axis=0).astype(BF16)                           # (E+H, E)
    wdecg = jnp.concatenate([dih0, dhh0, dih1, dhh1], axis=0).astype(BF16)  # (E+3H, 4H)
    bg = jnp.concatenate([db0, db1], axis=0)                               # (2, 4H)
    wout = jnp.zeros((H, Vp), jnp.float32).at[:, :V].set(w_out.T).astype(BF16)

    return dict(embed=embed[:, None, :].astype(BF16),     # (V,1,E): row-gatherable layout
                w256=w256, whh=whh, wlin_t=wlin_t, b8h=b8h,
                wdece=wdece, wdecg=wdecg, bg=bg, wout=wout)


def _resident_spec(arr):
    zeros = (0,) * arr.ndim
    # index_map receives (grid idx, *scalar-prefetch refs) positionally
    return pl.BlockSpec(arr.shape, lambda i, q_ids, a_ids, z=zeros: z)


# ----------------------------------------------------------------------------
# Forward pass (train=True path of Seq2Seq.forward)
# ----------------------------------------------------------------------------
@functools.partial(jax.jit, static_argnames=("vocab_size",))
def seq2seq_forward(params, question, answer, *, vocab_size):
    H = params["wlin_t"].shape[1]
    E = params["wdece"].shape[1]
    Vp = params["wout"].shape[1]
    V = vocab_size
    B, Sq = question.shape
    Sa = answer.shape[1]

    # token ids, time-major (row r = t*B + b), scalar-prefetched into SMEM
    q_ids = jnp.transpose(question).reshape(Sq * B).astype(jnp.int32)
    a_ids = jnp.transpose(answer).reshape(Sa * B).astype(jnp.int32)

    tensor_inputs = (params["embed"], params["w256"], params["whh"],
                     params["wlin_t"], params["wdece"], params["wdecg"],
                     params["wout"], params["b8h"], params["bg"])

    kernel = make_seq2seq_kernel(B, Sq, Sa, H, E, V, Vp)
    grid_spec = pltpu.PrefetchScalarGridSpec(
        num_scalar_prefetch=2,
        grid=(1,),
        in_specs=[_resident_spec(a) for a in tensor_inputs],
        out_specs=pl.BlockSpec((Sa * P, Vp), lambda i, q_ids, a_ids: (0, 0)),
        scratch_shapes=[
            pltpu.VMEM((Sq * P, E), BF16),            # gathered question embeddings
            pltpu.VMEM((Sa * P, E), BF16),            # gathered answer embeddings
            pltpu.VMEM((Sq * P, H), jnp.float32),     # encoder layer-0 fwd outputs
            pltpu.VMEM((Sq * P, H), jnp.float32),     # encoder layer-0 bwd outputs
            pltpu.VMEM((Sa * P, H), jnp.float32),     # decoder layer-1 outputs
        ],
    )
    logp = pl.pallas_call(
        kernel,
        grid_spec=grid_spec,
        out_shape=jax.ShapeDtypeStruct((Sa * P, Vp), jnp.float32),
        compiler_params=pltpu.CompilerParams(dimension_semantics=("arbitrary",)),
    )(q_ids, a_ids, *tensor_inputs)

    # kernel rows are (t, padded-b)-major; PyTorch returns (B,Sa,V).view(-1,V)
    logp = logp.reshape(Sa, P, Vp)[:, :B, :V]
    return jnp.transpose(logp, (1, 0, 2)).reshape(B * Sa, V)


# TODO(synk): the train=False branch (torch.multinomial sampling loop + corpus
# detokenization) has no clean Pallas equivalent and is not implemented.

if __name__ == "__main__":
    VOCAB, HIDDEN, EMB = 64, 32, 128
    B, SQ, SA = 2, 8, 8

    key = jax.random.PRNGKey(0)
    pkey, qkey, akey = jax.random.split(key, 3)
    params = init_params(pkey, VOCAB, HIDDEN, EMB)
    question = jax.random.randint(qkey, (B, SQ), 0, VOCAB, jnp.int32)
    answer = jax.random.randint(akey, (B, SA), 0, VOCAB, jnp.int32)

    out = seq2seq_forward(params, question, answer, vocab_size=VOCAB)
    out = jax.block_until_ready(out)
    assert out.shape == (B * SA, VOCAB), out.shape
    assert bool(jnp.all(jnp.isfinite(out)))
    # rows of a log_softmax must exponentiate-and-sum to ~1
    assert jnp.allclose(jnp.sum(jnp.exp(out), axis=1), 1.0, atol=1e-4)
    print("KERNEL_OK")
</pallas_src>

<mosaic_0001>
module attributes {stable_mosaic.version = 11 : i64} {
  func.func @kernel(%arg0: i32, %arg1: memref<16xi32, #tpu.memory_space<smem>>, %arg2: memref<16xi32, #tpu.memory_space<smem>>, %arg3: memref<64x1x128xbf16, #tpu.memory_space<vmem>>, %arg4: memref<192x256xbf16, #tpu.memory_space<vmem>>, %arg5: memref<128x128xbf16, #tpu.memory_space<vmem>>, %arg6: memref<256x32xbf16, #tpu.memory_space<vmem>>, %arg7: memref<160x128xbf16, #tpu.memory_space<vmem>>, %arg8: memref<224x128xbf16, #tpu.memory_space<vmem>>, %arg9: memref<32x128xbf16, #tpu.memory_space<vmem>>, %arg10: memref<2x256xf32, #tpu.memory_space<vmem>>, %arg11: memref<2x128xf32, #tpu.memory_space<vmem>>, %arg12: memref<64x128xf32, #tpu.memory_space<vmem>>, %arg13: memref<64x128xbf16, #tpu.memory_space<vmem>>, %arg14: memref<64x128xbf16, #tpu.memory_space<vmem>>, %arg15: memref<64x32xf32, #tpu.memory_space<vmem>>, %arg16: memref<64x32xf32, #tpu.memory_space<vmem>>, %arg17: memref<64x32xf32, #tpu.memory_space<vmem>>) attributes {dimension_semantics = [#tpu.dimension_semantics<arbitrary>], iteration_bounds = array<i64: 1>, scalar_prefetch = 2 : i64, scratch_operands = 5 : i64, tpu.core_type = #tpu.core_type<tc>, window_params = [{pipeline_mode = #tpu.pipeline_mode<synchronous>, transform_indices = @transform_0, window_bounds = array<i64: 64, 1, 128>}, {pipeline_mode = #tpu.pipeline_mode<synchronous>, transform_indices = @transform_1, window_bounds = array<i64: 192, 256>}, {pipeline_mode = #tpu.pipeline_mode<synchronous>, transform_indices = @transform_2, window_bounds = array<i64: 128, 128>}, {pipeline_mode = #tpu.pipeline_mode<synchronous>, transform_indices = @transform_3, window_bounds = array<i64: 256, 32>}, {pipeline_mode = #tpu.pipeline_mode<synchronous>, transform_indices = @transform_4, window_bounds = array<i64: 160, 128>}, {pipeline_mode = #tpu.pipeline_mode<synchronous>, transform_indices = @transform_5, window_bounds = array<i64: 224, 128>}, {pipeline_mode = #tpu.pipeline_mode<synchronous>, transform_indices = @transform_6, window_bounds = array<i64: 32, 128>}, {pipeline_mode = #tpu.pipeline_mode<synchronous>, transform_indices = @transform_7, window_bounds = array<i64: 2, 256>}, {pipeline_mode = #tpu.pipeline_mode<synchronous>, transform_indices = @transform_8, window_bounds = array<i64: 2, 128>}, {pipeline_mode = #tpu.pipeline_mode<synchronous>, transform_indices = @transform_9, window_bounds = array<i64: 64, 128>}]} {
    %cst = arith.constant 0.000000e+00 : bf16
    %0 = vector.broadcast %cst : bf16 to vector<64x128xbf16>
    %c0 = arith.constant 0 : index
    %c0_0 = arith.constant 0 : index
    %1 = vector.load %arg13[%c0, %c0_0] : memref<64x128xbf16, #tpu.memory_space<vmem>>, vector<64x128xbf16>
    tpu.vector_store %arg13[%c0, %c0_0], %0 {strides = array<i32>} : memref<64x128xbf16, #tpu.memory_space<vmem>>, vector<64x128xbf16>,
    %cst_1 = arith.constant 0.000000e+00 : bf16
    %2 = vector.broadcast %cst_1 : bf16 to vector<64x128xbf16>
    %c0_2 = arith.constant 0 : index
    %c0_3 = arith.constant 0 : index
    %3 = vector.load %arg14[%c0_2, %c0_3] : memref<64x128xbf16, #tpu.memory_space<vmem>>, vector<64x128xbf16>
    tpu.vector_store %arg14[%c0_2, %c0_3], %2 {strides = array<i32>} : memref<64x128xbf16, #tpu.memory_space<vmem>>, vector<64x128xbf16>,
    %c0_4 = arith.constant 0 : index
    %4 = memref.load %arg1[%c0_4] : memref<16xi32, #tpu.memory_space<smem>>
    %5 = arith.index_cast %4 : i32 to index
    %c0_5 = arith.constant 0 : index
    %c0_6 = arith.constant 0 : index
    %6 = vector.load %arg3[%5, %c0_5, %c0_6] : memref<64x1x128xbf16, #tpu.memory_space<vmem>>, vector<1x1x128xbf16>
    %7 = vector.shape_cast %6 : vector<1x1x128xbf16> to vector<1x128xbf16>
    %c0_7 = arith.constant 0 : index
    %c0_8 = arith.constant 0 : index
    %8 = vector.load %arg13[%c0_7, %c0_8] : memref<64x128xbf16, #tpu.memory_space<vmem>>, vector<1x128xbf16>
    tpu.vector_store %arg13[%c0_7, %c0_8], %7 {strides = array<i32>} : memref<64x128xbf16, #tpu.memory_space<vmem>>, vector<1x128xbf16>,
    %c1 = arith.constant 1 : index
    %9 = memref.load %arg1[%c1] : memref<16xi32, #tpu.memory_space<smem>>
    %10 = arith.index_cast %9 : i32 to index
    %c0_9 = arith.constant 0 : index
    %c0_10 = arith.constant 0 : index
    %11 = vector.load %arg3[%10, %c0_9, %c0_10] : memref<64x1x128xbf16, #tpu.memory_space<vmem>>, vector<1x1x128xbf16>
    %12 = vector.shape_cast %11 : vector<1x1x128xbf16> to vector<1x128xbf16>
    %c1_11 = arith.constant 1 : index
    %c0_12 = arith.constant 0 : index
    %13 = vector.load %arg13[%c1_11, %c0_12] : memref<64x128xbf16, #tpu.memory_space<vmem>>, vector<1x128xbf16>
    tpu.vector_store %arg13[%c1_11, %c0_12], %12 {strides = array<i32>} : memref<64x128xbf16, #tpu.memory_space<vmem>>, vector<1x128xbf16>,
    %c2 = arith.constant 2 : index
    %14 = memref.load %arg1[%c2] : memref<16xi32, #tpu.memory_space<smem>>
    %15 = arith.index_cast %14 : i32 to index
    %c0_13 = arith.constant 0 : index
    %c0_14 = arith.constant 0 : index
    %16 = vector.load %arg3[%15, %c0_13, %c0_14] : memref<64x1x128xbf16, #tpu.memory_space<vmem>>, vector<1x1x128xbf16>
    %17 = vector.shape_cast %16 : vector<1x1x128xbf16> to vector<1x128xbf16>
    %c8 = arith.constant 8 : index
    %c0_15 = arith.constant 0 : index
    %18 = vector.load %arg13[%c8, %c0_15] : memref<64x128xbf16, #tpu.memory_space<vmem>>, vector<1x128xbf16>
    tpu.vector_store %arg13[%c8, %c0_15], %17 {strides = array<i32>} : memref<64x128xbf16, #tpu.memory_space<vmem>>, vector<1x128xbf16>,
    %c3 = arith.constant 3 : index
    %19 = memref.load %arg1[%c3] : memref<16xi32, #tpu.memory_space<smem>>
    %20 = arith.index_cast %19 : i32 to index
    %c0_16 = arith.constant 0 : index
    %c0_17 = arith.constant 0 : index
    %21 = vector.load %arg3[%20, %c0_16, %c0_17] : memref<64x1x128xbf16, #tpu.memory_space<vmem>>, vector<1x1x128xbf16>
    %22 = vector.shape_cast %21 : vector<1x1x128xbf16> to vector<1x128xbf16>
    %c9 = arith.constant 9 : index
    %c0_18 = arith.constant 0 : index
    %23 = vector.load %arg13[%c9, %c0_18] : memref<64x128xbf16, #tpu.memory_space<vmem>>, vector<1x128xbf16>
    tpu.vector_store %arg13[%c9, %c0_18], %22 {strides = array<i32>} : memref<64x128xbf16, #tpu.memory_space<vmem>>, vector<1x128xbf16>,
    %c4 = arith.constant 4 : index
    %24 = memref.load %arg1[%c4] : memref<16xi32, #tpu.memory_space<smem>>
    %25 = arith.index_cast %24 : i32 to index
    %c0_19 = arith.constant 0 : index
    %c0_20 = arith.constant 0 : index
    %26 = vector.load %arg3[%25, %c0_19, %c0_20] : memref<64x1x128xbf16, #tpu.memory_space<vmem>>, vector<1x1x128xbf16>
    %27 = vector.shape_cast %26 : vector<1x1x128xbf16> to vector<1x128xbf16>
    %c16 = arith.constant 16 : index
    %c0_21 = arith.constant 0 : index
    %28 = vector.load %arg13[%c16, %c0_21] : memref<64x128xbf16, #tpu.memory_space<vmem>>, vector<1x128xbf16>
    tpu.vector_store %arg13[%c16, %c0_21], %27 {strides = array<i32>} : memref<64x128xbf16, #tpu.memory_space<vmem>>, vector<1x128xbf16>,
    %c5 = arith.constant 5 : index
    %29 = memref.load %arg1[%c5] : memref<16xi32, #tpu.memory_space<smem>>
    %30 = arith.index_cast %29 : i32 to index
    %c0_22 = arith.constant 0 : index
    %c0_23 = arith.constant 0 : index
    %31 = vector.load %arg3[%30, %c0_22, %c0_23] : memref<64x1x128xbf16, #tpu.memory_space<vmem>>, vector<1x1x128xbf16>
    %32 = vector.shape_cast %31 : vector<1x1x128xbf16> to vector<1x128xbf16>
    %c17 = arith.constant 17 : index
    %c0_24 = arith.constant 0 : index
    %33 = vector.load %arg13[%c17, %c0_24] : memref<64x128xbf16, #tpu.memory_space<vmem>>, vector<1x128xbf16>
    tpu.vector_store %arg13[%c17, %c0_24], %32 {strides = array<i32>} : memref<64x128xbf16, #tpu.memory_space<vmem>>, vector<1x128xbf16>,
    %c6 = arith.constant 6 : index
    %34 = memref.load %arg1[%c6] : memref<16xi32, #tpu.memory_space<smem>>
    %35 = arith.index_cast %34 : i32 to index
    %c0_25 = arith.constant 0 : index
    %c0_26 = arith.constant 0 : index
    %36 = vector.load %arg3[%35, %c0_25, %c0_26] : memref<64x1x128xbf16, #tpu.memory_space<vmem>>, vector<1x1x128xbf16>
    %37 = vector.shape_cast %36 : vector<1x1x128xbf16> to vector<1x128xbf16>
    %c24 = arith.constant 24 : index
    %c0_27 = arith.constant 0 : index
    %38 = vector.load %arg13[%c24, %c0_27] : memref<64x128xbf16, #tpu.memory_space<vmem>>, vector<1x128xbf16>
    tpu.vector_store %arg13[%c24, %c0_27], %37 {strides = array<i32>} : memref<64x128xbf16, #tpu.memory_space<vmem>>, vector<1x128xbf16>,
    %c7 = arith.constant 7 : index
    %39 = memref.load %arg1[%c7] : memref<16xi32, #tpu.memory_space<smem>>
    %40 = arith.index_cast %39 : i32 to index
    %c0_28 = arith.constant 0 : index
    %c0_29 = arith.constant 0 : index
    %41 = vector.load %arg3[%40, %c0_28, %c0_29] : memref<64x1x128xbf16, #tpu.memory_space<vmem>>, vector<1x1x128xbf16>
    %42 = vector.shape_cast %41 : vector<1x1x128xbf16> to vector<1x128xbf16>
    %c25 = arith.constant 25 : index
    %c0_30 = arith.constant 0 : index
    %43 = vector.load %arg13[%c25, %c0_30] : memref<64x128xbf16, #tpu.memory_space<vmem>>, vector<1x128xbf16>
    tpu.vector_store %arg13[%c25, %c0_30], %42 {strides = array<i32>} : memref<64x128xbf16, #tpu.memory_space<vmem>>, vector<1x128xbf16>,
    %c8_31 = arith.constant 8 : index
    %44 = memref.load %arg1[%c8_31] : memref<16xi32, #tpu.memory_space<smem>>
    %45 = arith.index_cast %44 : i32 to index
    %c0_32 = arith.constant 0 : index
    %c0_33 = arith.constant 0 : index
    %46 = vector.load %arg3[%45, %c0_32, %c0_33] : memref<64x1x128xbf16, #tpu.memory_space<vmem>>, vector<1x1x128xbf16>
    %47 = vector.shape_cast %46 : vector<1x1x128xbf16> to vector<1x128xbf16>
    %c32 = arith.constant 32 : index
    %c0_34 = arith.constant 0 : index
    %48 = vector.load %arg13[%c32, %c0_34] : memref<64x128xbf16, #tpu.memory_space<vmem>>, vector<1x128xbf16>
    tpu.vector_store %arg13[%c32, %c0_34], %47 {strides = array<i32>} : memref<64x128xbf16, #tpu.memory_space<vmem>>, vector<1x128xbf16>,
    %c9_35 = arith.constant 9 : index
    %49 = memref.load %arg1[%c9_35] : memref<16xi32, #tpu.memory_space<smem>>
    %50 = arith.index_cast %49 : i32 to index
    %c0_36 = arith.constant 0 : index
    %c0_37 = arith.constant 0 : index
    %51 = vector.load %arg3[%50, %c0_36, %c0_37] : memref<64x1x128xbf16, #tpu.memory_space<vmem>>, vector<1x1x128xbf16>
    %52 = vector.shape_cast %51 : vector<1x1x128xbf16> to vector<1x128xbf16>
    %c33 = arith.constant 33 : index
    %c0_38 = arith.constant 0 : index
    %53 = vector.load %arg13[%c33, %c0_38] : memref<64x128xbf16, #tpu.memory_space<vmem>>, vector<1x128xbf16>
    tpu.vector_store %arg13[%c33, %c0_38], %52 {strides = array<i32>} : memref<64x128xbf16, #tpu.memory_space<vmem>>, vector<1x128xbf16>,
    %c10 = arith.constant 10 : index
    %54 = memref.load %arg1[%c10] : memref<16xi32, #tpu.memory_space<smem>>
    %55 = arith.index_cast %54 : i32 to index
    %c0_39 = arith.constant 0 : index
    %c0_40 = arith.constant 0 : index
    %56 = vector.load %arg3[%55, %c0_39, %c0_40] : memref<64x1x128xbf16, #tpu.memory_space<vmem>>, vector<1x1x128xbf16>
    %57 = vector.shape_cast %56 : vector<1x1x128xbf16> to vector<1x128xbf16>
    %c40 = arith.constant 40 : index
    %c0_41 = arith.constant 0 : index
    %58 = vector.load %arg13[%c40, %c0_41] : memref<64x128xbf16, #tpu.memory_space<vmem>>, vector<1x128xbf16>
    tpu.vector_store %arg13[%c40, %c0_41], %57 {strides = array<i32>} : memref<64x128xbf16, #tpu.memory_space<vmem>>, vector<1x128xbf16>,
    %c11 = arith.constant 11 : index
    %59 = memref.load %arg1[%c11] : memref<16xi32, #tpu.memory_space<smem>>
    %60 = arith.index_cast %59 : i32 to index
    %c0_42 = arith.constant 0 : index
    %c0_43 = arith.constant 0 : index
    %61 = vector.load %arg3[%60, %c0_42, %c0_43] : memref<64x1x128xbf16, #tpu.memory_space<vmem>>, vector<1x1x128xbf16>
    %62 = vector.shape_cast %61 : vector<1x1x128xbf16> to vector<1x128xbf16>
    %c41 = arith.constant 41 : index
    %c0_44 = arith.constant 0 : index
    %63 = vector.load %arg13[%c41, %c0_44] : memref<64x128xbf16, #tpu.memory_space<vmem>>, vector<1x128xbf16>
    tpu.vector_store %arg13[%c41, %c0_44], %62 {strides = array<i32>} : memref<64x128xbf16, #tpu.memory_space<vmem>>, vector<1x128xbf16>,
    %c12 = arith.constant 12 : index
    %64 = memref.load %arg1[%c12] : memref<16xi32, #tpu.memory_space<smem>>
    %65 = arith.index_cast %64 : i32 to index
    %c0_45 = arith.constant 0 : index
    %c0_46 = arith.constant 0 : index
    %66 = vector.load %arg3[%65, %c0_45, %c0_46] : memref<64x1x128xbf16, #tpu.memory_space<vmem>>, vector<1x1x128xbf16>
    %67 = vector.shape_cast %66 : vector<1x1x128xbf16> to vector<1x128xbf16>
    %c48 = arith.constant 48 : index
    %c0_47 = arith.constant 0 : index
    %68 = vector.load %arg13[%c48, %c0_47] : memref<64x128xbf16, #tpu.memory_space<vmem>>, vector<1x128xbf16>
    tpu.vector_store %arg13[%c48, %c0_47], %67 {strides = array<i32>} : memref<64x128xbf16, #tpu.memory_space<vmem>>, vector<1x128xbf16>,
    %c13 = arith.constant 13 : index
    %69 = memref.load %arg1[%c13] : memref<16xi32, #tpu.memory_space<smem>>
    %70 = arith.index_cast %69 : i32 to index
    %c0_48 = arith.constant 0 : index
    %c0_49 = arith.constant 0 : index
    %71 = vector.load %arg3[%70, %c0_48, %c0_49] : memref<64x1x128xbf16, #tpu.memory_space<vmem>>, vector<1x1x128xbf16>
    %72 = vector.shape_cast %71 : vector<1x1x128xbf16> to vector<1x128xbf16>
    %c49 = arith.constant 49 : index
    %c0_50 = arith.constant 0 : index
    %73 = vector.load %arg13[%c49, %c0_50] : memref<64x128xbf16, #tpu.memory_space<vmem>>, vector<1x128xbf16>
    tpu.vector_store %arg13[%c49, %c0_50], %72 {strides = array<i32>} : memref<64x128xbf16, #tpu.memory_space<vmem>>, vector<1x128xbf16>,
    %c14 = arith.constant 14 : index
    %74 = memref.load %arg1[%c14] : memref<16xi32, #tpu.memory_space<smem>>
    %75 = arith.index_cast %74 : i32 to index
    %c0_51 = arith.constant 0 : index
    %c0_52 = arith.constant 0 : index
    %76 = vector.load %arg3[%75, %c0_51, %c0_52] : memref<64x1x128xbf16, #tpu.memory_space<vmem>>, vector<1x1x128xbf16>
    %77 = vector.shape_cast %76 : vector<1x1x128xbf16> to vector<1x128xbf16>
    %c56 = arith.constant 56 : index
    %c0_53 = arith.constant 0 : index
    %78 = vector.load %arg13[%c56, %c0_53] : memref<64x128xbf16, #tpu.memory_space<vmem>>, vector<1x128xbf16>
    tpu.vector_store %arg13[%c56, %c0_53], %77 {strides = array<i32>} : memref<64x128xbf16, #tpu.memory_space<vmem>>, vector<1x128xbf16>,
    %c15 = arith.constant 15 : index
    %79 = memref.load %arg1[%c15] : memref<16xi32, #tpu.memory_space<smem>>
    %80 = arith.index_cast %79 : i32 to index
    %c0_54 = arith.constant 0 : index
    %c0_55 = arith.constant 0 : index
    %81 = vector.load %arg3[%80, %c0_54, %c0_55] : memref<64x1x128xbf16, #tpu.memory_space<vmem>>, vector<1x1x128xbf16>
    %82 = vector.shape_cast %81 : vector<1x1x128xbf16> to vector<1x128xbf16>
    %c57 = arith.constant 57 : index
    %c0_56 = arith.constant 0 : index
    %83 = vector.load %arg13[%c57, %c0_56] : memref<64x128xbf16, #tpu.memory_space<vmem>>, vector<1x128xbf16>
    tpu.vector_store %arg13[%c57, %c0_56], %82 {strides = array<i32>} : memref<64x128xbf16, #tpu.memory_space<vmem>>, vector<1x128xbf16>,
    %c0_57 = arith.constant 0 : index
    %84 = memref.load %arg2[%c0_57] : memref<16xi32, #tpu.memory_space<smem>>
    %85 = arith.index_cast %84 : i32 to index
    %c0_58 = arith.constant 0 : index
    %c0_59 = arith.constant 0 : index
    %86 = vector.load %arg3[%85, %c0_58, %c0_59] : memref<64x1x128xbf16, #tpu.memory_space<vmem>>, vector<1x1x128xbf16>
    %87 = vector.shape_cast %86 : vector<1x1x128xbf16> to vector<1x128xbf16>
    %c0_60 = arith.constant 0 : index
    %c0_61 = arith.constant 0 : index
    %88 = vector.load %arg14[%c0_60, %c0_61] : memref<64x128xbf16, #tpu.memory_space<vmem>>, vector<1x128xbf16>
    tpu.vector_store %arg14[%c0_60, %c0_61], %87 {strides = array<i32>} : memref<64x128xbf16, #tpu.memory_space<vmem>>, vector<1x128xbf16>,
    %c1_62 = arith.constant 1 : index
    %89 = memref.load %arg2[%c1_62] : memref<16xi32, #tpu.memory_space<smem>>
    %90 = arith.index_cast %89 : i32 to index
    %c0_63 = arith.constant 0 : index
    %c0_64 = arith.constant 0 : index
    %91 = vector.load %arg3[%90, %c0_63, %c0_64] : memref<64x1x128xbf16, #tpu.memory_space<vmem>>, vector<1x1x128xbf16>
    %92 = vector.shape_cast %91 : vector<1x1x128xbf16> to vector<1x128xbf16>
    %c1_65 = arith.constant 1 : index
    %c0_66 = arith.constant 0 : index
    %93 = vector.load %arg14[%c1_65, %c0_66] : memref<64x128xbf16, #tpu.memory_space<vmem>>, vector<1x128xbf16>
    tpu.vector_store %arg14[%c1_65, %c0_66], %92 {strides = array<i32>} : memref<64x128xbf16, #tpu.memory_space<vmem>>, vector<1x128xbf16>,
    %c2_67 = arith.constant 2 : index
    %94 = memref.load %arg2[%c2_67] : memref<16xi32, #tpu.memory_space<smem>>
    %95 = arith.index_cast %94 : i32 to index
    %c0_68 = arith.constant 0 : index
    %c0_69 = arith.constant 0 : index
    %96 = vector.load %arg3[%95, %c0_68, %c0_69] : memref<64x1x128xbf16, #tpu.memory_space<vmem>>, vector<1x1x128xbf16>
    %97 = vector.shape_cast %96 : vector<1x1x128xbf16> to vector<1x128xbf16>
    %c8_70 = arith.constant 8 : index
    %c0_71 = arith.constant 0 : index
    %98 = vector.load %arg14[%c8_70, %c0_71] : memref<64x128xbf16, #tpu.memory_space<vmem>>, vector<1x128xbf16>
    tpu.vector_store %arg14[%c8_70, %c0_71], %97 {strides = array<i32>} : memref<64x128xbf16, #tpu.memory_space<vmem>>, vector<1x128xbf16>,
    %c3_72 = arith.constant 3 : index
    %99 = memref.load %arg2[%c3_72] : memref<16xi32, #tpu.memory_space<smem>>
    %100 = arith.index_cast %99 : i32 to index
    %c0_73 = arith.constant 0 : index
    %c0_74 = arith.constant 0 : index
    %101 = vector.load %arg3[%100, %c0_73, %c0_74] : memref<64x1x128xbf16, #tpu.memory_space<vmem>>, vector<1x1x128xbf16>
    %102 = vector.shape_cast %101 : vector<1x1x128xbf16> to vector<1x128xbf16>
    %c9_75 = arith.constant 9 : index
    %c0_76 = arith.constant 0 : index
    %103 = vector.load %arg14[%c9_75, %c0_76] : memref<64x128xbf16, #tpu.memory_space<vmem>>, vector<1x128xbf16>
    tpu.vector_store %arg14[%c9_75, %c0_76], %102 {strides = array<i32>} : memref<64x128xbf16, #tpu.memory_space<vmem>>, vector<1x128xbf16>,
    %c4_77 = arith.constant 4 : index
    %104 = memref.load %arg2[%c4_77] : memref<16xi32, #tpu.memory_space<smem>>
    %105 = arith.index_cast %104 : i32 to index
    %c0_78 = arith.constant 0 : index
    %c0_79 = arith.constant 0 : index
    %106 = vector.load %arg3[%105, %c0_78, %c0_79] : memref<64x1x128xbf16, #tpu.memory_space<vmem>>, vector<1x1x128xbf16>
    %107 = vector.shape_cast %106 : vector<1x1x128xbf16> to vector<1x128xbf16>
    %c16_80 = arith.constant 16 : index
    %c0_81 = arith.constant 0 : index
    %108 = vector.load %arg14[%c16_80, %c0_81] : memref<64x128xbf16, #tpu.memory_space<vmem>>, vector<1x128xbf16>
    tpu.vector_store %arg14[%c16_80, %c0_81], %107 {strides = array<i32>} : memref<64x128xbf16, #tpu.memory_space<vmem>>, vector<1x128xbf16>,
    %c5_82 = arith.constant 5 : index
    %109 = memref.load %arg2[%c5_82] : memref<16xi32, #tpu.memory_space<smem>>
    %110 = arith.index_cast %109 : i32 to index
    %c0_83 = arith.constant 0 : index
    %c0_84 = arith.constant 0 : index
    %111 = vector.load %arg3[%110, %c0_83, %c0_84] : memref<64x1x128xbf16, #tpu.memory_space<vmem>>, vector<1x1x128xbf16>
    %112 = vector.shape_cast %111 : vector<1x1x128xbf16> to vector<1x128xbf16>
    %c17_85 = arith.constant 17 : index
    %c0_86 = arith.constant 0 : index
    %113 = vector.load %arg14[%c17_85, %c0_86] : memref<64x128xbf16, #tpu.memory_space<vmem>>, vector<1x128xbf16>
    tpu.vector_store %arg14[%c17_85, %c0_86], %112 {strides = array<i32>} : memref<64x128xbf16, #tpu.memory_space<vmem>>, vector<1x128xbf16>,
    %c6_87 = arith.constant 6 : index
    %114 = memref.load %arg2[%c6_87] : memref<16xi32, #tpu.memory_space<smem>>
    %115 = arith.index_cast %114 : i32 to index
    %c0_88 = arith.constant 0 : index
    %c0_89 = arith.constant 0 : index
    %116 = vector.load %arg3[%115, %c0_88, %c0_89] : memref<64x1x128xbf16, #tpu.memory_space<vmem>>, vector<1x1x128xbf16>
    %117 = vector.shape_cast %116 : vector<1x1x128xbf16> to vector<1x128xbf16>
    %c24_90 = arith.constant 24 : index
    %c0_91 = arith.constant 0 : index
    %118 = vector.load %arg14[%c24_90, %c0_91] : memref<64x128xbf16, #tpu.memory_space<vmem>>, vector<1x128xbf16>
    tpu.vector_store %arg14[%c24_90, %c0_91], %117 {strides = array<i32>} : memref<64x128xbf16, #tpu.memory_space<vmem>>, vector<1x128xbf16>,
    %c7_92 = arith.constant 7 : index
    %119 = memref.load %arg2[%c7_92] : memref<16xi32, #tpu.memory_space<smem>>
    %120 = arith.index_cast %119 : i32 to index
    %c0_93 = arith.constant 0 : index
    %c0_94 = arith.constant 0 : index
    %121 = vector.load %arg3[%120, %c0_93, %c0_94] : memref<64x1x128xbf16, #tpu.memory_space<vmem>>, vector<1x1x128xbf16>
    %122 = vector.shape_cast %121 : vector<1x1x128xbf16> to vector<1x128xbf16>
    %c25_95 = arith.constant 25 : index
    %c0_96 = arith.constant 0 : index
    %123 = vector.load %arg14[%c25_95, %c0_96] : memref<64x128xbf16, #tpu.memory_space<vmem>>, vector<1x128xbf16>
    tpu.vector_store %arg14[%c25_95, %c0_96], %122 {strides = array<i32>} : memref<64x128xbf16, #tpu.memory_space<vmem>>, vector<1x128xbf16>,
    %c8_97 = arith.constant 8 : index
    %124 = memref.load %arg2[%c8_97] : memref<16xi32, #tpu.memory_space<smem>>
    %125 = arith.index_cast %124 : i32 to index
    %c0_98 = arith.constant 0 : index
    %c0_99 = arith.constant 0 : index
    %126 = vector.load %arg3[%125, %c0_98, %c0_99] : memref<64x1x128xbf16, #tpu.memory_space<vmem>>, vector<1x1x128xbf16>
    %127 = vector.shape_cast %126 : vector<1x1x128xbf16> to vector<1x128xbf16>
    %c32_100 = arith.constant 32 : index
    %c0_101 = arith.constant 0 : index
    %128 = vector.load %arg14[%c32_100, %c0_101] : memref<64x128xbf16, #tpu.memory_space<vmem>>, vector<1x128xbf16>
    tpu.vector_store %arg14[%c32_100, %c0_101], %127 {strides = array<i32>} : memref<64x128xbf16, #tpu.memory_space<vmem>>, vector<1x128xbf16>,
    %c9_102 = arith.constant 9 : index
    %129 = memref.load %arg2[%c9_102] : memref<16xi32, #tpu.memory_space<smem>>
    %130 = arith.index_cast %129 : i32 to index
    %c0_103 = arith.constant 0 : index
    %c0_104 = arith.constant 0 : index
    %131 = vector.load %arg3[%130, %c0_103, %c0_104] : memref<64x1x128xbf16, #tpu.memory_space<vmem>>, vector<1x1x128xbf16>
    %132 = vector.shape_cast %131 : vector<1x1x128xbf16> to vector<1x128xbf16>
    %c33_105 = arith.constant 33 : index
    %c0_106 = arith.constant 0 : index
    %133 = vector.load %arg14[%c33_105, %c0_106] : memref<64x128xbf16, #tpu.memory_space<vmem>>, vector<1x128xbf16>
    tpu.vector_store %arg14[%c33_105, %c0_106], %132 {strides = array<i32>} : memref<64x128xbf16, #tpu.memory_space<vmem>>, vector<1x128xbf16>,
    %c10_107 = arith.constant 10 : index
    %134 = memref.load %arg2[%c10_107] : memref<16xi32, #tpu.memory_space<smem>>
    %135 = arith.index_cast %134 : i32 to index
    %c0_108 = arith.constant 0 : index
    %c0_109 = arith.constant 0 : index
    %136 = vector.load %arg3[%135, %c0_108, %c0_109] : memref<64x1x128xbf16, #tpu.memory_space<vmem>>, vector<1x1x128xbf16>
    %137 = vector.shape_cast %136 : vector<1x1x128xbf16> to vector<1x128xbf16>
    %c40_110 = arith.constant 40 : index
    %c0_111 = arith.constant 0 : index
    %138 = vector.load %arg14[%c40_110, %c0_111] : memref<64x128xbf16, #tpu.memory_space<vmem>>, vector<1x128xbf16>
    tpu.vector_store %arg14[%c40_110, %c0_111], %137 {strides = array<i32>} : memref<64x128xbf16, #tpu.memory_space<vmem>>, vector<1x128xbf16>,
    %c11_112 = arith.constant 11 : index
    %139 = memref.load %arg2[%c11_112] : memref<16xi32, #tpu.memory_space<smem>>
    %140 = arith.index_cast %139 : i32 to index
    %c0_113 = arith.constant 0 : index
    %c0_114 = arith.constant 0 : index
    %141 = vector.load %arg3[%140, %c0_113, %c0_114] : memref<64x1x128xbf16, #tpu.memory_space<vmem>>, vector<1x1x128xbf16>
    %142 = vector.shape_cast %141 : vector<1x1x128xbf16> to vector<1x128xbf16>
    %c41_115 = arith.constant 41 : index
    %c0_116 = arith.constant 0 : index
    %143 = vector.load %arg14[%c41_115, %c0_116] : memref<64x128xbf16, #tpu.memory_space<vmem>>, vector<1x128xbf16>
    tpu.vector_store %arg14[%c41_115, %c0_116], %142 {strides = array<i32>} : memref<64x128xbf16, #tpu.memory_space<vmem>>, vector<1x128xbf16>,
    %c12_117 = arith.constant 12 : index
    %144 = memref.load %arg2[%c12_117] : memref<16xi32, #tpu.memory_space<smem>>
    %145 = arith.index_cast %144 : i32 to index
    %c0_118 = arith.constant 0 : index
    %c0_119 = arith.constant 0 : index
    %146 = vector.load %arg3[%145, %c0_118, %c0_119] : memref<64x1x128xbf16, #tpu.memory_space<vmem>>, vector<1x1x128xbf16>
    %147 = vector.shape_cast %146 : vector<1x1x128xbf16> to vector<1x128xbf16>
    %c48_120 = arith.constant 48 : index
    %c0_121 = arith.constant 0 : index
    %148 = vector.load %arg14[%c48_120, %c0_121] : memref<64x128xbf16, #tpu.memory_space<vmem>>, vector<1x128xbf16>
    tpu.vector_store %arg14[%c48_120, %c0_121], %147 {strides = array<i32>} : memref<64x128xbf16, #tpu.memory_space<vmem>>, vector<1x128xbf16>,
    %c13_122 = arith.constant 13 : index
    %149 = memref.load %arg2[%c13_122] : memref<16xi32, #tpu.memory_space<smem>>
    %150 = arith.index_cast %149 : i32 to index
    %c0_123 = arith.constant 0 : index
    %c0_124 = arith.constant 0 : index
    %151 = vector.load %arg3[%150, %c0_123, %c0_124] : memref<64x1x128xbf16, #tpu.memory_space<vmem>>, vector<1x1x128xbf16>
    %152 = vector.shape_cast %151 : vector<1x1x128xbf16> to vector<1x128xbf16>
    %c49_125 = arith.constant 49 : index
    %c0_126 = arith.constant 0 : index
    %153 = vector.load %arg14[%c49_125, %c0_126] : memref<64x128xbf16, #tpu.memory_space<vmem>>, vector<1x128xbf16>
    tpu.vector_store %arg14[%c49_125, %c0_126], %152 {strides = array<i32>} : memref<64x128xbf16, #tpu.memory_space<vmem>>, vector<1x128xbf16>,
    %c14_127 = arith.constant 14 : index
    %154 = memref.load %arg2[%c14_127] : memref<16xi32, #tpu.memory_space<smem>>
    %155 = arith.index_cast %154 : i32 to index
    %c0_128 = arith.constant 0 : index
    %c0_129 = arith.constant 0 : index
    %156 = vector.load %arg3[%155, %c0_128, %c0_129] : memref<64x1x128xbf16, #tpu.memory_space<vmem>>, vector<1x1x128xbf16>
    %157 = vector.shape_cast %156 : vector<1x1x128xbf16> to vector<1x128xbf16>
    %c56_130 = arith.constant 56 : index
    %c0_131 = arith.constant 0 : index
    %158 = vector.load %arg14[%c56_130, %c0_131] : memref<64x128xbf16, #tpu.memory_space<vmem>>, vector<1x128xbf16>
    tpu.vector_store %arg14[%c56_130, %c0_131], %157 {strides = array<i32>} : memref<64x128xbf16, #tpu.memory_space<vmem>>, vector<1x128xbf16>,
    %c15_132 = arith.constant 15 : index
    %159 = memref.load %arg2[%c15_132] : memref<16xi32, #tpu.memory_space<smem>>
    %160 = arith.index_cast %159 : i32 to index
    %c0_133 = arith.constant 0 : index
    %c0_134 = arith.constant 0 : index
    %161 = vector.load %arg3[%160, %c0_133, %c0_134] : memref<64x1x128xbf16, #tpu.memory_space<vmem>>, vector<1x1x128xbf16>
    %162 = vector.shape_cast %161 : vector<1x1x128xbf16> to vector<1x128xbf16>
    %c57_135 = arith.constant 57 : index
    %c0_136 = arith.constant 0 : index
    %163 = vector.load %arg14[%c57_135, %c0_136] : memref<64x128xbf16, #tpu.memory_space<vmem>>, vector<1x128xbf16>
    tpu.vector_store %arg14[%c57_135, %c0_136], %162 {strides = array<i32>} : memref<64x128xbf16, #tpu.memory_space<vmem>>, vector<1x128xbf16>,
    %c0_137 = arith.constant 0 : index
    %c0_138 = arith.constant 0 : index
    %164 = vector.load %arg4[%c0_137, %c0_138] : memref<192x256xbf16, #tpu.memory_space<vmem>>, vector<128x256xbf16>
    %c128 = arith.constant 128 : index
    %c0_139 = arith.constant 0 : index
    %165 = vector.load %arg4[%c128, %c0_139] : memref<192x256xbf16, #tpu.memory_space<vmem>>, vector<32x256xbf16>
    %c160 = arith.constant 160 : index
    %c0_140 = arith.constant 0 : index
    %166 = vector.load %arg4[%c160, %c0_140] : memref<192x256xbf16, #tpu.memory_space<vmem>>, vector<32x256xbf16>
    %c0_141 = arith.constant 0 : index
    %c0_142 = arith.constant 0 : index
    %167 = vector.load %arg5[%c0_141, %c0_142] : memref<128x128xbf16, #tpu.memory_space<vmem>>, vector<32x128xbf16>
    %c32_143 = arith.constant 32 : index
    %c0_144 = arith.constant 0 : index
    %168 = vector.load %arg5[%c32_143, %c0_144] : memref<128x128xbf16, #tpu.memory_space<vmem>>, vector<32x128xbf16>
    %c64 = arith.constant 64 : index
    %c0_145 = arith.constant 0 : index
    %169 = vector.load %arg5[%c64, %c0_145] : memref<128x128xbf16, #tpu.memory_space<vmem>>, vector<32x128xbf16>
    %c96 = arith.constant 96 : index
    %c0_146 = arith.constant 0 : index
    %170 = vector.load %arg5[%c96, %c0_146] : memref<128x128xbf16, #tpu.memory_space<vmem>>, vector<32x128xbf16>
    %c0_147 = arith.constant 0 : index
    %c0_148 = arith.constant 0 : index
    %171 = vector.load %arg10[%c0_147, %c0_148] : memref<2x256xf32, #tpu.memory_space<vmem>>, vector<1x256xf32>
    %c1_149 = arith.constant 1 : index
    %c0_150 = arith.constant 0 : index
    %172 = vector.load %arg10[%c1_149, %c0_150] : memref<2x256xf32, #tpu.memory_space<vmem>>, vector<1x256xf32>
    %cst_151 = arith.constant 0.000000e+00 : f32
    %173 = vector.broadcast %cst_151 : f32 to vector<8x32xf32>
    %c0_152 = arith.constant 0 : index
    %c0_153 = arith.constant 0 : index
    %174 = vector.load %arg13[%c0_152, %c0_153] : memref<64x128xbf16, #tpu.memory_space<vmem>>, vector<64x128xbf16>
    %cst_154 = arith.constant dense<0.000000e+00> : vector<64x256xf32>
    %175 = tpu.matmul %174, %164, %cst_154 {dimension_numbers = #tpu.dot_dimension_numbers<[1], [0], [0], [1], [0, 0, 1, 1], [], []>} : vector<64x128xbf16>, vector<128x256xbf16>, vector<64x256xf32> -> vector<64x256xf32>
    %176 = vector.broadcast %171 : vector<1x256xf32> to vector<64x256xf32>
    %177 = arith.addf %175, %176 : vector<64x256xf32>
    %178 = vector.extract_strided_slice %177 {offsets = [0, 0], sizes = [8, 128], strides = [1, 1]} : vector<64x256xf32> to vector<8x128xf32>
    %179 = arith.truncf %173 : vector<8x32xf32> to vector<8x32xbf16>
    %cst_155 = arith.constant dense<0.000000e+00> : vector<8x128xf32>
    %180 = tpu.matmul %179, %167, %cst_155 {dimension_numbers = #tpu.dot_dimension_numbers<[1], [0], [0], [1], [0, 0, 1, 1], [], []>} : vector<8x32xbf16>, vector<32x128xbf16>, vector<8x128xf32> -> vector<8x128xf32>
    %181 = arith.addf %178, %180 : vector<8x128xf32>
    %182 = arith.negf %181 : vector<8x128xf32>
    %183 = math.exp %182 : vector<8x128xf32>
    %cst_156 = arith.constant 1.000000e+00 : f32
    %184 = vector.broadcast %cst_156 : f32 to vector<8x128xf32>
    %185 = arith.addf %184, %183 : vector<8x128xf32>
    %186 = arith.divf %184, %185 : vector<8x128xf32>
    %187 = math.tanh %181 : vector<8x128xf32>
    %188 = vector.extract_strided_slice %186 {offsets = [0, 0], sizes = [8, 32], strides = [1, 1]} : vector<8x128xf32> to vector<8x32xf32>
    %189 = vector.extract_strided_slice %186 {offsets = [0, 32], sizes = [8, 32], strides = [1, 1]} : vector<8x128xf32> to vector<8x32xf32>
    %190 = vector.extract_strided_slice %187 {offsets = [0, 64], sizes = [8, 32], strides = [1, 1]} : vector<8x128xf32> to vector<8x32xf32>
    %191 = vector.extract_strided_slice %186 {offsets = [0, 96], sizes = [8, 32], strides = [1, 1]} : vector<8x128xf32> to vector<8x32xf32>
    %192 = arith.mulf %189, %173 : vector<8x32xf32>
    %193 = arith.mulf %188, %190 : vector<8x32xf32>
    %194 = arith.addf %192, %193 : vector<8x32xf32>
    %195 = math.tanh %194 : vector<8x32xf32>
    %196 = arith.mulf %191, %195 : vector<8x32xf32>
    %c0_157 = arith.constant 0 : index
    %c0_158 = arith.constant 0 : index
    %197 = vector.load %arg15[%c0_157, %c0_158] : memref<64x32xf32, #tpu.memory_space<vmem>>, vector<8x32xf32>
    tpu.vector_store %arg15[%c0_157, %c0_158], %196 {strides = array<i32>} : memref<64x32xf32, #tpu.memory_space<vmem>>, vector<8x32xf32>,
    %198 = vector.extract_strided_slice %177 {offsets = [8, 0], sizes = [8, 128], strides = [1, 1]} : vector<64x256xf32> to vector<8x128xf32>
    %199 = arith.truncf %196 : vector<8x32xf32> to vector<8x32xbf16>
    %cst_159 = arith.constant dense<0.000000e+00> : vector<8x128xf32>
    %200 = tpu.matmul %199, %167, %cst_159 {dimension_numbers = #tpu.dot_dimension_numbers<[1], [0], [0], [1], [0, 0, 1, 1], [], []>} : vector<8x32xbf16>, vector<32x128xbf16>, vector<8x128xf32> -> vector<8x128xf32>
    %201 = arith.addf %198, %200 : vector<8x128xf32>
    %202 = arith.negf %201 : vector<8x128xf32>
    %203 = math.exp %202 : vector<8x128xf32>
    %cst_160 = arith.constant 1.000000e+00 : f32
    %204 = vector.broadcast %cst_160 : f32 to vector<8x128xf32>
    %205 = arith.addf %204, %203 : vector<8x128xf32>
    %206 = arith.divf %204, %205 : vector<8x128xf32>
    %207 = math.tanh %201 : vector<8x128xf32>
    %208 = vector.extract_strided_slice %206 {offsets = [0, 0], sizes = [8, 32], strides = [1, 1]} : vector<8x128xf32> to vector<8x32xf32>
    %209 = vector.extract_strided_slice %206 {offsets = [0, 32], sizes = [8, 32], strides = [1, 1]} : vector<8x128xf32> to vector<8x32xf32>
    %210 = vector.extract_strided_slice %207 {offsets = [0, 64], sizes = [8, 32], strides = [1, 1]} : vector<8x128xf32> to vector<8x32xf32>
    %211 = vector.extract_strided_slice %206 {offsets = [0, 96], sizes = [8, 32], strides = [1, 1]} : vector<8x128xf32> to vector<8x32xf32>
    %212 = arith.mulf %209, %194 : vector<8x32xf32>
    %213 = arith.mulf %208, %210 : vector<8x32xf32>
    %214 = arith.addf %212, %213 : vector<8x32xf32>
    %215 = math.tanh %214 : vector<8x32xf32>
    %216 = arith.mulf %211, %215 : vector<8x32xf32>
    %c8_161 = arith.constant 8 : index
    %c0_162 = arith.constant 0 : index
    %217 = vector.load %arg15[%c8_161, %c0_162] : memref<64x32xf32, #tpu.memory_space<vmem>>, vector<8x32xf32>
    tpu.vector_store %arg15[%c8_161, %c0_162], %216 {strides = array<i32>} : memref<64x32xf32, #tpu.memory_space<vmem>>, vector<8x32xf32>,
    %218 = vector.extract_strided_slice %177 {offsets = [16, 0], sizes = [8, 128], strides = [1, 1]} : vector<64x256xf32> to vector<8x128xf32>
    %219 = arith.truncf %216 : vector<8x32xf32> to vector<8x32xbf16>
    %cst_163 = arith.constant dense<0.000000e+00> : vector<8x128xf32>
    %220 = tpu.matmul %219, %167, %cst_163 {dimension_numbers = #tpu.dot_dimension_numbers<[1], [0], [0], [1], [0, 0, 1, 1], [], []>} : vector<8x32xbf16>, vector<32x128xbf16>, vector<8x128xf32> -> vector<8x128xf32>
    %221 = arith.addf %218, %220 : vector<8x128xf32>
    %222 = arith.negf %221 : vector<8x128xf32>
    %223 = math.exp %222 : vector<8x128xf32>
    %cst_164 = arith.constant 1.000000e+00 : f32
    %224 = vector.broadcast %cst_164 : f32 to vector<8x128xf32>
    %225 = arith.addf %224, %223 : vector<8x128xf32>
    %226 = arith.divf %224, %225 : vector<8x128xf32>
    %227 = math.tanh %221 : vector<8x128xf32>
    %228 = vector.extract_strided_slice %226 {offsets = [0, 0], sizes = [8, 32], strides = [1, 1]} : vector<8x128xf32> to vector<8x32xf32>
    %229 = vector.extract_strided_slice %226 {offsets = [0, 32], sizes = [8, 32], strides = [1, 1]} : vector<8x128xf32> to vector<8x32xf32>
    %230 = vector.extract_strided_slice %227 {offsets = [0, 64], sizes = [8, 32], strides = [1, 1]} : vector<8x128xf32> to vector<8x32xf32>
    %231 = vector.extract_strided_slice %226 {offsets = [0, 96], sizes = [8, 32], strides = [1, 1]} : vector<8x128xf32> to vector<8x32xf32>
    %232 = arith.mulf %229, %214 : vector<8x32xf32>
    %233 = arith.mulf %228, %230 : vector<8x32xf32>
    %234 = arith.addf %232, %233 : vector<8x32xf32>
    %235 = math.tanh %234 : vector<8x32xf32>
    %236 = arith.mulf %231, %235 : vector<8x32xf32>
    %c16_165 = arith.constant 16 : index
    %c0_166 = arith.constant 0 : index
    %237 = vector.load %arg15[%c16_165, %c0_166] : memref<64x32xf32, #tpu.memory_space<vmem>>, vector<8x32xf32>
    tpu.vector_store %arg15[%c16_165, %c0_166], %236 {strides = array<i32>} : memref<64x32xf32, #tpu.memory_space<vmem>>, vector<8x32xf32>,
    %238 = vector.extract_strided_slice %177 {offsets = [24, 0], sizes = [8, 128], strides = [1, 1]} : vector<64x256xf32> to vector<8x128xf32>
    %239 = arith.truncf %236 : vector<8x32xf32> to vector<8x32xbf16>
    %cst_167 = arith.constant dense<0.000000e+00> : vector<8x128xf32>
    %240 = tpu.matmul %239, %167, %cst_167 {dimension_numbers = #tpu.dot_dimension_numbers<[1], [0], [0], [1], [0, 0, 1, 1], [], []>} : vector<8x32xbf16>, vector<32x128xbf16>, vector<8x128xf32> -> vector<8x128xf32>
    %241 = arith.addf %238, %240 : vector<8x128xf32>
    %242 = arith.negf %241 : vector<8x128xf32>
    %243 = math.exp %242 : vector<8x128xf32>
    %cst_168 = arith.constant 1.000000e+00 : f32
    %244 = vector.broadcast %cst_168 : f32 to vector<8x128xf32>
    %245 = arith.addf %244, %243 : vector<8x128xf32>
    %246 = arith.divf %244, %245 : vector<8x128xf32>
    %247 = math.tanh %241 : vector<8x128xf32>
    %248 = vector.extract_strided_slice %246 {offsets = [0, 0], sizes = [8, 32], strides = [1, 1]} : vector<8x128xf32> to vector<8x32xf32>
    %249 = vector.extract_strided_slice %246 {offsets = [0, 32], sizes = [8, 32], strides = [1, 1]} : vector<8x128xf32> to vector<8x32xf32>
    %250 = vector.extract_strided_slice %247 {offsets = [0, 64], sizes = [8, 32], strides = [1, 1]} : vector<8x128xf32> to vector<8x32xf32>
    %251 = vector.extract_strided_slice %246 {offsets = [0, 96], sizes = [8, 32], strides = [1, 1]} : vector<8x128xf32> to vector<8x32xf32>
    %252 = arith.mulf %249, %234 : vector<8x32xf32>
    %253 = arith.mulf %248, %250 : vector<8x32xf32>
    %254 = arith.addf %252, %253 : vector<8x32xf32>
    %255 = math.tanh %254 : vector<8x32xf32>
    %256 = arith.mulf %251, %255 : vector<8x32xf32>
    %c24_169 = arith.constant 24 : index
    %c0_170 = arith.constant 0 : index
    %257 = vector.load %arg15[%c24_169, %c0_170] : memref<64x32xf32, #tpu.memory_space<vmem>>, vector<8x32xf32>
    tpu.vector_store %arg15[%c24_169, %c0_170], %256 {strides = array<i32>} : memref<64x32xf32, #tpu.memory_space<vmem>>, vector<8x32xf32>,
    %258 = vector.extract_strided_slice %177 {offsets = [32, 0], sizes = [8, 128], strides = [1, 1]} : vector<64x256xf32> to vector<8x128xf32>
    %259 = arith.truncf %256 : vector<8x32xf32> to vector<8x32xbf16>
    %cst_171 = arith.constant dense<0.000000e+00> : vector<8x128xf32>
    %260 = tpu.matmul %259, %167, %cst_171 {dimension_numbers = #tpu.dot_dimension_numbers<[1], [0], [0], [1], [0, 0, 1, 1], [], []>} : vector<8x32xbf16>, vector<32x128xbf16>, vector<8x128xf32> -> vector<8x128xf32>
    %261 = arith.addf %258, %260 : vector<8x128xf32>
    %262 = arith.negf %261 : vector<8x128xf32>
    %263 = math.exp %262 : vector<8x128xf32>
    %cst_172 = arith.constant 1.000000e+00 : f32
    %264 = vector.broadcast %cst_172 : f32 to vector<8x128xf32>
    %265 = arith.addf %264, %263 : vector<8x128xf32>
    %266 = arith.divf %264, %265 : vector<8x128xf32>
    %267 = math.tanh %261 : vector<8x128xf32>
    %268 = vector.extract_strided_slice %266 {offsets = [0, 0], sizes = [8, 32], strides = [1, 1]} : vector<8x128xf32> to vector<8x32xf32>
    %269 = vector.extract_strided_slice %266 {offsets = [0, 32], sizes = [8, 32], strides = [1, 1]} : vector<8x128xf32> to vector<8x32xf32>
    %270 = vector.extract_strided_slice %267 {offsets = [0, 64], sizes = [8, 32], strides = [1, 1]} : vector<8x128xf32> to vector<8x32xf32>
    %271 = vector.extract_strided_slice %266 {offsets = [0, 96], sizes = [8, 32], strides = [1, 1]} : vector<8x128xf32> to vector<8x32xf32>
    %272 = arith.mulf %269, %254 : vector<8x32xf32>
    %273 = arith.mulf %268, %270 : vector<8x32xf32>
    %274 = arith.addf %272, %273 : vector<8x32xf32>
    %275 = math.tanh %274 : vector<8x32xf32>
    %276 = arith.mulf %271, %275 : vector<8x32xf32>
    %c32_173 = arith.constant 32 : index
    %c0_174 = arith.constant 0 : index
    %277 = vector.load %arg15[%c32_173, %c0_174] : memref<64x32xf32, #tpu.memory_space<vmem>>, vector<8x32xf32>
    tpu.vector_store %arg15[%c32_173, %c0_174], %276 {strides = array<i32>} : memref<64x32xf32, #tpu.memory_space<vmem>>, vector<8x32xf32>,
    %278 = vector.extract_strided_slice %177 {offsets = [40, 0], sizes = [8, 128], strides = [1, 1]} : vector<64x256xf32> to vector<8x128xf32>
    %279 = arith.truncf %276 : vector<8x32xf32> to vector<8x32xbf16>
    %cst_175 = arith.constant dense<0.000000e+00> : vector<8x128xf32>
    %280 = tpu.matmul %279, %167, %cst_175 {dimension_numbers = #tpu.dot_dimension_numbers<[1], [0], [0], [1], [0, 0, 1, 1], [], []>} : vector<8x32xbf16>, vector<32x128xbf16>, vector<8x128xf32> -> vector<8x128xf32>
    %281 = arith.addf %278, %280 : vector<8x128xf32>
    %282 = arith.negf %281 : vector<8x128xf32>
    %283 = math.exp %282 : vector<8x128xf32>
    %cst_176 = arith.constant 1.000000e+00 : f32
    %284 = vector.broadcast %cst_176 : f32 to vector<8x128xf32>
    %285 = arith.addf %284, %283 : vector<8x128xf32>
    %286 = arith.divf %284, %285 : vector<8x128xf32>
    %287 = math.tanh %281 : vector<8x128xf32>
    %288 = vector.extract_strided_slice %286 {offsets = [0, 0], sizes = [8, 32], strides = [1, 1]} : vector<8x128xf32> to vector<8x32xf32>
    %289 = vector.extract_strided_slice %286 {offsets = [0, 32], sizes = [8, 32], strides = [1, 1]} : vector<8x128xf32> to vector<8x32xf32>
    %290 = vector.extract_strided_slice %287 {offsets = [0, 64], sizes = [8, 32], strides = [1, 1]} : vector<8x128xf32> to vector<8x32xf32>
    %291 = vector.extract_strided_slice %286 {offsets = [0, 96], sizes = [8, 32], strides = [1, 1]} : vector<8x128xf32> to vector<8x32xf32>
    %292 = arith.mulf %289, %274 : vector<8x32xf32>
    %293 = arith.mulf %288, %290 : vector<8x32xf32>
    %294 = arith.addf %292, %293 : vector<8x32xf32>
    %295 = math.tanh %294 : vector<8x32xf32>
    %296 = arith.mulf %291, %295 : vector<8x32xf32>
    %c40_177 = arith.constant 40 : index
    %c0_178 = arith.constant 0 : index
    %297 = vector.load %arg15[%c40_177, %c0_178] : memref<64x32xf32, #tpu.memory_space<vmem>>, vector<8x32xf32>
    tpu.vector_store %arg15[%c40_177, %c0_178], %296 {strides = array<i32>} : memref<64x32xf32, #tpu.memory_space<vmem>>, vector<8x32xf32>,
    %298 = vector.extract_strided_slice %177 {offsets = [48, 0], sizes = [8, 128], strides = [1, 1]} : vector<64x256xf32> to vector<8x128xf32>
    %299 = arith.truncf %296 : vector<8x32xf32> to vector<8x32xbf16>
    %cst_179 = arith.constant dense<0.000000e+00> : vector<8x128xf32>
    %300 = tpu.matmul %299, %167, %cst_179 {dimension_numbers = #tpu.dot_dimension_numbers<[1], [0], [0], [1], [0, 0, 1, 1], [], []>} : vector<8x32xbf16>, vector<32x128xbf16>, vector<8x128xf32> -> vector<8x128xf32>
    %301 = arith.addf %298, %300 : vector<8x128xf32>
    %302 = arith.negf %301 : vector<8x128xf32>
    %303 = math.exp %302 : vector<8x128xf32>
    %cst_180 = arith.constant 1.000000e+00 : f32
    %304 = vector.broadcast %cst_180 : f32 to vector<8x128xf32>
    %305 = arith.addf %304, %303 : vector<8x128xf32>
    %306 = arith.divf %304, %305 : vector<8x128xf32>
    %307 = math.tanh %301 : vector<8x128xf32>
    %308 = vector.extract_strided_slice %306 {offsets = [0, 0], sizes = [8, 32], strides = [1, 1]} : vector<8x128xf32> to vector<8x32xf32>
    %309 = vector.extract_strided_slice %306 {offsets = [0, 32], sizes = [8, 32], strides = [1, 1]} : vector<8x128xf32> to vector<8x32xf32>
    %310 = vector.extract_strided_slice %307 {offsets = [0, 64], sizes = [8, 32], strides = [1, 1]} : vector<8x128xf32> to vector<8x32xf32>
    %311 = vector.extract_strided_slice %306 {offsets = [0, 96], sizes = [8, 32], strides = [1, 1]} : vector<8x128xf32> to vector<8x32xf32>
    %312 = arith.mulf %309, %294 : vector<8x32xf32>
    %313 = arith.mulf %308, %310 : vector<8x32xf32>
    %314 = arith.addf %312, %313 : vector<8x32xf32>
    %315 = math.tanh %314 : vector<8x32xf32>
    %316 = arith.mulf %311, %315 : vector<8x32xf32>
    %c48_181 = arith.constant 48 : index
    %c0_182 = arith.constant 0 : index
    %317 = vector.load %arg15[%c48_181, %c0_182] : memref<64x32xf32, #tpu.memory_space<vmem>>, vector<8x32xf32>
    tpu.vector_store %arg15[%c48_181, %c0_182], %316 {strides = array<i32>} : memref<64x32xf32, #tpu.memory_space<vmem>>, vector<8x32xf32>,
    %318 = vector.extract_strided_slice %177 {offsets = [56, 0], sizes = [8, 128], strides = [1, 1]} : vector<64x256xf32> to vector<8x128xf32>
    %319 = arith.truncf %316 : vector<8x32xf32> to vector<8x32xbf16>
    %cst_183 = arith.constant dense<0.000000e+00> : vector<8x128xf32>
    %320 = tpu.matmul %319, %167, %cst_183 {dimension_numbers = #tpu.dot_dimension_numbers<[1], [0], [0], [1], [0, 0, 1, 1], [], []>} : vector<8x32xbf16>, vector<32x128xbf16>, vector<8x128xf32> -> vector<8x128xf32>
    %321 = arith.addf %318, %320 : vector<8x128xf32>
    %322 = arith.negf %321 : vector<8x128xf32>
    %323 = math.exp %322 : vector<8x128xf32>
    %cst_184 = arith.constant 1.000000e+00 : f32
    %324 = vector.broadcast %cst_184 : f32 to vector<8x128xf32>
    %325 = arith.addf %324, %323 : vector<8x128xf32>
    %326 = arith.divf %324, %325 : vector<8x128xf32>
    %327 = math.tanh %321 : vector<8x128xf32>
    %328 = vector.extract_strided_slice %326 {offsets = [0, 0], sizes = [8, 32], strides = [1, 1]} : vector<8x128xf32> to vector<8x32xf32>
    %329 = vector.extract_strided_slice %326 {offsets = [0, 32], sizes = [8, 32], strides = [1, 1]} : vector<8x128xf32> to vector<8x32xf32>
    %330 = vector.extract_strided_slice %327 {offsets = [0, 64], sizes = [8, 32], strides = [1, 1]} : vector<8x128xf32> to vector<8x32xf32>
    %331 = vector.extract_strided_slice %326 {offsets = [0, 96], sizes = [8, 32], strides = [1, 1]} : vector<8x128xf32> to vector<8x32xf32>
    %332 = arith.mulf %329, %314 : vector<8x32xf32>
    %333 = arith.mulf %328, %330 : vector<8x32xf32>
    %334 = arith.addf %332, %333 : vector<8x32xf32>
    %335 = math.tanh %334 : vector<8x32xf32>
    %336 = arith.mulf %331, %335 : vector<8x32xf32>
    %c56_185 = arith.constant 56 : index
    %c0_186 = arith.constant 0 : index
    %337 = vector.load %arg15[%c56_185, %c0_186] : memref<64x32xf32, #tpu.memory_space<vmem>>, vector<8x32xf32>
    tpu.vector_store %arg15[%c56_185, %c0_186], %336 {strides = array<i32>} : memref<64x32xf32, #tpu.memory_space<vmem>>, vector<8x32xf32>,
    %338 = vector.extract_strided_slice %177 {offsets = [56, 128], sizes = [8, 128], strides = [1, 1]} : vector<64x256xf32> to vector<8x128xf32>
    %339 = arith.truncf %173 : vector<8x32xf32> to vector<8x32xbf16>
    %cst_187 = arith.constant dense<0.000000e+00> : vector<8x128xf32>
    %340 = tpu.matmul %339, %168, %cst_187 {dimension_numbers = #tpu.dot_dimension_numbers<[1], [0], [0], [1], [0, 0, 1, 1], [], []>} : vector<8x32xbf16>, vector<32x128xbf16>, vector<8x128xf32> -> vector<8x128xf32>
    %341 = arith.addf %338, %340 : vector<8x128xf32>
    %342 = arith.negf %341 : vector<8x128xf32>
    %343 = math.exp %342 : vector<8x128xf32>
    %cst_188 = arith.constant 1.000000e+00 : f32
    %344 = vector.broadcast %cst_188 : f32 to vector<8x128xf32>
    %345 = arith.addf %344, %343 : vector<8x128xf32>
    %346 = arith.divf %344, %345 : vector<8x128xf32>
    %347 = math.tanh %341 : vector<8x128xf32>
    %348 = vector.extract_strided_slice %346 {offsets = [0, 0], sizes = [8, 32], strides = [1, 1]} : vector<8x128xf32> to vector<8x32xf32>
    %349 = vector.extract_strided_slice %346 {offsets = [0, 32], sizes = [8, 32], strides = [1, 1]} : vector<8x128xf32> to vector<8x32xf32>
    %350 = vector.extract_strided_slice %347 {offsets = [0, 64], sizes = [8, 32], strides = [1, 1]} : vector<8x128xf32> to vector<8x32xf32>
    %351 = vector.extract_strided_slice %346 {offsets = [0, 96], sizes = [8, 32], strides = [1, 1]} : vector<8x128xf32> to vector<8x32xf32>
    %352 = arith.mulf %349, %173 : vector<8x32xf32>
    %353 = arith.mulf %348, %350 : vector<8x32xf32>
    %354 = arith.addf %352, %353 : vector<8x32xf32>
    %355 = math.tanh %354 : vector<8x32xf32>
    %356 = arith.mulf %351, %355 : vector<8x32xf32>
    %c56_189 = arith.constant 56 : index
    %c0_190 = arith.constant 0 : index
    %357 = vector.load %arg16[%c56_189, %c0_190] : memref<64x32xf32, #tpu.memory_space<vmem>>, vector<8x32xf32>
    tpu.vector_store %arg16[%c56_189, %c0_190], %356 {strides = array<i32>} : memref<64x32xf32, #tpu.memory_space<vmem>>, vector<8x32xf32>,
    %358 = vector.extract_strided_slice %177 {offsets = [48, 128], sizes = [8, 128], strides = [1, 1]} : vector<64x256xf32> to vector<8x128xf32>
    %359 = arith.truncf %356 : vector<8x32xf32> to vector<8x32xbf16>
    %cst_191 = arith.constant dense<0.000000e+00> : vector<8x128xf32>
    %360 = tpu.matmul %359, %168, %cst_191 {dimension_numbers = #tpu.dot_dimension_numbers<[1], [0], [0], [1], [0, 0, 1, 1], [], []>} : vector<8x32xbf16>, vector<32x128xbf16>, vector<8x128xf32> -> vector<8x128xf32>
    %361 = arith.addf %358, %360 : vector<8x128xf32>
    %362 = arith.negf %361 : vector<8x128xf32>
    %363 = math.exp %362 : vector<8x128xf32>
    %cst_192 = arith.constant 1.000000e+00 : f32
    %364 = vector.broadcast %cst_192 : f32 to vector<8x128xf32>
    %365 = arith.addf %364, %363 : vector<8x128xf32>
    %366 = arith.divf %364, %365 : vector<8x128xf32>
    %367 = math.tanh %361 : vector<8x128xf32>
    %368 = vector.extract_strided_slice %366 {offsets = [0, 0], sizes = [8, 32], strides = [1, 1]} : vector<8x128xf32> to vector<8x32xf32>
    %369 = vector.extract_strided_slice %366 {offsets = [0, 32], sizes = [8, 32], strides = [1, 1]} : vector<8x128xf32> to vector<8x32xf32>
    %370 = vector.extract_strided_slice %367 {offsets = [0, 64], sizes = [8, 32], strides = [1, 1]} : vector<8x128xf32> to vector<8x32xf32>
    %371 = vector.extract_strided_slice %366 {offsets = [0, 96], sizes = [8, 32], strides = [1, 1]} : vector<8x128xf32> to vector<8x32xf32>
    %372 = arith.mulf %369, %354 : vector<8x32xf32>
    %373 = arith.mulf %368, %370 : vector<8x32xf32>
    %374 = arith.addf %372, %373 : vector<8x32xf32>
    %375 = math.tanh %374 : vector<8x32xf32>
    %376 = arith.mulf %371, %375 : vector<8x32xf32>
    %c48_193 = arith.constant 48 : index
    %c0_194 = arith.constant 0 : index
    %377 = vector.load %arg16[%c48_193, %c0_194] : memref<64x32xf32, #tpu.memory_space<vmem>>, vector<8x32xf32>
    tpu.vector_store %arg16[%c48_193, %c0_194], %376 {strides = array<i32>} : memref<64x32xf32, #tpu.memory_space<vmem>>, vector<8x32xf32>,
    %378 = vector.extract_strided_slice %177 {offsets = [40, 128], sizes = [8, 128], strides = [1, 1]} : vector<64x256xf32> to vector<8x128xf32>
    %379 = arith.truncf %376 : vector<8x32xf32> to vector<8x32xbf16>
    %cst_195 = arith.constant dense<0.000000e+00> : vector<8x128xf32>
    %380 = tpu.matmul %379, %168, %cst_195 {dimension_numbers = #tpu.dot_dimension_numbers<[1], [0], [0], [1], [0, 0, 1, 1], [], []>} : vector<8x32xbf16>, vector<32x128xbf16>, vector<8x128xf32> -> vector<8x128xf32>
    %381 = arith.addf %378, %380 : vector<8x128xf32>
    %382 = arith.negf %381 : vector<8x128xf32>
    %383 = math.exp %382 : vector<8x128xf32>
    %cst_196 = arith.constant 1.000000e+00 : f32
    %384 = vector.broadcast %cst_196 : f32 to vector<8x128xf32>
    %385 = arith.addf %384, %383 : vector<8x128xf32>
    %386 = arith.divf %384, %385 : vector<8x128xf32>
    %387 = math.tanh %381 : vector<8x128xf32>
    %388 = vector.extract_strided_slice %386 {offsets = [0, 0], sizes = [8, 32], strides = [1, 1]} : vector<8x128xf32> to vector<8x32xf32>
    %389 = vector.extract_strided_slice %386 {offsets = [0, 32], sizes = [8, 32], strides = [1, 1]} : vector<8x128xf32> to vector<8x32xf32>
    %390 = vector.extract_strided_slice %387 {offsets = [0, 64], sizes = [8, 32], strides = [1, 1]} : vector<8x128xf32> to vector<8x32xf32>
    %391 = vector.extract_strided_slice %386 {offsets = [0, 96], sizes = [8, 32], strides = [1, 1]} : vector<8x128xf32> to vector<8x32xf32>
    %392 = arith.mulf %389, %374 : vector<8x32xf32>
    %393 = arith.mulf %388, %390 : vector<8x32xf32>
    %394 = arith.addf %392, %393 : vector<8x32xf32>
    %395 = math.tanh %394 : vector<8x32xf32>
    %396 = arith.mulf %391, %395 : vector<8x32xf32>
    %c40_197 = arith.constant 40 : index
    %c0_198 = arith.constant 0 : index
    %397 = vector.load %arg16[%c40_197, %c0_198] : memref<64x32xf32, #tpu.memory_space<vmem>>, vector<8x32xf32>
    tpu.vector_store %arg16[%c40_197, %c0_198], %396 {strides = array<i32>} : memref<64x32xf32, #tpu.memory_space<vmem>>, vector<8x32xf32>,
    %398 = vector.extract_strided_slice %177 {offsets = [32, 128], sizes = [8, 128], strides = [1, 1]} : vector<64x256xf32> to vector<8x128xf32>
    %399 = arith.truncf %396 : vector<8x32xf32> to vector<8x32xbf16>
    %cst_199 = arith.constant dense<0.000000e+00> : vector<8x128xf32>
    %400 = tpu.matmul %399, %168, %cst_199 {dimension_numbers = #tpu.dot_dimension_numbers<[1], [0], [0], [1], [0, 0, 1, 1], [], []>} : vector<8x32xbf16>, vector<32x128xbf16>, vector<8x128xf32> -> vector<8x128xf32>
    %401 = arith.addf %398, %400 : vector<8x128xf32>
    %402 = arith.negf %401 : vector<8x128xf32>
    %403 = math.exp %402 : vector<8x128xf32>
    %cst_200 = arith.constant 1.000000e+00 : f32
    %404 = vector.broadcast %cst_200 : f32 to vector<8x128xf32>
    %405 = arith.addf %404, %403 : vector<8x128xf32>
    %406 = arith.divf %404, %405 : vector<8x128xf32>
    %407 = math.tanh %401 : vector<8x128xf32>
    %408 = vector.extract_strided_slice %406 {offsets = [0, 0], sizes = [8, 32], strides = [1, 1]} : vector<8x128xf32> to vector<8x32xf32>
    %409 = vector.extract_strided_slice %406 {offsets = [0, 32], sizes = [8, 32], strides = [1, 1]} : vector<8x128xf32> to vector<8x32xf32>
    %410 = vector.extract_strided_slice %407 {offsets = [0, 64], sizes = [8, 32], strides = [1, 1]} : vector<8x128xf32> to vector<8x32xf32>
    %411 = vector.extract_strided_slice %406 {offsets = [0, 96], sizes = [8, 32], strides = [1, 1]} : vector<8x128xf32> to vector<8x32xf32>
    %412 = arith.mulf %409, %394 : vector<8x32xf32>
    %413 = arith.mulf %408, %410 : vector<8x32xf32>
    %414 = arith.addf %412, %413 : vector<8x32xf32>
    %415 = math.tanh %414 : vector<8x32xf32>
    %416 = arith.mulf %411, %415 : vector<8x32xf32>
    %c32_201 = arith.constant 32 : index
    %c0_202 = arith.constant 0 : index
    %417 = vector.load %arg16[%c32_201, %c0_202] : memref<64x32xf32, #tpu.memory_space<vmem>>, vector<8x32xf32>
    tpu.vector_store %arg16[%c32_201, %c0_202], %416 {strides = array<i32>} : memref<64x32xf32, #tpu.memory_space<vmem>>, vector<8x32xf32>,
    %418 = vector.extract_strided_slice %177 {offsets = [24, 128], sizes = [8, 128], strides = [1, 1]} : vector<64x256xf32> to vector<8x128xf32>
    %419 = arith.truncf %416 : vector<8x32xf32> to vector<8x32xbf16>
    %cst_203 = arith.constant dense<0.000000e+00> : vector<8x128xf32>
    %420 = tpu.matmul %419, %168, %cst_203 {dimension_numbers = #tpu.dot_dimension_numbers<[1], [0], [0], [1], [0, 0, 1, 1], [], []>} : vector<8x32xbf16>, vector<32x128xbf16>, vector<8x128xf32> -> vector<8x128xf32>
    %421 = arith.addf %418, %420 : vector<8x128xf32>
    %422 = arith.negf %421 : vector<8x128xf32>
    %423 = math.exp %422 : vector<8x128xf32>
    %cst_204 = arith.constant 1.000000e+00 : f32
    %424 = vector.broadcast %cst_204 : f32 to vector<8x128xf32>
    %425 = arith.addf %424, %423 : vector<8x128xf32>
    %426 = arith.divf %424, %425 : vector<8x128xf32>
    %427 = math.tanh %421 : vector<8x128xf32>
    %428 = vector.extract_strided_slice %426 {offsets = [0, 0], sizes = [8, 32], strides = [1, 1]} : vector<8x128xf32> to vector<8x32xf32>
    %429 = vector.extract_strided_slice %426 {offsets = [0, 32], sizes = [8, 32], strides = [1, 1]} : vector<8x128xf32> to vector<8x32xf32>
    %430 = vector.extract_strided_slice %427 {offsets = [0, 64], sizes = [8, 32], strides = [1, 1]} : vector<8x128xf32> to vector<8x32xf32>
    %431 = vector.extract_strided_slice %426 {offsets = [0, 96], sizes = [8, 32], strides = [1, 1]} : vector<8x128xf32> to vector<8x32xf32>
    %432 = arith.mulf %429, %414 : vector<8x32xf32>
    %433 = arith.mulf %428, %430 : vector<8x32xf32>
    %434 = arith.addf %432, %433 : vector<8x32xf32>
    %435 = math.tanh %434 : vector<8x32xf32>
    %436 = arith.mulf %431, %435 : vector<8x32xf32>
    %c24_205 = arith.constant 24 : index
    %c0_206 = arith.constant 0 : index
    %437 = vector.load %arg16[%c24_205, %c0_206] : memref<64x32xf32, #tpu.memory_space<vmem>>, vector<8x32xf32>
    tpu.vector_store %arg16[%c24_205, %c0_206], %436 {strides = array<i32>} : memref<64x32xf32, #tpu.memory_space<vmem>>, vector<8x32xf32>,
    %438 = vector.extract_strided_slice %177 {offsets = [16, 128], sizes = [8, 128], strides = [1, 1]} : vector<64x256xf32> to vector<8x128xf32>
    %439 = arith.truncf %436 : vector<8x32xf32> to vector<8x32xbf16>
    %cst_207 = arith.constant dense<0.000000e+00> : vector<8x128xf32>
    %440 = tpu.matmul %439, %168, %cst_207 {dimension_numbers = #tpu.dot_dimension_numbers<[1], [0], [0], [1], [0, 0, 1, 1], [], []>} : vector<8x32xbf16>, vector<32x128xbf16>, vector<8x128xf32> -> vector<8x128xf32>
    %441 = arith.addf %438, %440 : vector<8x128xf32>
    %442 = arith.negf %441 : vector<8x128xf32>
    %443 = math.exp %442 : vector<8x128xf32>
    %cst_208 = arith.constant 1.000000e+00 : f32
    %444 = vector.broadcast %cst_208 : f32 to vector<8x128xf32>
    %445 = arith.addf %444, %443 : vector<8x128xf32>
    %446 = arith.divf %444, %445 : vector<8x128xf32>
    %447 = math.tanh %441 : vector<8x128xf32>
    %448 = vector.extract_strided_slice %446 {offsets = [0, 0], sizes = [8, 32], strides = [1, 1]} : vector<8x128xf32> to vector<8x32xf32>
    %449 = vector.extract_strided_slice %446 {offsets = [0, 32], sizes = [8, 32], strides = [1, 1]} : vector<8x128xf32> to vector<8x32xf32>
    %450 = vector.extract_strided_slice %447 {offsets = [0, 64], sizes = [8, 32], strides = [1, 1]} : vector<8x128xf32> to vector<8x32xf32>
    %451 = vector.extract_strided_slice %446 {offsets = [0, 96], sizes = [8, 32], strides = [1, 1]} : vector<8x128xf32> to vector<8x32xf32>
    %452 = arith.mulf %449, %434 : vector<8x32xf32>
    %453 = arith.mulf %448, %450 : vector<8x32xf32>
    %454 = arith.addf %452, %453 : vector<8x32xf32>
    %455 = math.tanh %454 : vector<8x32xf32>
    %456 = arith.mulf %451, %455 : vector<8x32xf32>
    %c16_209 = arith.constant 16 : index
    %c0_210 = arith.constant 0 : index
    %457 = vector.load %arg16[%c16_209, %c0_210] : memref<64x32xf32, #tpu.memory_space<vmem>>, vector<8x32xf32>
    tpu.vector_store %arg16[%c16_209, %c0_210], %456 {strides = array<i32>} : memref<64x32xf32, #tpu.memory_space<vmem>>, vector<8x32xf32>,
    %458 = vector.extract_strided_slice %177 {offsets = [8, 128], sizes = [8, 128], strides = [1, 1]} : vector<64x256xf32> to vector<8x128xf32>
    %459 = arith.truncf %456 : vector<8x32xf32> to vector<8x32xbf16>
    %cst_211 = arith.constant dense<0.000000e+00> : vector<8x128xf32>
    %460 = tpu.matmul %459, %168, %cst_211 {dimension_numbers = #tpu.dot_dimension_numbers<[1], [0], [0], [1], [0, 0, 1, 1], [], []>} : vector<8x32xbf16>, vector<32x128xbf16>, vector<8x128xf32> -> vector<8x128xf32>
    %461 = arith.addf %458, %460 : vector<8x128xf32>
    %462 = arith.negf %461 : vector<8x128xf32>
    %463 = math.exp %462 : vector<8x128xf32>
    %cst_212 = arith.constant 1.000000e+00 : f32
    %464 = vector.broadcast %cst_212 : f32 to vector<8x128xf32>
    %465 = arith.addf %464, %463 : vector<8x128xf32>
    %466 = arith.divf %464, %465 : vector<8x128xf32>
    %467 = math.tanh %461 : vector<8x128xf32>
    %468 = vector.extract_strided_slice %466 {offsets = [0, 0], sizes = [8, 32], strides = [1, 1]} : vector<8x128xf32> to vector<8x32xf32>
    %469 = vector.extract_strided_slice %466 {offsets = [0, 32], sizes = [8, 32], strides = [1, 1]} : vector<8x128xf32> to vector<8x32xf32>
    %470 = vector.extract_strided_slice %467 {offsets = [0, 64], sizes = [8, 32], strides = [1, 1]} : vector<8x128xf32> to vector<8x32xf32>
    %471 = vector.extract_strided_slice %466 {offsets = [0, 96], sizes = [8, 32], strides = [1, 1]} : vector<8x128xf32> to vector<8x32xf32>
    %472 = arith.mulf %469, %454 : vector<8x32xf32>
    %473 = arith.mulf %468, %470 : vector<8x32xf32>
    %474 = arith.addf %472, %473 : vector<8x32xf32>
    %475 = math.tanh %474 : vector<8x32xf32>
    %476 = arith.mulf %471, %475 : vector<8x32xf32>
    %c8_213 = arith.constant 8 : index
    %c0_214 = arith.constant 0 : index
    %477 = vector.load %arg16[%c8_213, %c0_214] : memref<64x32xf32, #tpu.memory_space<vmem>>, vector<8x32xf32>
    tpu.vector_store %arg16[%c8_213, %c0_214], %476 {strides = array<i32>} : memref<64x32xf32, #tpu.memory_space<vmem>>, vector<8x32xf32>,
    %478 = vector.extract_strided_slice %177 {offsets = [0, 128], sizes = [8, 128], strides = [1, 1]} : vector<64x256xf32> to vector<8x128xf32>
    %479 = arith.truncf %476 : vector<8x32xf32> to vector<8x32xbf16>
    %cst_215 = arith.constant dense<0.000000e+00> : vector<8x128xf32>
    %480 = tpu.matmul %479, %168, %cst_215 {dimension_numbers = #tpu.dot_dimension_numbers<[1], [0], [0], [1], [0, 0, 1, 1], [], []>} : vector<8x32xbf16>, vector<32x128xbf16>, vector<8x128xf32> -> vector<8x128xf32>
    %481 = arith.addf %478, %480 : vector<8x128xf32>
    %482 = arith.negf %481 : vector<8x128xf32>
    %483 = math.exp %482 : vector<8x128xf32>
    %cst_216 = arith.constant 1.000000e+00 : f32
    %484 = vector.broadcast %cst_216 : f32 to vector<8x128xf32>
    %485 = arith.addf %484, %483 : vector<8x128xf32>
    %486 = arith.divf %484, %485 : vector<8x128xf32>
    %487 = math.tanh %481 : vector<8x128xf32>
    %488 = vector.extract_strided_slice %486 {offsets = [0, 0], sizes = [8, 32], strides = [1, 1]} : vector<8x128xf32> to vector<8x32xf32>
    %489 = vector.extract_strided_slice %486 {offsets = [0, 32], sizes = [8, 32], strides = [1, 1]} : vector<8x128xf32> to vector<8x32xf32>
    %490 = vector.extract_strided_slice %487 {offsets = [0, 64], sizes = [8, 32], strides = [1, 1]} : vector<8x128xf32> to vector<8x32xf32>
    %491 = vector.extract_strided_slice %486 {offsets = [0, 96], sizes = [8, 32], strides = [1, 1]} : vector<8x128xf32> to vector<8x32xf32>
    %492 = arith.mulf %489, %474 : vector<8x32xf32>
    %493 = arith.mulf %488, %490 : vector<8x32xf32>
    %494 = arith.addf %492, %493 : vector<8x32xf32>
    %495 = math.tanh %494 : vector<8x32xf32>
    %496 = arith.mulf %491, %495 : vector<8x32xf32>
    %c0_217 = arith.constant 0 : index
    %c0_218 = arith.constant 0 : index
    %497 = vector.load %arg16[%c0_217, %c0_218] : memref<64x32xf32, #tpu.memory_space<vmem>>, vector<8x32xf32>
    tpu.vector_store %arg16[%c0_217, %c0_218], %496 {strides = array<i32>} : memref<64x32xf32, #tpu.memory_space<vmem>>, vector<8x32xf32>,
    %c0_219 = arith.constant 0 : index
    %c0_220 = arith.constant 0 : index
    %498 = vector.load %arg15[%c0_219, %c0_220] : memref<64x32xf32, #tpu.memory_space<vmem>>, vector<64x32xf32>
    %499 = arith.truncf %498 : vector<64x32xf32> to vector<64x32xbf16>
    %cst_221 = arith.constant dense<0.000000e+00> : vector<64x256xf32>
    %500 = tpu.matmul %499, %165, %cst_221 {dimension_numbers = #tpu.dot_dimension_numbers<[1], [0], [0], [1], [0, 0, 1, 1], [], []>} : vector<64x32xbf16>, vector<32x256xbf16>, vector<64x256xf32> -> vector<64x256xf32>
    %c0_222 = arith.constant 0 : index
    %c0_223 = arith.constant 0 : index
    %501 = vector.load %arg16[%c0_222, %c0_223] : memref<64x32xf32, #tpu.memory_space<vmem>>, vector<64x32xf32>
    %502 = arith.truncf %501 : vector<64x32xf32> to vector<64x32xbf16>
    %cst_224 = arith.constant dense<0.000000e+00> : vector<64x256xf32>
    %503 = tpu.matmul %502, %166, %cst_224 {dimension_numbers = #tpu.dot_dimension_numbers<[1], [0], [0], [1], [0, 0, 1, 1], [], []>} : vector<64x32xbf16>, vector<32x256xbf16>, vector<64x256xf32> -> vector<64x256xf32>
    %504 = arith.addf %500, %503 : vector<64x256xf32>
    %505 = vector.broadcast %172 : vector<1x256xf32> to vector<64x256xf32>
    %506 = arith.addf %504, %505 : vector<64x256xf32>
    %507 = vector.extract_strided_slice %506 {offsets = [0, 0], sizes = [8, 128], strides = [1, 1]} : vector<64x256xf32> to vector<8x128xf32>
    %508 = arith.truncf %173 : vector<8x32xf32> to vector<8x32xbf16>
    %cst_225 = arith.constant dense<0.000000e+00> : vector<8x128xf32>
    %509 = tpu.matmul %508, %169, %cst_225 {dimension_numbers = #tpu.dot_dimension_numbers<[1], [0], [0], [1], [0, 0, 1, 1], [], []>} : vector<8x32xbf16>, vector<32x128xbf16>, vector<8x128xf32> -> vector<8x128xf32>
    %510 = arith.addf %507, %509 : vector<8x128xf32>
    %511 = arith.negf %510 : vector<8x128xf32>
    %512 = math.exp %511 : vector<8x128xf32>
    %cst_226 = arith.constant 1.000000e+00 : f32
    %513 = vector.broadcast %cst_226 : f32 to vector<8x128xf32>
    %514 = arith.addf %513, %512 : vector<8x128xf32>
    %515 = arith.divf %513, %514 : vector<8x128xf32>
    %516 = math.tanh %510 : vector<8x128xf32>
    %517 = vector.extract_strided_slice %515 {offsets = [0, 0], sizes = [8, 32], strides = [1, 1]} : vector<8x128xf32> to vector<8x32xf32>
    %518 = vector.extract_strided_slice %515 {offsets = [0, 32], sizes = [8, 32], strides = [1, 1]} : vector<8x128xf32> to vector<8x32xf32>
    %519 = vector.extract_strided_slice %516 {offsets = [0, 64], sizes = [8, 32], strides = [1, 1]} : vector<8x128xf32> to vector<8x32xf32>
    %520 = vector.extract_strided_slice %515 {offsets = [0, 96], sizes = [8, 32], strides = [1, 1]} : vector<8x128xf32> to vector<8x32xf32>
    %521 = arith.mulf %518, %173 : vector<8x32xf32>
    %522 = arith.mulf %517, %519 : vector<8x32xf32>
    %523 = arith.addf %521, %522 : vector<8x32xf32>
    %524 = math.tanh %523 : vector<8x32xf32>
    %525 = arith.mulf %520, %524 : vector<8x32xf32>
    %526 = vector.extract_strided_slice %506 {offsets = [8, 0], sizes = [8, 128], strides = [1, 1]} : vector<64x256xf32> to vector<8x128xf32>
    %527 = arith.truncf %525 : vector<8x32xf32> to vector<8x32xbf16>
    %cst_227 = arith.constant dense<0.000000e+00> : vector<8x128xf32>
    %528 = tpu.matmul %527, %169, %cst_227 {dimension_numbers = #tpu.dot_dimension_numbers<[1], [0], [0], [1], [0, 0, 1, 1], [], []>} : vector<8x32xbf16>, vector<32x128xbf16>, vector<8x128xf32> -> vector<8x128xf32>
    %529 = arith.addf %526, %528 : vector<8x128xf32>
    %530 = arith.negf %529 : vector<8x128xf32>
    %531 = math.exp %530 : vector<8x128xf32>
    %cst_228 = arith.constant 1.000000e+00 : f32
    %532 = vector.broadcast %cst_228 : f32 to vector<8x128xf32>
    %533 = arith.addf %532, %531 : vector<8x128xf32>
    %534 = arith.divf %532, %533 : vector<8x128xf32>
    %535 = math.tanh %529 : vector<8x128xf32>
    %536 = vector.extract_strided_slice %534 {offsets = [0, 0], sizes = [8, 32], strides = [1, 1]} : vector<8x128xf32> to vector<8x32xf32>
    %537 = vector.extract_strided_slice %534 {offsets = [0, 32], sizes = [8, 32], strides = [1, 1]} : vector<8x128xf32> to vector<8x32xf32>
    %538 = vector.extract_strided_slice %535 {offsets = [0, 64], sizes = [8, 32], strides = [1, 1]} : vector<8x128xf32> to vector<8x32xf32>
    %539 = vector.extract_strided_slice %534 {offsets = [0, 96], sizes = [8, 32], strides = [1, 1]} : vector<8x128xf32> to vector<8x32xf32>
    %540 = arith.mulf %537, %523 : vector<8x32xf32>
    %541 = arith.mulf %536, %538 : vector<8x32xf32>
    %542 = arith.addf %540, %541 : vector<8x32xf32>
    %543 = math.tanh %542 : vector<8x32xf32>
    %544 = arith.mulf %539, %543 : vector<8x32xf32>
    %545 = vector.extract_strided_slice %506 {offsets = [16, 0], sizes = [8, 128], strides = [1, 1]} : vector<64x256xf32> to vector<8x128xf32>
    %546 = arith.truncf %544 : vector<8x32xf32> to vector<8x32xbf16>
    %cst_229 = arith.constant dense<0.000000e+00> : vector<8x128xf32>
    %547 = tpu.matmul %546, %169, %cst_229 {dimension_numbers = #tpu.dot_dimension_numbers<[1], [0], [0], [1], [0, 0, 1, 1], [], []>} : vector<8x32xbf16>, vector<32x128xbf16>, vector<8x128xf32> -> vector<8x128xf32>
    %548 = arith.addf %545, %547 : vector<8x128xf32>
    %549 = arith.negf %548 : vector<8x128xf32>
    %550 = math.exp %549 : vector<8x128xf32>
    %cst_230 = arith.constant 1.000000e+00 : f32
    %551 = vector.broadcast %cst_230 : f32 to vector<8x128xf32>
    %552 = arith.addf %551, %550 : vector<8x128xf32>
    %553 = arith.divf %551, %552 : vector<8x128xf32>
    %554 = math.tanh %548 : vector<8x128xf32>
    %555 = vector.extract_strided_slice %553 {offsets = [0, 0], sizes = [8, 32], strides = [1, 1]} : vector<8x128xf32> to vector<8x32xf32>
    %556 = vector.extract_strided_slice %553 {offsets = [0, 32], sizes = [8, 32], strides = [1, 1]} : vector<8x128xf32> to vector<8x32xf32>
    %557 = vector.extract_strided_slice %554 {offsets = [0, 64], sizes = [8, 32], strides = [1, 1]} : vector<8x128xf32> to vector<8x32xf32>
    %558 = vector.extract_strided_slice %553 {offsets = [0, 96], sizes = [8, 32], strides = [1, 1]} : vector<8x128xf32> to vector<8x32xf32>
    %559 = arith.mulf %556, %542 : vector<8x32xf32>
    %560 = arith.mulf %555, %557 : vector<8x32xf32>
    %561 = arith.addf %559, %560 : vector<8x32xf32>
    %562 = math.tanh %561 : vector<8x32xf32>
    %563 = arith.mulf %558, %562 : vector<8x32xf32>
    %564 = vector.extract_strided_slice %506 {offsets = [24, 0], sizes = [8, 128], strides = [1, 1]} : vector<64x256xf32> to vector<8x128xf32>
    %565 = arith.truncf %563 : vector<8x32xf32> to vector<8x32xbf16>
    %cst_231 = arith.constant dense<0.000000e+00> : vector<8x128xf32>
    %566 = tpu.matmul %565, %169, %cst_231 {dimension_numbers = #tpu.dot_dimension_numbers<[1], [0], [0], [1], [0, 0, 1, 1], [], []>} : vector<8x32xbf16>, vector<32x128xbf16>, vector<8x128xf32> -> vector<8x128xf32>
    %567 = arith.addf %564, %566 : vector<8x128xf32>
    %568 = arith.negf %567 : vector<8x128xf32>
    %569 = math.exp %568 : vector<8x128xf32>
    %cst_232 = arith.constant 1.000000e+00 : f32
    %570 = vector.broadcast %cst_232 : f32 to vector<8x128xf32>
    %571 = arith.addf %570, %569 : vector<8x128xf32>
    %572 = arith.divf %570, %571 : vector<8x128xf32>
    %573 = math.tanh %567 : vector<8x128xf32>
    %574 = vector.extract_strided_slice %572 {offsets = [0, 0], sizes = [8, 32], strides = [1, 1]} : vector<8x128xf32> to vector<8x32xf32>
    %575 = vector.extract_strided_slice %572 {offsets = [0, 32], sizes = [8, 32], strides = [1, 1]} : vector<8x128xf32> to vector<8x32xf32>
    %576 = vector.extract_strided_slice %573 {offsets = [0, 64], sizes = [8, 32], strides = [1, 1]} : vector<8x128xf32> to vector<8x32xf32>
    %577 = vector.extract_strided_slice %572 {offsets = [0, 96], sizes = [8, 32], strides = [1, 1]} : vector<8x128xf32> to vector<8x32xf32>
    %578 = arith.mulf %575, %561 : vector<8x32xf32>
    %579 = arith.mulf %574, %576 : vector<8x32xf32>
    %580 = arith.addf %578, %579 : vector<8x32xf32>
    %581 = math.tanh %580 : vector<8x32xf32>
    %582 = arith.mulf %577, %581 : vector<8x32xf32>
    %583 = vector.extract_strided_slice %506 {offsets = [32, 0], sizes = [8, 128], strides = [1, 1]} : vector<64x256xf32> to vector<8x128xf32>
    %584 = arith.truncf %582 : vector<8x32xf32> to vector<8x32xbf16>
    %cst_233 = arith.constant dense<0.000000e+00> : vector<8x128xf32>
    %585 = tpu.matmul %584, %169, %cst_233 {dimension_numbers = #tpu.dot_dimension_numbers<[1], [0], [0], [1], [0, 0, 1, 1], [], []>} : vector<8x32xbf16>, vector<32x128xbf16>, vector<8x128xf32> -> vector<8x128xf32>
    %586 = arith.addf %583, %585 : vector<8x128xf32>
    %587 = arith.negf %586 : vector<8x128xf32>
    %588 = math.exp %587 : vector<8x128xf32>
    %cst_234 = arith.constant 1.000000e+00 : f32
    %589 = vector.broadcast %cst_234 : f32 to vector<8x128xf32>
    %590 = arith.addf %589, %588 : vector<8x128xf32>
    %591 = arith.divf %589, %590 : vector<8x128xf32>
    %592 = math.tanh %586 : vector<8x128xf32>
    %593 = vector.extract_strided_slice %591 {offsets = [0, 0], sizes = [8, 32], strides = [1, 1]} : vector<8x128xf32> to vector<8x32xf32>
    %594 = vector.extract_strided_slice %591 {offsets = [0, 32], sizes = [8, 32], strides = [1, 1]} : vector<8x128xf32> to vector<8x32xf32>
    %595 = vector.extract_strided_slice %592 {offsets = [0, 64], sizes = [8, 32], strides = [1, 1]} : vector<8x128xf32> to vector<8x32xf32>
    %596 = vector.extract_strided_slice %591 {offsets = [0, 96], sizes = [8, 32], strides = [1, 1]} : vector<8x128xf32> to vector<8x32xf32>
    %597 = arith.mulf %594, %580 : vector<8x32xf32>
    %598 = arith.mulf %593, %595 : vector<8x32xf32>
    %599 = arith.addf %597, %598 : vector<8x32xf32>
    %600 = math.tanh %599 : vector<8x32xf32>
    %601 = arith.mulf %596, %600 : vector<8x32xf32>
    %602 = vector.extract_strided_slice %506 {offsets = [40, 0], sizes = [8, 128], strides = [1, 1]} : vector<64x256xf32> to vector<8x128xf32>
    %603 = arith.truncf %601 : vector<8x32xf32> to vector<8x32xbf16>
    %cst_235 = arith.constant dense<0.000000e+00> : vector<8x128xf32>
    %604 = tpu.matmul %603, %169, %cst_235 {dimension_numbers = #tpu.dot_dimension_numbers<[1], [0], [0], [1], [0, 0, 1, 1], [], []>} : vector<8x32xbf16>, vector<32x128xbf16>, vector<8x128xf32> -> vector<8x128xf32>
    %605 = arith.addf %602, %604 : vector<8x128xf32>
    %606 = arith.negf %605 : vector<8x128xf32>
    %607 = math.exp %606 : vector<8x128xf32>
    %cst_236 = arith.constant 1.000000e+00 : f32
    %608 = vector.broadcast %cst_236 : f32 to vector<8x128xf32>
    %609 = arith.addf %608, %607 : vector<8x128xf32>
    %610 = arith.divf %608, %609 : vector<8x128xf32>
    %611 = math.tanh %605 : vector<8x128xf32>
    %612 = vector.extract_strided_slice %610 {offsets = [0, 0], sizes = [8, 32], strides = [1, 1]} : vector<8x128xf32> to vector<8x32xf32>
    %613 = vector.extract_strided_slice %610 {offsets = [0, 32], sizes = [8, 32], strides = [1, 1]} : vector<8x128xf32> to vector<8x32xf32>
    %614 = vector.extract_strided_slice %611 {offsets = [0, 64], sizes = [8, 32], strides = [1, 1]} : vector<8x128xf32> to vector<8x32xf32>
    %615 = vector.extract_strided_slice %610 {offsets = [0, 96], sizes = [8, 32], strides = [1, 1]} : vector<8x128xf32> to vector<8x32xf32>
    %616 = arith.mulf %613, %599 : vector<8x32xf32>
    %617 = arith.mulf %612, %614 : vector<8x32xf32>
    %618 = arith.addf %616, %617 : vector<8x32xf32>
    %619 = math.tanh %618 : vector<8x32xf32>
    %620 = arith.mulf %615, %619 : vector<8x32xf32>
    %621 = vector.extract_strided_slice %506 {offsets = [48, 0], sizes = [8, 128], strides = [1, 1]} : vector<64x256xf32> to vector<8x128xf32>
    %622 = arith.truncf %620 : vector<8x32xf32> to vector<8x32xbf16>
    %cst_237 = arith.constant dense<0.000000e+00> : vector<8x128xf32>
    %623 = tpu.matmul %622, %169, %cst_237 {dimension_numbers = #tpu.dot_dimension_numbers<[1], [0], [0], [1], [0, 0, 1, 1], [], []>} : vector<8x32xbf16>, vector<32x128xbf16>, vector<8x128xf32> -> vector<8x128xf32>
    %624 = arith.addf %621, %623 : vector<8x128xf32>
    %625 = arith.negf %624 : vector<8x128xf32>
    %626 = math.exp %625 : vector<8x128xf32>
    %cst_238 = arith.constant 1.000000e+00 : f32
    %627 = vector.broadcast %cst_238 : f32 to vector<8x128xf32>
    %628 = arith.addf %627, %626 : vector<8x128xf32>
    %629 = arith.divf %627, %628 : vector<8x128xf32>
    %630 = math.tanh %624 : vector<8x128xf32>
    %631 = vector.extract_strided_slice %629 {offsets = [0, 0], sizes = [8, 32], strides = [1, 1]} : vector<8x128xf32> to vector<8x32xf32>
    %632 = vector.extract_strided_slice %629 {offsets = [0, 32], sizes = [8, 32], strides = [1, 1]} : vector<8x128xf32> to vector<8x32xf32>
    %633 = vector.extract_strided_slice %630 {offsets = [0, 64], sizes = [8, 32], strides = [1, 1]} : vector<8x128xf32> to vector<8x32xf32>
    %634 = vector.extract_strided_slice %629 {offsets = [0, 96], sizes = [8, 32], strides = [1, 1]} : vector<8x128xf32> to vector<8x32xf32>
    %635 = arith.mulf %632, %618 : vector<8x32xf32>
    %636 = arith.mulf %631, %633 : vector<8x32xf32>
    %637 = arith.addf %635, %636 : vector<8x32xf32>
    %638 = math.tanh %637 : vector<8x32xf32>
    %639 = arith.mulf %634, %638 : vector<8x32xf32>
    %640 = vector.extract_strided_slice %506 {offsets = [56, 0], sizes = [8, 128], strides = [1, 1]} : vector<64x256xf32> to vector<8x128xf32>
    %641 = arith.truncf %639 : vector<8x32xf32> to vector<8x32xbf16>
    %cst_239 = arith.constant dense<0.000000e+00> : vector<8x128xf32>
    %642 = tpu.matmul %641, %169, %cst_239 {dimension_numbers = #tpu.dot_dimension_numbers<[1], [0], [0], [1], [0, 0, 1, 1], [], []>} : vector<8x32xbf16>, vector<32x128xbf16>, vector<8x128xf32> -> vector<8x128xf32>
    %643 = arith.addf %640, %642 : vector<8x128xf32>
    %644 = arith.negf %643 : vector<8x128xf32>
    %645 = math.exp %644 : vector<8x128xf32>
    %cst_240 = arith.constant 1.000000e+00 : f32
    %646 = vector.broadcast %cst_240 : f32 to vector<8x128xf32>
    %647 = arith.addf %646, %645 : vector<8x128xf32>
    %648 = arith.divf %646, %647 : vector<8x128xf32>
    %649 = math.tanh %643 : vector<8x128xf32>
    %650 = vector.extract_strided_slice %648 {offsets = [0, 0], sizes = [8, 32], strides = [1, 1]} : vector<8x128xf32> to vector<8x32xf32>
    %651 = vector.extract_strided_slice %648 {offsets = [0, 32], sizes = [8, 32], strides = [1, 1]} : vector<8x128xf32> to vector<8x32xf32>
    %652 = vector.extract_strided_slice %649 {offsets = [0, 64], sizes = [8, 32], strides = [1, 1]} : vector<8x128xf32> to vector<8x32xf32>
    %653 = vector.extract_strided_slice %648 {offsets = [0, 96], sizes = [8, 32], strides = [1, 1]} : vector<8x128xf32> to vector<8x32xf32>
    %654 = arith.mulf %651, %637 : vector<8x32xf32>
    %655 = arith.mulf %650, %652 : vector<8x32xf32>
    %656 = arith.addf %654, %655 : vector<8x32xf32>
    %657 = math.tanh %656 : vector<8x32xf32>
    %658 = arith.mulf %653, %657 : vector<8x32xf32>
    %659 = vector.extract_strided_slice %506 {offsets = [56, 128], sizes = [8, 128], strides = [1, 1]} : vector<64x256xf32> to vector<8x128xf32>
    %660 = arith.truncf %173 : vector<8x32xf32> to vector<8x32xbf16>
    %cst_241 = arith.constant dense<0.000000e+00> : vector<8x128xf32>
    %661 = tpu.matmul %660, %170, %cst_241 {dimension_numbers = #tpu.dot_dimension_numbers<[1], [0], [0], [1], [0, 0, 1, 1], [], []>} : vector<8x32xbf16>, vector<32x128xbf16>, vector<8x128xf32> -> vector<8x128xf32>
    %662 = arith.addf %659, %661 : vector<8x128xf32>
    %663 = arith.negf %662 : vector<8x128xf32>
    %664 = math.exp %663 : vector<8x128xf32>
    %cst_242 = arith.constant 1.000000e+00 : f32
    %665 = vector.broadcast %cst_242 : f32 to vector<8x128xf32>
    %666 = arith.addf %665, %664 : vector<8x128xf32>
    %667 = arith.divf %665, %666 : vector<8x128xf32>
    %668 = math.tanh %662 : vector<8x128xf32>
    %669 = vector.extract_strided_slice %667 {offsets = [0, 0], sizes = [8, 32], strides = [1, 1]} : vector<8x128xf32> to vector<8x32xf32>
    %670 = vector.extract_strided_slice %667 {offsets = [0, 32], sizes = [8, 32], strides = [1, 1]} : vector<8x128xf32> to vector<8x32xf32>
    %671 = vector.extract_strided_slice %668 {offsets = [0, 64], sizes = [8, 32], strides = [1, 1]} : vector<8x128xf32> to vector<8x32xf32>
    %672 = vector.extract_strided_slice %667 {offsets = [0, 96], sizes = [8, 32], strides = [1, 1]} : vector<8x128xf32> to vector<8x32xf32>
    %673 = arith.mulf %670, %173 : vector<8x32xf32>
    %674 = arith.mulf %669, %671 : vector<8x32xf32>
    %675 = arith.addf %673, %674 : vector<8x32xf32>
    %676 = math.tanh %675 : vector<8x32xf32>
    %677 = arith.mulf %672, %676 : vector<8x32xf32>
    %678 = vector.extract_strided_slice %506 {offsets = [48, 128], sizes = [8, 128], strides = [1, 1]} : vector<64x256xf32> to vector<8x128xf32>
    %679 = arith.truncf %677 : vector<8x32xf32> to vector<8x32xbf16>
    %cst_243 = arith.constant dense<0.000000e+00> : vector<8x128xf32>
    %680 = tpu.matmul %679, %170, %cst_243 {dimension_numbers = #tpu.dot_dimension_numbers<[1], [0], [0], [1], [0, 0, 1, 1], [], []>} : vector<8x32xbf16>, vector<32x128xbf16>, vector<8x128xf32> -> vector<8x128xf32>
    %681 = arith.addf %678, %680 : vector<8x128xf32>
    %682 = arith.negf %681 : vector<8x128xf32>
    %683 = math.exp %682 : vector<8x128xf32>
    %cst_244 = arith.constant 1.000000e+00 : f32
    %684 = vector.broadcast %cst_244 : f32 to vector<8x128xf32>
    %685 = arith.addf %684, %683 : vector<8x128xf32>
    %686 = arith.divf %684, %685 : vector<8x128xf32>
    %687 = math.tanh %681 : vector<8x128xf32>
    %688 = vector.extract_strided_slice %686 {offsets = [0, 0], sizes = [8, 32], strides = [1, 1]} : vector<8x128xf32> to vector<8x32xf32>
    %689 = vector.extract_strided_slice %686 {offsets = [0, 32], sizes = [8, 32], strides = [1, 1]} : vector<8x128xf32> to vector<8x32xf32>
    %690 = vector.extract_strided_slice %687 {offsets = [0, 64], sizes = [8, 32], strides = [1, 1]} : vector<8x128xf32> to vector<8x32xf32>
    %691 = vector.extract_strided_slice %686 {offsets = [0, 96], sizes = [8, 32], strides = [1, 1]} : vector<8x128xf32> to vector<8x32xf32>
    %692 = arith.mulf %689, %675 : vector<8x32xf32>
    %693 = arith.mulf %688, %690 : vector<8x32xf32>
    %694 = arith.addf %692, %693 : vector<8x32xf32>
    %695 = math.tanh %694 : vector<8x32xf32>
    %696 = arith.mulf %691, %695 : vector<8x32xf32>
    %697 = vector.extract_strided_slice %506 {offsets = [40, 128], sizes = [8, 128], strides = [1, 1]} : vector<64x256xf32> to vector<8x128xf32>
    %698 = arith.truncf %696 : vector<8x32xf32> to vector<8x32xbf16>
    %cst_245 = arith.constant dense<0.000000e+00> : vector<8x128xf32>
    %699 = tpu.matmul %698, %170, %cst_245 {dimension_numbers = #tpu.dot_dimension_numbers<[1], [0], [0], [1], [0, 0, 1, 1], [], []>} : vector<8x32xbf16>, vector<32x128xbf16>, vector<8x128xf32> -> vector<8x128xf32>
    %700 = arith.addf %697, %699 : vector<8x128xf32>
    %701 = arith.negf %700 : vector<8x128xf32>
    %702 = math.exp %701 : vector<8x128xf32>
    %cst_246 = arith.constant 1.000000e+00 : f32
    %703 = vector.broadcast %cst_246 : f32 to vector<8x128xf32>
    %704 = arith.addf %703, %702 : vector<8x128xf32>
    %705 = arith.divf %703, %704 : vector<8x128xf32>
    %706 = math.tanh %700 : vector<8x128xf32>
    %707 = vector.extract_strided_slice %705 {offsets = [0, 0], sizes = [8, 32], strides = [1, 1]} : vector<8x128xf32> to vector<8x32xf32>
    %708 = vector.extract_strided_slice %705 {offsets = [0, 32], sizes = [8, 32], strides = [1, 1]} : vector<8x128xf32> to vector<8x32xf32>
    %709 = vector.extract_strided_slice %706 {offsets = [0, 64], sizes = [8, 32], strides = [1, 1]} : vector<8x128xf32> to vector<8x32xf32>
    %710 = vector.extract_strided_slice %705 {offsets = [0, 96], sizes = [8, 32], strides = [1, 1]} : vector<8x128xf32> to vector<8x32xf32>
    %711 = arith.mulf %708, %694 : vector<8x32xf32>
    %712 = arith.mulf %707, %709 : vector<8x32xf32>
    %713 = arith.addf %711, %712 : vector<8x32xf32>
    %714 = math.tanh %713 : vector<8x32xf32>
    %715 = arith.mulf %710, %714 : vector<8x32xf32>
    %716 = vector.extract_strided_slice %506 {offsets = [32, 128], sizes = [8, 128], strides = [1, 1]} : vector<64x256xf32> to vector<8x128xf32>
    %717 = arith.truncf %715 : vector<8x32xf32> to vector<8x32xbf16>
    %cst_247 = arith.constant dense<0.000000e+00> : vector<8x128xf32>
    %718 = tpu.matmul %717, %170, %cst_247 {dimension_numbers = #tpu.dot_dimension_numbers<[1], [0], [0], [1], [0, 0, 1, 1], [], []>} : vector<8x32xbf16>, vector<32x128xbf16>, vector<8x128xf32> -> vector<8x128xf32>
    %719 = arith.addf %716, %718 : vector<8x128xf32>
    %720 = arith.negf %719 : vector<8x128xf32>
    %721 = math.exp %720 : vector<8x128xf32>
    %cst_248 = arith.constant 1.000000e+00 : f32
    %722 = vector.broadcast %cst_248 : f32 to vector<8x128xf32>
    %723 = arith.addf %722, %721 : vector<8x128xf32>
    %724 = arith.divf %722, %723 : vector<8x128xf32>
    %725 = math.tanh %719 : vector<8x128xf32>
    %726 = vector.extract_strided_slice %724 {offsets = [0, 0], sizes = [8, 32], strides = [1, 1]} : vector<8x128xf32> to vector<8x32xf32>
    %727 = vector.extract_strided_slice %724 {offsets = [0, 32], sizes = [8, 32], strides = [1, 1]} : vector<8x128xf32> to vector<8x32xf32>
    %728 = vector.extract_strided_slice %725 {offsets = [0, 64], sizes = [8, 32], strides = [1, 1]} : vector<8x128xf32> to vector<8x32xf32>
    %729 = vector.extract_strided_slice %724 {offsets = [0, 96], sizes = [8, 32], strides = [1, 1]} : vector<8x128xf32> to vector<8x32xf32>
    %730 = arith.mulf %727, %713 : vector<8x32xf32>
    %731 = arith.mulf %726, %728 : vector<8x32xf32>
    %732 = arith.addf %730, %731 : vector<8x32xf32>
    %733 = math.tanh %732 : vector<8x32xf32>
    %734 = arith.mulf %729, %733 : vector<8x32xf32>
    %735 = vector.extract_strided_slice %506 {offsets = [24, 128], sizes = [8, 128], strides = [1, 1]} : vector<64x256xf32> to vector<8x128xf32>
    %736 = arith.truncf %734 : vector<8x32xf32> to vector<8x32xbf16>
    %cst_249 = arith.constant dense<0.000000e+00> : vector<8x128xf32>
    %737 = tpu.matmul %736, %170, %cst_249 {dimension_numbers = #tpu.dot_dimension_numbers<[1], [0], [0], [1], [0, 0, 1, 1], [], []>} : vector<8x32xbf16>, vector<32x128xbf16>, vector<8x128xf32> -> vector<8x128xf32>
    %738 = arith.addf %735, %737 : vector<8x128xf32>
    %739 = arith.negf %738 : vector<8x128xf32>
    %740 = math.exp %739 : vector<8x128xf32>
    %cst_250 = arith.constant 1.000000e+00 : f32
    %741 = vector.broadcast %cst_250 : f32 to vector<8x128xf32>
    %742 = arith.addf %741, %740 : vector<8x128xf32>
    %743 = arith.divf %741, %742 : vector<8x128xf32>
    %744 = math.tanh %738 : vector<8x128xf32>
    %745 = vector.extract_strided_slice %743 {offsets = [0, 0], sizes = [8, 32], strides = [1, 1]} : vector<8x128xf32> to vector<8x32xf32>
    %746 = vector.extract_strided_slice %743 {offsets = [0, 32], sizes = [8, 32], strides = [1, 1]} : vector<8x128xf32> to vector<8x32xf32>
    %747 = vector.extract_strided_slice %744 {offsets = [0, 64], sizes = [8, 32], strides = [1, 1]} : vector<8x128xf32> to vector<8x32xf32>
    %748 = vector.extract_strided_slice %743 {offsets = [0, 96], sizes = [8, 32], strides = [1, 1]} : vector<8x128xf32> to vector<8x32xf32>
    %749 = arith.mulf %746, %732 : vector<8x32xf32>
    %750 = arith.mulf %745, %747 : vector<8x32xf32>
    %751 = arith.addf %749, %750 : vector<8x32xf32>
    %752 = math.tanh %751 : vector<8x32xf32>
    %753 = arith.mulf %748, %752 : vector<8x32xf32>
    %754 = vector.extract_strided_slice %506 {offsets = [16, 128], sizes = [8, 128], strides = [1, 1]} : vector<64x256xf32> to vector<8x128xf32>
    %755 = arith.truncf %753 : vector<8x32xf32> to vector<8x32xbf16>
    %cst_251 = arith.constant dense<0.000000e+00> : vector<8x128xf32>
    %756 = tpu.matmul %755, %170, %cst_251 {dimension_numbers = #tpu.dot_dimension_numbers<[1], [0], [0], [1], [0, 0, 1, 1], [], []>} : vector<8x32xbf16>, vector<32x128xbf16>, vector<8x128xf32> -> vector<8x128xf32>
    %757 = arith.addf %754, %756 : vector<8x128xf32>
    %758 = arith.negf %757 : vector<8x128xf32>
    %759 = math.exp %758 : vector<8x128xf32>
    %cst_252 = arith.constant 1.000000e+00 : f32
    %760 = vector.broadcast %cst_252 : f32 to vector<8x128xf32>
    %761 = arith.addf %760, %759 : vector<8x128xf32>
    %762 = arith.divf %760, %761 : vector<8x128xf32>
    %763 = math.tanh %757 : vector<8x128xf32>
    %764 = vector.extract_strided_slice %762 {offsets = [0, 0], sizes = [8, 32], strides = [1, 1]} : vector<8x128xf32> to vector<8x32xf32>
    %765 = vector.extract_strided_slice %762 {offsets = [0, 32], sizes = [8, 32], strides = [1, 1]} : vector<8x128xf32> to vector<8x32xf32>
    %766 = vector.extract_strided_slice %763 {offsets = [0, 64], sizes = [8, 32], strides = [1, 1]} : vector<8x128xf32> to vector<8x32xf32>
    %767 = vector.extract_strided_slice %762 {offsets = [0, 96], sizes = [8, 32], strides = [1, 1]} : vector<8x128xf32> to vector<8x32xf32>
    %768 = arith.mulf %765, %751 : vector<8x32xf32>
    %769 = arith.mulf %764, %766 : vector<8x32xf32>
    %770 = arith.addf %768, %769 : vector<8x32xf32>
    %771 = math.tanh %770 : vector<8x32xf32>
    %772 = arith.mulf %767, %771 : vector<8x32xf32>
    %773 = vector.extract_strided_slice %506 {offsets = [8, 128], sizes = [8, 128], strides = [1, 1]} : vector<64x256xf32> to vector<8x128xf32>
    %774 = arith.truncf %772 : vector<8x32xf32> to vector<8x32xbf16>
    %cst_253 = arith.constant dense<0.000000e+00> : vector<8x128xf32>
    %775 = tpu.matmul %774, %170, %cst_253 {dimension_numbers = #tpu.dot_dimension_numbers<[1], [0], [0], [1], [0, 0, 1, 1], [], []>} : vector<8x32xbf16>, vector<32x128xbf16>, vector<8x128xf32> -> vector<8x128xf32>
    %776 = arith.addf %773, %775 : vector<8x128xf32>
    %777 = arith.negf %776 : vector<8x128xf32>
    %778 = math.exp %777 : vector<8x128xf32>
    %cst_254 = arith.constant 1.000000e+00 : f32
    %779 = vector.broadcast %cst_254 : f32 to vector<8x128xf32>
    %780 = arith.addf %779, %778 : vector<8x128xf32>
    %781 = arith.divf %779, %780 : vector<8x128xf32>
    %782 = math.tanh %776 : vector<8x128xf32>
    %783 = vector.extract_strided_slice %781 {offsets = [0, 0], sizes = [8, 32], strides = [1, 1]} : vector<8x128xf32> to vector<8x32xf32>
    %784 = vector.extract_strided_slice %781 {offsets = [0, 32], sizes = [8, 32], strides = [1, 1]} : vector<8x128xf32> to vector<8x32xf32>
    %785 = vector.extract_strided_slice %782 {offsets = [0, 64], sizes = [8, 32], strides = [1, 1]} : vector<8x128xf32> to vector<8x32xf32>
    %786 = vector.extract_strided_slice %781 {offsets = [0, 96], sizes = [8, 32], strides = [1, 1]} : vector<8x128xf32> to vector<8x32xf32>
    %787 = arith.mulf %784, %770 : vector<8x32xf32>
    %788 = arith.mulf %783, %785 : vector<8x32xf32>
    %789 = arith.addf %787, %788 : vector<8x32xf32>
    %790 = math.tanh %789 : vector<8x32xf32>
    %791 = arith.mulf %786, %790 : vector<8x32xf32>
    %792 = vector.extract_strided_slice %506 {offsets = [0, 128], sizes = [8, 128], strides = [1, 1]} : vector<64x256xf32> to vector<8x128xf32>
    %793 = arith.truncf %791 : vector<8x32xf32> to vector<8x32xbf16>
    %cst_255 = arith.constant dense<0.000000e+00> : vector<8x128xf32>
    %794 = tpu.matmul %793, %170, %cst_255 {dimension_numbers = #tpu.dot_dimension_numbers<[1], [0], [0], [1], [0, 0, 1, 1], [], []>} : vector<8x32xbf16>, vector<32x128xbf16>, vector<8x128xf32> -> vector<8x128xf32>
    %795 = arith.addf %792, %794 : vector<8x128xf32>
    %796 = arith.negf %795 : vector<8x128xf32>
    %797 = math.exp %796 : vector<8x128xf32>
    %cst_256 = arith.constant 1.000000e+00 : f32
    %798 = vector.broadcast %cst_256 : f32 to vector<8x128xf32>
    %799 = arith.addf %798, %797 : vector<8x128xf32>
    %800 = arith.divf %798, %799 : vector<8x128xf32>
    %801 = math.tanh %795 : vector<8x128xf32>
    %802 = vector.extract_strided_slice %800 {offsets = [0, 0], sizes = [8, 32], strides = [1, 1]} : vector<8x128xf32> to vector<8x32xf32>
    %803 = vector.extract_strided_slice %800 {offsets = [0, 32], sizes = [8, 32], strides = [1, 1]} : vector<8x128xf32> to vector<8x32xf32>
    %804 = vector.extract_strided_slice %801 {offsets = [0, 64], sizes = [8, 32], strides = [1, 1]} : vector<8x128xf32> to vector<8x32xf32>
    %805 = vector.extract_strided_slice %800 {offsets = [0, 96], sizes = [8, 32], strides = [1, 1]} : vector<8x128xf32> to vector<8x32xf32>
    %806 = arith.mulf %803, %789 : vector<8x32xf32>
    %807 = arith.mulf %802, %804 : vector<8x32xf32>
    %808 = arith.addf %806, %807 : vector<8x32xf32>
    %809 = math.tanh %808 : vector<8x32xf32>
    %810 = arith.mulf %805, %809 : vector<8x32xf32>
    %811 = vector.extract_strided_slice %336 {offsets = [0, 0], sizes = [1, 32], strides = [1, 1]} : vector<8x32xf32> to vector<1x32xf32>
    %812 = vector.extract_strided_slice %658 {offsets = [0, 0], sizes = [1, 32], strides = [1, 1]} : vector<8x32xf32> to vector<1x32xf32>
    %813 = tpu.concatenate %811, %812 in 0 : vector<1x32xf32>, vector<1x32xf32> -> vector<2x32xf32>
    %814 = vector.extract_strided_slice %336 {offsets = [1, 0], sizes = [1, 32], strides = [1, 1]} : vector<8x32xf32> to vector<1x32xf32>
    %815 = vector.extract_strided_slice %658 {offsets = [1, 0], sizes = [1, 32], strides = [1, 1]} : vector<8x32xf32> to vector<1x32xf32>
    %816 = tpu.concatenate %814, %815 in 0 : vector<1x32xf32>, vector<1x32xf32> -> vector<2x32xf32>
    %817 = vector.extract_strided_slice %496 {offsets = [0, 0], sizes = [1, 32], strides = [1, 1]} : vector<8x32xf32> to vector<1x32xf32>
    %818 = vector.extract_strided_slice %810 {offsets = [0, 0], sizes = [1, 32], strides = [1, 1]} : vector<8x32xf32> to vector<1x32xf32>
    %819 = tpu.concatenate %817, %818 in 0 : vector<1x32xf32>, vector<1x32xf32> -> vector<2x32xf32>
    %820 = vector.extract_strided_slice %496 {offsets = [1, 0], sizes = [1, 32], strides = [1, 1]} : vector<8x32xf32> to vector<1x32xf32>
    %821 = vector.extract_strided_slice %810 {offsets = [1, 0], sizes = [1, 32], strides = [1, 1]} : vector<8x32xf32> to vector<1x32xf32>
    %822 = tpu.concatenate %820, %821 in 0 : vector<1x32xf32>, vector<1x32xf32> -> vector<2x32xf32>
    %823 = vector.extract_strided_slice %334 {offsets = [0, 0], sizes = [1, 32], strides = [1, 1]} : vector<8x32xf32> to vector<1x32xf32>
    %824 = vector.extract_strided_slice %656 {offsets = [0, 0], sizes = [1, 32], strides = [1, 1]} : vector<8x32xf32> to vector<1x32xf32>
    %825 = tpu.concatenate %823, %824 in 0 : vector<1x32xf32>, vector<1x32xf32> -> vector<2x32xf32>
    %826 = vector.extract_strided_slice %334 {offsets = [1, 0], sizes = [1, 32], strides = [1, 1]} : vector<8x32xf32> to vector<1x32xf32>
    %827 = vector.extract_strided_slice %656 {offsets = [1, 0], sizes = [1, 32], strides = [1, 1]} : vector<8x32xf32> to vector<1x32xf32>
    %828 = tpu.concatenate %826, %827 in 0 : vector<1x32xf32>, vector<1x32xf32> -> vector<2x32xf32>
    %829 = vector.extract_strided_slice %494 {offsets = [0, 0], sizes = [1, 32], strides = [1, 1]} : vector<8x32xf32> to vector<1x32xf32>
    %830 = vector.extract_strided_slice %808 {offsets = [0, 0], sizes = [1, 32], strides = [1, 1]} : vector<8x32xf32> to vector<1x32xf32>
    %831 = tpu.concatenate %829, %830 in 0 : vector<1x32xf32>, vector<1x32xf32> -> vector<2x32xf32>
    %832 = vector.extract_strided_slice %494 {offsets = [1, 0], sizes = [1, 32], strides = [1, 1]} : vector<8x32xf32> to vector<1x32xf32>
    %833 = vector.extract_strided_slice %808 {offsets = [1, 0], sizes = [1, 32], strides = [1, 1]} : vector<8x32xf32> to vector<1x32xf32>
    %834 = tpu.concatenate %832, %833 in 0 : vector<1x32xf32>, vector<1x32xf32> -> vector<2x32xf32>
    %835 = tpu.concatenate %813, %816, %819, %822, %825, %828, %831, %834 in 1 : vector<2x32xf32>, vector<2x32xf32>, vector<2x32xf32>, vector<2x32xf32>, vector<2x32xf32>, vector<2x32xf32>, vector<2x32xf32>, vector<2x32xf32> -> vector<2x256xf32>
    %c0_257 = arith.constant 0 : index
    %c0_258 = arith.constant 0 : index
    %836 = vector.load %arg6[%c0_257, %c0_258] : memref<256x32xbf16, #tpu.memory_space<vmem>>, vector<256x32xbf16>
    %837 = arith.truncf %835 : vector<2x256xf32> to vector<2x256xbf16>
    %cst_259 = arith.constant dense<0.000000e+00> : vector<2x32xf32>
    %838 = tpu.matmul %837, %836, %cst_259 {dimension_numbers = #tpu.dot_dimension_numbers<[1], [0], [0], [1], [0, 0, 1, 1], [], []>} : vector<2x256xbf16>, vector<256x32xbf16>, vector<2x32xf32> -> vector<2x32xf32>
    %cst_260 = arith.constant 0.000000e+00 : f32
    %839 = vector.broadcast %cst_260 : f32 to vector<6x32xf32>
    %840 = tpu.concatenate %838, %839 in 0 : vector<2x32xf32>, vector<6x32xf32> -> vector<8x32xf32>
    %c0_261 = arith.constant 0 : index
    %c0_262 = arith.constant 0 : index
    %841 = vector.load %arg7[%c0_261, %c0_262] : memref<160x128xbf16, #tpu.memory_space<vmem>>, vector<128x128xbf16>
    %c128_263 = arith.constant 128 : index
    %c0_264 = arith.constant 0 : index
    %842 = vector.load %arg7[%c128_263, %c0_264] : memref<160x128xbf16, #tpu.memory_space<vmem>>, vector<32x128xbf16>
    %c0_265 = arith.constant 0 : index
    %c0_266 = arith.constant 0 : index
    %843 = vector.load %arg8[%c0_265, %c0_266] : memref<224x128xbf16, #tpu.memory_space<vmem>>, vector<128x128xbf16>
    %c128_267 = arith.constant 128 : index
    %c0_268 = arith.constant 0 : index
    %844 = vector.load %arg8[%c128_267, %c0_268] : memref<224x128xbf16, #tpu.memory_space<vmem>>, vector<32x128xbf16>
    %c160_269 = arith.constant 160 : index
    %c0_270 = arith.constant 0 : index
    %845 = vector.load %arg8[%c160_269, %c0_270] : memref<224x128xbf16, #tpu.memory_space<vmem>>, vector<64x128xbf16>
    %c0_271 = arith.constant 0 : index
    %c0_272 = arith.constant 0 : index
    %846 = vector.load %arg11[%c0_271, %c0_272] : memref<2x128xf32, #tpu.memory_space<vmem>>, vector<1x128xf32>
    %c1_273 = arith.constant 1 : index
    %c0_274 = arith.constant 0 : index
    %847 = vector.load %arg11[%c1_273, %c0_274] : memref<2x128xf32, #tpu.memory_space<vmem>>, vector<1x128xf32>
    %848 = arith.truncf %840 : vector<8x32xf32> to vector<8x32xbf16>
    %cst_275 = arith.constant dense<0.000000e+00> : vector<8x128xf32>
    %849 = tpu.matmul %848, %842, %cst_275 {dimension_numbers = #tpu.dot_dimension_numbers<[1], [0], [0], [1], [0, 0, 1, 1], [], []>} : vector<8x32xbf16>, vector<32x128xbf16>, vector<8x128xf32> -> vector<8x128xf32>
    %c0_276 = arith.constant 0 : index
    %c0_277 = arith.constant 0 : index
    %850 = vector.load %arg14[%c0_276, %c0_277] : memref<64x128xbf16, #tpu.memory_space<vmem>>, vector<64x128xbf16>
    %cst_278 = arith.constant dense<0.000000e+00> : vector<64x128xf32>
    %851 = tpu.matmul %850, %841, %cst_278 {dimension_numbers = #tpu.dot_dimension_numbers<[1], [0], [0], [1], [0, 0, 1, 1], [], []>} : vector<64x128xbf16>, vector<128x128xbf16>, vector<64x128xf32> -> vector<64x128xf32>
    %852 = tpu.concatenate %849, %849, %849, %849, %849, %849, %849, %849 in 0 : vector<8x128xf32>, vector<8x128xf32>, vector<8x128xf32>, vector<8x128xf32>, vector<8x128xf32>, vector<8x128xf32>, vector<8x128xf32>, vector<8x128xf32> -> vector<64x128xf32>
    %853 = arith.addf %851, %852 : vector<64x128xf32>
    %854 = arith.truncf %853 : vector<64x128xf32> to vector<64x128xbf16>
    %cst_279 = arith.constant dense<0.000000e+00> : vector<64x128xf32>
    %855 = tpu.matmul %854, %843, %cst_279 {dimension_numbers = #tpu.dot_dimension_numbers<[1], [0], [0], [1], [0, 0, 1, 1], [], []>} : vector<64x128xbf16>, vector<128x128xbf16>, vector<64x128xf32> -> vector<64x128xf32>
    %856 = vector.broadcast %846 : vector<1x128xf32> to vector<64x128xf32>
    %857 = arith.addf %855, %856 : vector<64x128xf32>
    %858 = vector.extract_strided_slice %857 {offsets = [0, 0], sizes = [8, 128], strides = [1, 1]} : vector<64x128xf32> to vector<8x128xf32>
    %859 = arith.truncf %840 : vector<8x32xf32> to vector<8x32xbf16>
    %cst_280 = arith.constant dense<0.000000e+00> : vector<8x128xf32>
    %860 = tpu.matmul %859, %844, %cst_280 {dimension_numbers = #tpu.dot_dimension_numbers<[1], [0], [0], [1], [0, 0, 1, 1], [], []>} : vector<8x32xbf16>, vector<32x128xbf16>, vector<8x128xf32> -> vector<8x128xf32>
    %861 = arith.addf %858, %860 : vector<8x128xf32>
    %862 = arith.negf %861 : vector<8x128xf32>
    %863 = math.exp %862 : vector<8x128xf32>
    %cst_281 = arith.constant 1.000000e+00 : f32
    %864 = vector.broadcast %cst_281 : f32 to vector<8x128xf32>
    %865 = arith.addf %864, %863 : vector<8x128xf32>
    %866 = arith.divf %864, %865 : vector<8x128xf32>
    %867 = math.tanh %861 : vector<8x128xf32>
    %868 = vector.extract_strided_slice %866 {offsets = [0, 0], sizes = [8, 32], strides = [1, 1]} : vector<8x128xf32> to vector<8x32xf32>
    %869 = vector.extract_strided_slice %866 {offsets = [0, 32], sizes = [8, 32], strides = [1, 1]} : vector<8x128xf32> to vector<8x32xf32>
    %870 = vector.extract_strided_slice %867 {offsets = [0, 64], sizes = [8, 32], strides = [1, 1]} : vector<8x128xf32> to vector<8x32xf32>
    %871 = vector.extract_strided_slice %866 {offsets = [0, 96], sizes = [8, 32], strides = [1, 1]} : vector<8x128xf32> to vector<8x32xf32>
    %872 = arith.mulf %869, %840 : vector<8x32xf32>
    %873 = arith.mulf %868, %870 : vector<8x32xf32>
    %874 = arith.addf %872, %873 : vector<8x32xf32>
    %875 = math.tanh %874 : vector<8x32xf32>
    %876 = arith.mulf %871, %875 : vector<8x32xf32>
    %877 = tpu.concatenate %876, %840 in 1 : vector<8x32xf32>, vector<8x32xf32> -> vector<8x64xf32>
    %878 = arith.truncf %877 : vector<8x64xf32> to vector<8x64xbf16>
    %cst_282 = arith.constant dense<0.000000e+00> : vector<8x128xf32>
    %879 = tpu.matmul %878, %845, %cst_282 {dimension_numbers = #tpu.dot_dimension_numbers<[1], [0], [0], [1], [0, 0, 1, 1], [], []>} : vector<8x64xbf16>, vector<64x128xbf16>, vector<8x128xf32> -> vector<8x128xf32>
    %880 = vector.broadcast %847 : vector<1x128xf32> to vector<8x128xf32>
    %881 = arith.addf %879, %880 : vector<8x128xf32>
    %882 = arith.negf %881 : vector<8x128xf32>
    %883 = math.exp %882 : vector<8x128xf32>
    %cst_283 = arith.constant 1.000000e+00 : f32
    %884 = vector.broadcast %cst_283 : f32 to vector<8x128xf32>
    %885 = arith.addf %884, %883 : vector<8x128xf32>
    %886 = arith.divf %884, %885 : vector<8x128xf32>
    %887 = math.tanh %881 : vector<8x128xf32>
    %888 = vector.extract_strided_slice %886 {offsets = [0, 0], sizes = [8, 32], strides = [1, 1]} : vector<8x128xf32> to vector<8x32xf32>
    %889 = vector.extract_strided_slice %886 {offsets = [0, 32], sizes = [8, 32], strides = [1, 1]} : vector<8x128xf32> to vector<8x32xf32>
    %890 = vector.extract_strided_slice %887 {offsets = [0, 64], sizes = [8, 32], strides = [1, 1]} : vector<8x128xf32> to vector<8x32xf32>
    %891 = vector.extract_strided_slice %886 {offsets = [0, 96], sizes = [8, 32], strides = [1, 1]} : vector<8x128xf32> to vector<8x32xf32>
    %892 = arith.mulf %889, %840 : vector<8x32xf32>
    %893 = arith.mulf %888, %890 : vector<8x32xf32>
    %894 = arith.addf %892, %893 : vector<8x32xf32>
    %895 = math.tanh %894 : vector<8x32xf32>
    %896 = arith.mulf %891, %895 : vector<8x32xf32>
    %c0_284 = arith.constant 0 : index
    %c0_285 = arith.constant 0 : index
    %897 = vector.load %arg17[%c0_284, %c0_285] : memref<64x32xf32, #tpu.memory_space<vmem>>, vector<8x32xf32>
    tpu.vector_store %arg17[%c0_284, %c0_285], %896 {strides = array<i32>} : memref<64x32xf32, #tpu.memory_space<vmem>>, vector<8x32xf32>,
    %898 = vector.extract_strided_slice %857 {offsets = [8, 0], sizes = [8, 128], strides = [1, 1]} : vector<64x128xf32> to vector<8x128xf32>
    %899 = arith.truncf %876 : vector<8x32xf32> to vector<8x32xbf16>
    %cst_286 = arith.constant dense<0.000000e+00> : vector<8x128xf32>
    %900 = tpu.matmul %899, %844, %cst_286 {dimension_numbers = #tpu.dot_dimension_numbers<[1], [0], [0], [1], [0, 0, 1, 1], [], []>} : vector<8x32xbf16>, vector<32x128xbf16>, vector<8x128xf32> -> vector<8x128xf32>
    %901 = arith.addf %898, %900 : vector<8x128xf32>
    %902 = arith.negf %901 : vector<8x128xf32>
    %903 = math.exp %902 : vector<8x128xf32>
    %cst_287 = arith.constant 1.000000e+00 : f32
    %904 = vector.broadcast %cst_287 : f32 to vector<8x128xf32>
    %905 = arith.addf %904, %903 : vector<8x128xf32>
    %906 = arith.divf %904, %905 : vector<8x128xf32>
    %907 = math.tanh %901 : vector<8x128xf32>
    %908 = vector.extract_strided_slice %906 {offsets = [0, 0], sizes = [8, 32], strides = [1, 1]} : vector<8x128xf32> to vector<8x32xf32>
    %909 = vector.extract_strided_slice %906 {offsets = [0, 32], sizes = [8, 32], strides = [1, 1]} : vector<8x128xf32> to vector<8x32xf32>
    %910 = vector.extract_strided_slice %907 {offsets = [0, 64], sizes = [8, 32], strides = [1, 1]} : vector<8x128xf32> to vector<8x32xf32>
    %911 = vector.extract_strided_slice %906 {offsets = [0, 96], sizes = [8, 32], strides = [1, 1]} : vector<8x128xf32> to vector<8x32xf32>
    %912 = arith.mulf %909, %874 : vector<8x32xf32>
    %913 = arith.mulf %908, %910 : vector<8x32xf32>
    %914 = arith.addf %912, %913 : vector<8x32xf32>
    %915 = math.tanh %914 : vector<8x32xf32>
    %916 = arith.mulf %911, %915 : vector<8x32xf32>
    %917 = tpu.concatenate %916, %896 in 1 : vector<8x32xf32>, vector<8x32xf32> -> vector<8x64xf32>
    %918 = arith.truncf %917 : vector<8x64xf32> to vector<8x64xbf16>
    %cst_288 = arith.constant dense<0.000000e+00> : vector<8x128xf32>
    %919 = tpu.matmul %918, %845, %cst_288 {dimension_numbers = #tpu.dot_dimension_numbers<[1], [0], [0], [1], [0, 0, 1, 1], [], []>} : vector<8x64xbf16>, vector<64x128xbf16>, vector<8x128xf32> -> vector<8x128xf32>
    %920 = vector.broadcast %847 : vector<1x128xf32> to vector<8x128xf32>
    %921 = arith.addf %919, %920 : vector<8x128xf32>
    %922 = arith.negf %921 : vector<8x128xf32>
    %923 = math.exp %922 : vector<8x128xf32>
    %cst_289 = arith.constant 1.000000e+00 : f32
    %924 = vector.broadcast %cst_289 : f32 to vector<8x128xf32>
    %925 = arith.addf %924, %923 : vector<8x128xf32>
    %926 = arith.divf %924, %925 : vector<8x128xf32>
    %927 = math.tanh %921 : vector<8x128xf32>
    %928 = vector.extract_strided_slice %926 {offsets = [0, 0], sizes = [8, 32], strides = [1, 1]} : vector<8x128xf32> to vector<8x32xf32>
    %929 = vector.extract_strided_slice %926 {offsets = [0, 32], sizes = [8, 32], strides = [1, 1]} : vector<8x128xf32> to vector<8x32xf32>
    %930 = vector.extract_strided_slice %927 {offsets = [0, 64], sizes = [8, 32], strides = [1, 1]} : vector<8x128xf32> to vector<8x32xf32>
    %931 = vector.extract_strided_slice %926 {offsets = [0, 96], sizes = [8, 32], strides = [1, 1]} : vector<8x128xf32> to vector<8x32xf32>
    %932 = arith.mulf %929, %894 : vector<8x32xf32>
    %933 = arith.mulf %928, %930 : vector<8x32xf32>
    %934 = arith.addf %932, %933 : vector<8x32xf32>
    %935 = math.tanh %934 : vector<8x32xf32>
    %936 = arith.mulf %931, %935 : vector<8x32xf32>
    %c8_290 = arith.constant 8 : index
    %c0_291 = arith.constant 0 : index
    %937 = vector.load %arg17[%c8_290, %c0_291] : memref<64x32xf32, #tpu.memory_space<vmem>>, vector<8x32xf32>
    tpu.vector_store %arg17[%c8_290, %c0_291], %936 {strides = array<i32>} : memref<64x32xf32, #tpu.memory_space<vmem>>, vector<8x32xf32>,
    %938 = vector.extract_strided_slice %857 {offsets = [16, 0], sizes = [8, 128], strides = [1, 1]} : vector<64x128xf32> to vector<8x128xf32>
    %939 = arith.truncf %916 : vector<8x32xf32> to vector<8x32xbf16>
    %cst_292 = arith.constant dense<0.000000e+00> : vector<8x128xf32>
    %940 = tpu.matmul %939, %844, %cst_292 {dimension_numbers = #tpu.dot_dimension_numbers<[1], [0], [0], [1], [0, 0, 1, 1], [], []>} : vector<8x32xbf16>, vector<32x128xbf16>, vector<8x128xf32> -> vector<8x128xf32>
    %941 = arith.addf %938, %940 : vector<8x128xf32>
    %942 = arith.negf %941 : vector<8x128xf32>
    %943 = math.exp %942 : vector<8x128xf32>
    %cst_293 = arith.constant 1.000000e+00 : f32
    %944 = vector.broadcast %cst_293 : f32 to vector<8x128xf32>
    %945 = arith.addf %944, %943 : vector<8x128xf32>
    %946 = arith.divf %944, %945 : vector<8x128xf32>
    %947 = math.tanh %941 : vector<8x128xf32>
    %948 = vector.extract_strided_slice %946 {offsets = [0, 0], sizes = [8, 32], strides = [1, 1]} : vector<8x128xf32> to vector<8x32xf32>
    %949 = vector.extract_strided_slice %946 {offsets = [0, 32], sizes = [8, 32], strides = [1, 1]} : vector<8x128xf32> to vector<8x32xf32>
    %950 = vector.extract_strided_slice %947 {offsets = [0, 64], sizes = [8, 32], strides = [1, 1]} : vector<8x128xf32> to vector<8x32xf32>
    %951 = vector.extract_strided_slice %946 {offsets = [0, 96], sizes = [8, 32], strides = [1, 1]} : vector<8x128xf32> to vector<8x32xf32>
    %952 = arith.mulf %949, %914 : vector<8x32xf32>
    %953 = arith.mulf %948, %950 : vector<8x32xf32>
    %954 = arith.addf %952, %953 : vector<8x32xf32>
    %955 = math.tanh %954 : vector<8x32xf32>
    %956 = arith.mulf %951, %955 : vector<8x32xf32>
    %957 = tpu.concatenate %956, %936 in 1 : vector<8x32xf32>, vector<8x32xf32> -> vector<8x64xf32>
    %958 = arith.truncf %957 : vector<8x64xf32> to vector<8x64xbf16>
    %cst_294 = arith.constant dense<0.000000e+00> : vector<8x128xf32>
    %959 = tpu.matmul %958, %845, %cst_294 {dimension_numbers = #tpu.dot_dimension_numbers<[1], [0], [0], [1], [0, 0, 1, 1], [], []>} : vector<8x64xbf16>, vector<64x128xbf16>, vector<8x128xf32> -> vector<8x128xf32>
    %960 = vector.broadcast %847 : vector<1x128xf32> to vector<8x128xf32>
    %961 = arith.addf %959, %960 : vector<8x128xf32>
    %962 = arith.negf %961 : vector<8x128xf32>
    %963 = math.exp %962 : vector<8x128xf32>
    %cst_295 = arith.constant 1.000000e+00 : f32
    %964 = vector.broadcast %cst_295 : f32 to vector<8x128xf32>
    %965 = arith.addf %964, %963 : vector<8x128xf32>
    %966 = arith.divf %964, %965 : vector<8x128xf32>
    %967 = math.tanh %961 : vector<8x128xf32>
    %968 = vector.extract_strided_slice %966 {offsets = [0, 0], sizes = [8, 32], strides = [1, 1]} : vector<8x128xf32> to vector<8x32xf32>
    %969 = vector.extract_strided_slice %966 {offsets = [0, 32], sizes = [8, 32], strides = [1, 1]} : vector<8x128xf32> to vector<8x32xf32>
    %970 = vector.extract_strided_slice %967 {offsets = [0, 64], sizes = [8, 32], strides = [1, 1]} : vector<8x128xf32> to vector<8x32xf32>
    %971 = vector.extract_strided_slice %966 {offsets = [0, 96], sizes = [8, 32], strides = [1, 1]} : vector<8x128xf32> to vector<8x32xf32>
    %972 = arith.mulf %969, %934 : vector<8x32xf32>
    %973 = arith.mulf %968, %970 : vector<8x32xf32>
    %974 = arith.addf %972, %973 : vector<8x32xf32>
    %975 = math.tanh %974 : vector<8x32xf32>
    %976 = arith.mulf %971, %975 : vector<8x32xf32>
    %c16_296 = arith.constant 16 : index
    %c0_297 = arith.constant 0 : index
    %977 = vector.load %arg17[%c16_296, %c0_297] : memref<64x32xf32, #tpu.memory_space<vmem>>, vector<8x32xf32>
    tpu.vector_store %arg17[%c16_296, %c0_297], %976 {strides = array<i32>} : memref<64x32xf32, #tpu.memory_space<vmem>>, vector<8x32xf32>,
    %978 = vector.extract_strided_slice %857 {offsets = [24, 0], sizes = [8, 128], strides = [1, 1]} : vector<64x128xf32> to vector<8x128xf32>
    %979 = arith.truncf %956 : vector<8x32xf32> to vector<8x32xbf16>
    %cst_298 = arith.constant dense<0.000000e+00> : vector<8x128xf32>
    %980 = tpu.matmul %979, %844, %cst_298 {dimension_numbers = #tpu.dot_dimension_numbers<[1], [0], [0], [1], [0, 0, 1, 1], [], []>} : vector<8x32xbf16>, vector<32x128xbf16>, vector<8x128xf32> -> vector<8x128xf32>
    %981 = arith.addf %978, %980 : vector<8x128xf32>
    %982 = arith.negf %981 : vector<8x128xf32>
    %983 = math.exp %982 : vector<8x128xf32>
    %cst_299 = arith.constant 1.000000e+00 : f32
    %984 = vector.broadcast %cst_299 : f32 to vector<8x128xf32>
    %985 = arith.addf %984, %983 : vector<8x128xf32>
    %986 = arith.divf %984, %985 : vector<8x128xf32>
    %987 = math.tanh %981 : vector<8x128xf32>
    %988 = vector.extract_strided_slice %986 {offsets = [0, 0], sizes = [8, 32], strides = [1, 1]} : vector<8x128xf32> to vector<8x32xf32>
    %989 = vector.extract_strided_slice %986 {offsets = [0, 32], sizes = [8, 32], strides = [1, 1]} : vector<8x128xf32> to vector<8x32xf32>
    %990 = vector.extract_strided_slice %987 {offsets = [0, 64], sizes = [8, 32], strides = [1, 1]} : vector<8x128xf32> to vector<8x32xf32>
    %991 = vector.extract_strided_slice %986 {offsets = [0, 96], sizes = [8, 32], strides = [1, 1]} : vector<8x128xf32> to vector<8x32xf32>
    %992 = arith.mulf %989, %954 : vector<8x32xf32>
    %993 = arith.mulf %988, %990 : vector<8x32xf32>
    %994 = arith.addf %992, %993 : vector<8x32xf32>
    %995 = math.tanh %994 : vector<8x32xf32>
    %996 = arith.mulf %991, %995 : vector<8x32xf32>
    %997 = tpu.concatenate %996, %976 in 1 : vector<8x32xf32>, vector<8x32xf32> -> vector<8x64xf32>
    %998 = arith.truncf %997 : vector<8x64xf32> to vector<8x64xbf16>
    %cst_300 = arith.constant dense<0.000000e+00> : vector<8x128xf32>
    %999 = tpu.matmul %998, %845, %cst_300 {dimension_numbers = #tpu.dot_dimension_numbers<[1], [0], [0], [1], [0, 0, 1, 1], [], []>} : vector<8x64xbf16>, vector<64x128xbf16>, vector<8x128xf32> -> vector<8x128xf32>
    %1000 = vector.broadcast %847 : vector<1x128xf32> to vector<8x128xf32>
    %1001 = arith.addf %999, %1000 : vector<8x128xf32>
    %1002 = arith.negf %1001 : vector<8x128xf32>
    %1003 = math.exp %1002 : vector<8x128xf32>
    %cst_301 = arith.constant 1.000000e+00 : f32
    %1004 = vector.broadcast %cst_301 : f32 to vector<8x128xf32>
    %1005 = arith.addf %1004, %1003 : vector<8x128xf32>
    %1006 = arith.divf %1004, %1005 : vector<8x128xf32>
    %1007 = math.tanh %1001 : vector<8x128xf32>
    %1008 = vector.extract_strided_slice %1006 {offsets = [0, 0], sizes = [8, 32], strides = [1, 1]} : vector<8x128xf32> to vector<8x32xf32>
    %1009 = vector.extract_strided_slice %1006 {offsets = [0, 32], sizes = [8, 32], strides = [1, 1]} : vector<8x128xf32> to vector<8x32xf32>
    %1010 = vector.extract_strided_slice %1007 {offsets = [0, 64], sizes = [8, 32], strides = [1, 1]} : vector<8x128xf32> to vector<8x32xf32>
    %1011 = vector.extract_strided_slice %1006 {offsets = [0, 96], sizes = [8, 32], strides = [1, 1]} : vector<8x128xf32> to vector<8x32xf32>
    %1012 = arith.mulf %1009, %974 : vector<8x32xf32>
    %1013 = arith.mulf %1008, %1010 : vector<8x32xf32>
    %1014 = arith.addf %1012, %1013 : vector<8x32xf32>
    %1015 = math.tanh %1014 : vector<8x32xf32>
    %1016 = arith.mulf %1011, %1015 : vector<8x32xf32>
    %c24_302 = arith.constant 24 : index
    %c0_303 = arith.constant 0 : index
    %1017 = vector.load %arg17[%c24_302, %c0_303] : memref<64x32xf32, #tpu.memory_space<vmem>>, vector<8x32xf32>
    tpu.vector_store %arg17[%c24_302, %c0_303], %1016 {strides = array<i32>} : memref<64x32xf32, #tpu.memory_space<vmem>>, vector<8x32xf32>,
    %1018 = vector.extract_strided_slice %857 {offsets = [32, 0], sizes = [8, 128], strides = [1, 1]} : vector<64x128xf32> to vector<8x128xf32>
    %1019 = arith.truncf %996 : vector<8x32xf32> to vector<8x32xbf16>
    %cst_304 = arith.constant dense<0.000000e+00> : vector<8x128xf32>
    %1020 = tpu.matmul %1019, %844, %cst_304 {dimension_numbers = #tpu.dot_dimension_numbers<[1], [0], [0], [1], [0, 0, 1, 1], [], []>} : vector<8x32xbf16>, vector<32x128xbf16>, vector<8x128xf32> -> vector<8x128xf32>
    %1021 = arith.addf %1018, %1020 : vector<8x128xf32>
    %1022 = arith.negf %1021 : vector<8x128xf32>
    %1023 = math.exp %1022 : vector<8x128xf32>
    %cst_305 = arith.constant 1.000000e+00 : f32
    %1024 = vector.broadcast %cst_305 : f32 to vector<8x128xf32>
    %1025 = arith.addf %1024, %1023 : vector<8x128xf32>
    %1026 = arith.divf %1024, %1025 : vector<8x128xf32>
    %1027 = math.tanh %1021 : vector<8x128xf32>
    %1028 = vector.extract_strided_slice %1026 {offsets = [0, 0], sizes = [8, 32], strides = [1, 1]} : vector<8x128xf32> to vector<8x32xf32>
    %1029 = vector.extract_strided_slice %1026 {offsets = [0, 32], sizes = [8, 32], strides = [1, 1]} : vector<8x128xf32> to vector<8x32xf32>
    %1030 = vector.extract_strided_slice %1027 {offsets = [0, 64], sizes = [8, 32], strides = [1, 1]} : vector<8x128xf32> to vector<8x32xf32>
    %1031 = vector.extract_strided_slice %1026 {offsets = [0, 96], sizes = [8, 32], strides = [1, 1]} : vector<8x128xf32> to vector<8x32xf32>
    %1032 = arith.mulf %1029, %994 : vector<8x32xf32>
    %1033 = arith.mulf %1028, %1030 : vector<8x32xf32>
    %1034 = arith.addf %1032, %1033 : vector<8x32xf32>
    %1035 = math.tanh %1034 : vector<8x32xf32>
    %1036 = arith.mulf %1031, %1035 : vector<8x32xf32>
    %1037 = tpu.concatenate %1036, %1016 in 1 : vector<8x32xf32>, vector<8x32xf32> -> vector<8x64xf32>
    %1038 = arith.truncf %1037 : vector<8x64xf32> to vector<8x64xbf16>
    %cst_306 = arith.constant dense<0.000000e+00> : vector<8x128xf32>
    %1039 = tpu.matmul %1038, %845, %cst_306 {dimension_numbers = #tpu.dot_dimension_numbers<[1], [0], [0], [1], [0, 0, 1, 1], [], []>} : vector<8x64xbf16>, vector<64x128xbf16>, vector<8x128xf32> -> vector<8x128xf32>
    %1040 = vector.broadcast %847 : vector<1x128xf32> to vector<8x128xf32>
    %1041 = arith.addf %1039, %1040 : vector<8x128xf32>
    %1042 = arith.negf %1041 : vector<8x128xf32>
    %1043 = math.exp %1042 : vector<8x128xf32>
    %cst_307 = arith.constant 1.000000e+00 : f32
    %1044 = vector.broadcast %cst_307 : f32 to vector<8x128xf32>
    %1045 = arith.addf %1044, %1043 : vector<8x128xf32>
    %1046 = arith.divf %1044, %1045 : vector<8x128xf32>
    %1047 = math.tanh %1041 : vector<8x128xf32>
    %1048 = vector.extract_strided_slice %1046 {offsets = [0, 0], sizes = [8, 32], strides = [1, 1]} : vector<8x128xf32> to vector<8x32xf32>
    %1049 = vector.extract_strided_slice %1046 {offsets = [0, 32], sizes = [8, 32], strides = [1, 1]} : vector<8x128xf32> to vector<8x32xf32>
    %1050 = vector.extract_strided_slice %1047 {offsets = [0, 64], sizes = [8, 32], strides = [1, 1]} : vector<8x128xf32> to vector<8x32xf32>
    %1051 = vector.extract_strided_slice %1046 {offsets = [0, 96], sizes = [8, 32], strides = [1, 1]} : vector<8x128xf32> to vector<8x32xf32>
    %1052 = arith.mulf %1049, %1014 : vector<8x32xf32>
    %1053 = arith.mulf %1048, %1050 : vector<8x32xf32>
    %1054 = arith.addf %1052, %1053 : vector<8x32xf32>
    %1055 = math.tanh %1054 : vector<8x32xf32>
    %1056 = arith.mulf %1051, %1055 : vector<8x32xf32>
    %c32_308 = arith.constant 32 : index
    %c0_309 = arith.constant 0 : index
    %1057 = vector.load %arg17[%c32_308, %c0_309] : memref<64x32xf32, #tpu.memory_space<vmem>>, vector<8x32xf32>
    tpu.vector_store %arg17[%c32_308, %c0_309], %1056 {strides = array<i32>} : memref<64x32xf32, #tpu.memory_space<vmem>>, vector<8x32xf32>,
    %1058 = vector.extract_strided_slice %857 {offsets = [40, 0], sizes = [8, 128], strides = [1, 1]} : vector<64x128xf32> to vector<8x128xf32>
    %1059 = arith.truncf %1036 : vector<8x32xf32> to vector<8x32xbf16>
    %cst_310 = arith.constant dense<0.000000e+00> : vector<8x128xf32>
    %1060 = tpu.matmul %1059, %844, %cst_310 {dimension_numbers = #tpu.dot_dimension_numbers<[1], [0], [0], [1], [0, 0, 1, 1], [], []>} : vector<8x32xbf16>, vector<32x128xbf16>, vector<8x128xf32> -> vector<8x128xf32>
    %1061 = arith.addf %1058, %1060 : vector<8x128xf32>
    %1062 = arith.negf %1061 : vector<8x128xf32>
    %1063 = math.exp %1062 : vector<8x128xf32>
    %cst_311 = arith.constant 1.000000e+00 : f32
    %1064 = vector.broadcast %cst_311 : f32 to vector<8x128xf32>
    %1065 = arith.addf %1064, %1063 : vector<8x128xf32>
    %1066 = arith.divf %1064, %1065 : vector<8x128xf32>
    %1067 = math.tanh %1061 : vector<8x128xf32>
    %1068 = vector.extract_strided_slice %1066 {offsets = [0, 0], sizes = [8, 32], strides = [1, 1]} : vector<8x128xf32> to vector<8x32xf32>
    %1069 = vector.extract_strided_slice %1066 {offsets = [0, 32], sizes = [8, 32], strides = [1, 1]} : vector<8x128xf32> to vector<8x32xf32>
    %1070 = vector.extract_strided_slice %1067 {offsets = [0, 64], sizes = [8, 32], strides = [1, 1]} : vector<8x128xf32> to vector<8x32xf32>
    %1071 = vector.extract_strided_slice %1066 {offsets = [0, 96], sizes = [8, 32], strides = [1, 1]} : vector<8x128xf32> to vector<8x32xf32>
    %1072 = arith.mulf %1069, %1034 : vector<8x32xf32>
    %1073 = arith.mulf %1068, %1070 : vector<8x32xf32>
    %1074 = arith.addf %1072, %1073 : vector<8x32xf32>
    %1075 = math.tanh %1074 : vector<8x32xf32>
    %1076 = arith.mulf %1071, %1075 : vector<8x32xf32>
    %1077 = tpu.concatenate %1076, %1056 in 1 : vector<8x32xf32>, vector<8x32xf32> -> vector<8x64xf32>
    %1078 = arith.truncf %1077 : vector<8x64xf32> to vector<8x64xbf16>
    %cst_312 = arith.constant dense<0.000000e+00> : vector<8x128xf32>
    %1079 = tpu.matmul %1078, %845, %cst_312 {dimension_numbers = #tpu.dot_dimension_numbers<[1], [0], [0], [1], [0, 0, 1, 1], [], []>} : vector<8x64xbf16>, vector<64x128xbf16>, vector<8x128xf32> -> vector<8x128xf32>
    %1080 = vector.broadcast %847 : vector<1x128xf32> to vector<8x128xf32>
    %1081 = arith.addf %1079, %1080 : vector<8x128xf32>
    %1082 = arith.negf %1081 : vector<8x128xf32>
    %1083 = math.exp %1082 : vector<8x128xf32>
    %cst_313 = arith.constant 1.000000e+00 : f32
    %1084 = vector.broadcast %cst_313 : f32 to vector<8x128xf32>
    %1085 = arith.addf %1084, %1083 : vector<8x128xf32>
    %1086 = arith.divf %1084, %1085 : vector<8x128xf32>
    %1087 = math.tanh %1081 : vector<8x128xf32>
    %1088 = vector.extract_strided_slice %1086 {offsets = [0, 0], sizes = [8, 32], strides = [1, 1]} : vector<8x128xf32> to vector<8x32xf32>
    %1089 = vector.extract_strided_slice %1086 {offsets = [0, 32], sizes = [8, 32], strides = [1, 1]} : vector<8x128xf32> to vector<8x32xf32>
    %1090 = vector.extract_strided_slice %1087 {offsets = [0, 64], sizes = [8, 32], strides = [1, 1]} : vector<8x128xf32> to vector<8x32xf32>
    %1091 = vector.extract_strided_slice %1086 {offsets = [0, 96], sizes = [8, 32], strides = [1, 1]} : vector<8x128xf32> to vector<8x32xf32>
    %1092 = arith.mulf %1089, %1054 : vector<8x32xf32>
    %1093 = arith.mulf %1088, %1090 : vector<8x32xf32>
    %1094 = arith.addf %1092, %1093 : vector<8x32xf32>
    %1095 = math.tanh %1094 : vector<8x32xf32>
    %1096 = arith.mulf %1091, %1095 : vector<8x32xf32>
    %c40_314 = arith.constant 40 : index
    %c0_315 = arith.constant 0 : index
    %1097 = vector.load %arg17[%c40_314, %c0_315] : memref<64x32xf32, #tpu.memory_space<vmem>>, vector<8x32xf32>
    tpu.vector_store %arg17[%c40_314, %c0_315], %1096 {strides = array<i32>} : memref<64x32xf32, #tpu.memory_space<vmem>>, vector<8x32xf32>,
    %1098 = vector.extract_strided_slice %857 {offsets = [48, 0], sizes = [8, 128], strides = [1, 1]} : vector<64x128xf32> to vector<8x128xf32>
    %1099 = arith.truncf %1076 : vector<8x32xf32> to vector<8x32xbf16>
    %cst_316 = arith.constant dense<0.000000e+00> : vector<8x128xf32>
    %1100 = tpu.matmul %1099, %844, %cst_316 {dimension_numbers = #tpu.dot_dimension_numbers<[1], [0], [0], [1], [0, 0, 1, 1], [], []>} : vector<8x32xbf16>, vector<32x128xbf16>, vector<8x128xf32> -> vector<8x128xf32>
    %1101 = arith.addf %1098, %1100 : vector<8x128xf32>
    %1102 = arith.negf %1101 : vector<8x128xf32>
    %1103 = math.exp %1102 : vector<8x128xf32>
    %cst_317 = arith.constant 1.000000e+00 : f32
    %1104 = vector.broadcast %cst_317 : f32 to vector<8x128xf32>
    %1105 = arith.addf %1104, %1103 : vector<8x128xf32>
    %1106 = arith.divf %1104, %1105 : vector<8x128xf32>
    %1107 = math.tanh %1101 : vector<8x128xf32>
    %1108 = vector.extract_strided_slice %1106 {offsets = [0, 0], sizes = [8, 32], strides = [1, 1]} : vector<8x128xf32> to vector<8x32xf32>
    %1109 = vector.extract_strided_slice %1106 {offsets = [0, 32], sizes = [8, 32], strides = [1, 1]} : vector<8x128xf32> to vector<8x32xf32>
    %1110 = vector.extract_strided_slice %1107 {offsets = [0, 64], sizes = [8, 32], strides = [1, 1]} : vector<8x128xf32> to vector<8x32xf32>
    %1111 = vector.extract_strided_slice %1106 {offsets = [0, 96], sizes = [8, 32], strides = [1, 1]} : vector<8x128xf32> to vector<8x32xf32>
    %1112 = arith.mulf %1109, %1074 : vector<8x32xf32>
    %1113 = arith.mulf %1108, %1110 : vector<8x32xf32>
    %1114 = arith.addf %1112, %1113 : vector<8x32xf32>
    %1115 = math.tanh %1114 : vector<8x32xf32>
    %1116 = arith.mulf %1111, %1115 : vector<8x32xf32>
    %1117 = tpu.concatenate %1116, %1096 in 1 : vector<8x32xf32>, vector<8x32xf32> -> vector<8x64xf32>
    %1118 = arith.truncf %1117 : vector<8x64xf32> to vector<8x64xbf16>
    %cst_318 = arith.constant dense<0.000000e+00> : vector<8x128xf32>
    %1119 = tpu.matmul %1118, %845, %cst_318 {dimension_numbers = #tpu.dot_dimension_numbers<[1], [0], [0], [1], [0, 0, 1, 1], [], []>} : vector<8x64xbf16>, vector<64x128xbf16>, vector<8x128xf32> -> vector<8x128xf32>
    %1120 = vector.broadcast %847 : vector<1x128xf32> to vector<8x128xf32>
    %1121 = arith.addf %1119, %1120 : vector<8x128xf32>
    %1122 = arith.negf %1121 : vector<8x128xf32>
    %1123 = math.exp %1122 : vector<8x128xf32>
    %cst_319 = arith.constant 1.000000e+00 : f32
    %1124 = vector.broadcast %cst_319 : f32 to vector<8x128xf32>
    %1125 = arith.addf %1124, %1123 : vector<8x128xf32>
    %1126 = arith.divf %1124, %1125 : vector<8x128xf32>
    %1127 = math.tanh %1121 : vector<8x128xf32>
    %1128 = vector.extract_strided_slice %1126 {offsets = [0, 0], sizes = [8, 32], strides = [1, 1]} : vector<8x128xf32> to vector<8x32xf32>
    %1129 = vector.extract_strided_slice %1126 {offsets = [0, 32], sizes = [8, 32], strides = [1, 1]} : vector<8x128xf32> to vector<8x32xf32>
    %1130 = vector.extract_strided_slice %1127 {offsets = [0, 64], sizes = [8, 32], strides = [1, 1]} : vector<8x128xf32> to vector<8x32xf32>
    %1131 = vector.extract_strided_slice %1126 {offsets = [0, 96], sizes = [8, 32], strides = [1, 1]} : vector<8x128xf32> to vector<8x32xf32>
    %1132 = arith.mulf %1129, %1094 : vector<8x32xf32>
    %1133 = arith.mulf %1128, %1130 : vector<8x32xf32>
    %1134 = arith.addf %1132, %1133 : vector<8x32xf32>
    %1135 = math.tanh %1134 : vector<8x32xf32>
    %1136 = arith.mulf %1131, %1135 : vector<8x32xf32>
    %c48_320 = arith.constant 48 : index
    %c0_321 = arith.constant 0 : index
    %1137 = vector.load %arg17[%c48_320, %c0_321] : memref<64x32xf32, #tpu.memory_space<vmem>>, vector<8x32xf32>
    tpu.vector_store %arg17[%c48_320, %c0_321], %1136 {strides = array<i32>} : memref<64x32xf32, #tpu.memory_space<vmem>>, vector<8x32xf32>,
    %1138 = vector.extract_strided_slice %857 {offsets = [56, 0], sizes = [8, 128], strides = [1, 1]} : vector<64x128xf32> to vector<8x128xf32>
    %1139 = arith.truncf %1116 : vector<8x32xf32> to vector<8x32xbf16>
    %cst_322 = arith.constant dense<0.000000e+00> : vector<8x128xf32>
    %1140 = tpu.matmul %1139, %844, %cst_322 {dimension_numbers = #tpu.dot_dimension_numbers<[1], [0], [0], [1], [0, 0, 1, 1], [], []>} : vector<8x32xbf16>, vector<32x128xbf16>, vector<8x128xf32> -> vector<8x128xf32>
    %1141 = arith.addf %1138, %1140 : vector<8x128xf32>
    %1142 = arith.negf %1141 : vector<8x128xf32>
    %1143 = math.exp %1142 : vector<8x128xf32>
    %cst_323 = arith.constant 1.000000e+00 : f32
    %1144 = vector.broadcast %cst_323 : f32 to vector<8x128xf32>
    %1145 = arith.addf %1144, %1143 : vector<8x128xf32>
    %1146 = arith.divf %1144, %1145 : vector<8x128xf32>
    %1147 = math.tanh %1141 : vector<8x128xf32>
    %1148 = vector.extract_strided_slice %1146 {offsets = [0, 0], sizes = [8, 32], strides = [1, 1]} : vector<8x128xf32> to vector<8x32xf32>
    %1149 = vector.extract_strided_slice %1146 {offsets = [0, 32], sizes = [8, 32], strides = [1, 1]} : vector<8x128xf32> to vector<8x32xf32>
    %1150 = vector.extract_strided_slice %1147 {offsets = [0, 64], sizes = [8, 32], strides = [1, 1]} : vector<8x128xf32> to vector<8x32xf32>
    %1151 = vector.extract_strided_slice %1146 {offsets = [0, 96], sizes = [8, 32], strides = [1, 1]} : vector<8x128xf32> to vector<8x32xf32>
    %1152 = arith.mulf %1149, %1114 : vector<8x32xf32>
    %1153 = arith.mulf %1148, %1150 : vector<8x32xf32>
    %1154 = arith.addf %1152, %1153 : vector<8x32xf32>
    %1155 = math.tanh %1154 : vector<8x32xf32>
    %1156 = arith.mulf %1151, %1155 : vector<8x32xf32>
    %1157 = tpu.concatenate %1156, %1136 in 1 : vector<8x32xf32>, vector<8x32xf32> -> vector<8x64xf32>
    %1158 = arith.truncf %1157 : vector<8x64xf32> to vector<8x64xbf16>
    %cst_324 = arith.constant dense<0.000000e+00> : vector<8x128xf32>
    %1159 = tpu.matmul %1158, %845, %cst_324 {dimension_numbers = #tpu.dot_dimension_numbers<[1], [0], [0], [1], [0, 0, 1, 1], [], []>} : vector<8x64xbf16>, vector<64x128xbf16>, vector<8x128xf32> -> vector<8x128xf32>
    %1160 = vector.broadcast %847 : vector<1x128xf32> to vector<8x128xf32>
    %1161 = arith.addf %1159, %1160 : vector<8x128xf32>
    %1162 = arith.negf %1161 : vector<8x128xf32>
    %1163 = math.exp %1162 : vector<8x128xf32>
    %cst_325 = arith.constant 1.000000e+00 : f32
    %1164 = vector.broadcast %cst_325 : f32 to vector<8x128xf32>
    %1165 = arith.addf %1164, %1163 : vector<8x128xf32>
    %1166 = arith.divf %1164, %1165 : vector<8x128xf32>
    %1167 = math.tanh %1161 : vector<8x128xf32>
    %1168 = vector.extract_strided_slice %1166 {offsets = [0, 0], sizes = [8, 32], strides = [1, 1]} : vector<8x128xf32> to vector<8x32xf32>
    %1169 = vector.extract_strided_slice %1166 {offsets = [0, 32], sizes = [8, 32], strides = [1, 1]} : vector<8x128xf32> to vector<8x32xf32>
    %1170 = vector.extract_strided_slice %1167 {offsets = [0, 64], sizes = [8, 32], strides = [1, 1]} : vector<8x128xf32> to vector<8x32xf32>
    %1171 = vector.extract_strided_slice %1166 {offsets = [0, 96], sizes = [8, 32], strides = [1, 1]} : vector<8x128xf32> to vector<8x32xf32>
    %1172 = arith.mulf %1169, %1134 : vector<8x32xf32>
    %1173 = arith.mulf %1168, %1170 : vector<8x32xf32>
    %1174 = arith.addf %1172, %1173 : vector<8x32xf32>
    %1175 = math.tanh %1174 : vector<8x32xf32>
    %1176 = arith.mulf %1171, %1175 : vector<8x32xf32>
    %c56_326 = arith.constant 56 : index
    %c0_327 = arith.constant 0 : index
    %1177 = vector.load %arg17[%c56_326, %c0_327] : memref<64x32xf32, #tpu.memory_space<vmem>>, vector<8x32xf32>
    tpu.vector_store %arg17[%c56_326, %c0_327], %1176 {strides = array<i32>} : memref<64x32xf32, #tpu.memory_space<vmem>>, vector<8x32xf32>,
    %c0_328 = arith.constant 0 : index
    %c0_329 = arith.constant 0 : index
    %1178 = vector.load %arg17[%c0_328, %c0_329] : memref<64x32xf32, #tpu.memory_space<vmem>>, vector<64x32xf32>
    %c0_330 = arith.constant 0 : index
    %c0_331 = arith.constant 0 : index
    %1179 = vector.load %arg9[%c0_330, %c0_331] : memref<32x128xbf16, #tpu.memory_space<vmem>>, vector<32x128xbf16>
    %1180 = arith.truncf %1178 : vector<64x32xf32> to vector<64x32xbf16>
    %cst_332 = arith.constant dense<0.000000e+00> : vector<64x128xf32>
    %1181 = tpu.matmul %1180, %1179, %cst_332 {dimension_numbers = #tpu.dot_dimension_numbers<[1], [0], [0], [1], [0, 0, 1, 1], [], []>} : vector<64x32xbf16>, vector<32x128xbf16>, vector<64x128xf32> -> vector<64x128xf32>
    %1182 = tpu.iota {dimensions = array<i32: 1>} : vector<64x128xi32>
    %c64_i32 = arith.constant 64 : i32
    %1183 = vector.broadcast %c64_i32 : i32 to vector<64x128xi32>
    %1184 = arith.cmpi slt, %1182, %1183 : vector<64x128xi32>
    %cst_333 = arith.constant -1.000000e+30 : f32
    %1185 = vector.broadcast %cst_333 : f32 to vector<64x128xf32>
    %1186 = arith.select %1184, %1181, %1185 : vector<64x128xi1>, vector<64x128xf32>
    %cst_334 = arith.constant dense<0xFF800000> : vector<64xf32>
    %1187 = vector.multi_reduction <maximumf>, %1186, %cst_334 [1] : vector<64x128xf32> to vector<64xf32>
    %1188 = vector.shape_cast %1187 : vector<64xf32> to vector<64x1xf32>
    %1189 = vector.broadcast %1188 : vector<64x1xf32> to vector<64x128xf32>
    %1190 = arith.subf %1186, %1189 : vector<64x128xf32>
    %1191 = math.exp %1190 : vector<64x128xf32>
    %cst_335 = arith.constant dense<0.000000e+00> : vector<64xf32>
    %1192 = vector.multi_reduction <add>, %1191, %cst_335 [1] : vector<64x128xf32> to vector<64xf32>
    %1193 = vector.shape_cast %1192 : vector<64xf32> to vector<64x1xf32>
    %1194 = math.log %1193 : vector<64x1xf32>
    %1195 = vector.broadcast %1194 : vector<64x1xf32> to vector<64x128xf32>
    %1196 = arith.subf %1190, %1195 : vector<64x128xf32>
    %c0_336 = arith.constant 0 : index
    %c0_337 = arith.constant 0 : index
    %1197 = vector.load %arg12[%c0_336, %c0_337] : memref<64x128xf32, #tpu.memory_space<vmem>>, vector<64x128xf32>
    tpu.vector_store %arg12[%c0_336, %c0_337], %1196 {strides = array<i32>} : memref<64x128xf32, #tpu.memory_space<vmem>>, vector<64x128xf32>,
    return
  }
  func.func @transform_0(%arg0: i32, %arg1: memref<16xi32, #tpu.memory_space<smem>>, %arg2: memref<16xi32, #tpu.memory_space<smem>>) -> (i32, i32, i32) {
    %c0_i32 = arith.constant 0 : i32
    %c0_i32_0 = arith.constant 0 : i32
    %c0_i32_1 = arith.constant 0 : i32
    %c0_i32_2 = arith.constant 0 : i32
    return %c0_i32, %c0_i32_0, %c0_i32_1 : i32, i32, i32
  }
  func.func @transform_1(%arg0: i32, %arg1: memref<16xi32, #tpu.memory_space<smem>>, %arg2: memref<16xi32, #tpu.memory_space<smem>>) -> (i32, i32) {
    %c0_i32 = arith.constant 0 : i32
    %c0_i32_0 = arith.constant 0 : i32
    %c0_i32_1 = arith.constant 0 : i32
    return %c0_i32, %c0_i32_0 : i32, i32
  }
  func.func @transform_2(%arg0: i32, %arg1: memref<16xi32, #tpu.memory_space<smem>>, %arg2: memref<16xi32, #tpu.memory_space<smem>>) -> (i32, i32) {
    %c0_i32 = arith.constant 0 : i32
    %c0_i32_0 = arith.constant 0 : i32
    %c0_i32_1 = arith.constant 0 : i32
    return %c0_i32, %c0_i32_0 : i32, i32
  }
  func.func @transform_3(%arg0: i32, %arg1: memref<16xi32, #tpu.memory_space<smem>>, %arg2: memref<16xi32, #tpu.memory_space<smem>>) -> (i32, i32) {
    %c0_i32 = arith.constant 0 : i32
    %c0_i32_0 = arith.constant 0 : i32
    %c0_i32_1 = arith.constant 0 : i32
    return %c0_i32, %c0_i32_0 : i32, i32
  }
  func.func @transform_4(%arg0: i32, %arg1: memref<16xi32, #tpu.memory_space<smem>>, %arg2: memref<16xi32, #tpu.memory_space<smem>>) -> (i32, i32) {
    %c0_i32 = arith.constant 0 : i32
    %c0_i32_0 = arith.constant 0 : i32
    %c0_i32_1 = arith.constant 0 : i32
    return %c0_i32, %c0_i32_0 : i32, i32
  }
  func.func @transform_5(%arg0: i32, %arg1: memref<16xi32, #tpu.memory_space<smem>>, %arg2: memref<16xi32, #tpu.memory_space<smem>>) -> (i32, i32) {
    %c0_i32 = arith.constant 0 : i32
    %c0_i32_0 = arith.constant 0 : i32
    %c0_i32_1 = arith.constant 0 : i32
    return %c0_i32, %c0_i32_0 : i32, i32
  }
  func.func @transform_6(%arg0: i32, %arg1: memref<16xi32, #tpu.memory_space<smem>>, %arg2: memref<16xi32, #tpu.memory_space<smem>>) -> (i32, i32) {
    %c0_i32 = arith.constant 0 : i32
    %c0_i32_0 = arith.constant 0 : i32
    %c0_i32_1 = arith.constant 0 : i32
    return %c0_i32, %c0_i32_0 : i32, i32
  }
  func.func @transform_7(%arg0: i32, %arg1: memref<16xi32, #tpu.memory_space<smem>>, %arg2: memref<16xi32, #tpu.memory_space<smem>>) -> (i32, i32) {
    %c0_i32 = arith.constant 0 : i32
    %c0_i32_0 = arith.constant 0 : i32
    %c0_i32_1 = arith.constant 0 : i32
    return %c0_i32, %c0_i32_0 : i32, i32
  }
  func.func @transform_8(%arg0: i32, %arg1: memref<16xi32, #tpu.memory_space<smem>>, %arg2: memref<16xi32, #tpu.memory_space<smem>>) -> (i32, i32) {
    %c0_i32 = arith.constant 0 : i32
    %c0_i32_0 = arith.constant 0 : i32
    %c0_i32_1 = arith.constant 0 : i32
    return %c0_i32, %c0_i32_0 : i32, i32
  }
  func.func @transform_9(%arg0: i32, %arg1: memref<16xi32, #tpu.memory_space<smem>>, %arg2: memref<16xi32, #tpu.memory_space<smem>>) -> (i32, i32) {
    %c0_i32 = arith.constant 0 : i32
    %c0_i32_0 = arith.constant 0 : i32
    %c0_i32_1 = arith.constant 0 : i32
    return %c0_i32, %c0_i32_0 : i32, i32
  }
}

</mosaic_0001>

<llo_original>
// kernel: seq2seq_forward.1
$region0: #{seq2seq_forward.1}
  #allocation0 [shape = 'u32[]', space=smem, size = 0x4, offset = 0x4, fixed_abs, tag = 'smem constant byte address 0x4 - core index']
  #allocation1 [shape = 'u32[144,128]{1,0:T(1,128)}', space=vmem, size = 0x12000, scoped, tag = 'internal scratch']
  #allocation2 [shape = 'bf16[64,128]{1,0:T(16,128)(2,1)}', space=vmem, size = 0x4000, scoped, tag = 'scratch operand']
  #allocation3 [shape = 'bf16[64,128]{1,0:T(16,128)(2,1)}', space=vmem, size = 0x4000, scoped, tag = 'scratch operand']
  #allocation4 [shape = 'f32[64,32]{1,0:T(8,128)}', space=vmem, size = 0x8000, scoped, tag = 'scratch operand']
  #allocation5 [shape = 'f32[64,32]{1,0:T(8,128)}', space=vmem, size = 0x8000, scoped, tag = 'scratch operand']
  #allocation6 [shape = 'f32[64,32]{1,0:T(8,128)}', space=vmem, size = 0x8000, scoped, tag = 'scratch operand']
  #allocation7 [shape = 's32[1]{0}', space=sflag, size = 0x4, scoped, tag = 'scoped memory for seq2seq_forward.1']
  #allocation8 [shape = 'u8[512]{0}', space=smem, size = 0x200, scoped, tag = 'prefetched SMEM operand 0']
  #allocation9 [shape = 'u8[512]{0}', space=smem, size = 0x200, scoped, tag = 'prefetched SMEM operand 1']
  %s0 = inlined_call_operand.vmem [shape: s32[16], index: 0, kind: input, shape index: {}]
  %s1 = inlined_call_operand.vmem [shape: s32[16], index: 1, kind: input, shape index: {}]
  %s2 = inlined_call_operand.vmem [shape: bf16[64,1,128], index: 2, kind: input, shape index: {}]
  %s3 = inlined_call_operand.vmem [shape: bf16[192,256], index: 3, kind: input, shape index: {}]
  %s4 = inlined_call_operand.hbm [shape: bf16[128,128], index: 4, kind: input, shape index: {}]
  %s5 = inlined_call_operand.vmem [shape: bf16[256,32], index: 5, kind: input, shape index: {}]
  %s6 = inlined_call_operand.hbm [shape: bf16[160,128], index: 6, kind: input, shape index: {}]
  %s7 = inlined_call_operand.vmem [shape: bf16[224,128], index: 7, kind: input, shape index: {}]
  %s8 = inlined_call_operand.vmem [shape: bf16[32,128], index: 8, kind: input, shape index: {}]
  %s9 = inlined_call_operand.hbm [shape: f32[2,256], index: 9, kind: input, shape index: {}]
  %s10 = inlined_call_operand.hbm [shape: f32[2,128], index: 10, kind: input, shape index: {}]
  %s11 = inlined_call_operand.vmem [shape: f32[64,128], index: 11, kind: output, shape index: {}]
  %s12 = sld [smem:[#allocation0]]
  $region62: #{seq2seq_forward.1} parent=0
    _
  %s14 = ssub.s32 1, %s12
  %s15 = scalar_select 0, %s14, %s12
  %s16 = sshll.u32 %s0, 4
  %s17 = int_to_ptr.vmem [resolvable:$true] %s16
  %19 = dma.vmem_to_smem %s17, 16, [#allocation8], [#allocation7]
  %s20 = sshll.u32 %s1, 4
  %s21 = int_to_ptr.vmem [resolvable:$true] %s20
  %23 = dma.vmem_to_smem %s21, 16, [#allocation9], [#allocation7]
  %24 = dma.done [#allocation7], 32
  %25 = sfence
  $region1: #{seq2seq_forward.1} parent=0
    #allocation10 [shape = 'u8[32768]{0}', space=vmem, size = 0x8000, scoped, tag = 'input window, operand 4, single buffered']
    #allocation11 [shape = 's32[1]{0}', space=sflag, size = 0x4, scoped, tag = 'scoped memory for seq2seq_forward.1']
    #allocation12 [shape = 'u8[40960]{0}', space=vmem, size = 0xa000, scoped, tag = 'input window, operand 6, single buffered']
    #allocation13 [shape = 's32[1]{0}', space=sflag, size = 0x4, scoped, tag = 'scoped memory for seq2seq_forward.1']
    #allocation14 [shape = 'u8[2048]{0}', space=vmem, size = 0x800, scoped, tag = 'input window, operand 9, single buffered']
    #allocation15 [shape = 'u8[1024]{0}', space=vmem, size = 0x400, scoped, tag = 'input window, operand 10, single buffered']
    #allocation16 [shape = 's32[1]{0}', space=sflag, size = 0x4, scoped, tag = 'scoped memory for seq2seq_forward.1']
    %26 = vsyncpa [#allocation11], 0
    %27 = vsyncpa [#allocation13], 0
    %28 = vsyncpa [#allocation16], 0
    // Predicated region
    $region2: #{seq2seq_forward.1} parent=1 // pred_check
      _
    $region3: #{seq2seq_forward.1} parent=1 // pred_check_branch
      %30 = sbr.rel (0) target = $region5
    $region4: #{seq2seq_forward.1} parent=1 // pred_region
      _
    $region5: #{seq2seq_forward.1} parent=1 // pred_fallthru
      _
    // Predicated region
    $region6: #{seq2seq_forward.1} parent=1 // pred_check
      _
    $region7: #{seq2seq_forward.1} parent=1 // pred_check_branch
      %32 = sbr.rel (0) target = $region9
    $region8: #{seq2seq_forward.1} parent=1 // pred_region
      _
    $region9: #{seq2seq_forward.1} parent=1 // pred_fallthru
      _
    // Predicated region
    $region10: #{seq2seq_forward.1} parent=1 // pred_check
      _
    $region11: #{seq2seq_forward.1} parent=1 // pred_check_branch
      %34 = sbr.rel (0) target = $region13
    $region12: #{seq2seq_forward.1} parent=1 // pred_region
      %s36 = ssub.s32 1024, 1024
      %37 = vsyncadd [#allocation11], %s36
      %s38 = sshll.u32 [#allocation10], 4
      %s39 = int_to_ptr.vmem [resolvable:$true] %s38
      %44 = dma.hbm_to_vmem [thread:$0]  %s4, 1024, %s39, [#allocation11], 64, 64, 4
    $region13: #{seq2seq_forward.1} parent=1 // pred_fallthru
      _
    // Predicated region
    $region14: #{seq2seq_forward.1} parent=1 // pred_check
      _
    $region15: #{seq2seq_forward.1} parent=1 // pred_check_branch
      %46 = sbr.rel (0) target = $region17
    $region16: #{seq2seq_forward.1} parent=1 // pred_region
      _
    $region17: #{seq2seq_forward.1} parent=1 // pred_fallthru
      _
    // Predicated region
    $region18: #{seq2seq_forward.1} parent=1 // pred_check
      _
    $region19: #{seq2seq_forward.1} parent=1 // pred_check_branch
      %48 = sbr.rel (0) target = $region21
    $region20: #{seq2seq_forward.1} parent=1 // pred_region
      %s50 = ssub.s32 1280, 1280
      %51 = vsyncadd [#allocation13], %s50
      %s52 = sshll.u32 [#allocation12], 4
      %s53 = int_to_ptr.vmem [resolvable:$true] %s52
      %58 = dma.hbm_to_vmem [thread:$0]  %s6, 1280, %s53, [#allocation13], 64, 64, 4
    $region21: #{seq2seq_forward.1} parent=1 // pred_fallthru
      _
    // Predicated region
    $region22: #{seq2seq_forward.1} parent=1 // pred_check
      _
    $region23: #{seq2seq_forward.1} parent=1 // pred_check_branch
      %60 = sbr.rel (0) target = $region25
    $region24: #{seq2seq_forward.1} parent=1 // pred_region
      _
    $region25: #{seq2seq_forward.1} parent=1 // pred_fallthru
      _
    // Predicated region
    $region26: #{seq2seq_forward.1} parent=1 // pred_check
      _
    $region27: #{seq2seq_forward.1} parent=1 // pred_check_branch
      %62 = sbr.rel (0) target = $region29
    $region28: #{seq2seq_forward.1} parent=1 // pred_region
      _
    $region29: #{seq2seq_forward.1} parent=1 // pred_fallthru
      _
    // Predicated region
    $region30: #{seq2seq_forward.1} parent=1 // pred_check
      _
    $region31: #{seq2seq_forward.1} parent=1 // pred_check_branch
      %64 = sbr.rel (0) target = $region33
    $region32: #{seq2seq_forward.1} parent=1 // pred_region
      %s66 = ssub.s32 64, 64
      %67 = vsyncadd [#allocation13], %s66
      %s69 = sshll.u32 [#allocation14], 4
      %s70 = int_to_ptr.vmem [resolvable:$true] %s69
      %72 = dma.hbm_to_vmem [thread:$0]  %s9, 64, %s70, [#allocation13]
    $region33: #{seq2seq_forward.1} parent=1 // pred_fallthru
      _
    // Predicated region
    $region34: #{seq2seq_forward.1} parent=1 // pred_check
      _
    $region35: #{seq2seq_forward.1} parent=1 // pred_check_branch
      %74 = sbr.rel (0) target = $region37
    $region36: #{seq2seq_forward.1} parent=1 // pred_region
      %s76 = ssub.s32 32, 32
      %77 = vsyncadd [#allocation16], %s76
      %s79 = sshll.u32 [#allocation15], 4
      %s80 = int_to_ptr.vmem [resolvable:$true] %s79
      %82 = dma.hbm_to_vmem [thread:$0]  %s10, 32, %s80, [#allocation16]
    $region37: #{seq2seq_forward.1} parent=1 // pred_fallthru
      _
    // Predicated region
    $region38: #{seq2seq_forward.1} parent=1 // pred_check
      _
    $region39: #{seq2seq_forward.1} parent=1 // pred_check_branch
      %84 = sbr.rel (0) target = $region41
    $region40: #{seq2seq_forward.1} parent=1 // pred_region
      %85 = dma.done [#allocation11], 1024
    $region41: #{seq2seq_forward.1} parent=1 // pred_fallthru
      _
    // Predicated region
    $region42: #{seq2seq_forward.1} parent=1 // pred_check
      _
    $region43: #{seq2seq_forward.1} parent=1 // pred_check_branch
      %87 = sbr.rel (0) target = $region45
    $region44: #{seq2seq_forward.1} parent=1 // pred_region
      %88 = dma.done [#allocation13], 1280
    $region45: #{seq2seq_forward.1} parent=1 // pred_fallthru
      _
    // Predicated region
    $region46: #{seq2seq_forward.1} parent=1 // pred_check
      _
    $region47: #{seq2seq_forward.1} parent=1 // pred_check_branch
      %90 = sbr.rel (0) target = $region49
    $region48: #{seq2seq_forward.1} parent=1 // pred_region
      %91 = dma.done [#allocation13], 64
    $region49: #{seq2seq_forward.1} parent=1 // pred_fallthru
      _
    // Predicated region
    $region50: #{seq2seq_forward.1} parent=1 // pred_check
      _
    $region51: #{seq2seq_forward.1} parent=1 // pred_check_branch
      %93 = sbr.rel (0) target = $region53
    $region52: #{seq2seq_forward.1} parent=1 // pred_region
      %94 = dma.done [#allocation16], 32
    $region53: #{seq2seq_forward.1} parent=1 // pred_fallthru
      _
    %96 = vst [vmem:[#allocation2] sm:$0xff] 0
    %97 = vst [vmem:[#allocation2 + $0x8] sm:$0xff] 0
    %98 = vst [vmem:[#allocation2 + $0x10] sm:$0xff] 0
    %99 = vst [vmem:[#allocation2 + $0x18] sm:$0xff] 0
    %100 = vst [vmem:[#allocation3] sm:$0xff] 0
    %101 = vst [vmem:[#allocation3 + $0x8] sm:$0xff] 0
    %102 = vst [vmem:[#allocation3 + $0x10] sm:$0xff] 0
    %103 = vst [vmem:[#allocation3 + $0x18] sm:$0xff] 0
    %s104 = sld [smem:[#allocation8]]
    %s105 = scalar_lea.vmem %s2, %s104
    %v106 = vld [vmem:[%s105] sm:$0x1]
    %vm107 = vcmask 1040384
    %vm108 = vsmask.f32 256
    %vm109 = vmand %vm107, %vm108
    %v110 = vld [vmem:[#allocation2] sm:$0x1]
    %v111 = vsel %vm109, %v106, %v110
    %112 = vst [vmem:[#allocation2] sm:$0x1] %v111
    %s113 = sld [smem:[#allocation8 + $0x1]]
    %s114 = scalar_lea.vmem %s2, %s113
    %v115 = vld [vmem:[%s114] sm:$0x1]
    %v118 = vunpack.c.l.s4 1966171168
    %v119 = vunpack.c.0.s8 %v118
    %v120 = vlaneseq
    %v121 = vshrl.u32 %v120, 7
    %v122 = vsub.s32 %v119, %v121
    %v123 = vrot.slane %v115, %v122
    %v125 = vunpack.c.l.s4 1966171168
    %v126 = vunpack.c.0.s8 %v125
    %v127 = vlaneseq
    %v128 = vshrl.u32 %v127, 7
    %v129 = vsub.s32 %v126, %v128
    %v130 = vrot.slane %v123, %v129
    %v132 = vshll.u32 %v130, 16
    %vm135 = vsmask.f32 7938
    %vm136 = vmand %vm107, %vm135
    %v137 = vld [vmem:[#allocation2] sm:$0x1]
    %v138 = vsel %vm136, %v132, %v137
    %139 = vst [vmem:[#allocation2] sm:$0x1] %v138
    %s140 = sld [smem:[#allocation8 + $0x2]]
    %s141 = scalar_lea.vmem %s2, %s140
    %v142 = vld [vmem:[%s141] sm:$0x1]
    %v145 = vunpack.c.l.s4 1966171168
    %v146 = vunpack.c.0.s8 %v145
    %v147 = vlaneseq
    %v148 = vshrl.u32 %v147, 7
    %v149 = vsub.s32 %v146, %v148
    %v150 = vrot.slane %v142, %v149
    %v152 = vunpack.c.l.s4 1966171168
    %v153 = vunpack.c.0.s8 %v152
    %v154 = vlaneseq
    %v155 = vshrl.u32 %v154, 7
    %v156 = vsub.s32 %v153, %v155
    %v157 = vrot.slane %v150, %v156
    %v158 = vcombine.low %v157, %v157
    %vm160 = vcmask 1044484
    %vm161 = vsmask.f32 4352
    %vm162 = vmand %vm160, %vm161
    %v163 = vld [vmem:[#allocation2] sm:$0x10]
    %v164 = vsel %vm162, %v158, %v163
    %165 = vst [vmem:[#allocation2] sm:$0x10] %v164
    %s166 = sld [smem:[#allocation8 + $0x3]]
    %s167 = scalar_lea.vmem %s2, %s166
    %v168 = vld [vmem:[%s167] sm:$0x1]
    %v171 = vunpack.c.l.s4 1966171168
    %v172 = vunpack.c.0.s8 %v171
    %v173 = vlaneseq
    %v174 = vshrl.u32 %v173, 7
    %v175 = vsub.s32 %v172, %v174
    %v176 = vrot.slane %v168, %v175
    %v178 = vunpack.c.l.s4 1966171168
    %v179 = vunpack.c.0.s8 %v178
    %v180 = vlaneseq
    %v181 = vshrl.u32 %v180, 7
    %v182 = vsub.s32 %v179, %v181
    %v183 = vrot.slane %v176, %v182
    %v185 = vshll.u32 %v183, 16
    %v187 = vrot.slane %v185, 4
    %vm189 = vsmask.f32 7954
    %vm190 = vmand %vm160, %vm189
    %v191 = vld [vmem:[#allocation2] sm:$0x10]
    %v192 = vsel %vm190, %v187, %v191
    %193 = vst [vmem:[#allocation2] sm:$0x10] %v192
    %s194 = sld [smem:[#allocation8 + $0x4]]
    %s195 = scalar_lea.vmem %s2, %s194
    %v196 = vld [vmem:[%s195] sm:$0x1]
    %v197 = vld [vmem:[#allocation2 + $0x8] sm:$0x1]
    %v198 = vsel %vm109, %v196, %v197
    %199 = vst [vmem:[#allocation2 + $0x8] sm:$0x1] %v198
    %s200 = sld [smem:[#allocation8 + $0x5]]
    %s201 = scalar_lea.vmem %s2, %s200
    %v202 = vld [vmem:[%s201] sm:$0x1]
    %v205 = vunpack.c.l.s4 1966171168
    %v206 = vunpack.c.0.s8 %v205
    %v207 = vlaneseq
    %v208 = vshrl.u32 %v207, 7
    %v209 = vsub.s32 %v206, %v208
    %v210 = vrot.slane %v202, %v209
    %v212 = vunpack.c.l.s4 1966171168
    %v213 = vunpack.c.0.s8 %v212
    %v214 = vlaneseq
    %v215 = vshrl.u32 %v214, 7
    %v216 = vsub.s32 %v213, %v215
    %v217 = vrot.slane %v210, %v216
    %v219 = vshll.u32 %v217, 16
    %v222 = vld [vmem:[#allocation2 + $0x8] sm:$0x1]
    %v223 = vsel %vm136, %v219, %v222
    %224 = vst [vmem:[#allocation2 + $0x8] sm:$0x1] %v223
    %s225 = sld [smem:[#allocation8 + $0x6]]
    %s226 = scalar_lea.vmem %s2, %s225
    %v227 = vld [vmem:[%s226] sm:$0x1]
    %v230 = vunpack.c.l.s4 1966171168
    %v231 = vunpack.c.0.s8 %v230
    %v232 = vlaneseq
    %v233 = vshrl.u32 %v232, 7
    %v234 = vsub.s32 %v231, %v233
    %v235 = vrot.slane %v227, %v234
    %v237 = vunpack.c.l.s4 1966171168
    %v238 = vunpack.c.0.s8 %v237
    %v239 = vlaneseq
    %v240 = vshrl.u32 %v239, 7
    %v241 = vsub.s32 %v238, %v240
    %v242 = vrot.slane %v235, %v241
    %v243 = vcombine.low %v242, %v242
    %v245 = vld [vmem:[#allocation2 + $0x8] sm:$0x10]
    %v246 = vsel %vm162, %v243, %v245
    %247 = vst [vmem:[#allocation2 + $0x8] sm:$0x10] %v246
    %s248 = sld [smem:[#allocation8 + $0x7]]
    %s249 = scalar_lea.vmem %s2, %s248
    %v250 = vld [vmem:[%s249] sm:$0x1]
    %v253 = vunpack.c.l.s4 1966171168
    %v254 = vunpack.c.0.s8 %v253
    %v255 = vlaneseq
    %v256 = vshrl.u32 %v255, 7
    %v257 = vsub.s32 %v254, %v256
    %v258 = vrot.slane %v250, %v257
    %v260 = vunpack.c.l.s4 1966171168
    %v261 = vunpack.c.0.s8 %v260
    %v262 = vlaneseq
    %v263 = vshrl.u32 %v262, 7
    %v264 = vsub.s32 %v261, %v263
    %v265 = vrot.slane %v258, %v264
    %v267 = vshll.u32 %v265, 16
    %v269 = vrot.slane %v267, 4
    %v271 = vld [vmem:[#allocation2 + $0x8] sm:$0x10]
    %v272 = vsel %vm190, %v269, %v271
    %273 = vst [vmem:[#allocation2 + $0x8] sm:$0x10] %v272
    %s274 = sld [smem:[#allocation8 + $0x8]]
    %s275 = scalar_lea.vmem %s2, %s274
    %v276 = vld [vmem:[%s275] sm:$0x1]
    %v277 = vld [vmem:[#allocation2 + $0x10] sm:$0x1]
    %v278 = vsel %vm109, %v276, %v277
    %279 = vst [vmem:[#allocation2 + $0x10] sm:$0x1] %v278
    %s280 = sld [smem:[#allocation8 + $0x9]]
    %s281 = scalar_lea.vmem %s2, %s280
    %v282 = vld [vmem:[%s281] sm:$0x1]
    %v285 = vunpack.c.l.s4 1966171168
    %v286 = vunpack.c.0.s8 %v285
    %v287 = vlaneseq
    %v288 = vshrl.u32 %v287, 7
    %v289 = vsub.s32 %v286, %v288
    %v290 = vrot.slane %v282, %v289
    %v292 = vunpack.c.l.s4 1966171168
    %v293 = vunpack.c.0.s8 %v292
    %v294 = vlaneseq
    %v295 = vshrl.u32 %v294, 7
    %v296 = vsub.s32 %v293, %v295
    %v297 = vrot.slane %v290, %v296
    %v299 = vshll.u32 %v297, 16
    %v302 = vld [vmem:[#allocation2 + $0x10] sm:$0x1]
    %v303 = vsel %vm136, %v299, %v302
    %304 = vst [vmem:[#allocation2 + $0x10] sm:$0x1] %v303
    %s305 = sld [smem:[#allocation8 + $0xa]]
    %s306 = scalar_lea.vmem %s2, %s305
    %v307 = vld [vmem:[%s306] sm:$0x1]
    %v310 = vunpack.c.l.s4 1966171168
    %v311 = vunpack.c.0.s8 %v310
    %v312 = vlaneseq
    %v313 = vshrl.u32 %v312, 7
    %v314 = vsub.s32 %v311, %v313
    %v315 = vrot.slane %v307, %v314
    %v317 = vunpack.c.l.s4 1966171168
    %v318 = vunpack.c.0.s8 %v317
    %v319 = vlaneseq
    %v320 = vshrl.u32 %v319, 7
    %v321 = vsub.s32 %v318, %v320
    %v322 = vrot.slane %v315, %v321
    %v323 = vcombine.low %v322, %v322
    %v325 = vld [vmem:[#allocation2 + $0x10] sm:$0x10]
    %v326 = vsel %vm162, %v323, %v325
    %327 = vst [vmem:[#allocation2 + $0x10] sm:$0x10] %v326
    %s328 = sld [smem:[#allocation8 + $0xb]]
    %s329 = scalar_lea.vmem %s2, %s328
    %v330 = vld [vmem:[%s329] sm:$0x1]
    %v333 = vunpack.c.l.s4 1966171168
    %v334 = vunpack.c.0.s8 %v333
    %v335 = vlaneseq
    %v336 = vshrl.u32 %v335, 7
    %v337 = vsub.s32 %v334, %v336
    %v338 = vrot.slane %v330, %v337
    %v340 = vunpack.c.l.s4 1966171168
    %v341 = vunpack.c.0.s8 %v340
    %v342 = vlaneseq
    %v343 = vshrl.u32 %v342, 7
    %v344 = vsub.s32 %v341, %v343
    %v345 = vrot.slane %v338, %v344
    %v347 = vshll.u32 %v345, 16
    %v349 = vrot.slane %v347, 4
    %v351 = vld [vmem:[#allocation2 + $0x10] sm:$0x10]
    %v352 = vsel %vm190, %v349, %v351
    %353 = vst [vmem:[#allocation2 + $0x10] sm:$0x10] %v352
    %s354 = sld [smem:[#allocation8 + $0xc]]
    %s355 = scalar_lea.vmem %s2, %s354
    %v356 = vld [vmem:[%s355] sm:$0x1]
    %v357 = vld [vmem:[#allocation2 + $0x18] sm:$0x1]
    %v358 = vsel %vm109, %v356, %v357
    %359 = vst [vmem:[#allocation2 + $0x18] sm:$0x1] %v358
    %s360 = sld [smem:[#allocation8 + $0xd]]
    %s361 = scalar_lea.vmem %s2, %s360
    %v362 = vld [vmem:[%s361] sm:$0x1]
    %v365 = vunpack.c.l.s4 1966171168
    %v366 = vunpack.c.0.s8 %v365
    %v367 = vlaneseq
    %v368 = vshrl.u32 %v367, 7
    %v369 = vsub.s32 %v366, %v368
    %v370 = vrot.slane %v362, %v369
    %v372 = vunpack.c.l.s4 1966171168
    %v373 = vunpack.c.0.s8 %v372
    %v374 = vlaneseq
    %v375 = vshrl.u32 %v374, 7
    %v376 = vsub.s32 %v373, %v375
    %v377 = vrot.slane %v370, %v376
    %v379 = vshll.u32 %v377, 16
    %v382 = vld [vmem:[#allocation2 + $0x18] sm:$0x1]
    %v383 = vsel %vm136, %v379, %v382
    %384 = vst [vmem:[#allocation2 + $0x18] sm:$0x1] %v383
    %s385 = sld [smem:[#allocation8 + $0xe]]
    %s386 = scalar_lea.vmem %s2, %s385
    %v387 = vld [vmem:[%s386] sm:$0x1]
    %v390 = vunpack.c.l.s4 1966171168
    %v391 = vunpack.c.0.s8 %v390
    %v392 = vlaneseq
    %v393 = vshrl.u32 %v392, 7
    %v394 = vsub.s32 %v391, %v393
    %v395 = vrot.slane %v387, %v394
    %v397 = vunpack.c.l.s4 1966171168
    %v398 = vunpack.c.0.s8 %v397
    %v399 = vlaneseq
    %v400 = vshrl.u32 %v399, 7
    %v401 = vsub.s32 %v398, %v400
    %v402 = vrot.slane %v395, %v401
    %v403 = vcombine.low %v402, %v402
    %v405 = vld [vmem:[#allocation2 + $0x18] sm:$0x10]
    %v406 = vsel %vm162, %v403, %v405
    %407 = vst [vmem:[#allocation2 + $0x18] sm:$0x10] %v406
    %s408 = sld [smem:[#allocation8 + $0xf]]
    %s409 = scalar_lea.vmem %s2, %s408
    %v410 = vld [vmem:[%s409] sm:$0x1]
    %v413 = vunpack.c.l.s4 1966171168
    %v414 = vunpack.c.0.s8 %v413
    %v415 = vlaneseq
    %v416 = vshrl.u32 %v415, 7
    %v417 = vsub.s32 %v414, %v416
    %v418 = vrot.slane %v410, %v417
    %v420 = vunpack.c.l.s4 1966171168
    %v421 = vunpack.c.0.s8 %v420
    %v422 = vlaneseq
    %v423 = vshrl.u32 %v422, 7
    %v424 = vsub.s32 %v421, %v423
    %v425 = vrot.slane %v418, %v424
    %v427 = vshll.u32 %v425, 16
    %v429 = vrot.slane %v427, 4
    %v431 = vld [vmem:[#allocation2 + $0x18] sm:$0x10]
    %v432 = vsel %vm190, %v429, %v431
    %433 = vst [vmem:[#allocation2 + $0x18] sm:$0x10] %v432
    %s434 = sld [smem:[#allocation9]]
    %s435 = scalar_lea.vmem %s2, %s434
    %v436 = vld [vmem:[%s435] sm:$0x1]
    %v437 = vld [vmem:[#allocation3] sm:$0x1]
    %v438 = vsel %vm109, %v436, %v437
    %439 = vst [vmem:[#allocation3] sm:$0x1] %v438
    %s440 = sld [smem:[#allocation9 + $0x1]]
    %s441 = scalar_lea.vmem %s2, %s440
    %v442 = vld [vmem:[%s441] sm:$0x1]
    %v445 = vunpack.c.l.s4 1966171168
    %v446 = vunpack.c.0.s8 %v445
    %v447 = vlaneseq
    %v448 = vshrl.u32 %v447, 7
    %v449 = vsub.s32 %v446, %v448
    %v450 = vrot.slane %v442, %v449
    %v452 = vunpack.c.l.s4 1966171168
    %v453 = vunpack.c.0.s8 %v452
    %v454 = vlaneseq
    %v455 = vshrl.u32 %v454, 7
    %v456 = vsub.s32 %v453, %v455
    %v457 = vrot.slane %v450, %v456
    %v459 = vshll.u32 %v457, 16
    %v462 = vld [vmem:[#allocation3] sm:$0x1]
    %v463 = vsel %vm136, %v459, %v462
    %464 = vst [vmem:[#allocation3] sm:$0x1] %v463
    %s465 = sld [smem:[#allocation9 + $0x2]]
    %s466 = scalar_lea.vmem %s2, %s465
    %v467 = vld [vmem:[%s466] sm:$0x1]
    %v470 = vunpack.c.l.s4 1966171168
    %v471 = vunpack.c.0.s8 %v470
    %v472 = vlaneseq
    %v473 = vshrl.u32 %v472, 7
    %v474 = vsub.s32 %v471, %v473
    %v475 = vrot.slane %v467, %v474
    %v477 = vunpack.c.l.s4 1966171168
    %v478 = vunpack.c.0.s8 %v477
    %v479 = vlaneseq
    %v480 = vshrl.u32 %v479, 7
    %v481 = vsub.s32 %v478, %v480
    %v482 = vrot.slane %v475, %v481
    %v483 = vcombine.low %v482, %v482
    %v485 = vld [vmem:[#allocation3] sm:$0x10]
    %v486 = vsel %vm162, %v483, %v485
    %487 = vst [vmem:[#allocation3] sm:$0x10] %v486
    %s488 = sld [smem:[#allocation9 + $0x3]]
    %s489 = scalar_lea.vmem %s2, %s488
    %v490 = vld [vmem:[%s489] sm:$0x1]
    %v493 = vunpack.c.l.s4 1966171168
    %v494 = vunpack.c.0.s8 %v493
    %v495 = vlaneseq
    %v496 = vshrl.u32 %v495, 7
    %v497 = vsub.s32 %v494, %v496
    %v498 = vrot.slane %v490, %v497
    %v500 = vunpack.c.l.s4 1966171168
    %v501 = vunpack.c.0.s8 %v500
    %v502 = vlaneseq
    %v503 = vshrl.u32 %v502, 7
    %v504 = vsub.s32 %v501, %v503
    %v505 = vrot.slane %v498, %v504
    %v507 = vshll.u32 %v505, 16
    %v509 = vrot.slane %v507, 4
    %v511 = vld [vmem:[#allocation3] sm:$0x10]
    %v512 = vsel %vm190, %v509, %v511
    %513 = vst [vmem:[#allocation3] sm:$0x10] %v512
    %s514 = sld [smem:[#allocation9 + $0x4]]
    %s515 = scalar_lea.vmem %s2, %s514
    %v516 = vld [vmem:[%s515] sm:$0x1]
    %v517 = vld [vmem:[#allocation3 + $0x8] sm:$0x1]
    %v518 = vsel %vm109, %v516, %v517
    %519 = vst [vmem:[#allocation3 + $0x8] sm:$0x1] %v518
    %s520 = sld [smem:[#allocation9 + $0x5]]
    %s521 = scalar_lea.vmem %s2, %s520
    %v522 = vld [vmem:[%s521] sm:$0x1]
    %v525 = vunpack.c.l.s4 1966171168
    %v526 = vunpack.c.0.s8 %v525
    %v527 = vlaneseq
    %v528 = vshrl.u32 %v527, 7
    %v529 = vsub.s32 %v526, %v528
    %v530 = vrot.slane %v522, %v529
    %v532 = vunpack.c.l.s4 1966171168
    %v533 = vunpack.c.0.s8 %v532
    %v534 = vlaneseq
    %v535 = vshrl.u32 %v534, 7
    %v536 = vsub.s32 %v533, %v535
    %v537 = vrot.slane %v530, %v536
    %v539 = vshll.u32 %v537, 16
    %v542 = vld [vmem:[#allocation3 + $0x8] sm:$0x1]
    %v543 = vsel %vm136, %v539, %v542
    %544 = vst [vmem:[#allocation3 + $0x8] sm:$0x1] %v543
    %s545 = sld [smem:[#allocation9 + $0x6]]
    %s546 = scalar_lea.vmem %s2, %s545
    %v547 = vld [vmem:[%s546] sm:$0x1]
    %v550 = vunpack.c.l.s4 1966171168
    %v551 = vunpack.c.0.s8 %v550
    %v552 = vlaneseq
    %v553 = vshrl.u32 %v552, 7
    %v554 = vsub.s32 %v551, %v553
    %v555 = vrot.slane %v547, %v554
    %v557 = vunpack.c.l.s4 1966171168
    %v558 = vunpack.c.0.s8 %v557
    %v559 = vlaneseq
    %v560 = vshrl.u32 %v559, 7
    %v561 = vsub.s32 %v558, %v560
    %v562 = vrot.slane %v555, %v561
    %v563 = vcombine.low %v562, %v562
    %v565 = vld [vmem:[#allocation3 + $0x8] sm:$0x10]
    %v566 = vsel %vm162, %v563, %v565
    %567 = vst [vmem:[#allocation3 + $0x8] sm:$0x10] %v566
    %s568 = sld [smem:[#allocation9 + $0x7]]
    %s569 = scalar_lea.vmem %s2, %s568
    %v570 = vld [vmem:[%s569] sm:$0x1]
    %v573 = vunpack.c.l.s4 1966171168
    %v574 = vunpack.c.0.s8 %v573
    %v575 = vlaneseq
    %v576 = vshrl.u32 %v575, 7
    %v577 = vsub.s32 %v574, %v576
    %v578 = vrot.slane %v570, %v577
    %v580 = vunpack.c.l.s4 1966171168
    %v581 = vunpack.c.0.s8 %v580
    %v582 = vlaneseq
    %v583 = vshrl.u32 %v582, 7
    %v584 = vsub.s32 %v581, %v583
    %v585 = vrot.slane %v578, %v584
    %v587 = vshll.u32 %v585, 16
    %v589 = vrot.slane %v587, 4
    %v591 = vld [vmem:[#allocation3 + $0x8] sm:$0x10]
    %v592 = vsel %vm190, %v589, %v591
    %593 = vst [vmem:[#allocation3 + $0x8] sm:$0x10] %v592
    %s594 = sld [smem:[#allocation9 + $0x8]]
    %s595 = scalar_lea.vmem %s2, %s594
    %v596 = vld [vmem:[%s595] sm:$0x1]
    %v597 = vld [vmem:[#allocation3 + $0x10] sm:$0x1]
    %v598 = vsel %vm109, %v596, %v597
    %599 = vst [vmem:[#allocation3 + $0x10] sm:$0x1] %v598
    %s600 = sld [smem:[#allocation9 + $0x9]]
    %s601 = scalar_lea.vmem %s2, %s600
    %v602 = vld [vmem:[%s601] sm:$0x1]
    %v605 = vunpack.c.l.s4 1966171168
    %v606 = vunpack.c.0.s8 %v605
    %v607 = vlaneseq
    %v608 = vshrl.u32 %v607, 7
    %v609 = vsub.s32 %v606, %v608
    %v610 = vrot.slane %v602, %v609
    %v612 = vunpack.c.l.s4 1966171168
    %v613 = vunpack.c.0.s8 %v612
    %v614 = vlaneseq
    %v615 = vshrl.u32 %v614, 7
    %v616 = vsub.s32 %v613, %v615
    %v617 = vrot.slane %v610, %v616
    %v619 = vshll.u32 %v617, 16
    %v622 = vld [vmem:[#allocation3 + $0x10] sm:$0x1]
    %v623 = vsel %vm136, %v619, %v622
    %624 = vst [vmem:[#allocation3 + $0x10] sm:$0x1] %v623
    %s625 = sld [smem:[#allocation9 + $0xa]]
    %s626 = scalar_lea.vmem %s2, %s625
    %v627 = vld [vmem:[%s626] sm:$0x1]
    %v630 = vunpack.c.l.s4 1966171168
    %v631 = vunpack.c.0.s8 %v630
    %v632 = vlaneseq
    %v633 = vshrl.u32 %v632, 7
    %v634 = vsub.s32 %v631, %v633
    %v635 = vrot.slane %v627, %v634
    %v637 = vunpack.c.l.s4 1966171168
    %v638 = vunpack.c.0.s8 %v637
    %v639 = vlaneseq
    %v640 = vshrl.u32 %v639, 7
    %v641 = vsub.s32 %v638, %v640
    %v642 = vrot.slane %v635, %v641
    %v643 = vcombine.low %v642, %v642
    %v645 = vld [vmem:[#allocation3 + $0x10] sm:$0x10]
    %v646 = vsel %vm162, %v643, %v645
    %647 = vst [vmem:[#allocation3 + $0x10] sm:$0x10] %v646
    %s648 = sld [smem:[#allocation9 + $0xb]]
    %s649 = scalar_lea.vmem %s2, %s648
    %v650 = vld [vmem:[%s649] sm:$0x1]
    %v653 = vunpack.c.l.s4 1966171168
    %v654 = vunpack.c.0.s8 %v653
    %v655 = vlaneseq
    %v656 = vshrl.u32 %v655, 7
    %v657 = vsub.s32 %v654, %v656
    %v658 = vrot.slane %v650, %v657
    %v660 = vunpack.c.l.s4 1966171168
    %v661 = vunpack.c.0.s8 %v660
    %v662 = vlaneseq
    %v663 = vshrl.u32 %v662, 7
    %v664 = vsub.s32 %v661, %v663
    %v665 = vrot.slane %v658, %v664
    %v667 = vshll.u32 %v665, 16
    %v669 = vrot.slane %v667, 4
    %v671 = vld [vmem:[#allocation3 + $0x10] sm:$0x10]
    %v672 = vsel %vm190, %v669, %v671
    %673 = vst [vmem:[#allocation3 + $0x10] sm:$0x10] %v672
    %s674 = sld [smem:[#allocation9 + $0xc]]
    %s675 = scalar_lea.vmem %s2, %s674
    %v676 = vld [vmem:[%s675] sm:$0x1]
    %v677 = vld [vmem:[#allocation3 + $0x18] sm:$0x1]
    %v678 = vsel %vm109, %v676, %v677
    %679 = vst [vmem:[#allocation3 + $0x18] sm:$0x1] %v678
    %s680 = sld [smem:[#allocation9 + $0xd]]
    %s681 = scalar_lea.vmem %s2, %s680
    %v682 = vld [vmem:[%s681] sm:$0x1]
    %v685 = vunpack.c.l.s4 1966171168
    %v686 = vunpack.c.0.s8 %v685
    %v687 = vlaneseq
    %v688 = vshrl.u32 %v687, 7
    %v689 = vsub.s32 %v686, %v688
    %v690 = vrot.slane %v682, %v689
    %v692 = vunpack.c.l.s4 1966171168
    %v693 = vunpack.c.0.s8 %v692
    %v694 = vlaneseq
    %v695 = vshrl.u32 %v694, 7
    %v696 = vsub.s32 %v693, %v695
    %v697 = vrot.slane %v690, %v696
    %v699 = vshll.u32 %v697, 16
    %v702 = vld [vmem:[#allocation3 + $0x18] sm:$0x1]
    %v703 = vsel %vm136, %v699, %v702
    %704 = vst [vmem:[#allocation3 + $0x18] sm:$0x1] %v703
    %s705 = sld [smem:[#allocation9 + $0xe]]
    %s706 = scalar_lea.vmem %s2, %s705
    %v707 = vld [vmem:[%s706] sm:$0x1]
    %v710 = vunpack.c.l.s4 1966171168
    %v711 = vunpack.c.0.s8 %v710
    %v712 = vlaneseq
    %v713 = vshrl.u32 %v712, 7
    %v714 = vsub.s32 %v711, %v713
    %v715 = vrot.slane %v707, %v714
    %v717 = vunpack.c.l.s4 1966171168
    %v718 = vunpack.c.0.s8 %v717
    %v719 = vlaneseq
    %v720 = vshrl.u32 %v719, 7
    %v721 = vsub.s32 %v718, %v720
    %v722 = vrot.slane %v715, %v721
    %v723 = vcombine.low %v722, %v722
    %v725 = vld [vmem:[#allocation3 + $0x18] sm:$0x10]
    %v726 = vsel %vm162, %v723, %v725
    %727 = vst [vmem:[#allocation3 + $0x18] sm:$0x10] %v726
    %s728 = sld [smem:[#allocation9 + $0xf]]
    %s729 = scalar_lea.vmem %s2, %s728
    %v730 = vld [vmem:[%s729] sm:$0x1]
    %v733 = vunpack.c.l.s4 1966171168
    %v734 = vunpack.c.0.s8 %v733
    %v735 = vlaneseq
    %v736 = vshrl.u32 %v735, 7
    %v737 = vsub.s32 %v734, %v736
    %v738 = vrot.slane %v730, %v737
    %v740 = vunpack.c.l.s4 1966171168
    %v741 = vunpack.c.0.s8 %v740
    %v742 = vlaneseq
    %v743 = vshrl.u32 %v742, 7
    %v744 = vsub.s32 %v741, %v743
    %v745 = vrot.slane %v738, %v744
    %v747 = vshll.u32 %v745, 16
    %v749 = vrot.slane %v747, 4
    %v751 = vld [vmem:[#allocation3 + $0x18] sm:$0x10]
    %v752 = vsel %vm190, %v749, %v751
    %753 = vst [vmem:[#allocation3 + $0x18] sm:$0x10] %v752
    %v754 = vld [vmem:[%s3] sm:$0xff]
    %v755 = vld [vmem:[%s3 + $0x8] sm:$0xff]
    %v756 = vld [vmem:[%s3 + $0x10] sm:$0xff]
    %v757 = vld [vmem:[%s3 + $0x18] sm:$0xff]
    %v758 = vld [vmem:[%s3 + $0x20] sm:$0xff]
    %v759 = vld [vmem:[%s3 + $0x28] sm:$0xff]
    %v760 = vld [vmem:[%s3 + $0x30] sm:$0xff]
    %v761 = vld [vmem:[%s3 + $0x38] sm:$0xff]
    %v762 = vld [vmem:[%s3 + $0x40] sm:$0xff]
    %v763 = vld [vmem:[%s3 + $0x48] sm:$0xff]
    %v764 = vld [vmem:[%s3 + $0x50] sm:$0xff]
    %v765 = vld [vmem:[%s3 + $0x58] sm:$0xff]
    %v766 = vld [vmem:[%s3 + $0x60] sm:$0xff]
    %v767 = vld [vmem:[%s3 + $0x68] sm:$0xff]
    %v768 = vld [vmem:[%s3 + $0x70] sm:$0xff]
    %v769 = vld [vmem:[%s3 + $0x78] sm:$0xff]
    %v770 = vld [vmem:[%s3 + $0x80] sm:$0xff]
    %v771 = vld [vmem:[%s3 + $0x88] sm:$0xff]
    %v772 = vld [vmem:[%s3 + $0x90] sm:$0xff]
    %v773 = vld [vmem:[%s3 + $0x98] sm:$0xff]
    %v774 = vld [vmem:[%s3 + $0xa0] sm:$0xff]
    %v775 = vld [vmem:[%s3 + $0xa8] sm:$0xff]
    %v776 = vld [vmem:[%s3 + $0xb0] sm:$0xff]
    %v777 = vld [vmem:[%s3 + $0xb8] sm:$0xff]
    %v778 = vld [vmem:[#allocation10] sm:$0xf]
    %v779 = vld [vmem:[#allocation10 + $0x4] sm:$0xf]
    %v780 = vld [vmem:[#allocation10 + $0x8] sm:$0xf]
    %v781 = vld [vmem:[#allocation10 + $0xc] sm:$0xf]
    %v782 = vld [vmem:[#allocation10 + $0x10] sm:$0xf]
    %v783 = vld [vmem:[#allocation10 + $0x14] sm:$0xf]
    %v784 = vld [vmem:[#allocation10 + $0x18] sm:$0xf]
    %v785 = vld [vmem:[#allocation10 + $0x1c] sm:$0xf]
    %v786 = vld [vmem:[#allocation10 + $0x20] sm:$0xf]
    %v787 = vld [vmem:[#allocation10 + $0x24] sm:$0xf]
    %v788 = vld [vmem:[#allocation10 + $0x28] sm:$0xf]
    %v789 = vld [vmem:[#allocation10 + $0x2c] sm:$0xf]
    %v790 = vld [vmem:[#allocation10 + $0x30] sm:$0xf]
    %v791 = vld [vmem:[#allocation10 + $0x34] sm:$0xf]
    %v792 = vld [vmem:[#allocation10 + $0x38] sm:$0xf]
    %v793 = vld [vmem:[#allocation10 + $0x3c] sm:$0xf]
    %v794 = vld [vmem:[#allocation14] ss:$2 sm:$0x3]
    %s795 = scalar_lea.vmem [#allocation14], 1
    %v796 = vld [vmem:[%s795] ss:$2 sm:$0x3]
    %v797 = vld [vmem:[#allocation2] sm:$0xff]
    %v798 = vld [vmem:[#allocation2 + $0x8] sm:$0xff]
    %v799 = vld [vmem:[#allocation2 + $0x10] sm:$0xff]
    %v800 = vld [vmem:[#allocation2 + $0x18] sm:$0xff]
    %v802 = vlaneseq
    %v803 = vshrl.u32 %v802, 7
    %v804 = vsub.s32 0, %v803
    %v805 = vrot.slane %v794, %v804
    %v806 = vlaneseq
    %v807 = vshrl.u32 %v806, 7
    %v808 = vsub.s32 1, %v807
    %v809 = vrot.slane %v794, %v808
    %v828 = vunpack.c.l.b16 %v754
    %v829 = vunpack.c.h.b16 %v754
    %v830 = vunpack.c.l.b16 %v755
    %v831 = vunpack.c.h.b16 %v755
    %v832 = vunpack.c.l.b16 %v756
    %v833 = vunpack.c.h.b16 %v756
    %v834 = vunpack.c.l.b16 %v757
    %v835 = vunpack.c.h.b16 %v757
    %v836 = vunpack.c.l.b16 %v758
    %v837 = vunpack.c.h.b16 %v758
    %v838 = vunpack.c.l.b16 %v759
    %v839 = vunpack.c.h.b16 %v759
    %v840 = vunpack.c.l.b16 %v760
    %v841 = vunpack.c.h.b16 %v760
    %v842 = vunpack.c.l.b16 %v761
    %v843 = vunpack.c.h.b16 %v761
    %v844 = vunpack.c.l.b16 %v762
    %v845 = vunpack.c.h.b16 %v762
    %v846 = vunpack.c.l.b16 %v763
    %v847 = vunpack.c.h.b16 %v763
    %v848 = vunpack.c.l.b16 %v764
    %v849 = vunpack.c.h.b16 %v764
    %v850 = vunpack.c.l.b16 %v765
    %v851 = vunpack.c.h.b16 %v765
    %v852 = vunpack.c.l.b16 %v766
    %v853 = vunpack.c.h.b16 %v766
    %v854 = vunpack.c.l.b16 %v767
    %v855 = vunpack.c.h.b16 %v767
    %v856 = vunpack.c.l.b16 %v768
    %v857 = vunpack.c.h.b16 %v768
    %v858 = vunpack.c.l.b16 %v769
    %v859 = vunpack.c.h.b16 %v769
    %v860 = vpack.c.b16 %v830, %v828
    %v861 = vpack.c.b16 %v831, %v829
    %v862 = vpack.c.b16 %v834, %v832
    %v863 = vpack.c.b16 %v835, %v833
    %v864 = vpack.c.b16 %v838, %v836
    %v865 = vpack.c.b16 %v839, %v837
    %v866 = vpack.c.b16 %v842, %v840
    %v867 = vpack.c.b16 %v843, %v841
    %v868 = vpack.c.b16 %v846, %v844
    %v869 = vpack.c.b16 %v847, %v845
    %v870 = vpack.c.b16 %v850, %v848
    %v871 = vpack.c.b16 %v851, %v849
    %v872 = vpack.c.b16 %v854, %v852
    %v873 = vpack.c.b16 %v855, %v853
    %v874 = vpack.c.b16 %v858, %v856
    %v875 = vpack.c.b16 %v859, %v857
    %892 = vmatprep.subr.bf16.mxu0 %v861
    %893 = vmatpush1.bf16.msra.mxu0 %v860
    %894 = vmatprep.subr.bf16.mxu0 %v863
    %895 = vmatpush1.bf16.msra.mxu0 %v862
    %896 = vmatprep.subr.bf16.mxu0 %v865
    %897 = vmatpush1.bf16.msra.mxu0 %v864
    %898 = vmatprep.subr.bf16.mxu0 %v867
    %899 = vmatpush1.bf16.msra.mxu0 %v866
    %900 = vmatprep.subr.bf16.mxu0 %v869
    %901 = vmatpush1.bf16.msra.mxu0 %v868
    %902 = vmatprep.subr.bf16.mxu0 %v871
    %903 = vmatpush1.bf16.msra.mxu0 %v870
    %904 = vmatprep.subr.bf16.mxu0 %v873
    %905 = vmatpush1.bf16.msra.mxu0 %v872
    %906 = vmatprep.subr.bf16.mxu0 %v875
    %907 = vmatpush1.bf16.msra.mxu0 %v874
    %908 = vmatprep.subr.bf16.mxu0 0
    %909 = vmatpush1.bf16.msra.mxu0 0
    %910 = vmatprep.subr.bf16.mxu0 0
    %911 = vmatpush1.bf16.msra.mxu0 0
    %912 = vmatprep.subr.bf16.mxu0 0
    %913 = vmatpush1.bf16.msra.mxu0 0
    %914 = vmatprep.subr.bf16.mxu0 0
    %915 = vmatpush1.bf16.msra.mxu0 0
    %916 = vmatprep.subr.bf16.mxu0 0
    %917 = vmatpush1.bf16.msra.mxu0 0
    %918 = vmatprep.subr.bf16.mxu0 0
    %919 = vmatpush1.bf16.msra.mxu0 0
    %920 = vmatprep.subr.bf16.mxu0 0
    %921 = vmatpush1.bf16.msra.mxu0 0
    %922 = vmatprep.subr.bf16.mxu0 0
    %923 = vmatpush1.bf16.msra.mxu0 0
    %924 = vmatprep.mubr.bf16.mxu0 0
    %925 = vmatmul.mubr.bf16.gmra.mrb[0].mxu0 %v797
    %v926 = vpop.f32.mrb[0].mxu0
    %v927 = vadd.f32 %v805, %v926
    %v928 = vpop.f32.mrb[0].mxu0
    %v929 = vadd.f32 %v809, %v928
    %v930 = vpop.f32.mrb[0].mxu0
    %v931 = vadd.f32 %v805, %v930
    %v932 = vpop.f32.mrb[0].mxu0
    %v933 = vadd.f32 %v809, %v932
    %934 = vmatprep.mubr.bf16.mxu0 0
    %935 = vmatmul.mubr.bf16.gmra.mrb[0].mxu0 %v798
    %v936 = vpop.f32.mrb[0].mxu0
    %v937 = vadd.f32 %v805, %v936
    %v938 = vpop.f32.mrb[0].mxu0
    %v939 = vadd.f32 %v809, %v938
    %v940 = vpop.f32.mrb[0].mxu0
    %v941 = vadd.f32 %v805, %v940
    %v942 = vpop.f32.mrb[0].mxu0
    %v943 = vadd.f32 %v809, %v942
    %944 = vmatprep.mubr.bf16.mxu0 0
    %945 = vmatmul.mubr.bf16.gmra.mrb[0].mxu0 %v799
    %v946 = vpop.f32.mrb[0].mxu0
    %v947 = vadd.f32 %v805, %v946
    %v948 = vpop.f32.mrb[0].mxu0
    %v949 = vadd.f32 %v809, %v948
    %v950 = vpop.f32.mrb[0].mxu0
    %v951 = vadd.f32 %v805, %v950
    %v952 = vpop.f32.mrb[0].mxu0
    %v953 = vadd.f32 %v809, %v952
    %954 = vmatprep.mubr.bf16.mxu0 0
    %955 = vmatmul.mubr.bf16.gmra.mrb[0].mxu0 %v800
    %v956 = vpop.f32.mrb[0].mxu0
    %v957 = vadd.f32 %v805, %v956
    %v958 = vpop.f32.mrb[0].mxu0
    %v959 = vadd.f32 %v809, %v958
    %v960 = vpop.f32.mrb[0].mxu0
    %v961 = vadd.f32 %v805, %v960
    %v962 = vpop.f32.mrb[0].mxu0
    %v963 = vadd.f32 %v809, %v962
    %964 = vdwg.mxu0
    %v969 = vunpack.c.l.b16 %v778
    %v970 = vunpack.c.l.b16 %v779
    %v971 = vunpack.c.l.b16 %v780
    %v972 = vunpack.c.l.b16 %v781
    %v973 = vpack.c.b16 %v970, %v969
    %v974 = vpack.c.b16 %v972, %v971
    %vm977 = vcmask 261120
    %v979 = vsel %vm977, 0, 0
    %981 = vmatprep.subr.bf16.mxu0 0
    %982 = vmatpush1.bf16.msra.mxu0 %v973
    %983 = vmatprep.subr.bf16.mxu0 0
    %984 = vmatpush1.bf16.msra.mxu0 %v974
    %985 = vmatprep.subr.bf16.mxu0 0
    %986 = vmatpush1.bf16.msra.mxu0 0
    %987 = vmatprep.subr.bf16.mxu0 0
    %988 = vmatpush1.bf16.msra.mxu0 0
    %989 = vmatprep.subr.bf16.mxu0 0
    %990 = vmatpush1.bf16.msra.mxu0 0
    %991 = vmatprep.subr.bf16.mxu0 0
    %992 = vmatpush1.bf16.msra.mxu0 0
    %993 = vmatprep.subr.bf16.mxu0 0
    %994 = vmatpush1.bf16.msra.mxu0 0
    %995 = vmatprep.subr.bf16.mxu0 0
    %996 = vmatpush1.bf16.msra.mxu0 0
    %997 = vmatprep.subr.bf16.mxu0 0
    %998 = vmatpush1.bf16.msra.mxu0 0
    %999 = vmatprep.subr.bf16.mxu0 0
    %1000 = vmatpush1.bf16.msra.mxu0 0
    %1001 = vmatprep.subr.bf16.mxu0 0
    %1002 = vmatpush1.bf16.msra.mxu0 0
    %1003 = vmatprep.subr.bf16.mxu0 0
    %1004 = vmatpush1.bf16.msra.mxu0 0
    %1005 = vmatprep.subr.bf16.mxu0 0
    %1006 = vmatpush1.bf16.msra.mxu0 0
    %1007 = vmatprep.subr.bf16.mxu0 0
    %1008 = vmatpush1.bf16.msra.mxu0 0
    %1009 = vmatprep.subr.bf16.mxu0 0
    %1010 = vmatpush1.bf16.msra.mxu0 0
    %1011 = vmatprep.subr.bf16.mxu0 0
    %1012 = vmatpush1.bf16.msra.mxu0 0
    %1013 = vmatprep.mubr.bf16.mxu0 0
    %1014 = vmatmul.mubr.bf16.gmra.mrb[0].mxu0 %v979
    %v1015 = vpop.f32.mrb[0].mxu0
    %v1016 = vadd.f32 0.0, %v1015
    %v1017 = vpop.f32.mrb[0].mxu0
    %v1018 = vpop.f32.mrb[0].mxu0
    %v1019 = vpop.f32.mrb[0].mxu0
    %1020 = vdwg.mxu0
    %v1021 = vadd.f32 %v927, %v1016
    %v1022 = vxor.u32 %v1021, 2147483648
    %v1023 = vmul.f32 %v1022, 1.442695
    %v1024 = vpow.pop %v1023
    %v1025 = vadd.f32 %v1024, 1.0
    %v1026 = vrcp.pop %v1025
    %v1027 = vmul.f32 1.0, %v1026
    %v1028 = vtanh.pop %v1021
    %v1029 = vmul.f32 %v1027, 0.0
    %1031 = vrot.lane.b32.xlu0 %v1028, 64
    %v1032 = vpop.permute.xlu0 %1031
    %v1034 = vmul.f32 %v1027, %v1032
    %1036 = vrot.lane.b32.xlu0 %v1034, 32
    %v1037 = vpop.permute.xlu0 %1036
    %v1039 = vadd.f32 %v1029, %v1037
    %v1040 = vtanh.pop %v1039
    %1042 = vrot.lane.b32.xlu0 %v1040, 64
    %v1043 = vpop.permute.xlu0 %1042
    %v1045 = vmul.f32 %v1027, %v1043
    %1047 = vrot.lane.b32.xlu0 %v1045, 32
    %v1048 = vpop.permute.xlu0 %1047
    %1050 = vst.msk [vmem:[#allocation4] sm:$0xff] %vm977, %v1048
    %v1051 = vpack.c.bf16 %v1045, %v1045
    %1053 = vrot.lane.b32.xlu0 %v1051, 32
    %v1054 = vpop.permute.xlu0 %1053
    %v1056 = vsel %vm977, %v1054, 0
    %1058 = vmatprep.subr.bf16.mxu0 0
    %1059 = vmatpush1.bf16.msra.mxu0 %v973
    %1060 = vmatprep.subr.bf16.mxu0 0
    %1061 = vmatpush1.bf16.msra.mxu0 %v974
    %1062 = vmatprep.subr.bf16.mxu0 0
    %1063 = vmatpush1.bf16.msra.mxu0 0
    %1064 = vmatprep.subr.bf16.mxu0 0
    %1065 = vmatpush1.bf16.msra.mxu0 0
    %1066 = vmatprep.subr.bf16.mxu0 0
    %1067 = vmatpush1.bf16.msra.mxu0 0
    %1068 = vmatprep.subr.bf16.mxu0 0
    %1069 = vmatpush1.bf16.msra.mxu0 0
    %1070 = vmatprep.subr.bf16.mxu0 0
    %1071 = vmatpush1.bf16.msra.mxu0 0
    %1072 = vmatprep.subr.bf16.mxu0 0
    %1073 = vmatpush1.bf16.msra.mxu0 0
    %1074 = vmatprep.subr.bf16.mxu0 0
    %1075 = vmatpush1.bf16.msra.mxu0 0
    %1076 = vmatprep.subr.bf16.mxu0 0
    %1077 = vmatpush1.bf16.msra.mxu0 0
    %1078 = vmatprep.subr.bf16.mxu0 0
    %1079 = vmatpush1.bf16.msra.mxu0 0
    %1080 = vmatprep.subr.bf16.mxu0 0
    %1081 = vmatpush1.bf16.msra.mxu0 0
    %1082 = vmatprep.subr.bf16.mxu0 0
    %1083 = vmatpush1.bf16.msra.mxu0 0
    %1084 = vmatprep.subr.bf16.mxu0 0
    %1085 = vmatpush1.bf16.msra.mxu0 0
    %1086 = vmatprep.subr.bf16.mxu0 0
    %1087 = vmatpush1.bf16.msra.mxu0 0
    %1088 = vmatprep.subr.bf16.mxu0 0
    %1089 = vmatpush1.bf16.msra.mxu0 0
    %1090 = vmatprep.mubr.bf16.mxu0 0
    %1091 = vmatmul.mubr.bf16.gmra.mrb[0].mxu0 %v1056
    %v1092 = vpop.f32.mrb[0].mxu0
    %v1093 = vadd.f32 0.0, %v1092
    %v1094 = vpop.f32.mrb[0].mxu0
    %v1095 = vpop.f32.mrb[0].mxu0
    %v1096 = vpop.f32.mrb[0].mxu0
    %1097 = vdwg.mxu0
    %v1098 = vadd.f32 %v931, %v1093
    %v1099 = vxor.u32 %v1098, 2147483648
    %v1100 = vmul.f32 %v1099, 1.442695
    %v1101 = vpow.pop %v1100
    %v1102 = vadd.f32 %v1101, 1.0
    %v1103 = vrcp.pop %v1102
    %v1104 = vmul.f32 1.0, %v1103
    %v1105 = vtanh.pop %v1098
    %v1106 = vmul.f32 %v1104, %v1039
    %1108 = vrot.lane.b32.xlu0 %v1105, 64
    %v1109 = vpop.permute.xlu0 %1108
    %v1111 = vmul.f32 %v1104, %v1109
    %1113 = vrot.lane.b32.xlu0 %v1111, 32
    %v1114 = vpop.permute.xlu0 %1113
    %v1116 = vadd.f32 %v1106, %v1114
    %v1117 = vtanh.pop %v1116
    %1119 = vrot.lane.b32.xlu0 %v1117, 64
    %v1120 = vpop.permute.xlu0 %1119
    %v1122 = vmul.f32 %v1104, %v1120
    %1124 = vrot.lane.b32.xlu0 %v1122, 32
    %v1125 = vpop.permute.xlu0 %1124
    %1127 = vst.msk [vmem:[#allocation4 + $0x8] sm:$0xff] %vm977, %v1125
    %v1128 = vpack.c.bf16 %v1122, %v1122
    %1130 = vrot.lane.b32.xlu0 %v1128, 32
    %v1131 = vpop.permute.xlu0 %1130
    %v1133 = vsel %vm977, %v1131, 0
    %1135 = vmatprep.subr.bf16.mxu0 0
    %1136 = vmatpush1.bf16.msra.mxu0 %v973
    %1137 = vmatprep.subr.bf16.mxu0 0
    %1138 = vmatpush1.bf16.msra.mxu0 %v974
    %1139 = vmatprep.subr.bf16.mxu0 0
    %1140 = vmatpush1.bf16.msra.mxu0 0
    %1141 = vmatprep.subr.bf16.mxu0 0
    %1142 = vmatpush1.bf16.msra.mxu0 0
    %1143 = vmatprep.subr.bf16.mxu0 0
    %1144 = vmatpush1.bf16.msra.mxu0 0
    %1145 = vmatprep.subr.bf16.mxu0 0
    %1146 = vmatpush1.bf16.msra.mxu0 0
    %1147 = vmatprep.subr.bf16.mxu0 0
    %1148 = vmatpush1.bf16.msra.mxu0 0
    %1149 = vmatprep.subr.bf16.mxu0 0
    %1150 = vmatpush1.bf16.msra.mxu0 0
    %1151 = vmatprep.subr.bf16.mxu0 0
    %1152 = vmatpush1.bf16.msra.mxu0 0
    %1153 = vmatprep.subr.bf16.mxu0 0
    %1154 = vmatpush1.bf16.msra.mxu0 0
    %1155 = vmatprep.subr.bf16.mxu0 0
    %1156 = vmatpush1.bf16.msra.mxu0 0
    %1157 = vmatprep.subr.bf16.mxu0 0
    %1158 = vmatpush1.bf16.msra.mxu0 0
    %1159 = vmatprep.subr.bf16.mxu0 0
    %1160 = vmatpush1.bf16.msra.mxu0 0
    %1161 = vmatprep.subr.bf16.mxu0 0
    %1162 = vmatpush1.bf16.msra.mxu0 0
    %1163 = vmatprep.subr.bf16.mxu0 0
    %1164 = vmatpush1.bf16.msra.mxu0 0
    %1165 = vmatprep.subr.bf16.mxu0 0
    %1166 = vmatpush1.bf16.msra.mxu0 0
    %1167 = vmatprep.mubr.bf16.mxu0 0
    %1168 = vmatmul.mubr.bf16.gmra.mrb[0].mxu0 %v1133
    %v1169 = vpop.f32.mrb[0].mxu0
    %v1170 = vadd.f32 0.0, %v1169
    %v1171 = vpop.f32.mrb[0].mxu0
    %v1172 = vpop.f32.mrb[0].mxu0
    %v1173 = vpop.f32.mrb[0].mxu0
    %1174 = vdwg.mxu0
    %v1175 = vadd.f32 %v937, %v1170
    %v1176 = vxor.u32 %v1175, 2147483648
    %v1177 = vmul.f32 %v1176, 1.442695
    %v1178 = vpow.pop %v1177
    %v1179 = vadd.f32 %v1178, 1.0
    %v1180 = vrcp.pop %v1179
    %v1181 = vmul.f32 1.0, %v1180
    %v1182 = vtanh.pop %v1175
    %v1183 = vmul.f32 %v1181, %v1116
    %1185 = vrot.lane.b32.xlu0 %v1182, 64
    %v1186 = vpop.permute.xlu0 %1185
    %v1188 = vmul.f32 %v1181, %v1186
    %1190 = vrot.lane.b32.xlu0 %v1188, 32
    %v1191 = vpop.permute.xlu0 %1190
    %v1193 = vadd.f32 %v1183, %v1191
    %v1194 = vtanh.pop %v1193
    %1196 = vrot.lane.b32.xlu0 %v1194, 64
    %v1197 = vpop.permute.xlu0 %1196
    %v1199 = vmul.f32 %v1181, %v1197
    %1201 = vrot.lane.b32.xlu0 %v1199, 32
    %v1202 = vpop.permute.xlu0 %1201
    %1204 = vst.msk [vmem:[#allocation4 + $0x10] sm:$0xff] %vm977, %v1202
    %v1205 = vpack.c.bf16 %v1199, %v1199
    %1207 = vrot.lane.b32.xlu0 %v1205, 32
    %v1208 = vpop.permute.xlu0 %1207
    %v1210 = vsel %vm977, %v1208, 0
    %1212 = vmatprep.subr.bf16.mxu0 0
    %1213 = vmatpush1.bf16.msra.mxu0 %v973
    %1214 = vmatprep.subr.bf16.mxu0 0
    %1215 = vmatpush1.bf16.msra.mxu0 %v974
    %1216 = vmatprep.subr.bf16.mxu0 0
    %1217 = vmatpush1.bf16.msra.mxu0 0
    %1218 = vmatprep.subr.bf16.mxu0 0
    %1219 = vmatpush1.bf16.msra.mxu0 0
    %1220 = vmatprep.subr.bf16.mxu0 0
    %1221 = vmatpush1.bf16.msra.mxu0 0
    %1222 = vmatprep.subr.bf16.mxu0 0
    %1223 = vmatpush1.bf16.msra.mxu0 0
    %1224 = vmatprep.subr.bf16.mxu0 0
    %1225 = vmatpush1.bf16.msra.mxu0 0
    %1226 = vmatprep.subr.bf16.mxu0 0
    %1227 = vmatpush1.bf16.msra.mxu0 0
    %1228 = vmatprep.subr.bf16.mxu0 0
    %1229 = vmatpush1.bf16.msra.mxu0 0
    %1230 = vmatprep.subr.bf16.mxu0 0
    %1231 = vmatpush1.bf16.msra.mxu0 0
    %1232 = vmatprep.subr.bf16.mxu0 0
    %1233 = vmatpush1.bf16.msra.mxu0 0
    %1234 = vmatprep.subr.bf16.mxu0 0
    %1235 = vmatpush1.bf16.msra.mxu0 0
    %1236 = vmatprep.subr.bf16.mxu0 0
    %1237 = vmatpush1.bf16.msra.mxu0 0
    %1238 = vmatprep.subr.bf16.mxu0 0
    %1239 = vmatpush1.bf16.msra.mxu0 0
    %1240 = vmatprep.subr.bf16.mxu0 0
    %1241 = vmatpush1.bf16.msra.mxu0 0
    %1242 = vmatprep.subr.bf16.mxu0 0
    %1243 = vmatpush1.bf16.msra.mxu0 0
    %1244 = vmatprep.mubr.bf16.mxu0 0
    %1245 = vmatmul.mubr.bf16.gmra.mrb[0].mxu0 %v1210
    %v1246 = vpop.f32.mrb[0].mxu0
    %v1247 = vadd.f32 0.0, %v1246
    %v1248 = vpop.f32.mrb[0].mxu0
    %v1249 = vpop.f32.mrb[0].mxu0
    %v1250 = vpop.f32.mrb[0].mxu0
    %1251 = vdwg.mxu0
    %v1252 = vadd.f32 %v941, %v1247
    %v1253 = vxor.u32 %v1252, 2147483648
    %v1254 = vmul.f32 %v1253, 1.442695
    %v1255 = vpow.pop %v1254
    %v1256 = vadd.f32 %v1255, 1.0
    %v1257 = vrcp.pop %v1256
    %v1258 = vmul.f32 1.0, %v1257
    %v1259 = vtanh.pop %v1252
    %v1260 = vmul.f32 %v1258, %v1193
    %1262 = vrot.lane.b32.xlu0 %v1259, 64
    %v1263 = vpop.permute.xlu0 %1262
    %v1265 = vmul.f32 %v1258, %v1263
    %1267 = vrot.lane.b32.xlu0 %v1265, 32
    %v1268 = vpop.permute.xlu0 %1267
    %v1270 = vadd.f32 %v1260, %v1268
    %v1271 = vtanh.pop %v1270
    %1273 = vrot.lane.b32.xlu0 %v1271, 64
    %v1274 = vpop.permute.xlu0 %1273
    %v1276 = vmul.f32 %v1258, %v1274
    %1278 = vrot.lane.b32.xlu0 %v1276, 32
    %v1279 = vpop.permute.xlu0 %1278
    %1281 = vst.msk [vmem:[#allocation4 + $0x18] sm:$0xff] %vm977, %v1279
    %v1282 = vpack.c.bf16 %v1276, %v1276
    %1284 = vrot.lane.b32.xlu0 %v1282, 32
    %v1285 = vpop.permute.xlu0 %1284
    %v1287 = vsel %vm977, %v1285, 0
    %1289 = vmatprep.subr.bf16.mxu0 0
    %1290 = vmatpush1.bf16.msra.mxu0 %v973
    %1291 = vmatprep.subr.bf16.mxu0 0
    %1292 = vmatpush1.bf16.msra.mxu0 %v974
    %1293 = vmatprep.subr.bf16.mxu0 0
    %1294 = vmatpush1.bf16.msra.mxu0 0
    %1295 = vmatprep.subr.bf16.mxu0 0
    %1296 = vmatpush1.bf16.msra.mxu0 0
    %1297 = vmatprep.subr.bf16.mxu0 0
    %1298 = vmatpush1.bf16.msra.mxu0 0
    %1299 = vmatprep.subr.bf16.mxu0 0
    %1300 = vmatpush1.bf16.msra.mxu0 0
    %1301 = vmatprep.subr.bf16.mxu0 0
    %1302 = vmatpush1.bf16.msra.mxu0 0
    %1303 = vmatprep.subr.bf16.mxu0 0
    %1304 = vmatpush1.bf16.msra.mxu0 0
    %1305 = vmatprep.subr.bf16.mxu0 0
    %1306 = vmatpush1.bf16.msra.mxu0 0
    %1307 = vmatprep.subr.bf16.mxu0 0
    %1308 = vmatpush1.bf16.msra.mxu0 0
    %1309 = vmatprep.subr.bf16.mxu0 0
    %1310 = vmatpush1.bf16.msra.mxu0 0
    %1311 = vmatprep.subr.bf16.mxu0 0
    %1312 = vmatpush1.bf16.msra.mxu0 0
    %1313 = vmatprep.subr.bf16.mxu0 0
    %1314 = vmatpush1.bf16.msra.mxu0 0
    %1315 = vmatprep.subr.bf16.mxu0 0
    %1316 = vmatpush1.bf16.msra.mxu0 0
    %1317 = vmatprep.subr.bf16.mxu0 0
    %1318 = vmatpush1.bf16.msra.mxu0 0
    %1319 = vmatprep.subr.bf16.mxu0 0
    %1320 = vmatpush1.bf16.msra.mxu0 0
    %1321 = vmatprep.mubr.bf16.mxu0 0
    %1322 = vmatmul.mubr.bf16.gmra.mrb[0].mxu0 %v1287
    %v1323 = vpop.f32.mrb[0].mxu0
    %v1324 = vadd.f32 0.0, %v1323
    %v1325 = vpop.f32.mrb[0].mxu0
    %v1326 = vpop.f32.mrb[0].mxu0
    %v1327 = vpop.f32.mrb[0].mxu0
    %1328 = vdwg.mxu0
    %v1329 = vadd.f32 %v947, %v1324
    %v1330 = vxor.u32 %v1329, 2147483648
    %v1331 = vmul.f32 %v1330, 1.442695
    %v1332 = vpow.pop %v1331
    %v1333 = vadd.f32 %v1332, 1.0
    %v1334 = vrcp.pop %v1333
    %v1335 = vmul.f32 1.0, %v1334
    %v1336 = vtanh.pop %v1329
    %v1337 = vmul.f32 %v1335, %v1270
    %1339 = vrot.lane.b32.xlu0 %v1336, 64
    %v1340 = vpop.permute.xlu0 %1339
    %v1342 = vmul.f32 %v1335, %v1340
    %1344 = vrot.lane.b32.xlu0 %v1342, 32
    %v1345 = vpop.permute.xlu0 %1344
    %v1347 = vadd.f32 %v1337, %v1345
    %v1348 = vtanh.pop %v1347
    %1350 = vrot.lane.b32.xlu0 %v1348, 64
    %v1351 = vpop.permute.xlu0 %1350
    %v1353 = vmul.f32 %v1335, %v1351
    %1355 = vrot.lane.b32.xlu0 %v1353, 32
    %v1356 = vpop.permute.xlu0 %1355
    %1358 = vst.msk [vmem:[#allocation4 + $0x20] sm:$0xff] %vm977, %v1356
    %v1359 = vpack.c.bf16 %v1353, %v1353
    %1361 = vrot.lane.b32.xlu0 %v1359, 32
    %v1362 = vpop.permute.xlu0 %1361
    %v1364 = vsel %vm977, %v1362, 0
    %1366 = vmatprep.subr.bf16.mxu0 0
    %1367 = vmatpush1.bf16.msra.mxu0 %v973
    %1368 = vmatprep.subr.bf16.mxu0 0
    %1369 = vmatpush1.bf16.msra.mxu0 %v974
    %1370 = vmatprep.subr.bf16.mxu0 0
    %1371 = vmatpush1.bf16.msra.mxu0 0
    %1372 = vmatprep.subr.bf16.mxu0 0
    %1373 = vmatpush1.bf16.msra.mxu0 0
    %1374 = vmatprep.subr.bf16.mxu0 0
    %1375 = vmatpush1.bf16.msra.mxu0 0
    %1376 = vmatprep.subr.bf16.mxu0 0
    %1377 = vmatpush1.bf16.msra.mxu0 0
    %1378 = vmatprep.subr.bf16.mxu0 0
    %1379 = vmatpush1.bf16.msra.mxu0 0
    %1380 = vmatprep.subr.bf16.mxu0 0
    %1381 = vmatpush1.bf16.msra.mxu0 0
    %1382 = vmatprep.subr.bf16.mxu0 0
    %1383 = vmatpush1.bf16.msra.mxu0 0
    %1384 = vmatprep.subr.bf16.mxu0 0
    %1385 = vmatpush1.bf16.msra.mxu0 0
    %1386 = vmatprep.subr.bf16.mxu0 0
    %1387 = vmatpush1.bf16.msra.mxu0 0
    %1388 = vmatprep.subr.bf16.mxu0 0
    %1389 = vmatpush1.bf16.msra.mxu0 0
    %1390 = vmatprep.subr.bf16.mxu0 0
    %1391 = vmatpush1.bf16.msra.mxu0 0
    %1392 = vmatprep.subr.bf16.mxu0 0
    %1393 = vmatpush1.bf16.msra.mxu0 0
    %1394 = vmatprep.subr.bf16.mxu0 0
    %1395 = vmatpush1.bf16.msra.mxu0 0
    %1396 = vmatprep.subr.bf16.mxu0 0
    %1397 = vmatpush1.bf16.msra.mxu0 0
    %1398 = vmatprep.mubr.bf16.mxu0 0
    %1399 = vmatmul.mubr.bf16.gmra.mrb[0].mxu0 %v1364
    %v1400 = vpop.f32.mrb[0].mxu0
    %v1401 = vadd.f32 0.0, %v1400
    %v1402 = vpop.f32.mrb[0].mxu0
    %v1403 = vpop.f32.mrb[0].mxu0
    %v1404 = vpop.f32.mrb[0].mxu0
    %1405 = vdwg.mxu0
    %v1406 = vadd.f32 %v951, %v1401
    %v1407 = vxor.u32 %v1406, 2147483648
    %v1408 = vmul.f32 %v1407, 1.442695
    %v1409 = vpow.pop %v1408
    %v1410 = vadd.f32 %v1409, 1.0
    %v1411 = vrcp.pop %v1410
    %v1412 = vmul.f32 1.0, %v1411
    %v1413 = vtanh.pop %v1406
    %v1414 = vmul.f32 %v1412, %v1347
    %1416 = vrot.lane.b32.xlu0 %v1413, 64
    %v1417 = vpop.permute.xlu0 %1416
    %v1419 = vmul.f32 %v1412, %v1417
    %1421 = vrot.lane.b32.xlu0 %v1419, 32
    %v1422 = vpop.permute.xlu0 %1421
    %v1424 = vadd.f32 %v1414, %v1422
    %v1425 = vtanh.pop %v1424
    %1427 = vrot.lane.b32.xlu0 %v1425, 64
    %v1428 = vpop.permute.xlu0 %1427
    %v1430 = vmul.f32 %v1412, %v1428
    %1432 = vrot.lane.b32.xlu0 %v1430, 32
    %v1433 = vpop.permute.xlu0 %1432
    %1435 = vst.msk [vmem:[#allocation4 + $0x28] sm:$0xff] %vm977, %v1433
    %v1436 = vpack.c.bf16 %v1430, %v1430
    %1438 = vrot.lane.b32.xlu0 %v1436, 32
    %v1439 = vpop.permute.xlu0 %1438
    %v1441 = vsel %vm977, %v1439, 0
    %1443 = vmatprep.subr.bf16.mxu0 0
    %1444 = vmatpush1.bf16.msra.mxu0 %v973
    %1445 = vmatprep.subr.bf16.mxu0 0
    %1446 = vmatpush1.bf16.msra.mxu0 %v974
    %1447 = vmatprep.subr.bf16.mxu0 0
    %1448 = vmatpush1.bf16.msra.mxu0 0
    %1449 = vmatprep.subr.bf16.mxu0 0
    %1450 = vmatpush1.bf16.msra.mxu0 0
    %1451 = vmatprep.subr.bf16.mxu0 0
    %1452 = vmatpush1.bf16.msra.mxu0 0
    %1453 = vmatprep.subr.bf16.mxu0 0
    %1454 = vmatpush1.bf16.msra.mxu0 0
    %1455 = vmatprep.subr.bf16.mxu0 0
    %1456 = vmatpush1.bf16.msra.mxu0 0
    %1457 = vmatprep.subr.bf16.mxu0 0
    %1458 = vmatpush1.bf16.msra.mxu0 0
    %1459 = vmatprep.subr.bf16.mxu0 0
    %1460 = vmatpush1.bf16.msra.mxu0 0
    %1461 = vmatprep.subr.bf16.mxu0 0
    %1462 = vmatpush1.bf16.msra.mxu0 0
    %1463 = vmatprep.subr.bf16.mxu0 0
    %1464 = vmatpush1.bf16.msra.mxu0 0
    %1465 = vmatprep.subr.bf16.mxu0 0
    %1466 = vmatpush1.bf16.msra.mxu0 0
    %1467 = vmatprep.subr.bf16.mxu0 0
    %1468 = vmatpush1.bf16.msra.mxu0 0
    %1469 = vmatprep.subr.bf16.mxu0 0
    %1470 = vmatpush1.bf16.msra.mxu0 0
    %1471 = vmatprep.subr.bf16.mxu0 0
    %1472 = vmatpush1.bf16.msra.mxu0 0
    %1473 = vmatprep.subr.bf16.mxu0 0
    %1474 = vmatpush1.bf16.msra.mxu0 0
    %1475 = vmatprep.mubr.bf16.mxu0 0
    %1476 = vmatmul.mubr.bf16.gmra.mrb[0].mxu0 %v1441
    %v1477 = vpop.f32.mrb[0].mxu0
    %v1478 = vadd.f32 0.0, %v1477
    %v1479 = vpop.f32.mrb[0].mxu0
    %v1480 = vpop.f32.mrb[0].mxu0
    %v1481 = vpop.f32.mrb[0].mxu0
    %1482 = vdwg.mxu0
    %v1483 = vadd.f32 %v957, %v1478
    %v1484 = vxor.u32 %v1483, 2147483648
    %v1485 = vmul.f32 %v1484, 1.442695
    %v1486 = vpow.pop %v1485
    %v1487 = vadd.f32 %v1486, 1.0
    %v1488 = vrcp.pop %v1487
    %v1489 = vmul.f32 1.0, %v1488
    %v1490 = vtanh.pop %v1483
    %v1491 = vmul.f32 %v1489, %v1424
    %1493 = vrot.lane.b32.xlu0 %v1490, 64
    %v1494 = vpop.permute.xlu0 %1493
    %v1496 = vmul.f32 %v1489, %v1494
    %1498 = vrot.lane.b32.xlu0 %v1496, 32
    %v1499 = vpop.permute.xlu0 %1498
    %v1501 = vadd.f32 %v1491, %v1499
    %v1502 = vtanh.pop %v1501
    %1504 = vrot.lane.b32.xlu0 %v1502, 64
    %v1505 = vpop.permute.xlu0 %1504
    %v1507 = vmul.f32 %v1489, %v1505
    %1509 = vrot.lane.b32.xlu0 %v1507, 32
    %v1510 = vpop.permute.xlu0 %1509
    %1512 = vst.msk [vmem:[#allocation4 + $0x30] sm:$0xff] %vm977, %v1510
    %v1513 = vpack.c.bf16 %v1507, %v1507
    %1515 = vrot.lane.b32.xlu0 %v1513, 32
    %v1516 = vpop.permute.xlu0 %1515
    %v1518 = vsel %vm977, %v1516, 0
    %1520 = vmatprep.subr.bf16.mxu0 0
    %1521 = vmatpush1.bf16.msra.mxu0 %v973
    %1522 = vmatprep.subr.bf16.mxu0 0
    %1523 = vmatpush1.bf16.msra.mxu0 %v974
    %1524 = vmatprep.subr.bf16.mxu0 0
    %1525 = vmatpush1.bf16.msra.mxu0 0
    %1526 = vmatprep.subr.bf16.mxu0 0
    %1527 = vmatpush1.bf16.msra.mxu0 0
    %1528 = vmatprep.subr.bf16.mxu0 0
    %1529 = vmatpush1.bf16.msra.mxu0 0
    %1530 = vmatprep.subr.bf16.mxu0 0
    %1531 = vmatpush1.bf16.msra.mxu0 0
    %1532 = vmatprep.subr.bf16.mxu0 0
    %1533 = vmatpush1.bf16.msra.mxu0 0
    %1534 = vmatprep.subr.bf16.mxu0 0
    %1535 = vmatpush1.bf16.msra.mxu0 0
    %1536 = vmatprep.subr.bf16.mxu0 0
    %1537 = vmatpush1.bf16.msra.mxu0 0
    %1538 = vmatprep.subr.bf16.mxu0 0
    %1539 = vmatpush1.bf16.msra.mxu0 0
    %1540 = vmatprep.subr.bf16.mxu0 0
    %1541 = vmatpush1.bf16.msra.mxu0 0
    %1542 = vmatprep.subr.bf16.mxu0 0
    %1543 = vmatpush1.bf16.msra.mxu0 0
    %1544 = vmatprep.subr.bf16.mxu0 0
    %1545 = vmatpush1.bf16.msra.mxu0 0
    %1546 = vmatprep.subr.bf16.mxu0 0
    %1547 = vmatpush1.bf16.msra.mxu0 0
    %1548 = vmatprep.subr.bf16.mxu0 0
    %1549 = vmatpush1.bf16.msra.mxu0 0
    %1550 = vmatprep.subr.bf16.mxu0 0
    %1551 = vmatpush1.bf16.msra.mxu0 0
    %1552 = vmatprep.mubr.bf16.mxu0 0
    %1553 = vmatmul.mubr.bf16.gmra.mrb[0].mxu0 %v1518
    %v1554 = vpop.f32.mrb[0].mxu0
    %v1555 = vadd.f32 0.0, %v1554
    %v1556 = vpop.f32.mrb[0].mxu0
    %v1557 = vpop.f32.mrb[0].mxu0
    %v1558 = vpop.f32.mrb[0].mxu0
    %1559 = vdwg.mxu0
    %v1560 = vadd.f32 %v961, %v1555
    %v1561 = vxor.u32 %v1560, 2147483648
    %v1562 = vmul.f32 %v1561, 1.442695
    %v1563 = vpow.pop %v1562
    %v1564 = vadd.f32 %v1563, 1.0
    %v1565 = vrcp.pop %v1564
    %v1566 = vmul.f32 1.0, %v1565
    %v1567 = vtanh.pop %v1560
    %v1568 = vmul.f32 %v1566, %v1501
    %1570 = vrot.lane.b32.xlu0 %v1567, 64
    %v1571 = vpop.permute.xlu0 %1570
    %v1573 = vmul.f32 %v1566, %v1571
    %1575 = vrot.lane.b32.xlu0 %v1573, 32
    %v1576 = vpop.permute.xlu0 %1575
    %v1578 = vadd.f32 %v1568, %v1576
    %v1579 = vtanh.pop %v1578
    %1581 = vrot.lane.b32.xlu0 %v1579, 64
    %v1582 = vpop.permute.xlu0 %1581
    %v1584 = vmul.f32 %v1566, %v1582
    %1586 = vrot.lane.b32.xlu0 %v1584, 32
    %v1587 = vpop.permute.xlu0 %1586
    %1589 = vst.msk [vmem:[#allocation4 + $0x38] sm:$0xff] %vm977, %v1587
    %v1594 = vunpack.c.l.b16 %v782
    %v1595 = vunpack.c.l.b16 %v783
    %v1596 = vunpack.c.l.b16 %v784
    %v1597 = vunpack.c.l.b16 %v785
    %v1598 = vpack.c.b16 %v1595, %v1594
    %v1599 = vpack.c.b16 %v1597, %v1596
    %1602 = vmatprep.subr.bf16.mxu0 0
    %1603 = vmatpush1.bf16.msra.mxu0 %v1598
    %1604 = vmatprep.subr.bf16.mxu0 0
    %1605 = vmatpush1.bf16.msra.mxu0 %v1599
    %1606 = vmatprep.subr.bf16.mxu0 0
    %1607 = vmatpush1.bf16.msra.mxu0 0
    %1608 = vmatprep.subr.bf16.mxu0 0
    %1609 = vmatpush1.bf16.msra.mxu0 0
    %1610 = vmatprep.subr.bf16.mxu0 0
    %1611 = vmatpush1.bf16.msra.mxu0 0
    %1612 = vmatprep.subr.bf16.mxu0 0
    %1613 = vmatpush1.bf16.msra.mxu0 0
    %1614 = vmatprep.subr.bf16.mxu0 0
    %1615 = vmatpush1.bf16.msra.mxu0 0
    %1616 = vmatprep.subr.bf16.mxu0 0
    %1617 = vmatpush1.bf16.msra.mxu0 0
    %1618 = vmatprep.subr.bf16.mxu0 0
    %1619 = vmatpush1.bf16.msra.mxu0 0
    %1620 = vmatprep.subr.bf16.mxu0 0
    %1621 = vmatpush1.bf16.msra.mxu0 0
    %1622 = vmatprep.subr.bf16.mxu0 0
    %1623 = vmatpush1.bf16.msra.mxu0 0
    %1624 = vmatprep.subr.bf16.mxu0 0
    %1625 = vmatpush1.bf16.msra.mxu0 0
    %1626 = vmatprep.subr.bf16.mxu0 0
    %1627 = vmatpush1.bf16.msra.mxu0 0
    %1628 = vmatprep.subr.bf16.mxu0 0
    %1629 = vmatpush1.bf16.msra.mxu0 0
    %1630 = vmatprep.subr.bf16.mxu0 0
    %1631 = vmatpush1.bf16.msra.mxu0 0
    %1632 = vmatprep.subr.bf16.mxu0 0
    %1633 = vmatpush1.bf16.msra.mxu0 0
    %1634 = vmatprep.mubr.bf16.mxu0 0
    %1635 = vmatmul.mubr.bf16.gmra.mrb[0].mxu0 %v979
    %v1636 = vpop.f32.mrb[0].mxu0
    %v1637 = vadd.f32 0.0, %v1636
    %v1638 = vpop.f32.mrb[0].mxu0
    %v1639 = vpop.f32.mrb[0].mxu0
    %v1640 = vpop.f32.mrb[0].mxu0
    %1641 = vdwg.mxu0
    %v1642 = vadd.f32 %v963, %v1637
    %v1643 = vxor.u32 %v1642, 2147483648
    %v1644 = vmul.f32 %v1643, 1.442695
    %v1645 = vpow.pop %v1644
    %v1646 = vadd.f32 %v1645, 1.0
    %v1647 = vrcp.pop %v1646
    %v1648 = vmul.f32 1.0, %v1647
    %v1649 = vtanh.pop %v1642
    %v1650 = vmul.f32 %v1648, 0.0
    %1652 = vrot.lane.b32.xlu0 %v1649, 64
    %v1653 = vpop.permute.xlu0 %1652
    %v1655 = vmul.f32 %v1648, %v1653
    %1657 = vrot.lane.b32.xlu0 %v1655, 32
    %v1658 = vpop.permute.xlu0 %1657
    %v1660 = vadd.f32 %v1650, %v1658
    %v1661 = vtanh.pop %v1660
    %1663 = vrot.lane.b32.xlu0 %v1661, 64
    %v1664 = vpop.permute.xlu0 %1663
    %v1666 = vmul.f32 %v1648, %v1664
    %1668 = vrot.lane.b32.xlu0 %v1666, 32
    %v1669 = vpop.permute.xlu0 %1668
    %1671 = vst.msk [vmem:[#allocation5 + $0x38] sm:$0xff] %vm977, %v1669
    %v1672 = vpack.c.bf16 %v1666, %v1666
    %1674 = vrot.lane.b32.xlu0 %v1672, 32
    %v1675 = vpop.permute.xlu0 %1674
    %v1677 = vsel %vm977, %v1675, 0
    %1679 = vmatprep.subr.bf16.mxu0 0
    %1680 = vmatpush1.bf16.msra.mxu0 %v1598
    %1681 = vmatprep.subr.bf16.mxu0 0
    %1682 = vmatpush1.bf16.msra.mxu0 %v1599
    %1683 = vmatprep.subr.bf16.mxu0 0
    %1684 = vmatpush1.bf16.msra.mxu0 0
    %1685 = vmatprep.subr.bf16.mxu0 0
    %1686 = vmatpush1.bf16.msra.mxu0 0
    %1687 = vmatprep.subr.bf16.mxu0 0
    %1688 = vmatpush1.bf16.msra.mxu0 0
    %1689 = vmatprep.subr.bf16.mxu0 0
    %1690 = vmatpush1.bf16.msra.mxu0 0
    %1691 = vmatprep.subr.bf16.mxu0 0
    %1692 = vmatpush1.bf16.msra.mxu0 0
    %1693 = vmatprep.subr.bf16.mxu0 0
    %1694 = vmatpush1.bf16.msra.mxu0 0
    %1695 = vmatprep.subr.bf16.mxu0 0
    %1696 = vmatpush1.bf16.msra.mxu0 0
    %1697 = vmatprep.subr.bf16.mxu0 0
    %1698 = vmatpush1.bf16.msra.mxu0 0
    %1699 = vmatprep.subr.bf16.mxu0 0
    %1700 = vmatpush1.bf16.msra.mxu0 0
    %1701 = vmatprep.subr.bf16.mxu0 0
    %1702 = vmatpush1.bf16.msra.mxu0 0
    %1703 = vmatprep.subr.bf16.mxu0 0
    %1704 = vmatpush1.bf16.msra.mxu0 0
    %1705 = vmatprep.subr.bf16.mxu0 0
    %1706 = vmatpush1.bf16.msra.mxu0 0
    %1707 = vmatprep.subr.bf16.mxu0 0
    %1708 = vmatpush1.bf16.msra.mxu0 0
    %1709 = vmatprep.subr.bf16.mxu0 0
    %1710 = vmatpush1.bf16.msra.mxu0 0
    %1711 = vmatprep.mubr.bf16.mxu0 0
    %1712 = vmatmul.mubr.bf16.gmra.mrb[0].mxu0 %v1677
    %v1713 = vpop.f32.mrb[0].mxu0
    %v1714 = vadd.f32 0.0, %v1713
    %v1715 = vpop.f32.mrb[0].mxu0
    %v1716 = vpop.f32.mrb[0].mxu0
    %v1717 = vpop.f32.mrb[0].mxu0
    %1718 = vdwg.mxu0
    %v1719 = vadd.f32 %v959, %v1714
    %v1720 = vxor.u32 %v1719, 2147483648
    %v1721 = vmul.f32 %v1720, 1.442695
    %v1722 = vpow.pop %v1721
    %v1723 = vadd.f32 %v1722, 1.0
    %v1724 = vrcp.pop %v1723
    %v1725 = vmul.f32 1.0, %v1724
    %v1726 = vtanh.pop %v1719
    %v1727 = vmul.f32 %v1725, %v1660
    %1729 = vrot.lane.b32.xlu0 %v1726, 64
    %v1730 = vpop.permute.xlu0 %1729
    %v1732 = vmul.f32 %v1725, %v1730
    %1734 = vrot.lane.b32.xlu0 %v1732, 32
    %v1735 = vpop.permute.xlu0 %1734
    %v1737 = vadd.f32 %v1727, %v1735
    %v1738 = vtanh.pop %v1737
    %1740 = vrot.lane.b32.xlu0 %v1738, 64
    %v1741 = vpop.permute.xlu0 %1740
    %v1743 = vmul.f32 %v1725, %v1741
    %1745 = vrot.lane.b32.xlu0 %v1743, 32
    %v1746 = vpop.permute.xlu0 %1745
    %1748 = vst.msk [vmem:[#allocation5 + $0x30] sm:$0xff] %vm977, %v1746
    %v1749 = vpack.c.bf16 %v1743, %v1743
    %1751 = vrot.lane.b32.xlu0 %v1749, 32
    %v1752 = vpop.permute.xlu0 %1751
    %v1754 = vsel %vm977, %v1752, 0
    %1756 = vmatprep.subr.bf16.mxu0 0
    %1757 = vmatpush1.bf16.msra.mxu0 %v1598
    %1758 = vmatprep.subr.bf16.mxu0 0
    %1759 = vmatpush1.bf16.msra.mxu0 %v1599
    %1760 = vmatprep.subr.bf16.mxu0 0
    %1761 = vmatpush1.bf16.msra.mxu0 0
    %1762 = vmatprep.subr.bf16.mxu0 0
    %1763 = vmatpush1.bf16.msra.mxu0 0
    %1764 = vmatprep.subr.bf16.mxu0 0
    %1765 = vmatpush1.bf16.msra.mxu0 0
    %1766 = vmatprep.subr.bf16.mxu0 0
    %1767 = vmatpush1.bf16.msra.mxu0 0
    %1768 = vmatprep.subr.bf16.mxu0 0
    %1769 = vmatpush1.bf16.msra.mxu0 0
    %1770 = vmatprep.subr.bf16.mxu0 0
    %1771 = vmatpush1.bf16.msra.mxu0 0
    %1772 = vmatprep.subr.bf16.mxu0 0
    %1773 = vmatpush1.bf16.msra.mxu0 0
    %1774 = vmatprep.subr.bf16.mxu0 0
    %1775 = vmatpush1.bf16.msra.mxu0 0
    %1776 = vmatprep.subr.bf16.mxu0 0
    %1777 = vmatpush1.bf16.msra.mxu0 0
    %1778 = vmatprep.subr.bf16.mxu0 0
    %1779 = vmatpush1.bf16.msra.mxu0 0
    %1780 = vmatprep.subr.bf16.mxu0 0
    %1781 = vmatpush1.bf16.msra.mxu0 0
    %1782 = vmatprep.subr.bf16.mxu0 0
    %1783 = vmatpush1.bf16.msra.mxu0 0
    %1784 = vmatprep.subr.bf16.mxu0 0
    %1785 = vmatpush1.bf16.msra.mxu0 0
    %1786 = vmatprep.subr.bf16.mxu0 0
    %1787 = vmatpush1.bf16.msra.mxu0 0
    %1788 = vmatprep.mubr.bf16.mxu0 0
    %1789 = vmatmul.mubr.bf16.gmra.mrb[0].mxu0 %v1754
    %v1790 = vpop.f32.mrb[0].mxu0
    %v1791 = vadd.f32 0.0, %v1790
    %v1792 = vpop.f32.mrb[0].mxu0
    %v1793 = vpop.f32.mrb[0].mxu0
    %v1794 = vpop.f32.mrb[0].mxu0
    %1795 = vdwg.mxu0
    %v1796 = vadd.f32 %v953, %v1791
    %v1797 = vxor.u32 %v1796, 2147483648
    %v1798 = vmul.f32 %v1797, 1.442695
    %v1799 = vpow.pop %v1798
    %v1800 = vadd.f32 %v1799, 1.0
    %v1801 = vrcp.pop %v1800
    %v1802 = vmul.f32 1.0, %v1801
    %v1803 = vtanh.pop %v1796
    %v1804 = vmul.f32 %v1802, %v1737
    %1806 = vrot.lane.b32.xlu0 %v1803, 64
    %v1807 = vpop.permute.xlu0 %1806
    %v1809 = vmul.f32 %v1802, %v1807
    %1811 = vrot.lane.b32.xlu0 %v1809, 32
    %v1812 = vpop.permute.xlu0 %1811
    %v1814 = vadd.f32 %v1804, %v1812
    %v1815 = vtanh.pop %v1814
    %1817 = vrot.lane.b32.xlu0 %v1815, 64
    %v1818 = vpop.permute.xlu0 %1817
    %v1820 = vmul.f32 %v1802, %v1818
    %1822 = vrot.lane.b32.xlu0 %v1820, 32
    %v1823 = vpop.permute.xlu0 %1822
    %1825 = vst.msk [vmem:[#allocation5 + $0x28] sm:$0xff] %vm977, %v1823
    %v1826 = vpack.c.bf16 %v1820, %v1820
    %1828 = vrot.lane.b32.xlu0 %v1826, 32
    %v1829 = vpop.permute.xlu0 %1828
    %v1831 = vsel %vm977, %v1829, 0
    %1833 = vmatprep.subr.bf16.mxu0 0
    %1834 = vmatpush1.bf16.msra.mxu0 %v1598
    %1835 = vmatprep.subr.bf16.mxu0 0
    %1836 = vmatpush1.bf16.msra.mxu0 %v1599
    %1837 = vmatprep.subr.bf16.mxu0 0
    %1838 = vmatpush1.bf16.msra.mxu0 0
    %1839 = vmatprep.subr.bf16.mxu0 0
    %1840 = vmatpush1.bf16.msra.mxu0 0
    %1841 = vmatprep.subr.bf16.mxu0 0
    %1842 = vmatpush1.bf16.msra.mxu0 0
    %1843 = vmatprep.subr.bf16.mxu0 0
    %1844 = vmatpush1.bf16.msra.mxu0 0
    %1845 = vmatprep.subr.bf16.mxu0 0
    %1846 = vmatpush1.bf16.msra.mxu0 0
    %1847 = vmatprep.subr.bf16.mxu0 0
    %1848 = vmatpush1.bf16.msra.mxu0 0
    %1849 = vmatprep.subr.bf16.mxu0 0
    %1850 = vmatpush1.bf16.msra.mxu0 0
    %1851 = vmatprep.subr.bf16.mxu0 0
    %1852 = vmatpush1.bf16.msra.mxu0 0
    %1853 = vmatprep.subr.bf16.mxu0 0
    %1854 = vmatpush1.bf16.msra.mxu0 0
    %1855 = vmatprep.subr.bf16.mxu0 0
    %1856 = vmatpush1.bf16.msra.mxu0 0
    %1857 = vmatprep.subr.bf16.mxu0 0
    %1858 = vmatpush1.bf16.msra.mxu0 0
    %1859 = vmatprep.subr.bf16.mxu0 0
    %1860 = vmatpush1.bf16.msra.mxu0 0
    %1861 = vmatprep.subr.bf16.mxu0 0
    %1862 = vmatpush1.bf16.msra.mxu0 0
    %1863 = vmatprep.subr.bf16.mxu0 0
    %1864 = vmatpush1.bf16.msra.mxu0 0
    %1865 = vmatprep.mubr.bf16.mxu0 0
    %1866 = vmatmul.mubr.bf16.gmra.mrb[0].mxu0 %v1831
    %v1867 = vpop.f32.mrb[0].mxu0
    %v1868 = vadd.f32 0.0, %v1867
    %v1869 = vpop.f32.mrb[0].mxu0
    %v1870 = vpop.f32.mrb[0].mxu0
    %v1871 = vpop.f32.mrb[0].mxu0
    %1872 = vdwg.mxu0
    %v1873 = vadd.f32 %v949, %v1868
    %v1874 = vxor.u32 %v1873, 2147483648
    %v1875 = vmul.f32 %v1874, 1.442695
    %v1876 = vpow.pop %v1875
    %v1877 = vadd.f32 %v1876, 1.0
    %v1878 = vrcp.pop %v1877
    %v1879 = vmul.f32 1.0, %v1878
    %v1880 = vtanh.pop %v1873
    %v1881 = vmul.f32 %v1879, %v1814
    %1883 = vrot.lane.b32.xlu0 %v1880, 64
    %v1884 = vpop.permute.xlu0 %1883
    %v1886 = vmul.f32 %v1879, %v1884
    %1888 = vrot.lane.b32.xlu0 %v1886, 32
    %v1889 = vpop.permute.xlu0 %1888
    %v1891 = vadd.f32 %v1881, %v1889
    %v1892 = vtanh.pop %v1891
    %1894 = vrot.lane.b32.xlu0 %v1892, 64
    %v1895 = vpop.permute.xlu0 %1894
    %v1897 = vmul.f32 %v1879, %v1895
    %1899 = vrot.lane.b32.xlu0 %v1897, 32
    %v1900 = vpop.permute.xlu0 %1899
    %1902 = vst.msk [vmem:[#allocation5 + $0x20] sm:$0xff] %vm977, %v1900
    %v1903 = vpack.c.bf16 %v1897, %v1897
    %1905 = vrot.lane.b32.xlu0 %v1903, 32
    %v1906 = vpop.permute.xlu0 %1905
    %v1908 = vsel %vm977, %v1906, 0
    %1910 = vmatprep.subr.bf16.mxu0 0
    %1911 = vmatpush1.bf16.msra.mxu0 %v1598
    %1912 = vmatprep.subr.bf16.mxu0 0
    %1913 = vmatpush1.bf16.msra.mxu0 %v1599
    %1914 = vmatprep.subr.bf16.mxu0 0
    %1915 = vmatpush1.bf16.msra.mxu0 0
    %1916 = vmatprep.subr.bf16.mxu0 0
    %1917 = vmatpush1.bf16.msra.mxu0 0
    %1918 = vmatprep.subr.bf16.mxu0 0
    %1919 = vmatpush1.bf16.msra.mxu0 0
    %1920 = vmatprep.subr.bf16.mxu0 0
    %1921 = vmatpush1.bf16.msra.mxu0 0
    %1922 = vmatprep.subr.bf16.mxu0 0
    %1923 = vmatpush1.bf16.msra.mxu0 0
    %1924 = vmatprep.subr.bf16.mxu0 0
    %1925 = vmatpush1.bf16.msra.mxu0 0
    %1926 = vmatprep.subr.bf16.mxu0 0
    %1927 = vmatpush1.bf16.msra.mxu0 0
    %1928 = vmatprep.subr.bf16.mxu0 0
    %1929 = vmatpush1.bf16.msra.mxu0 0
    %1930 = vmatprep.subr.bf16.mxu0 0
    %1931 = vmatpush1.bf16.msra.mxu0 0
    %1932 = vmatprep.subr.bf16.mxu0 0
    %1933 = vmatpush1.bf16.msra.mxu0 0
    %1934 = vmatprep.subr.bf16.mxu0 0
    %1935 = vmatpush1.bf16.msra.mxu0 0
    %1936 = vmatprep.subr.bf16.mxu0 0
    %1937 = vmatpush1.bf16.msra.mxu0 0
    %1938 = vmatprep.subr.bf16.mxu0 0
    %1939 = vmatpush1.bf16.msra.mxu0 0
    %1940 = vmatprep.subr.bf16.mxu0 0
    %1941 = vmatpush1.bf16.msra.mxu0 0
    %1942 = vmatprep.mubr.bf16.mxu0 0
    %1943 = vmatmul.mubr.bf16.gmra.mrb[0].mxu0 %v1908
    %v1944 = vpop.f32.mrb[0].mxu0
    %v1945 = vadd.f32 0.0, %v1944
    %v1946 = vpop.f32.mrb[0].mxu0
    %v1947 = vpop.f32.mrb[0].mxu0
    %v1948 = vpop.f32.mrb[0].mxu0
    %1949 = vdwg.mxu0
    %v1950 = vadd.f32 %v943, %v1945
    %v1951 = vxor.u32 %v1950, 2147483648
    %v1952 = vmul.f32 %v1951, 1.442695
    %v1953 = vpow.pop %v1952
    %v1954 = vadd.f32 %v1953, 1.0
    %v1955 = vrcp.pop %v1954
    %v1956 = vmul.f32 1.0, %v1955
    %v1957 = vtanh.pop %v1950
    %v1958 = vmul.f32 %v1956, %v1891
    %1960 = vrot.lane.b32.xlu0 %v1957, 64
    %v1961 = vpop.permute.xlu0 %1960
    %v1963 = vmul.f32 %v1956, %v1961
    %1965 = vrot.lane.b32.xlu0 %v1963, 32
    %v1966 = vpop.permute.xlu0 %1965
    %v1968 = vadd.f32 %v1958, %v1966
    %v1969 = vtanh.pop %v1968
    %1971 = vrot.lane.b32.xlu0 %v1969, 64
    %v1972 = vpop.permute.xlu0 %1971
    %v1974 = vmul.f32 %v1956, %v1972
    %1976 = vrot.lane.b32.xlu0 %v1974, 32
    %v1977 = vpop.permute.xlu0 %1976
    %1979 = vst.msk [vmem:[#allocation5 + $0x18] sm:$0xff] %vm977, %v1977
    %v1980 = vpack.c.bf16 %v1974, %v1974
    %1982 = vrot.lane.b32.xlu0 %v1980, 32
    %v1983 = vpop.permute.xlu0 %1982
    %v1985 = vsel %vm977, %v1983, 0
    %1987 = vmatprep.subr.bf16.mxu0 0
    %1988 = vmatpush1.bf16.msra.mxu0 %v1598
    %1989 = vmatprep.subr.bf16.mxu0 0
    %1990 = vmatpush1.bf16.msra.mxu0 %v1599
    %1991 = vmatprep.subr.bf16.mxu0 0
    %1992 = vmatpush1.bf16.msra.mxu0 0
    %1993 = vmatprep.subr.bf16.mxu0 0
    %1994 = vmatpush1.bf16.msra.mxu0 0
    %1995 = vmatprep.subr.bf16.mxu0 0
    %1996 = vmatpush1.bf16.msra.mxu0 0
    %1997 = vmatprep.subr.bf16.mxu0 0
    %1998 = vmatpush1.bf16.msra.mxu0 0
    %1999 = vmatprep.subr.bf16.mxu0 0
    %2000 = vmatpush1.bf16.msra.mxu0 0
    %2001 = vmatprep.subr.bf16.mxu0 0
    %2002 = vmatpush1.bf16.msra.mxu0 0
    %2003 = vmatprep.subr.bf16.mxu0 0
    %2004 = vmatpush1.bf16.msra.mxu0 0
    %2005 = vmatprep.subr.bf16.mxu0 0
    %2006 = vmatpush1.bf16.msra.mxu0 0
    %2007 = vmatprep.subr.bf16.mxu0 0
    %2008 = vmatpush1.bf16.msra.mxu0 0
    %2009 = vmatprep.subr.bf16.mxu0 0
    %2010 = vmatpush1.bf16.msra.mxu0 0
    %2011 = vmatprep.subr.bf16.mxu0 0
    %2012 = vmatpush1.bf16.msra.mxu0 0
    %2013 = vmatprep.subr.bf16.mxu0 0
    %2014 = vmatpush1.bf16.msra.mxu0 0
    %2015 = vmatprep.subr.bf16.mxu0 0
    %2016 = vmatpush1.bf16.msra.mxu0 0
    %2017 = vmatprep.subr.bf16.mxu0 0
    %2018 = vmatpush1.bf16.msra.mxu0 0
    %2019 = vmatprep.mubr.bf16.mxu0 0
    %2020 = vmatmul.mubr.bf16.gmra.mrb[0].mxu0 %v1985
    %v2021 = vpop.f32.mrb[0].mxu0
    %v2022 = vadd.f32 0.0, %v2021
    %v2023 = vpop.f32.mrb[0].mxu0
    %v2024 = vpop.f32.mrb[0].mxu0
    %v2025 = vpop.f32.mrb[0].mxu0
    %2026 = vdwg.mxu0
    %v2027 = vadd.f32 %v939, %v2022
    %v2028 = vxor.u32 %v2027, 2147483648
    %v2029 = vmul.f32 %v2028, 1.442695
    %v2030 = vpow.pop %v2029
    %v2031 = vadd.f32 %v2030, 1.0
    %v2032 = vrcp.pop %v2031
    %v2033 = vmul.f32 1.0, %v2032
    %v2034 = vtanh.pop %v2027
    %v2035 = vmul.f32 %v2033, %v1968
    %2037 = vrot.lane.b32.xlu0 %v2034, 64
    %v2038 = vpop.permute.xlu0 %2037
    %v2040 = vmul.f32 %v2033, %v2038
    %2042 = vrot.lane.b32.xlu0 %v2040, 32
    %v2043 = vpop.permute.xlu0 %2042
    %v2045 = vadd.f32 %v2035, %v2043
    %v2046 = vtanh.pop %v2045
    %2048 = vrot.lane.b32.xlu0 %v2046, 64
    %v2049 = vpop.permute.xlu0 %2048
    %v2051 = vmul.f32 %v2033, %v2049
    %2053 = vrot.lane.b32.xlu0 %v2051, 32
    %v2054 = vpop.permute.xlu0 %2053
    %2056 = vst.msk [vmem:[#allocation5 + $0x10] sm:$0xff] %vm977, %v2054
    %v2057 = vpack.c.bf16 %v2051, %v2051
    %2059 = vrot.lane.b32.xlu0 %v2057, 32
    %v2060 = vpop.permute.xlu0 %2059
    %v2062 = vsel %vm977, %v2060, 0
    %2064 = vmatprep.subr.bf16.mxu0 0
    %2065 = vmatpush1.bf16.msra.mxu0 %v1598
    %2066 = vmatprep.subr.bf16.mxu0 0
    %2067 = vmatpush1.bf16.msra.mxu0 %v1599
    %2068 = vmatprep.subr.bf16.mxu0 0
    %2069 = vmatpush1.bf16.msra.mxu0 0
    %2070 = vmatprep.subr.bf16.mxu0 0
    %2071 = vmatpush1.bf16.msra.mxu0 0
    %2072 = vmatprep.subr.bf16.mxu0 0
    %2073 = vmatpush1.bf16.msra.mxu0 0
    %2074 = vmatprep.subr.bf16.mxu0 0
    %2075 = vmatpush1.bf16.msra.mxu0 0
    %2076 = vmatprep.subr.bf16.mxu0 0
    %2077 = vmatpush1.bf16.msra.mxu0 0
    %2078 = vmatprep.subr.bf16.mxu0 0
    %2079 = vmatpush1.bf16.msra.mxu0 0
    %2080 = vmatprep.subr.bf16.mxu0 0
    %2081 = vmatpush1.bf16.msra.mxu0 0
    %2082 = vmatprep.subr.bf16.mxu0 0
    %2083 = vmatpush1.bf16.msra.mxu0 0
    %2084 = vmatprep.subr.bf16.mxu0 0
    %2085 = vmatpush1.bf16.msra.mxu0 0
    %2086 = vmatprep.subr.bf16.mxu0 0
    %2087 = vmatpush1.bf16.msra.mxu0 0
    %2088 = vmatprep.subr.bf16.mxu0 0
    %2089 = vmatpush1.bf16.msra.mxu0 0
    %2090 = vmatprep.subr.bf16.mxu0 0
    %2091 = vmatpush1.bf16.msra.mxu0 0
    %2092 = vmatprep.subr.bf16.mxu0 0
    %2093 = vmatpush1.bf16.msra.mxu0 0
    %2094 = vmatprep.subr.bf16.mxu0 0
    %2095 = vmatpush1.bf16.msra.mxu0 0
    %2096 = vmatprep.mubr.bf16.mxu0 0
    %2097 = vmatmul.mubr.bf16.gmra.mrb[0].mxu0 %v2062
    %v2098 = vpop.f32.mrb[0].mxu0
    %v2099 = vadd.f32 0.0, %v2098
    %v2100 = vpop.f32.mrb[0].mxu0
    %v2101 = vpop.f32.mrb[0].mxu0
    %v2102 = vpop.f32.mrb[0].mxu0
    %2103 = vdwg.mxu0
    %v2104 = vadd.f32 %v933, %v2099
    %v2105 = vxor.u32 %v2104, 2147483648
    %v2106 = vmul.f32 %v2105, 1.442695
    %v2107 = vpow.pop %v2106
    %v2108 = vadd.f32 %v2107, 1.0
    %v2109 = vrcp.pop %v2108
    %v2110 = vmul.f32 1.0, %v2109
    %v2111 = vtanh.pop %v2104
    %v2112 = vmul.f32 %v2110, %v2045
    %2114 = vrot.lane.b32.xlu0 %v2111, 64
    %v2115 = vpop.permute.xlu0 %2114
    %v2117 = vmul.f32 %v2110, %v2115
    %2119 = vrot.lane.b32.xlu0 %v2117, 32
    %v2120 = vpop.permute.xlu0 %2119
    %v2122 = vadd.f32 %v2112, %v2120
    %v2123 = vtanh.pop %v2122
    %2125 = vrot.lane.b32.xlu0 %v2123, 64
    %v2126 = vpop.permute.xlu0 %2125
    %v2128 = vmul.f32 %v2110, %v2126
    %2130 = vrot.lane.b32.xlu0 %v2128, 32
    %v2131 = vpop.permute.xlu0 %2130
    %2133 = vst.msk [vmem:[#allocation5 + $0x8] sm:$0xff] %vm977, %v2131
    %v2134 = vpack.c.bf16 %v2128, %v2128
    %2136 = vrot.lane.b32.xlu0 %v2134, 32
    %v2137 = vpop.permute.xlu0 %2136
    %v2139 = vsel %vm977, %v2137, 0
    %2141 = vmatprep.subr.bf16.mxu0 0
    %2142 = vmatpush1.bf16.msra.mxu0 %v1598
    %2143 = vmatprep.subr.bf16.mxu0 0
    %2144 = vmatpush1.bf16.msra.mxu0 %v1599
    %2145 = vmatprep.subr.bf16.mxu0 0
    %2146 = vmatpush1.bf16.msra.mxu0 0
    %2147 = vmatprep.subr.bf16.mxu0 0
    %2148 = vmatpush1.bf16.msra.mxu0 0
    %2149 = vmatprep.subr.bf16.mxu0 0
    %2150 = vmatpush1.bf16.msra.mxu0 0
    %2151 = vmatprep.subr.bf16.mxu0 0
    %2152 = vmatpush1.bf16.msra.mxu0 0
    %2153 = vmatprep.subr.bf16.mxu0 0
    %2154 = vmatpush1.bf16.msra.mxu0 0
    %2155 = vmatprep.subr.bf16.mxu0 0
    %2156 = vmatpush1.bf16.msra.mxu0 0
    %2157 = vmatprep.subr.bf16.mxu0 0
    %2158 = vmatpush1.bf16.msra.mxu0 0
    %2159 = vmatprep.subr.bf16.mxu0 0
    %2160 = vmatpush1.bf16.msra.mxu0 0
    %2161 = vmatprep.subr.bf16.mxu0 0
    %2162 = vmatpush1.bf16.msra.mxu0 0
    %2163 = vmatprep.subr.bf16.mxu0 0
    %2164 = vmatpush1.bf16.msra.mxu0 0
    %2165 = vmatprep.subr.bf16.mxu0 0
    %2166 = vmatpush1.bf16.msra.mxu0 0
    %2167 = vmatprep.subr.bf16.mxu0 0
    %2168 = vmatpush1.bf16.msra.mxu0 0
    %2169 = vmatprep.subr.bf16.mxu0 0
    %2170 = vmatpush1.bf16.msra.mxu0 0
    %2171 = vmatprep.subr.bf16.mxu0 0
    %2172 = vmatpush1.bf16.msra.mxu0 0
    %2173 = vmatprep.mubr.bf16.mxu0 0
    %2174 = vmatmul.mubr.bf16.gmra.mrb[0].mxu0 %v2139
    %v2175 = vpop.f32.mrb[0].mxu0
    %v2176 = vadd.f32 0.0, %v2175
    %v2177 = vpop.f32.mrb[0].mxu0
    %v2178 = vpop.f32.mrb[0].mxu0
    %v2179 = vpop.f32.mrb[0].mxu0
    %2180 = vdwg.mxu0
    %v2181 = vadd.f32 %v929, %v2176
    %v2182 = vxor.u32 %v2181, 2147483648
    %v2183 = vmul.f32 %v2182, 1.442695
    %v2184 = vpow.pop %v2183
    %v2185 = vadd.f32 %v2184, 1.0
    %v2186 = vrcp.pop %v2185
    %v2187 = vmul.f32 1.0, %v2186
    %v2188 = vtanh.pop %v2181
    %v2189 = vmul.f32 %v2187, %v2122
    %2191 = vrot.lane.b32.xlu0 %v2188, 64
    %v2192 = vpop.permute.xlu0 %2191
    %v2194 = vmul.f32 %v2187, %v2192
    %2196 = vrot.lane.b32.xlu0 %v2194, 32
    %v2197 = vpop.permute.xlu0 %2196
    %v2199 = vadd.f32 %v2189, %v2197
    %v2200 = vtanh.pop %v2199
    %2202 = vrot.lane.b32.xlu0 %v2200, 64
    %v2203 = vpop.permute.xlu0 %2202
    %v2205 = vmul.f32 %v2187, %v2203
    %2207 = vrot.lane.b32.xlu0 %v2205, 32
    %v2208 = vpop.permute.xlu0 %2207
    %2210 = vst.msk [vmem:[#allocation5] sm:$0xff] %vm977, %v2208
    %v2211 = vld [vmem:[#allocation4] sm:$0xff]
    %v2212 = vld [vmem:[#allocation4 + $0x8] sm:$0xff]
    %v2213 = vld [vmem:[#allocation4 + $0x10] sm:$0xff]
    %v2214 = vld [vmem:[#allocation4 + $0x18] sm:$0xff]
    %v2215 = vld [vmem:[#allocation4 + $0x20] sm:$0xff]
    %v2216 = vld [vmem:[#allocation4 + $0x28] sm:$0xff]
    %v2217 = vld [vmem:[#allocation4 + $0x30] sm:$0xff]
    %v2218 = vld [vmem:[#allocation4 + $0x38] sm:$0xff]
    %v2219 = vpack.c.bf16 %v2212, %v2211
    %v2220 = vpack.c.bf16 %v2214, %v2213
    %v2221 = vpack.c.bf16 %v2216, %v2215
    %v2222 = vpack.c.bf16 %v2218, %v2217
    %v2223 = vld [vmem:[#allocation5] sm:$0xff]
    %v2224 = vld [vmem:[#allocation5 + $0x8] sm:$0xff]
    %v2225 = vld [vmem:[#allocation5 + $0x10] sm:$0xff]
    %v2226 = vld [vmem:[#allocation5 + $0x18] sm:$0xff]
    %v2227 = vld [vmem:[#allocation5 + $0x20] sm:$0xff]
    %v2228 = vld [vmem:[#allocation5 + $0x28] sm:$0xff]
    %v2229 = vld [vmem:[#allocation5 + $0x30] sm:$0xff]
    %v2230 = vld [vmem:[#allocation5 + $0x38] sm:$0xff]
    %v2231 = vpack.c.bf16 %v2224, %v2223
    %v2232 = vpack.c.bf16 %v2226, %v2225
    %v2233 = vpack.c.bf16 %v2228, %v2227
    %v2234 = vpack.c.bf16 %v2230, %v2229
    %v2239 = vunpack.c.l.b16 %v774
    %v2240 = vunpack.c.h.b16 %v774
    %v2241 = vunpack.c.l.b16 %v775
    %v2242 = vunpack.c.h.b16 %v775
    %v2243 = vunpack.c.l.b16 %v776
    %v2244 = vunpack.c.h.b16 %v776
    %v2245 = vunpack.c.l.b16 %v777
    %v2246 = vunpack.c.h.b16 %v777
    %v2247 = vpack.c.b16 %v2241, %v2239
    %v2248 = vpack.c.b16 %v2242, %v2240
    %v2249 = vpack.c.b16 %v2245, %v2243
    %v2250 = vpack.c.b16 %v2246, %v2244
    %v2256 = vsel %vm977, %v2231, 0
    %v2259 = vsel %vm977, %v2232, 0
    %v2262 = vsel %vm977, %v2233, 0
    %v2265 = vsel %vm977, %v2234, 0
    %2267 = vmatprep.subr.bf16.mxu0 %v2248
    %2268 = vmatpush1.bf16.msra.mxu0 %v2247
    %2269 = vmatprep.subr.bf16.mxu0 %v2250
    %2270 = vmatpush1.bf16.msra.mxu0 %v2249
    %2271 = vmatprep.subr.bf16.mxu0 0
    %2272 = vmatpush1.bf16.msra.mxu0 0
    %2273 = vmatprep.subr.bf16.mxu0 0
    %2274 = vmatpush1.bf16.msra.mxu0 0
    %2275 = vmatprep.subr.bf16.mxu0 0
    %2276 = vmatpush1.bf16.msra.mxu0 0
    %2277 = vmatprep.subr.bf16.mxu0 0
    %2278 = vmatpush1.bf16.msra.mxu0 0
    %2279 = vmatprep.subr.bf16.mxu0 0
    %2280 = vmatpush1.bf16.msra.mxu0 0
    %2281 = vmatprep.subr.bf16.mxu0 0
    %2282 = vmatpush1.bf16.msra.mxu0 0
    %2283 = vmatprep.subr.bf16.mxu0 0
    %2284 = vmatpush1.bf16.msra.mxu0 0
    %2285 = vmatprep.subr.bf16.mxu0 0
    %2286 = vmatpush1.bf16.msra.mxu0 0
    %2287 = vmatprep.subr.bf16.mxu0 0
    %2288 = vmatpush1.bf16.msra.mxu0 0
    %2289 = vmatprep.subr.bf16.mxu0 0
    %2290 = vmatpush1.bf16.msra.mxu0 0
    %2291 = vmatprep.subr.bf16.mxu0 0
    %2292 = vmatpush1.bf16.msra.mxu0 0
    %2293 = vmatprep.subr.bf16.mxu0 0
    %2294 = vmatpush1.bf16.msra.mxu0 0
    %2295 = vmatprep.subr.bf16.mxu0 0
    %2296 = vmatpush1.bf16.msra.mxu0 0
    %2297 = vmatprep.subr.bf16.mxu0 0
    %2298 = vmatpush1.bf16.msra.mxu0 0
    %2299 = vmatprep.mubr.bf16.mxu0 0
    %2300 = vmatmul.mubr.bf16.gmra.mrb[0].mxu0 %v2256
    %v2301 = vpop.f32.mrb[0].mxu0
    %v2302 = vadd.f32 0.0, %v2301
    %v2303 = vpop.f32.mrb[0].mxu0
    %v2304 = vadd.f32 0.0, %v2303
    %v2305 = vpop.f32.mrb[0].mxu0
    %v2306 = vadd.f32 0.0, %v2305
    %v2307 = vpop.f32.mrb[0].mxu0
    %v2308 = vadd.f32 0.0, %v2307
    %2309 = vmatprep.mubr.bf16.mxu0 0
    %2310 = vmatmul.mubr.bf16.gmra.mrb[0].mxu0 %v2259
    %v2311 = vpop.f32.mrb[0].mxu0
    %v2312 = vadd.f32 0.0, %v2311
    %v2313 = vpop.f32.mrb[0].mxu0
    %v2314 = vadd.f32 0.0, %v2313
    %v2315 = vpop.f32.mrb[0].mxu0
    %v2316 = vadd.f32 0.0, %v2315
    %v2317 = vpop.f32.mrb[0].mxu0
    %v2318 = vadd.f32 0.0, %v2317
    %2319 = vmatprep.mubr.bf16.mxu0 0
    %2320 = vmatmul.mubr.bf16.gmra.mrb[0].mxu0 %v2262
    %v2321 = vpop.f32.mrb[0].mxu0
    %v2322 = vadd.f32 0.0, %v2321
    %v2323 = vpop.f32.mrb[0].mxu0
    %v2324 = vadd.f32 0.0, %v2323
    %v2325 = vpop.f32.mrb[0].mxu0
    %v2326 = vadd.f32 0.0, %v2325
    %v2327 = vpop.f32.mrb[0].mxu0
    %v2328 = vadd.f32 0.0, %v2327
    %2329 = vmatprep.mubr.bf16.mxu0 0
    %2330 = vmatmul.mubr.bf16.gmra.mrb[0].mxu0 %v2265
    %v2331 = vpop.f32.mrb[0].mxu0
    %v2332 = vadd.f32 0.0, %v2331
    %v2333 = vpop.f32.mrb[0].mxu0
    %v2334 = vadd.f32 0.0, %v2333
    %v2335 = vpop.f32.mrb[0].mxu0
    %v2336 = vadd.f32 0.0, %v2335
    %v2337 = vpop.f32.mrb[0].mxu0
    %v2338 = vadd.f32 0.0, %v2337
    %2339 = vdwg.mxu0
    %v2344 = vunpack.c.l.b16 %v770
    %v2345 = vunpack.c.h.b16 %v770
    %v2346 = vunpack.c.l.b16 %v771
    %v2347 = vunpack.c.h.b16 %v771
    %v2348 = vunpack.c.l.b16 %v772
    %v2349 = vunpack.c.h.b16 %v772
    %v2350 = vunpack.c.l.b16 %v773
    %v2351 = vunpack.c.h.b16 %v773
    %v2352 = vpack.c.b16 %v2346, %v2344
    %v2353 = vpack.c.b16 %v2347, %v2345
    %v2354 = vpack.c.b16 %v2350, %v2348
    %v2355 = vpack.c.b16 %v2351, %v2349
    %v2361 = vsel %vm977, %v2219, 0
    %v2364 = vsel %vm977, %v2220, 0
    %v2367 = vsel %vm977, %v2221, 0
    %v2370 = vsel %vm977, %v2222, 0
    %2372 = vmatprep.subr.bf16.mxu0 %v2353
    %2373 = vmatpush1.bf16.msra.mxu0 %v2352
    %2374 = vmatprep.subr.bf16.mxu0 %v2355
    %2375 = vmatpush1.bf16.msra.mxu0 %v2354
    %2376 = vmatprep.subr.bf16.mxu0 0
    %2377 = vmatpush1.bf16.msra.mxu0 0
    %2378 = vmatprep.subr.bf16.mxu0 0
    %2379 = vmatpush1.bf16.msra.mxu0 0
    %2380 = vmatprep.subr.bf16.mxu0 0
    %2381 = vmatpush1.bf16.msra.mxu0 0
    %2382 = vmatprep.subr.bf16.mxu0 0
    %2383 = vmatpush1.bf16.msra.mxu0 0
    %2384 = vmatprep.subr.bf16.mxu0 0
    %2385 = vmatpush1.bf16.msra.mxu0 0
    %2386 = vmatprep.subr.bf16.mxu0 0
    %2387 = vmatpush1.bf16.msra.mxu0 0
    %2388 = vmatprep.subr.bf16.mxu0 0
    %2389 = vmatpush1.bf16.msra.mxu0 0
    %2390 = vmatprep.subr.bf16.mxu0 0
    %2391 = vmatpush1.bf16.msra.mxu0 0
    %2392 = vmatprep.subr.bf16.mxu0 0
    %2393 = vmatpush1.bf16.msra.mxu0 0
    %2394 = vmatprep.subr.bf16.mxu0 0
    %2395 = vmatpush1.bf16.msra.mxu0 0
    %2396 = vmatprep.subr.bf16.mxu0 0
    %2397 = vmatpush1.bf16.msra.mxu0 0
    %2398 = vmatprep.subr.bf16.mxu0 0
    %2399 = vmatpush1.bf16.msra.mxu0 0
    %2400 = vmatprep.subr.bf16.mxu0 0
    %2401 = vmatpush1.bf16.msra.mxu0 0
    %2402 = vmatprep.subr.bf16.mxu0 0
    %2403 = vmatpush1.bf16.msra.mxu0 0
    %2404 = vmatprep.mubr.bf16.mxu0 0
    %2405 = vmatmul.mubr.bf16.gmra.mrb[0].mxu0 %v2361
    %v2406 = vpop.f32.mrb[0].mxu0
    %v2407 = vadd.f32 %v2302, %v2406
    %v2408 = vpop.f32.mrb[0].mxu0
    %v2409 = vadd.f32 %v2304, %v2408
    %v2410 = vpop.f32.mrb[0].mxu0
    %v2411 = vadd.f32 %v2306, %v2410
    %v2412 = vpop.f32.mrb[0].mxu0
    %v2413 = vadd.f32 %v2308, %v2412
    %2414 = vmatprep.mubr.bf16.mxu0 0
    %2415 = vmatmul.mubr.bf16.gmra.mrb[0].mxu0 %v2364
    %v2416 = vpop.f32.mrb[0].mxu0
    %v2417 = vadd.f32 %v2312, %v2416
    %v2418 = vpop.f32.mrb[0].mxu0
    %v2419 = vadd.f32 %v2314, %v2418
    %v2420 = vpop.f32.mrb[0].mxu0
    %v2421 = vadd.f32 %v2316, %v2420
    %v2422 = vpop.f32.mrb[0].mxu0
    %v2423 = vadd.f32 %v2318, %v2422
    %2424 = vmatprep.mubr.bf16.mxu0 0
    %2425 = vmatmul.mubr.bf16.gmra.mrb[0].mxu0 %v2367
    %v2426 = vpop.f32.mrb[0].mxu0
    %v2427 = vadd.f32 %v2322, %v2426
    %v2428 = vpop.f32.mrb[0].mxu0
    %v2429 = vadd.f32 %v2324, %v2428
    %v2430 = vpop.f32.mrb[0].mxu0
    %v2431 = vadd.f32 %v2326, %v2430
    %v2432 = vpop.f32.mrb[0].mxu0
    %v2433 = vadd.f32 %v2328, %v2432
    %2434 = vmatprep.mubr.bf16.mxu0 0
    %2435 = vmatmul.mubr.bf16.gmra.mrb[0].mxu0 %v2370
    %v2436 = vpop.f32.mrb[0].mxu0
    %v2437 = vadd.f32 %v2332, %v2436
    %v2438 = vpop.f32.mrb[0].mxu0
    %v2439 = vadd.f32 %v2334, %v2438
    %v2440 = vpop.f32.mrb[0].mxu0
    %v2441 = vadd.f32 %v2336, %v2440
    %v2442 = vpop.f32.mrb[0].mxu0
    %v2443 = vadd.f32 %v2338, %v2442
    %2444 = vdwg.mxu0
    %v2446 = vlaneseq
    %v2447 = vshrl.u32 %v2446, 7
    %v2448 = vsub.s32 0, %v2447
    %v2449 = vrot.slane %v796, %v2448
    %v2450 = vlaneseq
    %v2451 = vshrl.u32 %v2450, 7
    %v2452 = vsub.s32 1, %v2451
    %v2453 = vrot.slane %v796, %v2452
    %v2456 = vadd.f32 %v2407, %v2449
    %v2457 = vadd.f32 %v2409, %v2453
    %v2458 = vadd.f32 %v2411, %v2449
    %v2459 = vadd.f32 %v2413, %v2453
    %v2460 = vadd.f32 %v2417, %v2449
    %v2461 = vadd.f32 %v2419, %v2453
    %v2462 = vadd.f32 %v2421, %v2449
    %v2463 = vadd.f32 %v2423, %v2453
    %v2464 = vadd.f32 %v2427, %v2449
    %v2465 = vadd.f32 %v2429, %v2453
    %v2466 = vadd.f32 %v2431, %v2449
    %v2467 = vadd.f32 %v2433, %v2453
    %v2468 = vadd.f32 %v2437, %v2449
    %v2469 = vadd.f32 %v2439, %v2453
    %v2470 = vadd.f32 %v2441, %v2449
    %v2471 = vadd.f32 %v2443, %v2453
    %v2476 = vunpack.c.l.b16 %v786
    %v2477 = vunpack.c.l.b16 %v787
    %v2478 = vunpack.c.l.b16 %v788
    %v2479 = vunpack.c.l.b16 %v789
    %v2480 = vpack.c.b16 %v2477, %v2476
    %v2481 = vpack.c.b16 %v2479, %v2478
    %2484 = vmatprep.subr.bf16.mxu0 0
    %2485 = vmatpush1.bf16.msra.mxu0 %v2480
    %2486 = vmatprep.subr.bf16.mxu0 0
    %2487 = vmatpush1.bf16.msra.mxu0 %v2481
    %2488 = vmatprep.subr.bf16.mxu0 0
    %2489 = vmatpush1.bf16.msra.mxu0 0
    %2490 = vmatprep.subr.bf16.mxu0 0
    %2491 = vmatpush1.bf16.msra.mxu0 0
    %2492 = vmatprep.subr.bf16.mxu0 0
    %2493 = vmatpush1.bf16.msra.mxu0 0
    %2494 = vmatprep.subr.bf16.mxu0 0
    %2495 = vmatpush1.bf16.msra.mxu0 0
    %2496 = vmatprep.subr.bf16.mxu0 0
    %2497 = vmatpush1.bf16.msra.mxu0 0
    %2498 = vmatprep.subr.bf16.mxu0 0
    %2499 = vmatpush1.bf16.msra.mxu0 0
    %2500 = vmatprep.subr.bf16.mxu0 0
    %2501 = vmatpush1.bf16.msra.mxu0 0
    %2502 = vmatprep.subr.bf16.mxu0 0
    %2503 = vmatpush1.bf16.msra.mxu0 0
    %2504 = vmatprep.subr.bf16.mxu0 0
    %2505 = vmatpush1.bf16.msra.mxu0 0
    %2506 = vmatprep.subr.bf16.mxu0 0
    %2507 = vmatpush1.bf16.msra.mxu0 0
    %2508 = vmatprep.subr.bf16.mxu0 0
    %2509 = vmatpush1.bf16.msra.mxu0 0
    %2510 = vmatprep.subr.bf16.mxu0 0
    %2511 = vmatpush1.bf16.msra.mxu0 0
    %2512 = vmatprep.subr.bf16.mxu0 0
    %2513 = vmatpush1.bf16.msra.mxu0 0
    %2514 = vmatprep.subr.bf16.mxu0 0
    %2515 = vmatpush1.bf16.msra.mxu0 0
    %2516 = vmatprep.mubr.bf16.mxu0 0
    %2517 = vmatmul.mubr.bf16.gmra.mrb[0].mxu0 %v979
    %v2518 = vpop.f32.mrb[0].mxu0
    %v2519 = vadd.f32 0.0, %v2518
    %v2520 = vpop.f32.mrb[0].mxu0
    %v2521 = vpop.f32.mrb[0].mxu0
    %v2522 = vpop.f32.mrb[0].mxu0
    %2523 = vdwg.mxu0
    %v2524 = vadd.f32 %v2456, %v2519
    %v2525 = vxor.u32 %v2524, 2147483648
    %v2526 = vmul.f32 %v2525, 1.442695
    %v2527 = vpow.pop %v2526
    %v2528 = vadd.f32 %v2527, 1.0
    %v2529 = vrcp.pop %v2528
    %v2530 = vmul.f32 1.0, %v2529
    %v2531 = vtanh.pop %v2524
    %v2532 = vmul.f32 %v2530, 0.0
    %2534 = vrot.lane.b32.xlu0 %v2531, 64
    %v2535 = vpop.permute.xlu0 %2534
    %v2537 = vmul.f32 %v2530, %v2535
    %2539 = vrot.lane.b32.xlu0 %v2537, 32
    %v2540 = vpop.permute.xlu0 %2539
    %v2542 = vadd.f32 %v2532, %v2540
    %v2543 = vtanh.pop %v2542
    %2545 = vrot.lane.b32.xlu0 %v2543, 64
    %v2546 = vpop.permute.xlu0 %2545
    %v2548 = vmul.f32 %v2530, %v2546
    %v2549 = vpack.c.bf16 %v2548, %v2548
    %2551 = vrot.lane.b32.xlu0 %v2549, 32
    %v2552 = vpop.permute.xlu0 %2551
    %v2554 = vsel %vm977, %v2552, 0
    %2556 = vmatprep.subr.bf16.mxu0 0
    %2557 = vmatpush1.bf16.msra.mxu0 %v2480
    %2558 = vmatprep.subr.bf16.mxu0 0
    %2559 = vmatpush1.bf16.msra.mxu0 %v2481
    %2560 = vmatprep.subr.bf16.mxu0 0
    %2561 = vmatpush1.bf16.msra.mxu0 0
    %2562 = vmatprep.subr.bf16.mxu0 0
    %2563 = vmatpush1.bf16.msra.mxu0 0
    %2564 = vmatprep.subr.bf16.mxu0 0
    %2565 = vmatpush1.bf16.msra.mxu0 0
    %2566 = vmatprep.subr.bf16.mxu0 0
    %2567 = vmatpush1.bf16.msra.mxu0 0
    %2568 = vmatprep.subr.bf16.mxu0 0
    %2569 = vmatpush1.bf16.msra.mxu0 0
    %2570 = vmatprep.subr.bf16.mxu0 0
    %2571 = vmatpush1.bf16.msra.mxu0 0
    %2572 = vmatprep.subr.bf16.mxu0 0
    %2573 = vmatpush1.bf16.msra.mxu0 0
    %2574 = vmatprep.subr.bf16.mxu0 0
    %2575 = vmatpush1.bf16.msra.mxu0 0
    %2576 = vmatprep.subr.bf16.mxu0 0
    %2577 = vmatpush1.bf16.msra.mxu0 0
    %2578 = vmatprep.subr.bf16.mxu0 0
    %2579 = vmatpush1.bf16.msra.mxu0 0
    %2580 = vmatprep.subr.bf16.mxu0 0
    %2581 = vmatpush1.bf16.msra.mxu0 0
    %2582 = vmatprep.subr.bf16.mxu0 0
    %2583 = vmatpush1.bf16.msra.mxu0 0
    %2584 = vmatprep.subr.bf16.mxu0 0
    %2585 = vmatpush1.bf16.msra.mxu0 0
    %2586 = vmatprep.subr.bf16.mxu0 0
    %2587 = vmatpush1.bf16.msra.mxu0 0
    %2588 = vmatprep.mubr.bf16.mxu0 0
    %2589 = vmatmul.mubr.bf16.gmra.mrb[0].mxu0 %v2554
    %v2590 = vpop.f32.mrb[0].mxu0
    %v2591 = vadd.f32 0.0, %v2590
    %v2592 = vpop.f32.mrb[0].mxu0
    %v2593 = vpop.f32.mrb[0].mxu0
    %v2594 = vpop.f32.mrb[0].mxu0
    %2595 = vdwg.mxu0
    %v2596 = vadd.f32 %v2458, %v2591
    %v2597 = vxor.u32 %v2596, 2147483648
    %v2598 = vmul.f32 %v2597, 1.442695
    %v2599 = vpow.pop %v2598
    %v2600 = vadd.f32 %v2599, 1.0
    %v2601 = vrcp.pop %v2600
    %v2602 = vmul.f32 1.0, %v2601
    %v2603 = vtanh.pop %v2596
    %v2604 = vmul.f32 %v2602, %v2542
    %2606 = vrot.lane.b32.xlu0 %v2603, 64
    %v2607 = vpop.permute.xlu0 %2606
    %v2609 = vmul.f32 %v2602, %v2607
    %2611 = vrot.lane.b32.xlu0 %v2609, 32
    %v2612 = vpop.permute.xlu0 %2611
    %v2614 = vadd.f32 %v2604, %v2612
    %v2615 = vtanh.pop %v2614
    %2617 = vrot.lane.b32.xlu0 %v2615, 64
    %v2618 = vpop.permute.xlu0 %2617
    %v2620 = vmul.f32 %v2602, %v2618
    %v2621 = vpack.c.bf16 %v2620, %v2620
    %2623 = vrot.lane.b32.xlu0 %v2621, 32
    %v2624 = vpop.permute.xlu0 %2623
    %v2626 = vsel %vm977, %v2624, 0
    %2628 = vmatprep.subr.bf16.mxu0 0
    %2629 = vmatpush1.bf16.msra.mxu0 %v2480
    %2630 = vmatprep.subr.bf16.mxu0 0
    %2631 = vmatpush1.bf16.msra.mxu0 %v2481
    %2632 = vmatprep.subr.bf16.mxu0 0
    %2633 = vmatpush1.bf16.msra.mxu0 0
    %2634 = vmatprep.subr.bf16.mxu0 0
    %2635 = vmatpush1.bf16.msra.mxu0 0
    %2636 = vmatprep.subr.bf16.mxu0 0
    %2637 = vmatpush1.bf16.msra.mxu0 0
    %2638 = vmatprep.subr.bf16.mxu0 0
    %2639 = vmatpush1.bf16.msra.mxu0 0
    %2640 = vmatprep.subr.bf16.mxu0 0
    %2641 = vmatpush1.bf16.msra.mxu0 0
    %2642 = vmatprep.subr.bf16.mxu0 0
    %2643 = vmatpush1.bf16.msra.mxu0 0
    %2644 = vmatprep.subr.bf16.mxu0 0
    %2645 = vmatpush1.bf16.msra.mxu0 0
    %2646 = vmatprep.subr.bf16.mxu0 0
    %2647 = vmatpush1.bf16.msra.mxu0 0
    %2648 = vmatprep.subr.bf16.mxu0 0
    %2649 = vmatpush1.bf16.msra.mxu0 0
    %2650 = vmatprep.subr.bf16.mxu0 0
    %2651 = vmatpush1.bf16.msra.mxu0 0
    %2652 = vmatprep.subr.bf16.mxu0 0
    %2653 = vmatpush1.bf16.msra.mxu0 0
    %2654 = vmatprep.subr.bf16.mxu0 0
    %2655 = vmatpush1.bf16.msra.mxu0 0
    %2656 = vmatprep.subr.bf16.mxu0 0
    %2657 = vmatpush1.bf16.msra.mxu0 0
    %2658 = vmatprep.subr.bf16.mxu0 0
    %2659 = vmatpush1.bf16.msra.mxu0 0
    %2660 = vmatprep.mubr.bf16.mxu0 0
    %2661 = vmatmul.mubr.bf16.gmra.mrb[0].mxu0 %v2626
    %v2662 = vpop.f32.mrb[0].mxu0
    %v2663 = vadd.f32 0.0, %v2662
    %v2664 = vpop.f32.mrb[0].mxu0
    %v2665 = vpop.f32.mrb[0].mxu0
    %v2666 = vpop.f32.mrb[0].mxu0
    %2667 = vdwg.mxu0
    %v2668 = vadd.f32 %v2460, %v2663
    %v2669 = vxor.u32 %v2668, 2147483648
    %v2670 = vmul.f32 %v2669, 1.442695
    %v2671 = vpow.pop %v2670
    %v2672 = vadd.f32 %v2671, 1.0
    %v2673 = vrcp.pop %v2672
    %v2674 = vmul.f32 1.0, %v2673
    %v2675 = vtanh.pop %v2668
    %v2676 = vmul.f32 %v2674, %v2614
    %2678 = vrot.lane.b32.xlu0 %v2675, 64
    %v2679 = vpop.permute.xlu0 %2678
    %v2681 = vmul.f32 %v2674, %v2679
    %2683 = vrot.lane.b32.xlu0 %v2681, 32
    %v2684 = vpop.permute.xlu0 %2683
    %v2686 = vadd.f32 %v2676, %v2684
    %v2687 = vtanh.pop %v2686
    %2689 = vrot.lane.b32.xlu0 %v2687, 64
    %v2690 = vpop.permute.xlu0 %2689
    %v2692 = vmul.f32 %v2674, %v2690
    %v2693 = vpack.c.bf16 %v2692, %v2692
    %2695 = vrot.lane.b32.xlu0 %v2693, 32
    %v2696 = vpop.permute.xlu0 %2695
    %v2698 = vsel %vm977, %v2696, 0
    %2700 = vmatprep.subr.bf16.mxu0 0
    %2701 = vmatpush1.bf16.msra.mxu0 %v2480
    %2702 = vmatprep.subr.bf16.mxu0 0
    %2703 = vmatpush1.bf16.msra.mxu0 %v2481
    %2704 = vmatprep.subr.bf16.mxu0 0
    %2705 = vmatpush1.bf16.msra.mxu0 0
    %2706 = vmatprep.subr.bf16.mxu0 0
    %2707 = vmatpush1.bf16.msra.mxu0 0
    %2708 = vmatprep.subr.bf16.mxu0 0
    %2709 = vmatpush1.bf16.msra.mxu0 0
    %2710 = vmatprep.subr.bf16.mxu0 0
    %2711 = vmatpush1.bf16.msra.mxu0 0
    %2712 = vmatprep.subr.bf16.mxu0 0
    %2713 = vmatpush1.bf16.msra.mxu0 0
    %2714 = vmatprep.subr.bf16.mxu0 0
    %2715 = vmatpush1.bf16.msra.mxu0 0
    %2716 = vmatprep.subr.bf16.mxu0 0
    %2717 = vmatpush1.bf16.msra.mxu0 0
    %2718 = vmatprep.subr.bf16.mxu0 0
    %2719 = vmatpush1.bf16.msra.mxu0 0
    %2720 = vmatprep.subr.bf16.mxu0 0
    %2721 = vmatpush1.bf16.msra.mxu0 0
    %2722 = vmatprep.subr.bf16.mxu0 0
    %2723 = vmatpush1.bf16.msra.mxu0 0
    %2724 = vmatprep.subr.bf16.mxu0 0
    %2725 = vmatpush1.bf16.msra.mxu0 0
    %2726 = vmatprep.subr.bf16.mxu0 0
    %2727 = vmatpush1.bf16.msra.mxu0 0
    %2728 = vmatprep.subr.bf16.mxu0 0
    %2729 = vmatpush1.bf16.msra.mxu0 0
    %2730 = vmatprep.subr.bf16.mxu0 0
    %2731 = vmatpush1.bf16.msra.mxu0 0
    %2732 = vmatprep.mubr.bf16.mxu0 0
    %2733 = vmatmul.mubr.bf16.gmra.mrb[0].mxu0 %v2698
    %v2734 = vpop.f32.mrb[0].mxu0
    %v2735 = vadd.f32 0.0, %v2734
    %v2736 = vpop.f32.mrb[0].mxu0
    %v2737 = vpop.f32.mrb[0].mxu0
    %v2738 = vpop.f32.mrb[0].mxu0
    %2739 = vdwg.mxu0
    %v2740 = vadd.f32 %v2462, %v2735
    %v2741 = vxor.u32 %v2740, 2147483648
    %v2742 = vmul.f32 %v2741, 1.442695
    %v2743 = vpow.pop %v2742
    %v2744 = vadd.f32 %v2743, 1.0
    %v2745 = vrcp.pop %v2744
    %v2746 = vmul.f32 1.0, %v2745
    %v2747 = vtanh.pop %v2740
    %v2748 = vmul.f32 %v2746, %v2686
    %2750 = vrot.lane.b32.xlu0 %v2747, 64
    %v2751 = vpop.permute.xlu0 %2750
    %v2753 = vmul.f32 %v2746, %v2751
    %2755 = vrot.lane.b32.xlu0 %v2753, 32
    %v2756 = vpop.permute.xlu0 %2755
    %v2758 = vadd.f32 %v2748, %v2756
    %v2759 = vtanh.pop %v2758
    %2761 = vrot.lane.b32.xlu0 %v2759, 64
    %v2762 = vpop.permute.xlu0 %2761
    %v2764 = vmul.f32 %v2746, %v2762
    %v2765 = vpack.c.bf16 %v2764, %v2764
    %2767 = vrot.lane.b32.xlu0 %v2765, 32
    %v2768 = vpop.permute.xlu0 %2767
    %v2770 = vsel %vm977, %v2768, 0
    %2772 = vmatprep.subr.bf16.mxu0 0
    %2773 = vmatpush1.bf16.msra.mxu0 %v2480
    %2774 = vmatprep.subr.bf16.mxu0 0
    %2775 = vmatpush1.bf16.msra.mxu0 %v2481
    %2776 = vmatprep.subr.bf16.mxu0 0
    %2777 = vmatpush1.bf16.msra.mxu0 0
    %2778 = vmatprep.subr.bf16.mxu0 0
    %2779 = vmatpush1.bf16.msra.mxu0 0
    %2780 = vmatprep.subr.bf16.mxu0 0
    %2781 = vmatpush1.bf16.msra.mxu0 0
    %2782 = vmatprep.subr.bf16.mxu0 0
    %2783 = vmatpush1.bf16.msra.mxu0 0
    %2784 = vmatprep.subr.bf16.mxu0 0
    %2785 = vmatpush1.bf16.msra.mxu0 0
    %2786 = vmatprep.subr.bf16.mxu0 0
    %2787 = vmatpush1.bf16.msra.mxu0 0
    %2788 = vmatprep.subr.bf16.mxu0 0
    %2789 = vmatpush1.bf16.msra.mxu0 0
    %2790 = vmatprep.subr.bf16.mxu0 0
    %2791 = vmatpush1.bf16.msra.mxu0 0
    %2792 = vmatprep.subr.bf16.mxu0 0
    %2793 = vmatpush1.bf16.msra.mxu0 0
    %2794 = vmatprep.subr.bf16.mxu0 0
    %2795 = vmatpush1.bf16.msra.mxu0 0
    %2796 = vmatprep.subr.bf16.mxu0 0
    %2797 = vmatpush1.bf16.msra.mxu0 0
    %2798 = vmatprep.subr.bf16.mxu0 0
    %2799 = vmatpush1.bf16.msra.mxu0 0
    %2800 = vmatprep.subr.bf16.mxu0 0
    %2801 = vmatpush1.bf16.msra.mxu0 0
    %2802 = vmatprep.subr.bf16.mxu0 0
    %2803 = vmatpush1.bf16.msra.mxu0 0
    %2804 = vmatprep.mubr.bf16.mxu0 0
    %2805 = vmatmul.mubr.bf16.gmra.mrb[0].mxu0 %v2770
    %v2806 = vpop.f32.mrb[0].mxu0
    %v2807 = vadd.f32 0.0, %v2806
    %v2808 = vpop.f32.mrb[0].mxu0
    %v2809 = vpop.f32.mrb[0].mxu0
    %v2810 = vpop.f32.mrb[0].mxu0
    %2811 = vdwg.mxu0
    %v2812 = vadd.f32 %v2464, %v2807
    %v2813 = vxor.u32 %v2812, 2147483648
    %v2814 = vmul.f32 %v2813, 1.442695
    %v2815 = vpow.pop %v2814
    %v2816 = vadd.f32 %v2815, 1.0
    %v2817 = vrcp.pop %v2816
    %v2818 = vmul.f32 1.0, %v2817
    %v2819 = vtanh.pop %v2812
    %v2820 = vmul.f32 %v2818, %v2758
    %2822 = vrot.lane.b32.xlu0 %v2819, 64
    %v2823 = vpop.permute.xlu0 %2822
    %v2825 = vmul.f32 %v2818, %v2823
    %2827 = vrot.lane.b32.xlu0 %v2825, 32
    %v2828 = vpop.permute.xlu0 %2827
    %v2830 = vadd.f32 %v2820, %v2828
    %v2831 = vtanh.pop %v2830
    %2833 = vrot.lane.b32.xlu0 %v2831, 64
    %v2834 = vpop.permute.xlu0 %2833
    %v2836 = vmul.f32 %v2818, %v2834
    %v2837 = vpack.c.bf16 %v2836, %v2836
    %2839 = vrot.lane.b32.xlu0 %v2837, 32
    %v2840 = vpop.permute.xlu0 %2839
    %v2842 = vsel %vm977, %v2840, 0
    %2844 = vmatprep.subr.bf16.mxu0 0
    %2845 = vmatpush1.bf16.msra.mxu0 %v2480
    %2846 = vmatprep.subr.bf16.mxu0 0
    %2847 = vmatpush1.bf16.msra.mxu0 %v2481
    %2848 = vmatprep.subr.bf16.mxu0 0
    %2849 = vmatpush1.bf16.msra.mxu0 0
    %2850 = vmatprep.subr.bf16.mxu0 0
    %2851 = vmatpush1.bf16.msra.mxu0 0
    %2852 = vmatprep.subr.bf16.mxu0 0
    %2853 = vmatpush1.bf16.msra.mxu0 0
    %2854 = vmatprep.subr.bf16.mxu0 0
    %2855 = vmatpush1.bf16.msra.mxu0 0
    %2856 = vmatprep.subr.bf16.mxu0 0
    %2857 = vmatpush1.bf16.msra.mxu0 0
    %2858 = vmatprep.subr.bf16.mxu0 0
    %2859 = vmatpush1.bf16.msra.mxu0 0
    %2860 = vmatprep.subr.bf16.mxu0 0
    %2861 = vmatpush1.bf16.msra.mxu0 0
    %2862 = vmatprep.subr.bf16.mxu0 0
    %2863 = vmatpush1.bf16.msra.mxu0 0
    %2864 = vmatprep.subr.bf16.mxu0 0
    %2865 = vmatpush1.bf16.msra.mxu0 0
    %2866 = vmatprep.subr.bf16.mxu0 0
    %2867 = vmatpush1.bf16.msra.mxu0 0
    %2868 = vmatprep.subr.bf16.mxu0 0
    %2869 = vmatpush1.bf16.msra.mxu0 0
    %2870 = vmatprep.subr.bf16.mxu0 0
    %2871 = vmatpush1.bf16.msra.mxu0 0
    %2872 = vmatprep.subr.bf16.mxu0 0
    %2873 = vmatpush1.bf16.msra.mxu0 0
    %2874 = vmatprep.subr.bf16.mxu0 0
    %2875 = vmatpush1.bf16.msra.mxu0 0
    %2876 = vmatprep.mubr.bf16.mxu0 0
    %2877 = vmatmul.mubr.bf16.gmra.mrb[0].mxu0 %v2842
    %v2878 = vpop.f32.mrb[0].mxu0
    %v2879 = vadd.f32 0.0, %v2878
    %v2880 = vpop.f32.mrb[0].mxu0
    %v2881 = vpop.f32.mrb[0].mxu0
    %v2882 = vpop.f32.mrb[0].mxu0
    %2883 = vdwg.mxu0
    %v2884 = vadd.f32 %v2466, %v2879
    %v2885 = vxor.u32 %v2884, 2147483648
    %v2886 = vmul.f32 %v2885, 1.442695
    %v2887 = vpow.pop %v2886
    %v2888 = vadd.f32 %v2887, 1.0
    %v2889 = vrcp.pop %v2888
    %v2890 = vmul.f32 1.0, %v2889
    %v2891 = vtanh.pop %v2884
    %v2892 = vmul.f32 %v2890, %v2830
    %2894 = vrot.lane.b32.xlu0 %v2891, 64
    %v2895 = vpop.permute.xlu0 %2894
    %v2897 = vmul.f32 %v2890, %v2895
    %2899 = vrot.lane.b32.xlu0 %v2897, 32
    %v2900 = vpop.permute.xlu0 %2899
    %v2902 = vadd.f32 %v2892, %v2900
    %v2903 = vtanh.pop %v2902
    %2905 = vrot.lane.b32.xlu0 %v2903, 64
    %v2906 = vpop.permute.xlu0 %2905
    %v2908 = vmul.f32 %v2890, %v2906
    %v2909 = vpack.c.bf16 %v2908, %v2908
    %2911 = vrot.lane.b32.xlu0 %v2909, 32
    %v2912 = vpop.permute.xlu0 %2911
    %v2914 = vsel %vm977, %v2912, 0
    %2916 = vmatprep.subr.bf16.mxu0 0
    %2917 = vmatpush1.bf16.msra.mxu0 %v2480
    %2918 = vmatprep.subr.bf16.mxu0 0
    %2919 = vmatpush1.bf16.msra.mxu0 %v2481
    %2920 = vmatprep.subr.bf16.mxu0 0
    %2921 = vmatpush1.bf16.msra.mxu0 0
    %2922 = vmatprep.subr.bf16.mxu0 0
    %2923 = vmatpush1.bf16.msra.mxu0 0
    %2924 = vmatprep.subr.bf16.mxu0 0
    %2925 = vmatpush1.bf16.msra.mxu0 0
    %2926 = vmatprep.subr.bf16.mxu0 0
    %2927 = vmatpush1.bf16.msra.mxu0 0
    %2928 = vmatprep.subr.bf16.mxu0 0
    %2929 = vmatpush1.bf16.msra.mxu0 0
    %2930 = vmatprep.subr.bf16.mxu0 0
    %2931 = vmatpush1.bf16.msra.mxu0 0
    %2932 = vmatprep.subr.bf16.mxu0 0
    %2933 = vmatpush1.bf16.msra.mxu0 0
    %2934 = vmatprep.subr.bf16.mxu0 0
    %2935 = vmatpush1.bf16.msra.mxu0 0
    %2936 = vmatprep.subr.bf16.mxu0 0
    %2937 = vmatpush1.bf16.msra.mxu0 0
    %2938 = vmatprep.subr.bf16.mxu0 0
    %2939 = vmatpush1.bf16.msra.mxu0 0
    %2940 = vmatprep.subr.bf16.mxu0 0
    %2941 = vmatpush1.bf16.msra.mxu0 0
    %2942 = vmatprep.subr.bf16.mxu0 0
    %2943 = vmatpush1.bf16.msra.mxu0 0
    %2944 = vmatprep.subr.bf16.mxu0 0
    %2945 = vmatpush1.bf16.msra.mxu0 0
    %2946 = vmatprep.subr.bf16.mxu0 0
    %2947 = vmatpush1.bf16.msra.mxu0 0
    %2948 = vmatprep.mubr.bf16.mxu0 0
    %2949 = vmatmul.mubr.bf16.gmra.mrb[0].mxu0 %v2914
    %v2950 = vpop.f32.mrb[0].mxu0
    %v2951 = vadd.f32 0.0, %v2950
    %v2952 = vpop.f32.mrb[0].mxu0
    %v2953 = vpop.f32.mrb[0].mxu0
    %v2954 = vpop.f32.mrb[0].mxu0
    %2955 = vdwg.mxu0
    %v2956 = vadd.f32 %v2468, %v2951
    %v2957 = vxor.u32 %v2956, 2147483648
    %v2958 = vmul.f32 %v2957, 1.442695
    %v2959 = vpow.pop %v2958
    %v2960 = vadd.f32 %v2959, 1.0
    %v2961 = vrcp.pop %v2960
    %v2962 = vmul.f32 1.0, %v2961
    %v2963 = vtanh.pop %v2956
    %v2964 = vmul.f32 %v2962, %v2902
    %2966 = vrot.lane.b32.xlu0 %v2963, 64
    %v2967 = vpop.permute.xlu0 %2966
    %v2969 = vmul.f32 %v2962, %v2967
    %2971 = vrot.lane.b32.xlu0 %v2969, 32
    %v2972 = vpop.permute.xlu0 %2971
    %v2974 = vadd.f32 %v2964, %v2972
    %v2975 = vtanh.pop %v2974
    %2977 = vrot.lane.b32.xlu0 %v2975, 64
    %v2978 = vpop.permute.xlu0 %2977
    %v2980 = vmul.f32 %v2962, %v2978
    %v2981 = vpack.c.bf16 %v2980, %v2980
    %2983 = vrot.lane.b32.xlu0 %v2981, 32
    %v2984 = vpop.permute.xlu0 %2983
    %v2986 = vsel %vm977, %v2984, 0
    %2988 = vmatprep.subr.bf16.mxu0 0
    %2989 = vmatpush1.bf16.msra.mxu0 %v2480
    %2990 = vmatprep.subr.bf16.mxu0 0
    %2991 = vmatpush1.bf16.msra.mxu0 %v2481
    %2992 = vmatprep.subr.bf16.mxu0 0
    %2993 = vmatpush1.bf16.msra.mxu0 0
    %2994 = vmatprep.subr.bf16.mxu0 0
    %2995 = vmatpush1.bf16.msra.mxu0 0
    %2996 = vmatprep.subr.bf16.mxu0 0
    %2997 = vmatpush1.bf16.msra.mxu0 0
    %2998 = vmatprep.subr.bf16.mxu0 0
    %2999 = vmatpush1.bf16.msra.mxu0 0
    %3000 = vmatprep.subr.bf16.mxu0 0
    %3001 = vmatpush1.bf16.msra.mxu0 0
    %3002 = vmatprep.subr.bf16.mxu0 0
    %3003 = vmatpush1.bf16.msra.mxu0 0
    %3004 = vmatprep.subr.bf16.mxu0 0
    %3005 = vmatpush1.bf16.msra.mxu0 0
    %3006 = vmatprep.subr.bf16.mxu0 0
    %3007 = vmatpush1.bf16.msra.mxu0 0
    %3008 = vmatprep.subr.bf16.mxu0 0
    %3009 = vmatpush1.bf16.msra.mxu0 0
    %3010 = vmatprep.subr.bf16.mxu0 0
    %3011 = vmatpush1.bf16.msra.mxu0 0
    %3012 = vmatprep.subr.bf16.mxu0 0
    %3013 = vmatpush1.bf16.msra.mxu0 0
    %3014 = vmatprep.subr.bf16.mxu0 0
    %3015 = vmatpush1.bf16.msra.mxu0 0
    %3016 = vmatprep.subr.bf16.mxu0 0
    %3017 = vmatpush1.bf16.msra.mxu0 0
    %3018 = vmatprep.subr.bf16.mxu0 0
    %3019 = vmatpush1.bf16.msra.mxu0 0
    %3020 = vmatprep.mubr.bf16.mxu0 0
    %3021 = vmatmul.mubr.bf16.gmra.mrb[0].mxu0 %v2986
    %v3022 = vpop.f32.mrb[0].mxu0
    %v3023 = vadd.f32 0.0, %v3022
    %v3024 = vpop.f32.mrb[0].mxu0
    %v3025 = vpop.f32.mrb[0].mxu0
    %v3026 = vpop.f32.mrb[0].mxu0
    %3027 = vdwg.mxu0
    %v3028 = vadd.f32 %v2470, %v3023
    %v3029 = vxor.u32 %v3028, 2147483648
    %v3030 = vmul.f32 %v3029, 1.442695
    %v3031 = vpow.pop %v3030
    %v3032 = vadd.f32 %v3031, 1.0
    %v3033 = vrcp.pop %v3032
    %v3034 = vmul.f32 1.0, %v3033
    %v3035 = vtanh.pop %v3028
    %v3036 = vmul.f32 %v3034, %v2974
    %3038 = vrot.lane.b32.xlu0 %v3035, 64
    %v3039 = vpop.permute.xlu0 %3038
    %v3041 = vmul.f32 %v3034, %v3039
    %3043 = vrot.lane.b32.xlu0 %v3041, 32
    %v3044 = vpop.permute.xlu0 %3043
    %v3046 = vadd.f32 %v3036, %v3044
    %v3047 = vtanh.pop %v3046
    %3049 = vrot.lane.b32.xlu0 %v3047, 64
    %v3050 = vpop.permute.xlu0 %3049
    %v3052 = vmul.f32 %v3034, %v3050
    %v3057 = vunpack.c.l.b16 %v790
    %v3058 = vunpack.c.l.b16 %v791
    %v3059 = vunpack.c.l.b16 %v792
    %v3060 = vunpack.c.l.b16 %v793
    %v3061 = vpack.c.b16 %v3058, %v3057
    %v3062 = vpack.c.b16 %v3060, %v3059
    %3065 = vmatprep.subr.bf16.mxu0 0
    %3066 = vmatpush1.bf16.msra.mxu0 %v3061
    %3067 = vmatprep.subr.bf16.mxu0 0
    %3068 = vmatpush1.bf16.msra.mxu0 %v3062
    %3069 = vmatprep.subr.bf16.mxu0 0
    %3070 = vmatpush1.bf16.msra.mxu0 0
    %3071 = vmatprep.subr.bf16.mxu0 0
    %3072 = vmatpush1.bf16.msra.mxu0 0
    %3073 = vmatprep.subr.bf16.mxu0 0
    %3074 = vmatpush1.bf16.msra.mxu0 0
    %3075 = vmatprep.subr.bf16.mxu0 0
    %3076 = vmatpush1.bf16.msra.mxu0 0
    %3077 = vmatprep.subr.bf16.mxu0 0
    %3078 = vmatpush1.bf16.msra.mxu0 0
    %3079 = vmatprep.subr.bf16.mxu0 0
    %3080 = vmatpush1.bf16.msra.mxu0 0
    %3081 = vmatprep.subr.bf16.mxu0 0
    %3082 = vmatpush1.bf16.msra.mxu0 0
    %3083 = vmatprep.subr.bf16.mxu0 0
    %3084 = vmatpush1.bf16.msra.mxu0 0
    %3085 = vmatprep.subr.bf16.mxu0 0
    %3086 = vmatpush1.bf16.msra.mxu0 0
    %3087 = vmatprep.subr.bf16.mxu0 0
    %3088 = vmatpush1.bf16.msra.mxu0 0
    %3089 = vmatprep.subr.bf16.mxu0 0
    %3090 = vmatpush1.bf16.msra.mxu0 0
    %3091 = vmatprep.subr.bf16.mxu0 0
    %3092 = vmatpush1.bf16.msra.mxu0 0
    %3093 = vmatprep.subr.bf16.mxu0 0
    %3094 = vmatpush1.bf16.msra.mxu0 0
    %3095 = vmatprep.subr.bf16.mxu0 0
    %3096 = vmatpush1.bf16.msra.mxu0 0
    %3097 = vmatprep.mubr.bf16.mxu0 0
    %3098 = vmatmul.mubr.bf16.gmra.mrb[0].mxu0 %v979
    %v3099 = vpop.f32.mrb[0].mxu0
    %v3100 = vadd.f32 0.0, %v3099
    %v3101 = vpop.f32.mrb[0].mxu0
    %v3102 = vpop.f32.mrb[0].mxu0
    %v3103 = vpop.f32.mrb[0].mxu0
    %3104 = vdwg.mxu0
    %v3105 = vadd.f32 %v2471, %v3100
    %v3106 = vxor.u32 %v3105, 2147483648
    %v3107 = vmul.f32 %v3106, 1.442695
    %v3108 = vpow.pop %v3107
    %v3109 = vadd.f32 %v3108, 1.0
    %v3110 = vrcp.pop %v3109
    %v3111 = vmul.f32 1.0, %v3110
    %v3112 = vtanh.pop %v3105
    %v3113 = vmul.f32 %v3111, 0.0
    %3115 = vrot.lane.b32.xlu0 %v3112, 64
    %v3116 = vpop.permute.xlu0 %3115
    %v3118 = vmul.f32 %v3111, %v3116
    %3120 = vrot.lane.b32.xlu0 %v3118, 32
    %v3121 = vpop.permute.xlu0 %3120
    %v3123 = vadd.f32 %v3113, %v3121
    %v3124 = vtanh.pop %v3123
    %3126 = vrot.lane.b32.xlu0 %v3124, 64
    %v3127 = vpop.permute.xlu0 %3126
    %v3129 = vmul.f32 %v3111, %v3127
    %v3130 = vpack.c.bf16 %v3129, %v3129
    %3132 = vrot.lane.b32.xlu0 %v3130, 32
    %v3133 = vpop.permute.xlu0 %3132
    %v3135 = vsel %vm977, %v3133, 0
    %3137 = vmatprep.subr.bf16.mxu0 0
    %3138 = vmatpush1.bf16.msra.mxu0 %v3061
    %3139 = vmatprep.subr.bf16.mxu0 0
    %3140 = vmatpush1.bf16.msra.mxu0 %v3062
    %3141 = vmatprep.subr.bf16.mxu0 0
    %3142 = vmatpush1.bf16.msra.mxu0 0
    %3143 = vmatprep.subr.bf16.mxu0 0
    %3144 = vmatpush1.bf16.msra.mxu0 0
    %3145 = vmatprep.subr.bf16.mxu0 0
    %3146 = vmatpush1.bf16.msra.mxu0 0
    %3147 = vmatprep.subr.bf16.mxu0 0
    %3148 = vmatpush1.bf16.msra.mxu0 0
    %3149 = vmatprep.subr.bf16.mxu0 0
    %3150 = vmatpush1.bf16.msra.mxu0 0
    %3151 = vmatprep.subr.bf16.mxu0 0
    %3152 = vmatpush1.bf16.msra.mxu0 0
    %3153 = vmatprep.subr.bf16.mxu0 0
    %3154 = vmatpush1.bf16.msra.mxu0 0
    %3155 = vmatprep.subr.bf16.mxu0 0
    %3156 = vmatpush1.bf16.msra.mxu0 0
    %3157 = vmatprep.subr.bf16.mxu0 0
    %3158 = vmatpush1.bf16.msra.mxu0 0
    %3159 = vmatprep.subr.bf16.mxu0 0
    %3160 = vmatpush1.bf16.msra.mxu0 0
    %3161 = vmatprep.subr.bf16.mxu0 0
    %3162 = vmatpush1.bf16.msra.mxu0 0
    %3163 = vmatprep.subr.bf16.mxu0 0
    %3164 = vmatpush1.bf16.msra.mxu0 0
    %3165 = vmatprep.subr.bf16.mxu0 0
    %3166 = vmatpush1.bf16.msra.mxu0 0
    %3167 = vmatprep.subr.bf16.mxu0 0
    %3168 = vmatpush1.bf16.msra.mxu0 0
    %3169 = vmatprep.mubr.bf16.mxu0 0
    %3170 = vmatmul.mubr.bf16.gmra.mrb[0].mxu0 %v3135
    %v3171 = vpop.f32.mrb[0].mxu0
    %v3172 = vadd.f32 0.0, %v3171
    %v3173 = vpop.f32.mrb[0].mxu0
    %v3174 = vpop.f32.mrb[0].mxu0
    %v3175 = vpop.f32.mrb[0].mxu0
    %3176 = vdwg.mxu0
    %v3177 = vadd.f32 %v2469, %v3172
    %v3178 = vxor.u32 %v3177, 2147483648
    %v3179 = vmul.f32 %v3178, 1.442695
    %v3180 = vpow.pop %v3179
    %v3181 = vadd.f32 %v3180, 1.0
    %v3182 = vrcp.pop %v3181
    %v3183 = vmul.f32 1.0, %v3182
    %v3184 = vtanh.pop %v3177
    %v3185 = vmul.f32 %v3183, %v3123
    %3187 = vrot.lane.b32.xlu0 %v3184, 64
    %v3188 = vpop.permute.xlu0 %3187
    %v3190 = vmul.f32 %v3183, %v3188
    %3192 = vrot.lane.b32.xlu0 %v3190, 32
    %v3193 = vpop.permute.xlu0 %3192
    %v3195 = vadd.f32 %v3185, %v3193
    %v3196 = vtanh.pop %v3195
    %3198 = vrot.lane.b32.xlu0 %v3196, 64
    %v3199 = vpop.permute.xlu0 %3198
    %v3201 = vmul.f32 %v3183, %v3199
    %v3202 = vpack.c.bf16 %v3201, %v3201
    %3204 = vrot.lane.b32.xlu0 %v3202, 32
    %v3205 = vpop.permute.xlu0 %3204
    %v3207 = vsel %vm977, %v3205, 0
    %3209 = vmatprep.subr.bf16.mxu0 0
    %3210 = vmatpush1.bf16.msra.mxu0 %v3061
    %3211 = vmatprep.subr.bf16.mxu0 0
    %3212 = vmatpush1.bf16.msra.mxu0 %v3062
    %3213 = vmatprep.subr.bf16.mxu0 0
    %3214 = vmatpush1.bf16.msra.mxu0 0
    %3215 = vmatprep.subr.bf16.mxu0 0
    %3216 = vmatpush1.bf16.msra.mxu0 0
    %3217 = vmatprep.subr.bf16.mxu0 0
    %3218 = vmatpush1.bf16.msra.mxu0 0
    %3219 = vmatprep.subr.bf16.mxu0 0
    %3220 = vmatpush1.bf16.msra.mxu0 0
    %3221 = vmatprep.subr.bf16.mxu0 0
    %3222 = vmatpush1.bf16.msra.mxu0 0
    %3223 = vmatprep.subr.bf16.mxu0 0
    %3224 = vmatpush1.bf16.msra.mxu0 0
    %3225 = vmatprep.subr.bf16.mxu0 0
    %3226 = vmatpush1.bf16.msra.mxu0 0
    %3227 = vmatprep.subr.bf16.mxu0 0
    %3228 = vmatpush1.bf16.msra.mxu0 0
    %3229 = vmatprep.subr.bf16.mxu0 0
    %3230 = vmatpush1.bf16.msra.mxu0 0
    %3231 = vmatprep.subr.bf16.mxu0 0
    %3232 = vmatpush1.bf16.msra.mxu0 0
    %3233 = vmatprep.subr.bf16.mxu0 0
    %3234 = vmatpush1.bf16.msra.mxu0 0
    %3235 = vmatprep.subr.bf16.mxu0 0
    %3236 = vmatpush1.bf16.msra.mxu0 0
    %3237 = vmatprep.subr.bf16.mxu0 0
    %3238 = vmatpush1.bf16.msra.mxu0 0
    %3239 = vmatprep.subr.bf16.mxu0 0
    %3240 = vmatpush1.bf16.msra.mxu0 0
    %3241 = vmatprep.mubr.bf16.mxu0 0
    %3242 = vmatmul.mubr.bf16.gmra.mrb[0].mxu0 %v3207
    %v3243 = vpop.f32.mrb[0].mxu0
    %v3244 = vadd.f32 0.0, %v3243
    %v3245 = vpop.f32.mrb[0].mxu0
    %v3246 = vpop.f32.mrb[0].mxu0
    %v3247 = vpop.f32.mrb[0].mxu0
    %3248 = vdwg.mxu0
    %v3249 = vadd.f32 %v2467, %v3244
    %v3250 = vxor.u32 %v3249, 2147483648
    %v3251 = vmul.f32 %v3250, 1.442695
    %v3252 = vpow.pop %v3251
    %v3253 = vadd.f32 %v3252, 1.0
    %v3254 = vrcp.pop %v3253
    %v3255 = vmul.f32 1.0, %v3254
    %v3256 = vtanh.pop %v3249
    %v3257 = vmul.f32 %v3255, %v3195
    %3259 = vrot.lane.b32.xlu0 %v3256, 64
    %v3260 = vpop.permute.xlu0 %3259
    %v3262 = vmul.f32 %v3255, %v3260
    %3264 = vrot.lane.b32.xlu0 %v3262, 32
    %v3265 = vpop.permute.xlu0 %3264
    %v3267 = vadd.f32 %v3257, %v3265
    %v3268 = vtanh.pop %v3267
    %3270 = vrot.lane.b32.xlu0 %v3268, 64
    %v3271 = vpop.permute.xlu0 %3270
    %v3273 = vmul.f32 %v3255, %v3271
    %v3274 = vpack.c.bf16 %v3273, %v3273
    %3276 = vrot.lane.b32.xlu0 %v3274, 32
    %v3277 = vpop.permute.xlu0 %3276
    %v3279 = vsel %vm977, %v3277, 0
    %3281 = vmatprep.subr.bf16.mxu0 0
    %3282 = vmatpush1.bf16.msra.mxu0 %v3061
    %3283 = vmatprep.subr.bf16.mxu0 0
    %3284 = vmatpush1.bf16.msra.mxu0 %v3062
    %3285 = vmatprep.subr.bf16.mxu0 0
    %3286 = vmatpush1.bf16.msra.mxu0 0
    %3287 = vmatprep.subr.bf16.mxu0 0
    %3288 = vmatpush1.bf16.msra.mxu0 0
    %3289 = vmatprep.subr.bf16.mxu0 0
    %3290 = vmatpush1.bf16.msra.mxu0 0
    %3291 = vmatprep.subr.bf16.mxu0 0
    %3292 = vmatpush1.bf16.msra.mxu0 0
    %3293 = vmatprep.subr.bf16.mxu0 0
    %3294 = vmatpush1.bf16.msra.mxu0 0
    %3295 = vmatprep.subr.bf16.mxu0 0
    %3296 = vmatpush1.bf16.msra.mxu0 0
    %3297 = vmatprep.subr.bf16.mxu0 0
    %3298 = vmatpush1.bf16.msra.mxu0 0
    %3299 = vmatprep.subr.bf16.mxu0 0
    %3300 = vmatpush1.bf16.msra.mxu0 0
    %3301 = vmatprep.subr.bf16.mxu0 0
    %3302 = vmatpush1.bf16.msra.mxu0 0
    %3303 = vmatprep.subr.bf16.mxu0 0
    %3304 = vmatpush1.bf16.msra.mxu0 0
    %3305 = vmatprep.subr.bf16.mxu0 0
    %3306 = vmatpush1.bf16.msra.mxu0 0
    %3307 = vmatprep.subr.bf16.mxu0 0
    %3308 = vmatpush1.bf16.msra.mxu0 0
    %3309 = vmatprep.subr.bf16.mxu0 0
    %3310 = vmatpush1.bf16.msra.mxu0 0
    %3311 = vmatprep.subr.bf16.mxu0 0
    %3312 = vmatpush1.bf16.msra.mxu0 0
    %3313 = vmatprep.mubr.bf16.mxu0 0
    %3314 = vmatmul.mubr.bf16.gmra.mrb[0].mxu0 %v3279
    %v3315 = vpop.f32.mrb[0].mxu0
    %v3316 = vadd.f32 0.0, %v3315
    %v3317 = vpop.f32.mrb[0].mxu0
    %v3318 = vpop.f32.mrb[0].mxu0
    %v3319 = vpop.f32.mrb[0].mxu0
    %3320 = vdwg.mxu0
    %v3321 = vadd.f32 %v2465, %v3316
    %v3322 = vxor.u32 %v3321, 2147483648
    %v3323 = vmul.f32 %v3322, 1.442695
    %v3324 = vpow.pop %v3323
    %v3325 = vadd.f32 %v3324, 1.0
    %v3326 = vrcp.pop %v3325
    %v3327 = vmul.f32 1.0, %v3326
    %v3328 = vtanh.pop %v3321
    %v3329 = vmul.f32 %v3327, %v3267
    %3331 = vrot.lane.b32.xlu0 %v3328, 64
    %v3332 = vpop.permute.xlu0 %3331
    %v3334 = vmul.f32 %v3327, %v3332
    %3336 = vrot.lane.b32.xlu0 %v3334, 32
    %v3337 = vpop.permute.xlu0 %3336
    %v3339 = vadd.f32 %v3329, %v3337
    %v3340 = vtanh.pop %v3339
    %3342 = vrot.lane.b32.xlu0 %v3340, 64
    %v3343 = vpop.permute.xlu0 %3342
    %v3345 = vmul.f32 %v3327, %v3343
    %v3346 = vpack.c.bf16 %v3345, %v3345
    %3348 = vrot.lane.b32.xlu0 %v3346, 32
    %v3349 = vpop.permute.xlu0 %3348
    %v3351 = vsel %vm977, %v3349, 0
    %3353 = vmatprep.subr.bf16.mxu0 0
    %3354 = vmatpush1.bf16.msra.mxu0 %v3061
    %3355 = vmatprep.subr.bf16.mxu0 0
    %3356 = vmatpush1.bf16.msra.mxu0 %v3062
    %3357 = vmatprep.subr.bf16.mxu0 0
    %3358 = vmatpush1.bf16.msra.mxu0 0
    %3359 = vmatprep.subr.bf16.mxu0 0
    %3360 = vmatpush1.bf16.msra.mxu0 0
    %3361 = vmatprep.subr.bf16.mxu0 0
    %3362 = vmatpush1.bf16.msra.mxu0 0
    %3363 = vmatprep.subr.bf16.mxu0 0
    %3364 = vmatpush1.bf16.msra.mxu0 0
    %3365 = vmatprep.subr.bf16.mxu0 0
    %3366 = vmatpush1.bf16.msra.mxu0 0
    %3367 = vmatprep.subr.bf16.mxu0 0
    %3368 = vmatpush1.bf16.msra.mxu0 0
    %3369 = vmatprep.subr.bf16.mxu0 0
    %3370 = vmatpush1.bf16.msra.mxu0 0
    %3371 = vmatprep.subr.bf16.mxu0 0
    %3372 = vmatpush1.bf16.msra.mxu0 0
    %3373 = vmatprep.subr.bf16.mxu0 0
    %3374 = vmatpush1.bf16.msra.mxu0 0
    %3375 = vmatprep.subr.bf16.mxu0 0
    %3376 = vmatpush1.bf16.msra.mxu0 0
    %3377 = vmatprep.subr.bf16.mxu0 0
    %3378 = vmatpush1.bf16.msra.mxu0 0
    %3379 = vmatprep.subr.bf16.mxu0 0
    %3380 = vmatpush1.bf16.msra.mxu0 0
    %3381 = vmatprep.subr.bf16.mxu0 0
    %3382 = vmatpush1.bf16.msra.mxu0 0
    %3383 = vmatprep.subr.bf16.mxu0 0
    %3384 = vmatpush1.bf16.msra.mxu0 0
    %3385 = vmatprep.mubr.bf16.mxu0 0
    %3386 = vmatmul.mubr.bf16.gmra.mrb[0].mxu0 %v3351
    %v3387 = vpop.f32.mrb[0].mxu0
    %v3388 = vadd.f32 0.0, %v3387
    %v3389 = vpop.f32.mrb[0].mxu0
    %v3390 = vpop.f32.mrb[0].mxu0
    %v3391 = vpop.f32.mrb[0].mxu0
    %3392 = vdwg.mxu0
    %v3393 = vadd.f32 %v2463, %v3388
    %v3394 = vxor.u32 %v3393, 2147483648
    %v3395 = vmul.f32 %v3394, 1.442695
    %v3396 = vpow.pop %v3395
    %v3397 = vadd.f32 %v3396, 1.0
    %v3398 = vrcp.pop %v3397
    %v3399 = vmul.f32 1.0, %v3398
    %v3400 = vtanh.pop %v3393
    %v3401 = vmul.f32 %v3399, %v3339
    %3403 = vrot.lane.b32.xlu0 %v3400, 64
    %v3404 = vpop.permute.xlu0 %3403
    %v3406 = vmul.f32 %v3399, %v3404
    %3408 = vrot.lane.b32.xlu0 %v3406, 32
    %v3409 = vpop.permute.xlu0 %3408
    %v3411 = vadd.f32 %v3401, %v3409
    %v3412 = vtanh.pop %v3411
    %3414 = vrot.lane.b32.xlu0 %v3412, 64
    %v3415 = vpop.permute.xlu0 %3414
    %v3417 = vmul.f32 %v3399, %v3415
    %v3418 = vpack.c.bf16 %v3417, %v3417
    %3420 = vrot.lane.b32.xlu0 %v3418, 32
    %v3421 = vpop.permute.xlu0 %3420
    %v3423 = vsel %vm977, %v3421, 0
    %3425 = vmatprep.subr.bf16.mxu0 0
    %3426 = vmatpush1.bf16.msra.mxu0 %v3061
    %3427 = vmatprep.subr.bf16.mxu0 0
    %3428 = vmatpush1.bf16.msra.mxu0 %v3062
    %3429 = vmatprep.subr.bf16.mxu0 0
    %3430 = vmatpush1.bf16.msra.mxu0 0
    %3431 = vmatprep.subr.bf16.mxu0 0
    %3432 = vmatpush1.bf16.msra.mxu0 0
    %3433 = vmatprep.subr.bf16.mxu0 0
    %3434 = vmatpush1.bf16.msra.mxu0 0
    %3435 = vmatprep.subr.bf16.mxu0 0
    %3436 = vmatpush1.bf16.msra.mxu0 0
    %3437 = vmatprep.subr.bf16.mxu0 0
    %3438 = vmatpush1.bf16.msra.mxu0 0
    %3439 = vmatprep.subr.bf16.mxu0 0
    %3440 = vmatpush1.bf16.msra.mxu0 0
    %3441 = vmatprep.subr.bf16.mxu0 0
    %3442 = vmatpush1.bf16.msra.mxu0 0
    %3443 = vmatprep.subr.bf16.mxu0 0
    %3444 = vmatpush1.bf16.msra.mxu0 0
    %3445 = vmatprep.subr.bf16.mxu0 0
    %3446 = vmatpush1.bf16.msra.mxu0 0
    %3447 = vmatprep.subr.bf16.mxu0 0
    %3448 = vmatpush1.bf16.msra.mxu0 0
    %3449 = vmatprep.subr.bf16.mxu0 0
    %3450 = vmatpush1.bf16.msra.mxu0 0
    %3451 = vmatprep.subr.bf16.mxu0 0
    %3452 = vmatpush1.bf16.msra.mxu0 0
    %3453 = vmatprep.subr.bf16.mxu0 0
    %3454 = vmatpush1.bf16.msra.mxu0 0
    %3455 = vmatprep.subr.bf16.mxu0 0
    %3456 = vmatpush1.bf16.msra.mxu0 0
    %3457 = vmatprep.mubr.bf16.mxu0 0
    %3458 = vmatmul.mubr.bf16.gmra.mrb[0].mxu0 %v3423
    %v3459 = vpop.f32.mrb[0].mxu0
    %v3460 = vadd.f32 0.0, %v3459
    %v3461 = vpop.f32.mrb[0].mxu0
    %v3462 = vpop.f32.mrb[0].mxu0
    %v3463 = vpop.f32.mrb[0].mxu0
    %3464 = vdwg.mxu0
    %v3465 = vadd.f32 %v2461, %v3460
    %v3466 = vxor.u32 %v3465, 2147483648
    %v3467 = vmul.f32 %v3466, 1.442695
    %v3468 = vpow.pop %v3467
    %v3469 = vadd.f32 %v3468, 1.0
    %v3470 = vrcp.pop %v3469
    %v3471 = vmul.f32 1.0, %v3470
    %v3472 = vtanh.pop %v3465
    %v3473 = vmul.f32 %v3471, %v3411
    %3475 = vrot.lane.b32.xlu0 %v3472, 64
    %v3476 = vpop.permute.xlu0 %3475
    %v3478 = vmul.f32 %v3471, %v3476
    %3480 = vrot.lane.b32.xlu0 %v3478, 32
    %v3481 = vpop.permute.xlu0 %3480
    %v3483 = vadd.f32 %v3473, %v3481
    %v3484 = vtanh.pop %v3483
    %3486 = vrot.lane.b32.xlu0 %v3484, 64
    %v3487 = vpop.permute.xlu0 %3486
    %v3489 = vmul.f32 %v3471, %v3487
    %v3490 = vpack.c.bf16 %v3489, %v3489
    %3492 = vrot.lane.b32.xlu0 %v3490, 32
    %v3493 = vpop.permute.xlu0 %3492
    %v3495 = vsel %vm977, %v3493, 0
    %3497 = vmatprep.subr.bf16.mxu0 0
    %3498 = vmatpush1.bf16.msra.mxu0 %v3061
    %3499 = vmatprep.subr.bf16.mxu0 0
    %3500 = vmatpush1.bf16.msra.mxu0 %v3062
    %3501 = vmatprep.subr.bf16.mxu0 0
    %3502 = vmatpush1.bf16.msra.mxu0 0
    %3503 = vmatprep.subr.bf16.mxu0 0
    %3504 = vmatpush1.bf16.msra.mxu0 0
    %3505 = vmatprep.subr.bf16.mxu0 0
    %3506 = vmatpush1.bf16.msra.mxu0 0
    %3507 = vmatprep.subr.bf16.mxu0 0
    %3508 = vmatpush1.bf16.msra.mxu0 0
    %3509 = vmatprep.subr.bf16.mxu0 0
    %3510 = vmatpush1.bf16.msra.mxu0 0
    %3511 = vmatprep.subr.bf16.mxu0 0
    %3512 = vmatpush1.bf16.msra.mxu0 0
    %3513 = vmatprep.subr.bf16.mxu0 0
    %3514 = vmatpush1.bf16.msra.mxu0 0
    %3515 = vmatprep.subr.bf16.mxu0 0
    %3516 = vmatpush1.bf16.msra.mxu0 0
    %3517 = vmatprep.subr.bf16.mxu0 0
    %3518 = vmatpush1.bf16.msra.mxu0 0
    %3519 = vmatprep.subr.bf16.mxu0 0
    %3520 = vmatpush1.bf16.msra.mxu0 0
    %3521 = vmatprep.subr.bf16.mxu0 0
    %3522 = vmatpush1.bf16.msra.mxu0 0
    %3523 = vmatprep.subr.bf16.mxu0 0
    %3524 = vmatpush1.bf16.msra.mxu0 0
    %3525 = vmatprep.subr.bf16.mxu0 0
    %3526 = vmatpush1.bf16.msra.mxu0 0
    %3527 = vmatprep.subr.bf16.mxu0 0
    %3528 = vmatpush1.bf16.msra.mxu0 0
    %3529 = vmatprep.mubr.bf16.mxu0 0
    %3530 = vmatmul.mubr.bf16.gmra.mrb[0].mxu0 %v3495
    %v3531 = vpop.f32.mrb[0].mxu0
    %v3532 = vadd.f32 0.0, %v3531
    %v3533 = vpop.f32.mrb[0].mxu0
    %v3534 = vpop.f32.mrb[0].mxu0
    %v3535 = vpop.f32.mrb[0].mxu0
    %3536 = vdwg.mxu0
    %v3537 = vadd.f32 %v2459, %v3532
    %v3538 = vxor.u32 %v3537, 2147483648
    %v3539 = vmul.f32 %v3538, 1.442695
    %v3540 = vpow.pop %v3539
    %v3541 = vadd.f32 %v3540, 1.0
    %v3542 = vrcp.pop %v3541
    %v3543 = vmul.f32 1.0, %v3542
    %v3544 = vtanh.pop %v3537
    %v3545 = vmul.f32 %v3543, %v3483
    %3547 = vrot.lane.b32.xlu0 %v3544, 64
    %v3548 = vpop.permute.xlu0 %3547
    %v3550 = vmul.f32 %v3543, %v3548
    %3552 = vrot.lane.b32.xlu0 %v3550, 32
    %v3553 = vpop.permute.xlu0 %3552
    %v3555 = vadd.f32 %v3545, %v3553
    %v3556 = vtanh.pop %v3555
    %3558 = vrot.lane.b32.xlu0 %v3556, 64
    %v3559 = vpop.permute.xlu0 %3558
    %v3561 = vmul.f32 %v3543, %v3559
    %v3562 = vpack.c.bf16 %v3561, %v3561
    %3564 = vrot.lane.b32.xlu0 %v3562, 32
    %v3565 = vpop.permute.xlu0 %3564
    %v3567 = vsel %vm977, %v3565, 0
    %3569 = vmatprep.subr.bf16.mxu0 0
    %3570 = vmatpush1.bf16.msra.mxu0 %v3061
    %3571 = vmatprep.subr.bf16.mxu0 0
    %3572 = vmatpush1.bf16.msra.mxu0 %v3062
    %3573 = vmatprep.subr.bf16.mxu0 0
    %3574 = vmatpush1.bf16.msra.mxu0 0
    %3575 = vmatprep.subr.bf16.mxu0 0
    %3576 = vmatpush1.bf16.msra.mxu0 0
    %3577 = vmatprep.subr.bf16.mxu0 0
    %3578 = vmatpush1.bf16.msra.mxu0 0
    %3579 = vmatprep.subr.bf16.mxu0 0
    %3580 = vmatpush1.bf16.msra.mxu0 0
    %3581 = vmatprep.subr.bf16.mxu0 0
    %3582 = vmatpush1.bf16.msra.mxu0 0
    %3583 = vmatprep.subr.bf16.mxu0 0
    %3584 = vmatpush1.bf16.msra.mxu0 0
    %3585 = vmatprep.subr.bf16.mxu0 0
    %3586 = vmatpush1.bf16.msra.mxu0 0
    %3587 = vmatprep.subr.bf16.mxu0 0
    %3588 = vmatpush1.bf16.msra.mxu0 0
    %3589 = vmatprep.subr.bf16.mxu0 0
    %3590 = vmatpush1.bf16.msra.mxu0 0
    %3591 = vmatprep.subr.bf16.mxu0 0
    %3592 = vmatpush1.bf16.msra.mxu0 0
    %3593 = vmatprep.subr.bf16.mxu0 0
    %3594 = vmatpush1.bf16.msra.mxu0 0
    %3595 = vmatprep.subr.bf16.mxu0 0
    %3596 = vmatpush1.bf16.msra.mxu0 0
    %3597 = vmatprep.subr.bf16.mxu0 0
    %3598 = vmatpush1.bf16.msra.mxu0 0
    %3599 = vmatprep.subr.bf16.mxu0 0
    %3600 = vmatpush1.bf16.msra.mxu0 0
    %3601 = vmatprep.mubr.bf16.mxu0 0
    %3602 = vmatmul.mubr.bf16.gmra.mrb[0].mxu0 %v3567
    %v3603 = vpop.f32.mrb[0].mxu0
    %v3604 = vadd.f32 0.0, %v3603
    %v3605 = vpop.f32.mrb[0].mxu0
    %v3606 = vpop.f32.mrb[0].mxu0
    %v3607 = vpop.f32.mrb[0].mxu0
    %3608 = vdwg.mxu0
    %v3609 = vadd.f32 %v2457, %v3604
    %v3610 = vxor.u32 %v3609, 2147483648
    %v3611 = vmul.f32 %v3610, 1.442695
    %v3612 = vpow.pop %v3611
    %v3613 = vadd.f32 %v3612, 1.0
    %v3614 = vrcp.pop %v3613
    %v3615 = vmul.f32 1.0, %v3614
    %v3616 = vtanh.pop %v3609
    %v3617 = vmul.f32 %v3615, %v3555
    %3619 = vrot.lane.b32.xlu0 %v3616, 64
    %v3620 = vpop.permute.xlu0 %3619
    %v3622 = vmul.f32 %v3615, %v3620
    %3624 = vrot.lane.b32.xlu0 %v3622, 32
    %v3625 = vpop.permute.xlu0 %3624
    %v3627 = vadd.f32 %v3617, %v3625
    %v3628 = vtanh.pop %v3627
    %3630 = vrot.lane.b32.xlu0 %v3628, 64
    %v3631 = vpop.permute.xlu0 %3630
    %v3633 = vmul.f32 %v3615, %v3631
    %v3635 = vrot.slane %v3052, 7
    %vm3637 = vcmask 1040384
    %v3638 = vsel %vm3637, %v1584, %v3635
    %v3639 = vrot.slane %v1584, 1
    %v3641 = vsel %vm3637, %v3639, %v3052
    %v3643 = vrot.slane %v3633, 7
    %v3645 = vsel %vm3637, %v2205, %v3643
    %v3646 = vrot.slane %v2205, 1
    %v3648 = vsel %vm3637, %v3646, %v3633
    %v3650 = vrot.slane %v3046, 7
    %v3652 = vsel %vm3637, %v1578, %v3650
    %v3654 = vrot.slane %v1578, 1
    %v3656 = vsel %vm3637, %v3654, %v3046
    %v3658 = vrot.slane %v3627, 7
    %v3660 = vsel %vm3637, %v2199, %v3658
    %v3662 = vrot.slane %v2199, 1
    %v3664 = vsel %vm3637, %v3662, %v3627
    %3666 = vrot.lane.b32.xlu0 %v3638, 32
    %v3667 = vpop.permute.xlu0 %3666
    %3670 = vrot.lane.b32.xlu0 %v3641, 64
    %v3671 = vpop.permute.xlu0 %3670
    %3674 = vrot.lane.b32.xlu0 %v3645, 96
    %v3675 = vpop.permute.xlu0 %3674
    %3678 = vrot.lane.b32.xlu0 %v3652, 96
    %v3679 = vpop.permute.xlu0 %3678
    %3682 = vrot.lane.b32.xlu0 %v3660, 32
    %v3683 = vpop.permute.xlu0 %3682
    %3686 = vrot.lane.b32.xlu0 %v3664, 64
    %v3687 = vpop.permute.xlu0 %3686
    %v3689 = vsel %vm977, %v3667, %v3671
    %vm3690 = vcmask 523264
    %v3691 = vsel %vm3690, %v3689, %v3675
    %vm3692 = vcmask 785408
    %v3693 = vsel %vm3692, %v3691, %v3648
    %v3694 = vsel %vm977, %v3679, %v3656
    %v3695 = vsel %vm3690, %v3694, %v3683
    %v3696 = vsel %vm3692, %v3695, %v3687
    %v3697 = vld [vmem:[%s5] sm:$0xf]
    %v3698 = vld [vmem:[%s5 + $0x4] sm:$0xf]
    %v3699 = vld [vmem:[%s5 + $0x8] sm:$0xf]
    %v3700 = vld [vmem:[%s5 + $0xc] sm:$0xf]
    %v3701 = vld [vmem:[%s5 + $0x10] sm:$0xf]
    %v3702 = vld [vmem:[%s5 + $0x14] sm:$0xf]
    %v3703 = vld [vmem:[%s5 + $0x18] sm:$0xf]
    %v3704 = vld [vmem:[%s5 + $0x1c] sm:$0xf]
    %v3705 = vld [vmem:[%s5 + $0x20] sm:$0xf]
    %v3706 = vld [vmem:[%s5 + $0x24] sm:$0xf]
    %v3707 = vld [vmem:[%s5 + $0x28] sm:$0xf]
    %v3708 = vld [vmem:[%s5 + $0x2c] sm:$0xf]
    %v3709 = vld [vmem:[%s5 + $0x30] sm:$0xf]
    %v3710 = vld [vmem:[%s5 + $0x34] sm:$0xf]
    %v3711 = vld [vmem:[%s5 + $0x38] sm:$0xf]
    %v3712 = vld [vmem:[%s5 + $0x3c] sm:$0xf]
    %v3713 = vld [vmem:[%s5 + $0x40] sm:$0xf]
    %v3714 = vld [vmem:[%s5 + $0x44] sm:$0xf]
    %v3715 = vld [vmem:[%s5 + $0x48] sm:$0xf]
    %v3716 = vld [vmem:[%s5 + $0x4c] sm:$0xf]
    %v3717 = vld [vmem:[%s5 + $0x50] sm:$0xf]
    %v3718 = vld [vmem:[%s5 + $0x54] sm:$0xf]
    %v3719 = vld [vmem:[%s5 + $0x58] sm:$0xf]
    %v3720 = vld [vmem:[%s5 + $0x5c] sm:$0xf]
    %v3721 = vld [vmem:[%s5 + $0x60] sm:$0xf]
    %v3722 = vld [vmem:[%s5 + $0x64] sm:$0xf]
    %v3723 = vld [vmem:[%s5 + $0x68] sm:$0xf]
    %v3724 = vld [vmem:[%s5 + $0x6c] sm:$0xf]
    %v3725 = vld [vmem:[%s5 + $0x70] sm:$0xf]
    %v3726 = vld [vmem:[%s5 + $0x74] sm:$0xf]
    %v3727 = vld [vmem:[%s5 + $0x78] sm:$0xf]
    %v3728 = vld [vmem:[%s5 + $0x7c] sm:$0xf]
    %v3729 = vpack.c.bf16 %v3693, %v3693
    %v3730 = vpack.c.bf16 %v3696, %v3696
    %v3763 = vunpack.c.l.b16 %v3697
    %v3764 = vunpack.c.l.b16 %v3698
    %v3765 = vunpack.c.l.b16 %v3699
    %v3766 = vunpack.c.l.b16 %v3700
    %v3767 = vunpack.c.l.b16 %v3701
    %v3768 = vunpack.c.l.b16 %v3702
    %v3769 = vunpack.c.l.b16 %v3703
    %v3770 = vunpack.c.l.b16 %v3704
    %v3771 = vunpack.c.l.b16 %v3705
    %v3772 = vunpack.c.l.b16 %v3706
    %v3773 = vunpack.c.l.b16 %v3707
    %v3774 = vunpack.c.l.b16 %v3708
    %v3775 = vunpack.c.l.b16 %v3709
    %v3776 = vunpack.c.l.b16 %v3710
    %v3777 = vunpack.c.l.b16 %v3711
    %v3778 = vunpack.c.l.b16 %v3712
    %v3779 = vunpack.c.l.b16 %v3713
    %v3780 = vunpack.c.l.b16 %v3714
    %v3781 = vunpack.c.l.b16 %v3715
    %v3782 = vunpack.c.l.b16 %v3716
    %v3783 = vunpack.c.l.b16 %v3717
    %v3784 = vunpack.c.l.b16 %v3718
    %v3785 = vunpack.c.l.b16 %v3719
    %v3786 = vunpack.c.l.b16 %v3720
    %v3787 = vunpack.c.l.b16 %v3721
    %v3788 = vunpack.c.l.b16 %v3722
    %v3789 = vunpack.c.l.b16 %v3723
    %v3790 = vunpack.c.l.b16 %v3724
    %v3791 = vunpack.c.l.b16 %v3725
    %v3792 = vunpack.c.l.b16 %v3726
    %v3793 = vunpack.c.l.b16 %v3727
    %v3794 = vunpack.c.l.b16 %v3728
    %v3795 = vpack.c.b16 %v3764, %v3763
    %v3796 = vpack.c.b16 %v3766, %v3765
    %v3797 = vpack.c.b16 %v3768, %v3767
    %v3798 = vpack.c.b16 %v3770, %v3769
    %v3799 = vpack.c.b16 %v3772, %v3771
    %v3800 = vpack.c.b16 %v3774, %v3773
    %v3801 = vpack.c.b16 %v3776, %v3775
    %v3802 = vpack.c.b16 %v3778, %v3777
    %v3803 = vpack.c.b16 %v3780, %v3779
    %v3804 = vpack.c.b16 %v3782, %v3781
    %v3805 = vpack.c.b16 %v3784, %v3783
    %v3806 = vpack.c.b16 %v3786, %v3785
    %v3807 = vpack.c.b16 %v3788, %v3787
    %v3808 = vpack.c.b16 %v3790, %v3789
    %v3809 = vpack.c.b16 %v3792, %v3791
    %v3810 = vpack.c.b16 %v3794, %v3793
    %3827 = vmatprep.subr.bf16.mxu0 0
    %3828 = vmatpush1.bf16.msra.mxu0 %v3795
    %3829 = vmatprep.subr.bf16.mxu0 0
    %3830 = vmatpush1.bf16.msra.mxu0 %v3796
    %3831 = vmatprep.subr.bf16.mxu0 0
    %3832 = vmatpush1.bf16.msra.mxu0 %v3797
    %3833 = vmatprep.subr.bf16.mxu0 0
    %3834 = vmatpush1.bf16.msra.mxu0 %v3798
    %3835 = vmatprep.subr.bf16.mxu0 0
    %3836 = vmatpush1.bf16.msra.mxu0 %v3799
    %3837 = vmatprep.subr.bf16.mxu0 0
    %3838 = vmatpush1.bf16.msra.mxu0 %v3800
    %3839 = vmatprep.subr.bf16.mxu0 0
    %3840 = vmatpush1.bf16.msra.mxu0 %v3801
    %3841 = vmatprep.subr.bf16.mxu0 0
    %3842 = vmatpush1.bf16.msra.mxu0 %v3802
    %3843 = vmatprep.subr.bf16.mxu0 0
    %3844 = vmatpush1.bf16.msra.mxu0 %v3803
    %3845 = vmatprep.subr.bf16.mxu0 0
    %3846 = vmatpush1.bf16.msra.mxu0 %v3804
    %3847 = vmatprep.subr.bf16.mxu0 0
    %3848 = vmatpush1.bf16.msra.mxu0 %v3805
    %3849 = vmatprep.subr.bf16.mxu0 0
    %3850 = vmatpush1.bf16.msra.mxu0 %v3806
    %3851 = vmatprep.subr.bf16.mxu0 0
    %3852 = vmatpush1.bf16.msra.mxu0 %v3807
    %3853 = vmatprep.subr.bf16.mxu0 0
    %3854 = vmatpush1.bf16.msra.mxu0 %v3808
    %3855 = vmatprep.subr.bf16.mxu0 0
    %3856 = vmatpush1.bf16.msra.mxu0 %v3809
    %3857 = vmatprep.subr.bf16.mxu0 0
    %3858 = vmatpush1.bf16.msra.mxu0 %v3810
    %3859 = vmatprep.mubr.bf16.mxu0 %v3730
    %3860 = vmatmul.mubr.bf16.gmra.mrb[0].mxu0 %v3729
    %v3861 = vpop.f32.mrb[0].mxu0
    %v3862 = vadd.f32 0.0, %v3861
    %v3863 = vpop.f32.mrb[0].mxu0
    %v3864 = vpop.f32.mrb[0].mxu0
    %v3865 = vpop.f32.mrb[0].mxu0
    %3866 = vdwg.mxu0
    %vm3867 = vcmask 1041408
    %v3868 = vsel %vm3867, %v3862, 0.0
    %v3869 = vld [vmem:[#allocation12] sm:$0xf]
    %v3870 = vld [vmem:[#allocation12 + $0x4] sm:$0xf]
    %v3871 = vld [vmem:[#allocation12 + $0x8] sm:$0xf]
    %v3872 = vld [vmem:[#allocation12 + $0xc] sm:$0xf]
    %v3873 = vld [vmem:[#allocation12 + $0x10] sm:$0xf]
    %v3874 = vld [vmem:[#allocation12 + $0x14] sm:$0xf]
    %v3875 = vld [vmem:[#allocation12 + $0x18] sm:$0xf]
    %v3876 = vld [vmem:[#allocation12 + $0x1c] sm:$0xf]
    %v3877 = vld [vmem:[#allocation12 + $0x20] sm:$0xf]
    %v3878 = vld [vmem:[#allocation12 + $0x24] sm:$0xf]
    %v3879 = vld [vmem:[#allocation12 + $0x28] sm:$0xf]
    %v3880 = vld [vmem:[#allocation12 + $0x2c] sm:$0xf]
    %v3881 = vld [vmem:[#allocation12 + $0x30] sm:$0xf]
    %v3882 = vld [vmem:[#allocation12 + $0x34] sm:$0xf]
    %v3883 = vld [vmem:[#allocation12 + $0x38] sm:$0xf]
    %v3884 = vld [vmem:[#allocation12 + $0x3c] sm:$0xf]
    %v3885 = vld [vmem:[#allocation12 + $0x40] sm:$0xf]
    %v3886 = vld [vmem:[#allocation12 + $0x44] sm:$0xf]
    %v3887 = vld [vmem:[#allocation12 + $0x48] sm:$0xf]
    %v3888 = vld [vmem:[#allocation12 + $0x4c] sm:$0xf]
    %v3889 = vld [vmem:[%s7] sm:$0xf]
    %v3890 = vld [vmem:[%s7 + $0x4] sm:$0xf]
    %v3891 = vld [vmem:[%s7 + $0x8] sm:$0xf]
    %v3892 = vld [vmem:[%s7 + $0xc] sm:$0xf]
    %v3893 = vld [vmem:[%s7 + $0x10] sm:$0xf]
    %v3894 = vld [vmem:[%s7 + $0x14] sm:$0xf]
    %v3895 = vld [vmem:[%s7 + $0x18] sm:$0xf]
    %v3896 = vld [vmem:[%s7 + $0x1c] sm:$0xf]
    %v3897 = vld [vmem:[%s7 + $0x20] sm:$0xf]
    %v3898 = vld [vmem:[%s7 + $0x24] sm:$0xf]
    %v3899 = vld [vmem:[%s7 + $0x28] sm:$0xf]
    %v3900 = vld [vmem:[%s7 + $0x2c] sm:$0xf]
    %v3901 = vld [vmem:[%s7 + $0x30] sm:$0xf]
    %v3902 = vld [vmem:[%s7 + $0x34] sm:$0xf]
    %v3903 = vld [vmem:[%s7 + $0x38] sm:$0xf]
    %v3904 = vld [vmem:[%s7 + $0x3c] sm:$0xf]
    %v3905 = vld [vmem:[%s7 + $0x40] sm:$0xf]
    %v3906 = vld [vmem:[%s7 + $0x44] sm:$0xf]
    %v3907 = vld [vmem:[%s7 + $0x48] sm:$0xf]
    %v3908 = vld [vmem:[%s7 + $0x4c] sm:$0xf]
    %v3909 = vld [vmem:[%s7 + $0x50] sm:$0xf]
    %v3910 = vld [vmem:[%s7 + $0x54] sm:$0xf]
    %v3911 = vld [vmem:[%s7 + $0x58] sm:$0xf]
    %v3912 = vld [vmem:[%s7 + $0x5c] sm:$0xf]
    %v3913 = vld [vmem:[%s7 + $0x60] sm:$0xf]
    %v3914 = vld [vmem:[%s7 + $0x64] sm:$0xf]
    %v3915 = vld [vmem:[%s7 + $0x68] sm:$0xf]
    %v3916 = vld [vmem:[%s7 + $0x6c] sm:$0xf]
    %v3917 = vld [vmem:[#allocation15] sm:$0x1]
    %v3918 = vld [vmem:[#allocation15 + $0x1] sm:$0x1]
    %v3919 = vpack.c.bf16 %v3868, %v3868
    %v3924 = vunpack.c.l.b16 %v3885
    %v3925 = vunpack.c.l.b16 %v3886
    %v3926 = vunpack.c.l.b16 %v3887
    %v3927 = vunpack.c.l.b16 %v3888
    %v3928 = vpack.c.b16 %v3925, %v3924
    %v3929 = vpack.c.b16 %v3927, %v3926
    %v3933 = vsel %vm977, %v3919, 0
    %3935 = vmatprep.subr.bf16.mxu0 0
    %3936 = vmatpush1.bf16.msra.mxu0 %v3928
    %3937 = vmatprep.subr.bf16.mxu0 0
    %3938 = vmatpush1.bf16.msra.mxu0 %v3929
    %3939 = vmatprep.subr.bf16.mxu0 0
    %3940 = vmatpush1.bf16.msra.mxu0 0
    %3941 = vmatprep.subr.bf16.mxu0 0
    %3942 = vmatpush1.bf16.msra.mxu0 0
    %3943 = vmatprep.subr.bf16.mxu0 0
    %3944 = vmatpush1.bf16.msra.mxu0 0
    %3945 = vmatprep.subr.bf16.mxu0 0
    %3946 = vmatpush1.bf16.msra.mxu0 0
    %3947 = vmatprep.subr.bf16.mxu0 0
    %3948 = vmatpush1.bf16.msra.mxu0 0
    %3949 = vmatprep.subr.bf16.mxu0 0
    %3950 = vmatpush1.bf16.msra.mxu0 0
    %3951 = vmatprep.subr.bf16.mxu0 0
    %3952 = vmatpush1.bf16.msra.mxu0 0
    %3953 = vmatprep.subr.bf16.mxu0 0
    %3954 = vmatpush1.bf16.msra.mxu0 0
    %3955 = vmatprep.subr.bf16.mxu0 0
    %3956 = vmatpush1.bf16.msra.mxu0 0
    %3957 = vmatprep.subr.bf16.mxu0 0
    %3958 = vmatpush1.bf16.msra.mxu0 0
    %3959 = vmatprep.subr.bf16.mxu0 0
    %3960 = vmatpush1.bf16.msra.mxu0 0
    %3961 = vmatprep.subr.bf16.mxu0 0
    %3962 = vmatpush1.bf16.msra.mxu0 0
    %3963 = vmatprep.subr.bf16.mxu0 0
    %3964 = vmatpush1.bf16.msra.mxu0 0
    %3965 = vmatprep.subr.bf16.mxu0 0
    %3966 = vmatpush1.bf16.msra.mxu0 0
    %3967 = vmatprep.mubr.bf16.mxu0 0
    %3968 = vmatmul.mubr.bf16.gmra.mrb[0].mxu0 %v3933
    %v3969 = vpop.f32.mrb[0].mxu0
    %v3970 = vadd.f32 0.0, %v3969
    %v3971 = vpop.f32.mrb[0].mxu0
    %v3972 = vpop.f32.mrb[0].mxu0
    %v3973 = vpop.f32.mrb[0].mxu0
    %3974 = vdwg.mxu0
    %v3975 = vld [vmem:[#allocation3] sm:$0xff]
    %v3976 = vld [vmem:[#allocation3 + $0x8] sm:$0xff]
    %v3977 = vld [vmem:[#allocation3 + $0x10] sm:$0xff]
    %v3978 = vld [vmem:[#allocation3 + $0x18] sm:$0xff]
    %v3995 = vunpack.c.l.b16 %v3869
    %v3996 = vunpack.c.l.b16 %v3870
    %v3997 = vunpack.c.l.b16 %v3871
    %v3998 = vunpack.c.l.b16 %v3872
    %v3999 = vunpack.c.l.b16 %v3873
    %v4000 = vunpack.c.l.b16 %v3874
    %v4001 = vunpack.c.l.b16 %v3875
    %v4002 = vunpack.c.l.b16 %v3876
    %v4003 = vunpack.c.l.b16 %v3877
    %v4004 = vunpack.c.l.b16 %v3878
    %v4005 = vunpack.c.l.b16 %v3879
    %v4006 = vunpack.c.l.b16 %v3880
    %v4007 = vunpack.c.l.b16 %v3881
    %v4008 = vunpack.c.l.b16 %v3882
    %v4009 = vunpack.c.l.b16 %v3883
    %v4010 = vunpack.c.l.b16 %v3884
    %v4011 = vpack.c.b16 %v3996, %v3995
    %v4012 = vpack.c.b16 %v3998, %v3997
    %v4013 = vpack.c.b16 %v4000, %v3999
    %v4014 = vpack.c.b16 %v4002, %v4001
    %v4015 = vpack.c.b16 %v4004, %v4003
    %v4016 = vpack.c.b16 %v4006, %v4005
    %v4017 = vpack.c.b16 %v4008, %v4007
    %v4018 = vpack.c.b16 %v4010, %v4009
    %4027 = vmatprep.subr.bf16.mxu0 0
    %4028 = vmatpush1.bf16.msra.mxu0 %v4011
    %4029 = vmatprep.subr.bf16.mxu0 0
    %4030 = vmatpush1.bf16.msra.mxu0 %v4012
    %4031 = vmatprep.subr.bf16.mxu0 0
    %4032 = vmatpush1.bf16.msra.mxu0 %v4013
    %4033 = vmatprep.subr.bf16.mxu0 0
    %4034 = vmatpush1.bf16.msra.mxu0 %v4014
    %4035 = vmatprep.subr.bf16.mxu0 0
    %4036 = vmatpush1.bf16.msra.mxu0 %v4015
    %4037 = vmatprep.subr.bf16.mxu0 0
    %4038 = vmatpush1.bf16.msra.mxu0 %v4016
    %4039 = vmatprep.subr.bf16.mxu0 0
    %4040 = vmatpush1.bf16.msra.mxu0 %v4017
    %4041 = vmatprep.subr.bf16.mxu0 0
    %4042 = vmatpush1.bf16.msra.mxu0 %v4018
    %4043 = vmatprep.subr.bf16.mxu0 0
    %4044 = vmatpush1.bf16.msra.mxu0 0
    %4045 = vmatprep.subr.bf16.mxu0 0
    %4046 = vmatpush1.bf16.msra.mxu0 0
    %4047 = vmatprep.subr.bf16.mxu0 0
    %4048 = vmatpush1.bf16.msra.mxu0 0
    %4049 = vmatprep.subr.bf16.mxu0 0
    %4050 = vmatpush1.bf16.msra.mxu0 0
    %4051 = vmatprep.subr.bf16.mxu0 0
    %4052 = vmatpush1.bf16.msra.mxu0 0
    %4053 = vmatprep.subr.bf16.mxu0 0
    %4054 = vmatpush1.bf16.msra.mxu0 0
    %4055 = vmatprep.subr.bf16.mxu0 0
    %4056 = vmatpush1.bf16.msra.mxu0 0
    %4057 = vmatprep.subr.bf16.mxu0 0
    %4058 = vmatpush1.bf16.msra.mxu0 0
    %4059 = vmatprep.mubr.bf16.mxu0 0
    %4060 = vmatmul.mubr.bf16.gmra.mrb[0].mxu0 %v3975
    %v4061 = vpop.f32.mrb[0].mxu0
    %v4062 = vadd.f32 %v3970, %v4061
    %v4063 = vpop.f32.mrb[0].mxu0
    %v4064 = vpop.f32.mrb[0].mxu0
    %v4065 = vadd.f32 %v3970, %v4064
    %v4066 = vpop.f32.mrb[0].mxu0
    %4067 = vmatprep.mubr.bf16.mxu0 0
    %4068 = vmatmul.mubr.bf16.gmra.mrb[0].mxu0 %v3976
    %v4069 = vpop.f32.mrb[0].mxu0
    %v4070 = vadd.f32 %v3970, %v4069
    %v4071 = vpop.f32.mrb[0].mxu0
    %v4072 = vpop.f32.mrb[0].mxu0
    %v4073 = vadd.f32 %v3970, %v4072
    %v4074 = vpop.f32.mrb[0].mxu0
    %4075 = vmatprep.mubr.bf16.mxu0 0
    %4076 = vmatmul.mubr.bf16.gmra.mrb[0].mxu0 %v3977
    %v4077 = vpop.f32.mrb[0].mxu0
    %v4078 = vadd.f32 %v3970, %v4077
    %v4079 = vpop.f32.mrb[0].mxu0
    %v4080 = vpop.f32.mrb[0].mxu0
    %v4081 = vadd.f32 %v3970, %v4080
    %v4082 = vpop.f32.mrb[0].mxu0
    %4083 = vmatprep.mubr.bf16.mxu0 0
    %4084 = vmatmul.mubr.bf16.gmra.mrb[0].mxu0 %v3978
    %v4085 = vpop.f32.mrb[0].mxu0
    %v4086 = vadd.f32 %v3970, %v4085
    %v4087 = vpop.f32.mrb[0].mxu0
    %v4088 = vpop.f32.mrb[0].mxu0
    %v4089 = vadd.f32 %v3970, %v4088
    %v4090 = vpop.f32.mrb[0].mxu0
    %4091 = vdwg.mxu0
    %v4092 = vpack.c.bf16 %v4065, %v4062
    %v4093 = vpack.c.bf16 %v4073, %v4070
    %v4094 = vpack.c.bf16 %v4081, %v4078
    %v4095 = vpack.c.bf16 %v4089, %v4086
    %v4096 = vlaneseq
    %v4097 = vshrl.u32 %v4096, 7
    %v4098 = vsub.s32 0, %v4097
    %v4099 = vrot.slane %v3917, %v4098
    %v4116 = vunpack.c.l.b16 %v3889
    %v4117 = vunpack.c.l.b16 %v3890
    %v4118 = vunpack.c.l.b16 %v3891
    %v4119 = vunpack.c.l.b16 %v3892
    %v4120 = vunpack.c.l.b16 %v3893
    %v4121 = vunpack.c.l.b16 %v3894
    %v4122 = vunpack.c.l.b16 %v3895
    %v4123 = vunpack.c.l.b16 %v3896
    %v4124 = vunpack.c.l.b16 %v3897
    %v4125 = vunpack.c.l.b16 %v3898
    %v4126 = vunpack.c.l.b16 %v3899
    %v4127 = vunpack.c.l.b16 %v3900
    %v4128 = vunpack.c.l.b16 %v3901
    %v4129 = vunpack.c.l.b16 %v3902
    %v4130 = vunpack.c.l.b16 %v3903
    %v4131 = vunpack.c.l.b16 %v3904
    %v4132 = vpack.c.b16 %v4117, %v4116
    %v4133 = vpack.c.b16 %v4119, %v4118
    %v4134 = vpack.c.b16 %v4121, %v4120
    %v4135 = vpack.c.b16 %v4123, %v4122
    %v4136 = vpack.c.b16 %v4125, %v4124
    %v4137 = vpack.c.b16 %v4127, %v4126
    %v4138 = vpack.c.b16 %v4129, %v4128
    %v4139 = vpack.c.b16 %v4131, %v4130
    %4148 = vmatprep.subr.bf16.mxu0 0
    %4149 = vmatpush1.bf16.msra.mxu0 %v4132
    %4150 = vmatprep.subr.bf16.mxu0 0
    %4151 = vmatpush1.bf16.msra.mxu0 %v4133
    %4152 = vmatprep.subr.bf16.mxu0 0
    %4153 = vmatpush1.bf16.msra.mxu0 %v4134
    %4154 = vmatprep.subr.bf16.mxu0 0
    %4155 = vmatpush1.bf16.msra.mxu0 %v4135
    %4156 = vmatprep.subr.bf16.mxu0 0
    %4157 = vmatpush1.bf16.msra.mxu0 %v4136
    %4158 = vmatprep.subr.bf16.mxu0 0
    %4159 = vmatpush1.bf16.msra.mxu0 %v4137
    %4160 = vmatprep.subr.bf16.mxu0 0
    %4161 = vmatpush1.bf16.msra.mxu0 %v4138
    %4162 = vmatprep.subr.bf16.mxu0 0
    %4163 = vmatpush1.bf16.msra.mxu0 %v4139
    %4164 = vmatprep.subr.bf16.mxu0 0
    %4165 = vmatpush1.bf16.msra.mxu0 0
    %4166 = vmatprep.subr.bf16.mxu0 0
    %4167 = vmatpush1.bf16.msra.mxu0 0
    %4168 = vmatprep.subr.bf16.mxu0 0
    %4169 = vmatpush1.bf16.msra.mxu0 0
    %4170 = vmatprep.subr.bf16.mxu0 0
    %4171 = vmatpush1.bf16.msra.mxu0 0
    %4172 = vmatprep.subr.bf16.mxu0 0
    %4173 = vmatpush1.bf16.msra.mxu0 0
    %4174 = vmatprep.subr.bf16.mxu0 0
    %4175 = vmatpush1.bf16.msra.mxu0 0
    %4176 = vmatprep.subr.bf16.mxu0 0
    %4177 = vmatpush1.bf16.msra.mxu0 0
    %4178 = vmatprep.subr.bf16.mxu0 0
    %4179 = vmatpush1.bf16.msra.mxu0 0
    %4180 = vmatprep.mubr.bf16.mxu0 0
    %4181 = vmatmul.mubr.bf16.gmra.mrb[0].mxu0 %v4092
    %v4182 = vpop.f32.mrb[0].mxu0
    %v4183 = vadd.f32 %v4099, %v4182
    %v4184 = vpop.f32.mrb[0].mxu0
    %v4185 = vpop.f32.mrb[0].mxu0
    %v4186 = vadd.f32 %v4099, %v4185
    %v4187 = vpop.f32.mrb[0].mxu0
    %4188 = vmatprep.mubr.bf16.mxu0 0
    %4189 = vmatmul.mubr.bf16.gmra.mrb[0].mxu0 %v4093
    %v4190 = vpop.f32.mrb[0].mxu0
    %v4191 = vadd.f32 %v4099, %v4190
    %v4192 = vpop.f32.mrb[0].mxu0
    %v4193 = vpop.f32.mrb[0].mxu0
    %v4194 = vadd.f32 %v4099, %v4193
    %v4195 = vpop.f32.mrb[0].mxu0
    %4196 = vmatprep.mubr.bf16.mxu0 0
    %4197 = vmatmul.mubr.bf16.gmra.mrb[0].mxu0 %v4094
    %v4198 = vpop.f32.mrb[0].mxu0
    %v4199 = vadd.f32 %v4099, %v4198
    %v4200 = vpop.f32.mrb[0].mxu0
    %v4201 = vpop.f32.mrb[0].mxu0
    %v4202 = vadd.f32 %v4099, %v4201
    %v4203 = vpop.f32.mrb[0].mxu0
    %4204 = vmatprep.mubr.bf16.mxu0 0
    %4205 = vmatmul.mubr.bf16.gmra.mrb[0].mxu0 %v4095
    %v4206 = vpop.f32.mrb[0].mxu0
    %v4207 = vadd.f32 %v4099, %v4206
    %v4208 = vpop.f32.mrb[0].mxu0
    %v4209 = vpop.f32.mrb[0].mxu0
    %v4210 = vadd.f32 %v4099, %v4209
    %v4211 = vpop.f32.mrb[0].mxu0
    %4212 = vdwg.mxu0
    %v4217 = vunpack.c.l.b16 %v3905
    %v4218 = vunpack.c.l.b16 %v3906
    %v4219 = vunpack.c.l.b16 %v3907
    %v4220 = vunpack.c.l.b16 %v3908
    %v4221 = vpack.c.b16 %v4218, %v4217
    %v4222 = vpack.c.b16 %v4220, %v4219
    %4225 = vmatprep.subr.bf16.mxu0 0
    %4226 = vmatpush1.bf16.msra.mxu0 %v4221
    %4227 = vmatprep.subr.bf16.mxu0 0
    %4228 = vmatpush1.bf16.msra.mxu0 %v4222
    %4229 = vmatprep.subr.bf16.mxu0 0
    %4230 = vmatpush1.bf16.msra.mxu0 0
    %4231 = vmatprep.subr.bf16.mxu0 0
    %4232 = vmatpush1.bf16.msra.mxu0 0
    %4233 = vmatprep.subr.bf16.mxu0 0
    %4234 = vmatpush1.bf16.msra.mxu0 0
    %4235 = vmatprep.subr.bf16.mxu0 0
    %4236 = vmatpush1.bf16.msra.mxu0 0
    %4237 = vmatprep.subr.bf16.mxu0 0
    %4238 = vmatpush1.bf16.msra.mxu0 0
    %4239 = vmatprep.subr.bf16.mxu0 0
    %4240 = vmatpush1.bf16.msra.mxu0 0
    %4241 = vmatprep.subr.bf16.mxu0 0
    %4242 = vmatpush1.bf16.msra.mxu0 0
    %4243 = vmatprep.subr.bf16.mxu0 0
    %4244 = vmatpush1.bf16.msra.mxu0 0
    %4245 = vmatprep.subr.bf16.mxu0 0
    %4246 = vmatpush1.bf16.msra.mxu0 0
    %4247 = vmatprep.subr.bf16.mxu0 0
    %4248 = vmatpush1.bf16.msra.mxu0 0
    %4249 = vmatprep.subr.bf16.mxu0 0
    %4250 = vmatpush1.bf16.msra.mxu0 0
    %4251 = vmatprep.subr.bf16.mxu0 0
    %4252 = vmatpush1.bf16.msra.mxu0 0
    %4253 = vmatprep.subr.bf16.mxu0 0
    %4254 = vmatpush1.bf16.msra.mxu0 0
    %4255 = vmatprep.subr.bf16.mxu0 0
    %4256 = vmatpush1.bf16.msra.mxu0 0
    %4257 = vmatprep.mubr.bf16.mxu0 0
    %4258 = vmatmul.mubr.bf16.gmra.mrb[0].mxu0 %v3933
    %v4259 = vpop.f32.mrb[0].mxu0
    %v4260 = vadd.f32 0.0, %v4259
    %v4261 = vpop.f32.mrb[0].mxu0
    %v4262 = vpop.f32.mrb[0].mxu0
    %v4263 = vpop.f32.mrb[0].mxu0
    %4264 = vdwg.mxu0
    %v4265 = vadd.f32 %v4183, %v4260
    %v4266 = vxor.u32 %v4265, 2147483648
    %v4267 = vmul.f32 %v4266, 1.442695
    %v4268 = vpow.pop %v4267
    %v4269 = vadd.f32 %v4268, 1.0
    %v4270 = vrcp.pop %v4269
    %v4271 = vmul.f32 1.0, %v4270
    %v4272 = vtanh.pop %v4265
    %4274 = vrot.lane.b32.xlu0 %v3868, 32
    %v4275 = vpop.permute.xlu0 %4274
    %v4277 = vmul.f32 %v4271, %v4275
    %4279 = vrot.lane.b32.xlu0 %v4272, 64
    %v4280 = vpop.permute.xlu0 %4279
    %v4282 = vmul.f32 %v4271, %v4280
    %4284 = vrot.lane.b32.xlu0 %v4282, 32
    %v4285 = vpop.permute.xlu0 %4284
    %v4287 = vadd.f32 %v4277, %v4285
    %v4288 = vtanh.pop %v4287
    %4290 = vrot.lane.b32.xlu0 %v4288, 64
    %v4291 = vpop.permute.xlu0 %4290
    %v4293 = vmul.f32 %v4271, %v4291
    %4295 = vrot.lane.b32.xlu0 %v4293, 32
    %v4296 = vpop.permute.xlu0 %4295
    %v4298 = vsel %vm977, %v4296, %v4275
    %v4299 = vpack.c.bf16 %v4298, %v4298
    %v4300 = vlaneseq
    %v4301 = vshrl.u32 %v4300, 7
    %v4302 = vsub.s32 0, %v4301
    %v4303 = vrot.slane %v3918, %v4302
    %v4312 = vunpack.c.l.b16 %v3909
    %v4313 = vunpack.c.l.b16 %v3910
    %v4314 = vunpack.c.l.b16 %v3911
    %v4315 = vunpack.c.l.b16 %v3912
    %v4316 = vunpack.c.l.b16 %v3913
    %v4317 = vunpack.c.l.b16 %v3914
    %v4318 = vunpack.c.l.b16 %v3915
    %v4319 = vunpack.c.l.b16 %v3916
    %v4320 = vpack.c.b16 %v4313, %v4312
    %v4321 = vpack.c.b16 %v4315, %v4314
    %v4322 = vpack.c.b16 %v4317, %v4316
    %v4323 = vpack.c.b16 %v4319, %v4318
    %v4329 = vsel %vm3690, %v4299, 0
    %4331 = vmatprep.subr.bf16.mxu0 0
    %4332 = vmatpush1.bf16.msra.mxu0 %v4320
    %4333 = vmatprep.subr.bf16.mxu0 0
    %4334 = vmatpush1.bf16.msra.mxu0 %v4321
    %4335 = vmatprep.subr.bf16.mxu0 0
    %4336 = vmatpush1.bf16.msra.mxu0 %v4322
    %4337 = vmatprep.subr.bf16.mxu0 0
    %4338 = vmatpush1.bf16.msra.mxu0 %v4323
    %4339 = vmatprep.subr.bf16.mxu0 0
    %4340 = vmatpush1.bf16.msra.mxu0 0
    %4341 = vmatprep.subr.bf16.mxu0 0
    %4342 = vmatpush1.bf16.msra.mxu0 0
    %4343 = vmatprep.subr.bf16.mxu0 0
    %4344 = vmatpush1.bf16.msra.mxu0 0
    %4345 = vmatprep.subr.bf16.mxu0 0
    %4346 = vmatpush1.bf16.msra.mxu0 0
    %4347 = vmatprep.subr.bf16.mxu0 0
    %4348 = vmatpush1.bf16.msra.mxu0 0
    %4349 = vmatprep.subr.bf16.mxu0 0
    %4350 = vmatpush1.bf16.msra.mxu0 0
    %4351 = vmatprep.subr.bf16.mxu0 0
    %4352 = vmatpush1.bf16.msra.mxu0 0
    %4353 = vmatprep.subr.bf16.mxu0 0
    %4354 = vmatpush1.bf16.msra.mxu0 0
    %4355 = vmatprep.subr.bf16.mxu0 0
    %4356 = vmatpush1.bf16.msra.mxu0 0
    %4357 = vmatprep.subr.bf16.mxu0 0
    %4358 = vmatpush1.bf16.msra.mxu0 0
    %4359 = vmatprep.subr.bf16.mxu0 0
    %4360 = vmatpush1.bf16.msra.mxu0 0
    %4361 = vmatprep.subr.bf16.mxu0 0
    %4362 = vmatpush1.bf16.msra.mxu0 0
    %4363 = vmatprep.mubr.bf16.mxu0 0
    %4364 = vmatmul.mubr.bf16.gmra.mrb[0].mxu0 %v4329
    %v4365 = vpop.f32.mrb[0].mxu0
    %v4366 = vadd.f32 %v4303, %v4365
    %v4367 = vpop.f32.mrb[0].mxu0
    %v4368 = vpop.f32.mrb[0].mxu0
    %v4369 = vpop.f32.mrb[0].mxu0
    %4370 = vdwg.mxu0
    %v4371 = vxor.u32 %v4366, 2147483648
    %v4372 = vmul.f32 %v4371, 1.442695
    %v4373 = vpow.pop %v4372
    %v4374 = vadd.f32 %v4373, 1.0
    %v4375 = vrcp.pop %v4374
    %v4376 = vmul.f32 1.0, %v4375
    %v4377 = vtanh.pop %v4366
    %v4378 = vmul.f32 %v4376, %v4275
    %4380 = vrot.lane.b32.xlu0 %v4377, 64
    %v4381 = vpop.permute.xlu0 %4380
    %v4383 = vmul.f32 %v4376, %v4381
    %4385 = vrot.lane.b32.xlu0 %v4383, 32
    %v4386 = vpop.permute.xlu0 %4385
    %v4388 = vadd.f32 %v4378, %v4386
    %v4389 = vtanh.pop %v4388
    %4391 = vrot.lane.b32.xlu0 %v4389, 64
    %v4392 = vpop.permute.xlu0 %4391
    %v4394 = vmul.f32 %v4376, %v4392
    %4396 = vrot.lane.b32.xlu0 %v4394, 32
    %v4397 = vpop.permute.xlu0 %4396
    %4399 = vst.msk [vmem:[#allocation6] sm:$0xff] %vm977, %v4397
    %v4400 = vpack.c.bf16 %v4293, %v4293
    %4402 = vrot.lane.b32.xlu0 %v4400, 32
    %v4403 = vpop.permute.xlu0 %4402
    %v4405 = vsel %vm977, %v4403, 0
    %4407 = vmatprep.subr.bf16.mxu0 0
    %4408 = vmatpush1.bf16.msra.mxu0 %v4221
    %4409 = vmatprep.subr.bf16.mxu0 0
    %4410 = vmatpush1.bf16.msra.mxu0 %v4222
    %4411 = vmatprep.subr.bf16.mxu0 0
    %4412 = vmatpush1.bf16.msra.mxu0 0
    %4413 = vmatprep.subr.bf16.mxu0 0
    %4414 = vmatpush1.bf16.msra.mxu0 0
    %4415 = vmatprep.subr.bf16.mxu0 0
    %4416 = vmatpush1.bf16.msra.mxu0 0
    %4417 = vmatprep.subr.bf16.mxu0 0
    %4418 = vmatpush1.bf16.msra.mxu0 0
    %4419 = vmatprep.subr.bf16.mxu0 0
    %4420 = vmatpush1.bf16.msra.mxu0 0
    %4421 = vmatprep.subr.bf16.mxu0 0
    %4422 = vmatpush1.bf16.msra.mxu0 0
    %4423 = vmatprep.subr.bf16.mxu0 0
    %4424 = vmatpush1.bf16.msra.mxu0 0
    %4425 = vmatprep.subr.bf16.mxu0 0
    %4426 = vmatpush1.bf16.msra.mxu0 0
    %4427 = vmatprep.subr.bf16.mxu0 0
    %4428 = vmatpush1.bf16.msra.mxu0 0
    %4429 = vmatprep.subr.bf16.mxu0 0
    %4430 = vmatpush1.bf16.msra.mxu0 0
    %4431 = vmatprep.subr.bf16.mxu0 0
    %4432 = vmatpush1.bf16.msra.mxu0 0
    %4433 = vmatprep.subr.bf16.mxu0 0
    %4434 = vmatpush1.bf16.msra.mxu0 0
    %4435 = vmatprep.subr.bf16.mxu0 0
    %4436 = vmatpush1.bf16.msra.mxu0 0
    %4437 = vmatprep.subr.bf16.mxu0 0
    %4438 = vmatpush1.bf16.msra.mxu0 0
    %4439 = vmatprep.mubr.bf16.mxu0 0
    %4440 = vmatmul.mubr.bf16.gmra.mrb[0].mxu0 %v4405
    %v4441 = vpop.f32.mrb[0].mxu0
    %v4442 = vadd.f32 0.0, %v4441
    %v4443 = vpop.f32.mrb[0].mxu0
    %v4444 = vpop.f32.mrb[0].mxu0
    %v4445 = vpop.f32.mrb[0].mxu0
    %4446 = vdwg.mxu0
    %v4447 = vadd.f32 %v4186, %v4442
    %v4448 = vxor.u32 %v4447, 2147483648
    %v4449 = vmul.f32 %v4448, 1.442695
    %v4450 = vpow.pop %v4449
    %v4451 = vadd.f32 %v4450, 1.0
    %v4452 = vrcp.pop %v4451
    %v4453 = vmul.f32 1.0, %v4452
    %v4454 = vtanh.pop %v4447
    %v4455 = vmul.f32 %v4453, %v4287
    %4457 = vrot.lane.b32.xlu0 %v4454, 64
    %v4458 = vpop.permute.xlu0 %4457
    %v4460 = vmul.f32 %v4453, %v4458
    %4462 = vrot.lane.b32.xlu0 %v4460, 32
    %v4463 = vpop.permute.xlu0 %4462
    %v4465 = vadd.f32 %v4455, %v4463
    %v4466 = vtanh.pop %v4465
    %4468 = vrot.lane.b32.xlu0 %v4466, 64
    %v4469 = vpop.permute.xlu0 %4468
    %v4471 = vmul.f32 %v4453, %v4469
    %4473 = vrot.lane.b32.xlu0 %v4471, 32
    %v4474 = vpop.permute.xlu0 %4473
    %4476 = vrot.lane.b32.xlu0 %v4394, 64
    %v4477 = vpop.permute.xlu0 %4476
    %v4479 = vsel %vm977, %v4474, %v4477
    %v4480 = vpack.c.bf16 %v4479, %v4479
    %v4482 = vsel %vm3690, %v4480, 0
    %4484 = vmatprep.subr.bf16.mxu0 0
    %4485 = vmatpush1.bf16.msra.mxu0 %v4320
    %4486 = vmatprep.subr.bf16.mxu0 0
    %4487 = vmatpush1.bf16.msra.mxu0 %v4321
    %4488 = vmatprep.subr.bf16.mxu0 0
    %4489 = vmatpush1.bf16.msra.mxu0 %v4322
    %4490 = vmatprep.subr.bf16.mxu0 0
    %4491 = vmatpush1.bf16.msra.mxu0 %v4323
    %4492 = vmatprep.subr.bf16.mxu0 0
    %4493 = vmatpush1.bf16.msra.mxu0 0
    %4494 = vmatprep.subr.bf16.mxu0 0
    %4495 = vmatpush1.bf16.msra.mxu0 0
    %4496 = vmatprep.subr.bf16.mxu0 0
    %4497 = vmatpush1.bf16.msra.mxu0 0
    %4498 = vmatprep.subr.bf16.mxu0 0
    %4499 = vmatpush1.bf16.msra.mxu0 0
    %4500 = vmatprep.subr.bf16.mxu0 0
    %4501 = vmatpush1.bf16.msra.mxu0 0
    %4502 = vmatprep.subr.bf16.mxu0 0
    %4503 = vmatpush1.bf16.msra.mxu0 0
    %4504 = vmatprep.subr.bf16.mxu0 0
    %4505 = vmatpush1.bf16.msra.mxu0 0
    %4506 = vmatprep.subr.bf16.mxu0 0
    %4507 = vmatpush1.bf16.msra.mxu0 0
    %4508 = vmatprep.subr.bf16.mxu0 0
    %4509 = vmatpush1.bf16.msra.mxu0 0
    %4510 = vmatprep.subr.bf16.mxu0 0
    %4511 = vmatpush1.bf16.msra.mxu0 0
    %4512 = vmatprep.subr.bf16.mxu0 0
    %4513 = vmatpush1.bf16.msra.mxu0 0
    %4514 = vmatprep.subr.bf16.mxu0 0
    %4515 = vmatpush1.bf16.msra.mxu0 0
    %4516 = vmatprep.mubr.bf16.mxu0 0
    %4517 = vmatmul.mubr.bf16.gmra.mrb[0].mxu0 %v4482
    %v4518 = vpop.f32.mrb[0].mxu0
    %v4519 = vadd.f32 %v4303, %v4518
    %v4520 = vpop.f32.mrb[0].mxu0
    %v4521 = vpop.f32.mrb[0].mxu0
    %v4522 = vpop.f32.mrb[0].mxu0
    %4523 = vdwg.mxu0
    %v4524 = vxor.u32 %v4519, 2147483648
    %v4525 = vmul.f32 %v4524, 1.442695
    %v4526 = vpow.pop %v4525
    %v4527 = vadd.f32 %v4526, 1.0
    %v4528 = vrcp.pop %v4527
    %v4529 = vmul.f32 1.0, %v4528
    %v4530 = vtanh.pop %v4519
    %v4531 = vmul.f32 %v4529, %v4388
    %4533 = vrot.lane.b32.xlu0 %v4530, 64
    %v4534 = vpop.permute.xlu0 %4533
    %v4536 = vmul.f32 %v4529, %v4534
    %4538 = vrot.lane.b32.xlu0 %v4536, 32
    %v4539 = vpop.permute.xlu0 %4538
    %v4541 = vadd.f32 %v4531, %v4539
    %v4542 = vtanh.pop %v4541
    %4544 = vrot.lane.b32.xlu0 %v4542, 64
    %v4545 = vpop.permute.xlu0 %4544
    %v4547 = vmul.f32 %v4529, %v4545
    %4549 = vrot.lane.b32.xlu0 %v4547, 32
    %v4550 = vpop.permute.xlu0 %4549
    %4552 = vst.msk [vmem:[#allocation6 + $0x8] sm:$0xff] %vm977, %v4550
    %v4553 = vpack.c.bf16 %v4471, %v4471
    %4555 = vrot.lane.b32.xlu0 %v4553, 32
    %v4556 = vpop.permute.xlu0 %4555
    %v4558 = vsel %vm977, %v4556, 0
    %4560 = vmatprep.subr.bf16.mxu0 0
    %4561 = vmatpush1.bf16.msra.mxu0 %v4221
    %4562 = vmatprep.subr.bf16.mxu0 0
    %4563 = vmatpush1.bf16.msra.mxu0 %v4222
    %4564 = vmatprep.subr.bf16.mxu0 0
    %4565 = vmatpush1.bf16.msra.mxu0 0
    %4566 = vmatprep.subr.bf16.mxu0 0
    %4567 = vmatpush1.bf16.msra.mxu0 0
    %4568 = vmatprep.subr.bf16.mxu0 0
    %4569 = vmatpush1.bf16.msra.mxu0 0
    %4570 = vmatprep.subr.bf16.mxu0 0
    %4571 = vmatpush1.bf16.msra.mxu0 0
    %4572 = vmatprep.subr.bf16.mxu0 0
    %4573 = vmatpush1.bf16.msra.mxu0 0
    %4574 = vmatprep.subr.bf16.mxu0 0
    %4575 = vmatpush1.bf16.msra.mxu0 0
    %4576 = vmatprep.subr.bf16.mxu0 0
    %4577 = vmatpush1.bf16.msra.mxu0 0
    %4578 = vmatprep.subr.bf16.mxu0 0
    %4579 = vmatpush1.bf16.msra.mxu0 0
    %4580 = vmatprep.subr.bf16.mxu0 0
    %4581 = vmatpush1.bf16.msra.mxu0 0
    %4582 = vmatprep.subr.bf16.mxu0 0
    %4583 = vmatpush1.bf16.msra.mxu0 0
    %4584 = vmatprep.subr.bf16.mxu0 0
    %4585 = vmatpush1.bf16.msra.mxu0 0
    %4586 = vmatprep.subr.bf16.mxu0 0
    %4587 = vmatpush1.bf16.msra.mxu0 0
    %4588 = vmatprep.subr.bf16.mxu0 0
    %4589 = vmatpush1.bf16.msra.mxu0 0
    %4590 = vmatprep.subr.bf16.mxu0 0
    %4591 = vmatpush1.bf16.msra.mxu0 0
    %4592 = vmatprep.mubr.bf16.mxu0 0
    %4593 = vmatmul.mubr.bf16.gmra.mrb[0].mxu0 %v4558
    %v4594 = vpop.f32.mrb[0].mxu0
    %v4595 = vadd.f32 0.0, %v4594
    %v4596 = vpop.f32.mrb[0].mxu0
    %v4597 = vpop.f32.mrb[0].mxu0
    %v4598 = vpop.f32.mrb[0].mxu0
    %4599 = vdwg.mxu0
    %v4600 = vadd.f32 %v4191, %v4595
    %v4601 = vxor.u32 %v4600, 2147483648
    %v4602 = vmul.f32 %v4601, 1.442695
    %v4603 = vpow.pop %v4602
    %v4604 = vadd.f32 %v4603, 1.0
    %v4605 = vrcp.pop %v4604
    %v4606 = vmul.f32 1.0, %v4605
    %v4607 = vtanh.pop %v4600
    %v4608 = vmul.f32 %v4606, %v4465
    %4610 = vrot.lane.b32.xlu0 %v4607, 64
    %v4611 = vpop.permute.xlu0 %4610
    %v4613 = vmul.f32 %v4606, %v4611
    %4615 = vrot.lane.b32.xlu0 %v4613, 32
    %v4616 = vpop.permute.xlu0 %4615
    %v4618 = vadd.f32 %v4608, %v4616
    %v4619 = vtanh.pop %v4618
    %4621 = vrot.lane.b32.xlu0 %v4619, 64
    %v4622 = vpop.permute.xlu0 %4621
    %v4624 = vmul.f32 %v4606, %v4622
    %4626 = vrot.lane.b32.xlu0 %v4624, 32
    %v4627 = vpop.permute.xlu0 %4626
    %4629 = vrot.lane.b32.xlu0 %v4547, 64
    %v4630 = vpop.permute.xlu0 %4629
    %v4632 = vsel %vm977, %v4627, %v4630
    %v4633 = vpack.c.bf16 %v4632, %v4632
    %v4635 = vsel %vm3690, %v4633, 0
    %4637 = vmatprep.subr.bf16.mxu0 0
    %4638 = vmatpush1.bf16.msra.mxu0 %v4320
    %4639 = vmatprep.subr.bf16.mxu0 0
    %4640 = vmatpush1.bf16.msra.mxu0 %v4321
    %4641 = vmatprep.subr.bf16.mxu0 0
    %4642 = vmatpush1.bf16.msra.mxu0 %v4322
    %4643 = vmatprep.subr.bf16.mxu0 0
    %4644 = vmatpush1.bf16.msra.mxu0 %v4323
    %4645 = vmatprep.subr.bf16.mxu0 0
    %4646 = vmatpush1.bf16.msra.mxu0 0
    %4647 = vmatprep.subr.bf16.mxu0 0
    %4648 = vmatpush1.bf16.msra.mxu0 0
    %4649 = vmatprep.subr.bf16.mxu0 0
    %4650 = vmatpush1.bf16.msra.mxu0 0
    %4651 = vmatprep.subr.bf16.mxu0 0
    %4652 = vmatpush1.bf16.msra.mxu0 0
    %4653 = vmatprep.subr.bf16.mxu0 0
    %4654 = vmatpush1.bf16.msra.mxu0 0
    %4655 = vmatprep.subr.bf16.mxu0 0
    %4656 = vmatpush1.bf16.msra.mxu0 0
    %4657 = vmatprep.subr.bf16.mxu0 0
    %4658 = vmatpush1.bf16.msra.mxu0 0
    %4659 = vmatprep.subr.bf16.mxu0 0
    %4660 = vmatpush1.bf16.msra.mxu0 0
    %4661 = vmatprep.subr.bf16.mxu0 0
    %4662 = vmatpush1.bf16.msra.mxu0 0
    %4663 = vmatprep.subr.bf16.mxu0 0
    %4664 = vmatpush1.bf16.msra.mxu0 0
    %4665 = vmatprep.subr.bf16.mxu0 0
    %4666 = vmatpush1.bf16.msra.mxu0 0
    %4667 = vmatprep.subr.bf16.mxu0 0
    %4668 = vmatpush1.bf16.msra.mxu0 0
    %4669 = vmatprep.mubr.bf16.mxu0 0
    %4670 = vmatmul.mubr.bf16.gmra.mrb[0].mxu0 %v4635
    %v4671 = vpop.f32.mrb[0].mxu0
    %v4672 = vadd.f32 %v4303, %v4671
    %v4673 = vpop.f32.mrb[0].mxu0
    %v4674 = vpop.f32.mrb[0].mxu0
    %v4675 = vpop.f32.mrb[0].mxu0
    %4676 = vdwg.mxu0
    %v4677 = vxor.u32 %v4672, 2147483648
    %v4678 = vmul.f32 %v4677, 1.442695
    %v4679 = vpow.pop %v4678
    %v4680 = vadd.f32 %v4679, 1.0
    %v4681 = vrcp.pop %v4680
    %v4682 = vmul.f32 1.0, %v4681
    %v4683 = vtanh.pop %v4672
    %v4684 = vmul.f32 %v4682, %v4541
    %4686 = vrot.lane.b32.xlu0 %v4683, 64
    %v4687 = vpop.permute.xlu0 %4686
    %v4689 = vmul.f32 %v4682, %v4687
    %4691 = vrot.lane.b32.xlu0 %v4689, 32
    %v4692 = vpop.permute.xlu0 %4691
    %v4694 = vadd.f32 %v4684, %v4692
    %v4695 = vtanh.pop %v4694
    %4697 = vrot.lane.b32.xlu0 %v4695, 64
    %v4698 = vpop.permute.xlu0 %4697
    %v4700 = vmul.f32 %v4682, %v4698
    %4702 = vrot.lane.b32.xlu0 %v4700, 32
    %v4703 = vpop.permute.xlu0 %4702
    %4705 = vst.msk [vmem:[#allocation6 + $0x10] sm:$0xff] %vm977, %v4703
    %v4706 = vpack.c.bf16 %v4624, %v4624
    %4708 = vrot.lane.b32.xlu0 %v4706, 32
    %v4709 = vpop.permute.xlu0 %4708
    %v4711 = vsel %vm977, %v4709, 0
    %4713 = vmatprep.subr.bf16.mxu0 0
    %4714 = vmatpush1.bf16.msra.mxu0 %v4221
    %4715 = vmatprep.subr.bf16.mxu0 0
    %4716 = vmatpush1.bf16.msra.mxu0 %v4222
    %4717 = vmatprep.subr.bf16.mxu0 0
    %4718 = vmatpush1.bf16.msra.mxu0 0
    %4719 = vmatprep.subr.bf16.mxu0 0
    %4720 = vmatpush1.bf16.msra.mxu0 0
    %4721 = vmatprep.subr.bf16.mxu0 0
    %4722 = vmatpush1.bf16.msra.mxu0 0
    %4723 = vmatprep.subr.bf16.mxu0 0
    %4724 = vmatpush1.bf16.msra.mxu0 0
    %4725 = vmatprep.subr.bf16.mxu0 0
    %4726 = vmatpush1.bf16.msra.mxu0 0
    %4727 = vmatprep.subr.bf16.mxu0 0
    %4728 = vmatpush1.bf16.msra.mxu0 0
    %4729 = vmatprep.subr.bf16.mxu0 0
    %4730 = vmatpush1.bf16.msra.mxu0 0
    %4731 = vmatprep.subr.bf16.mxu0 0
    %4732 = vmatpush1.bf16.msra.mxu0 0
    %4733 = vmatprep.subr.bf16.mxu0 0
    %4734 = vmatpush1.bf16.msra.mxu0 0
    %4735 = vmatprep.subr.bf16.mxu0 0
    %4736 = vmatpush1.bf16.msra.mxu0 0
    %4737 = vmatprep.subr.bf16.mxu0 0
    %4738 = vmatpush1.bf16.msra.mxu0 0
    %4739 = vmatprep.subr.bf16.mxu0 0
    %4740 = vmatpush1.bf16.msra.mxu0 0
    %4741 = vmatprep.subr.bf16.mxu0 0
    %4742 = vmatpush1.bf16.msra.mxu0 0
    %4743 = vmatprep.subr.bf16.mxu0 0
    %4744 = vmatpush1.bf16.msra.mxu0 0
    %4745 = vmatprep.mubr.bf16.mxu0 0
    %4746 = vmatmul.mubr.bf16.gmra.mrb[0].mxu0 %v4711
    %v4747 = vpop.f32.mrb[0].mxu0
    %v4748 = vadd.f32 0.0, %v4747
    %v4749 = vpop.f32.mrb[0].mxu0
    %v4750 = vpop.f32.mrb[0].mxu0
    %v4751 = vpop.f32.mrb[0].mxu0
    %4752 = vdwg.mxu0
    %v4753 = vadd.f32 %v4194, %v4748
    %v4754 = vxor.u32 %v4753, 2147483648
    %v4755 = vmul.f32 %v4754, 1.442695
    %v4756 = vpow.pop %v4755
    %v4757 = vadd.f32 %v4756, 1.0
    %v4758 = vrcp.pop %v4757
    %v4759 = vmul.f32 1.0, %v4758
    %v4760 = vtanh.pop %v4753
    %v4761 = vmul.f32 %v4759, %v4618
    %4763 = vrot.lane.b32.xlu0 %v4760, 64
    %v4764 = vpop.permute.xlu0 %4763
    %v4766 = vmul.f32 %v4759, %v4764
    %4768 = vrot.lane.b32.xlu0 %v4766, 32
    %v4769 = vpop.permute.xlu0 %4768
    %v4771 = vadd.f32 %v4761, %v4769
    %v4772 = vtanh.pop %v4771
    %4774 = vrot.lane.b32.xlu0 %v4772, 64
    %v4775 = vpop.permute.xlu0 %4774
    %v4777 = vmul.f32 %v4759, %v4775
    %4779 = vrot.lane.b32.xlu0 %v4777, 32
    %v4780 = vpop.permute.xlu0 %4779
    %4782 = vrot.lane.b32.xlu0 %v4700, 64
    %v4783 = vpop.permute.xlu0 %4782
    %v4785 = vsel %vm977, %v4780, %v4783
    %v4786 = vpack.c.bf16 %v4785, %v4785
    %v4788 = vsel %vm3690, %v4786, 0
    %4790 = vmatprep.subr.bf16.mxu0 0
    %4791 = vmatpush1.bf16.msra.mxu0 %v4320
    %4792 = vmatprep.subr.bf16.mxu0 0
    %4793 = vmatpush1.bf16.msra.mxu0 %v4321
    %4794 = vmatprep.subr.bf16.mxu0 0
    %4795 = vmatpush1.bf16.msra.mxu0 %v4322
    %4796 = vmatprep.subr.bf16.mxu0 0
    %4797 = vmatpush1.bf16.msra.mxu0 %v4323
    %4798 = vmatprep.subr.bf16.mxu0 0
    %4799 = vmatpush1.bf16.msra.mxu0 0
    %4800 = vmatprep.subr.bf16.mxu0 0
    %4801 = vmatpush1.bf16.msra.mxu0 0
    %4802 = vmatprep.subr.bf16.mxu0 0
    %4803 = vmatpush1.bf16.msra.mxu0 0
    %4804 = vmatprep.subr.bf16.mxu0 0
    %4805 = vmatpush1.bf16.msra.mxu0 0
    %4806 = vmatprep.subr.bf16.mxu0 0
    %4807 = vmatpush1.bf16.msra.mxu0 0
    %4808 = vmatprep.subr.bf16.mxu0 0
    %4809 = vmatpush1.bf16.msra.mxu0 0
    %4810 = vmatprep.subr.bf16.mxu0 0
    %4811 = vmatpush1.bf16.msra.mxu0 0
    %4812 = vmatprep.subr.bf16.mxu0 0
    %4813 = vmatpush1.bf16.msra.mxu0 0
    %4814 = vmatprep.subr.bf16.mxu0 0
    %4815 = vmatpush1.bf16.msra.mxu0 0
    %4816 = vmatprep.subr.bf16.mxu0 0
    %4817 = vmatpush1.bf16.msra.mxu0 0
    %4818 = vmatprep.subr.bf16.mxu0 0
    %4819 = vmatpush1.bf16.msra.mxu0 0
    %4820 = vmatprep.subr.bf16.mxu0 0
    %4821 = vmatpush1.bf16.msra.mxu0 0
    %4822 = vmatprep.mubr.bf16.mxu0 0
    %4823 = vmatmul.mubr.bf16.gmra.mrb[0].mxu0 %v4788
    %v4824 = vpop.f32.mrb[0].mxu0
    %v4825 = vadd.f32 %v4303, %v4824
    %v4826 = vpop.f32.mrb[0].mxu0
    %v4827 = vpop.f32.mrb[0].mxu0
    %v4828 = vpop.f32.mrb[0].mxu0
    %4829 = vdwg.mxu0
    %v4830 = vxor.u32 %v4825, 2147483648
    %v4831 = vmul.f32 %v4830, 1.442695
    %v4832 = vpow.pop %v4831
    %v4833 = vadd.f32 %v4832, 1.0
    %v4834 = vrcp.pop %v4833
    %v4835 = vmul.f32 1.0, %v4834
    %v4836 = vtanh.pop %v4825
    %v4837 = vmul.f32 %v4835, %v4694
    %4839 = vrot.lane.b32.xlu0 %v4836, 64
    %v4840 = vpop.permute.xlu0 %4839
    %v4842 = vmul.f32 %v4835, %v4840
    %4844 = vrot.lane.b32.xlu0 %v4842, 32
    %v4845 = vpop.permute.xlu0 %4844
    %v4847 = vadd.f32 %v4837, %v4845
    %v4848 = vtanh.pop %v4847
    %4850 = vrot.lane.b32.xlu0 %v4848, 64
    %v4851 = vpop.permute.xlu0 %4850
    %v4853 = vmul.f32 %v4835, %v4851
    %4855 = vrot.lane.b32.xlu0 %v4853, 32
    %v4856 = vpop.permute.xlu0 %4855
    %4858 = vst.msk [vmem:[#allocation6 + $0x18] sm:$0xff] %vm977, %v4856
    %v4859 = vpack.c.bf16 %v4777, %v4777
    %4861 = vrot.lane.b32.xlu0 %v4859, 32
    %v4862 = vpop.permute.xlu0 %4861
    %v4864 = vsel %vm977, %v4862, 0
    %4866 = vmatprep.subr.bf16.mxu0 0
    %4867 = vmatpush1.bf16.msra.mxu0 %v4221
    %4868 = vmatprep.subr.bf16.mxu0 0
    %4869 = vmatpush1.bf16.msra.mxu0 %v4222
    %4870 = vmatprep.subr.bf16.mxu0 0
    %4871 = vmatpush1.bf16.msra.mxu0 0
    %4872 = vmatprep.subr.bf16.mxu0 0
    %4873 = vmatpush1.bf16.msra.mxu0 0
    %4874 = vmatprep.subr.bf16.mxu0 0
    %4875 = vmatpush1.bf16.msra.mxu0 0
    %4876 = vmatprep.subr.bf16.mxu0 0
    %4877 = vmatpush1.bf16.msra.mxu0 0
    %4878 = vmatprep.subr.bf16.mxu0 0
    %4879 = vmatpush1.bf16.msra.mxu0 0
    %4880 = vmatprep.subr.bf16.mxu0 0
    %4881 = vmatpush1.bf16.msra.mxu0 0
    %4882 = vmatprep.subr.bf16.mxu0 0
    %4883 = vmatpush1.bf16.msra.mxu0 0
    %4884 = vmatprep.subr.bf16.mxu0 0
    %4885 = vmatpush1.bf16.msra.mxu0 0
    %4886 = vmatprep.subr.bf16.mxu0 0
    %4887 = vmatpush1.bf16.msra.mxu0 0
    %4888 = vmatprep.subr.bf16.mxu0 0
    %4889 = vmatpush1.bf16.msra.mxu0 0
    %4890 = vmatprep.subr.bf16.mxu0 0
    %4891 = vmatpush1.bf16.msra.mxu0 0
    %4892 = vmatprep.subr.bf16.mxu0 0
    %4893 = vmatpush1.bf16.msra.mxu0 0
    %4894 = vmatprep.subr.bf16.mxu0 0
    %4895 = vmatpush1.bf16.msra.mxu0 0
    %4896 = vmatprep.subr.bf16.mxu0 0
    %4897 = vmatpush1.bf16.msra.mxu0 0
    %4898 = vmatprep.mubr.bf16.mxu0 0
    %4899 = vmatmul.mubr.bf16.gmra.mrb[0].mxu0 %v4864
    %v4900 = vpop.f32.mrb[0].mxu0
    %v4901 = vadd.f32 0.0, %v4900
    %v4902 = vpop.f32.mrb[0].mxu0
    %v4903 = vpop.f32.mrb[0].mxu0
    %v4904 = vpop.f32.mrb[0].mxu0
    %4905 = vdwg.mxu0
    %v4906 = vadd.f32 %v4199, %v4901
    %v4907 = vxor.u32 %v4906, 2147483648
    %v4908 = vmul.f32 %v4907, 1.442695
    %v4909 = vpow.pop %v4908
    %v4910 = vadd.f32 %v4909, 1.0
    %v4911 = vrcp.pop %v4910
    %v4912 = vmul.f32 1.0, %v4911
    %v4913 = vtanh.pop %v4906
    %v4914 = vmul.f32 %v4912, %v4771
    %4916 = vrot.lane.b32.xlu0 %v4913, 64
    %v4917 = vpop.permute.xlu0 %4916
    %v4919 = vmul.f32 %v4912, %v4917
    %4921 = vrot.lane.b32.xlu0 %v4919, 32
    %v4922 = vpop.permute.xlu0 %4921
    %v4924 = vadd.f32 %v4914, %v4922
    %v4925 = vtanh.pop %v4924
    %4927 = vrot.lane.b32.xlu0 %v4925, 64
    %v4928 = vpop.permute.xlu0 %4927
    %v4930 = vmul.f32 %v4912, %v4928
    %4932 = vrot.lane.b32.xlu0 %v4930, 32
    %v4933 = vpop.permute.xlu0 %4932
    %4935 = vrot.lane.b32.xlu0 %v4853, 64
    %v4936 = vpop.permute.xlu0 %4935
    %v4938 = vsel %vm977, %v4933, %v4936
    %v4939 = vpack.c.bf16 %v4938, %v4938
    %v4941 = vsel %vm3690, %v4939, 0
    %4943 = vmatprep.subr.bf16.mxu0 0
    %4944 = vmatpush1.bf16.msra.mxu0 %v4320
    %4945 = vmatprep.subr.bf16.mxu0 0
    %4946 = vmatpush1.bf16.msra.mxu0 %v4321
    %4947 = vmatprep.subr.bf16.mxu0 0
    %4948 = vmatpush1.bf16.msra.mxu0 %v4322
    %4949 = vmatprep.subr.bf16.mxu0 0
    %4950 = vmatpush1.bf16.msra.mxu0 %v4323
    %4951 = vmatprep.subr.bf16.mxu0 0
    %4952 = vmatpush1.bf16.msra.mxu0 0
    %4953 = vmatprep.subr.bf16.mxu0 0
    %4954 = vmatpush1.bf16.msra.mxu0 0
    %4955 = vmatprep.subr.bf16.mxu0 0
    %4956 = vmatpush1.bf16.msra.mxu0 0
    %4957 = vmatprep.subr.bf16.mxu0 0
    %4958 = vmatpush1.bf16.msra.mxu0 0
    %4959 = vmatprep.subr.bf16.mxu0 0
    %4960 = vmatpush1.bf16.msra.mxu0 0
    %4961 = vmatprep.subr.bf16.mxu0 0
    %4962 = vmatpush1.bf16.msra.mxu0 0
    %4963 = vmatprep.subr.bf16.mxu0 0
    %4964 = vmatpush1.bf16.msra.mxu0 0
    %4965 = vmatprep.subr.bf16.mxu0 0
    %4966 = vmatpush1.bf16.msra.mxu0 0
    %4967 = vmatprep.subr.bf16.mxu0 0
    %4968 = vmatpush1.bf16.msra.mxu0 0
    %4969 = vmatprep.subr.bf16.mxu0 0
    %4970 = vmatpush1.bf16.msra.mxu0 0
    %4971 = vmatprep.subr.bf16.mxu0 0
    %4972 = vmatpush1.bf16.msra.mxu0 0
    %4973 = vmatprep.subr.bf16.mxu0 0
    %4974 = vmatpush1.bf16.msra.mxu0 0
    %4975 = vmatprep.mubr.bf16.mxu0 0
    %4976 = vmatmul.mubr.bf16.gmra.mrb[0].mxu0 %v4941
    %v4977 = vpop.f32.mrb[0].mxu0
    %v4978 = vadd.f32 %v4303, %v4977
    %v4979 = vpop.f32.mrb[0].mxu0
    %v4980 = vpop.f32.mrb[0].mxu0
    %v4981 = vpop.f32.mrb[0].mxu0
    %4982 = vdwg.mxu0
    %v4983 = vxor.u32 %v4978, 2147483648
    %v4984 = vmul.f32 %v4983, 1.442695
    %v4985 = vpow.pop %v4984
    %v4986 = vadd.f32 %v4985, 1.0
    %v4987 = vrcp.pop %v4986
    %v4988 = vmul.f32 1.0, %v4987
    %v4989 = vtanh.pop %v4978
    %v4990 = vmul.f32 %v4988, %v4847
    %4992 = vrot.lane.b32.xlu0 %v4989, 64
    %v4993 = vpop.permute.xlu0 %4992
    %v4995 = vmul.f32 %v4988, %v4993
    %4997 = vrot.lane.b32.xlu0 %v4995, 32
    %v4998 = vpop.permute.xlu0 %4997
    %v5000 = vadd.f32 %v4990, %v4998
    %v5001 = vtanh.pop %v5000
    %5003 = vrot.lane.b32.xlu0 %v5001, 64
    %v5004 = vpop.permute.xlu0 %5003
    %v5006 = vmul.f32 %v4988, %v5004
    %5008 = vrot.lane.b32.xlu0 %v5006, 32
    %v5009 = vpop.permute.xlu0 %5008
    %5011 = vst.msk [vmem:[#allocation6 + $0x20] sm:$0xff] %vm977, %v5009
    %v5012 = vpack.c.bf16 %v4930, %v4930
    %5014 = vrot.lane.b32.xlu0 %v5012, 32
    %v5015 = vpop.permute.xlu0 %5014
    %v5017 = vsel %vm977, %v5015, 0
    %5019 = vmatprep.subr.bf16.mxu0 0
    %5020 = vmatpush1.bf16.msra.mxu0 %v4221
    %5021 = vmatprep.subr.bf16.mxu0 0
    %5022 = vmatpush1.bf16.msra.mxu0 %v4222
    %5023 = vmatprep.subr.bf16.mxu0 0
    %5024 = vmatpush1.bf16.msra.mxu0 0
    %5025 = vmatprep.subr.bf16.mxu0 0
    %5026 = vmatpush1.bf16.msra.mxu0 0
    %5027 = vmatprep.subr.bf16.mxu0 0
    %5028 = vmatpush1.bf16.msra.mxu0 0
    %5029 = vmatprep.subr.bf16.mxu0 0
    %5030 = vmatpush1.bf16.msra.mxu0 0
    %5031 = vmatprep.subr.bf16.mxu0 0
    %5032 = vmatpush1.bf16.msra.mxu0 0
    %5033 = vmatprep.subr.bf16.mxu0 0
    %5034 = vmatpush1.bf16.msra.mxu0 0
    %5035 = vmatprep.subr.bf16.mxu0 0
    %5036 = vmatpush1.bf16.msra.mxu0 0
    %5037 = vmatprep.subr.bf16.mxu0 0
    %5038 = vmatpush1.bf16.msra.mxu0 0
    %5039 = vmatprep.subr.bf16.mxu0 0
    %5040 = vmatpush1.bf16.msra.mxu0 0
    %5041 = vmatprep.subr.bf16.mxu0 0
    %5042 = vmatpush1.bf16.msra.mxu0 0
    %5043 = vmatprep.subr.bf16.mxu0 0
    %5044 = vmatpush1.bf16.msra.mxu0 0
    %5045 = vmatprep.subr.bf16.mxu0 0
    %5046 = vmatpush1.bf16.msra.mxu0 0
    %5047 = vmatprep.subr.bf16.mxu0 0
    %5048 = vmatpush1.bf16.msra.mxu0 0
    %5049 = vmatprep.subr.bf16.mxu0 0
    %5050 = vmatpush1.bf16.msra.mxu0 0
    %5051 = vmatprep.mubr.bf16.mxu0 0
    %5052 = vmatmul.mubr.bf16.gmra.mrb[0].mxu0 %v5017
    %v5053 = vpop.f32.mrb[0].mxu0
    %v5054 = vadd.f32 0.0, %v5053
    %v5055 = vpop.f32.mrb[0].mxu0
    %v5056 = vpop.f32.mrb[0].mxu0
    %v5057 = vpop.f32.mrb[0].mxu0
    %5058 = vdwg.mxu0
    %v5059 = vadd.f32 %v4202, %v5054
    %v5060 = vxor.u32 %v5059, 2147483648
    %v5061 = vmul.f32 %v5060, 1.442695
    %v5062 = vpow.pop %v5061
    %v5063 = vadd.f32 %v5062, 1.0
    %v5064 = vrcp.pop %v5063
    %v5065 = vmul.f32 1.0, %v5064
    %v5066 = vtanh.pop %v5059
    %v5067 = vmul.f32 %v5065, %v4924
    %5069 = vrot.lane.b32.xlu0 %v5066, 64
    %v5070 = vpop.permute.xlu0 %5069
    %v5072 = vmul.f32 %v5065, %v5070
    %5074 = vrot.lane.b32.xlu0 %v5072, 32
    %v5075 = vpop.permute.xlu0 %5074
    %v5077 = vadd.f32 %v5067, %v5075
    %v5078 = vtanh.pop %v5077
    %5080 = vrot.lane.b32.xlu0 %v5078, 64
    %v5081 = vpop.permute.xlu0 %5080
    %v5083 = vmul.f32 %v5065, %v5081
    %5085 = vrot.lane.b32.xlu0 %v5083, 32
    %v5086 = vpop.permute.xlu0 %5085
    %5088 = vrot.lane.b32.xlu0 %v5006, 64
    %v5089 = vpop.permute.xlu0 %5088
    %v5091 = vsel %vm977, %v5086, %v5089
    %v5092 = vpack.c.bf16 %v5091, %v5091
    %v5094 = vsel %vm3690, %v5092, 0
    %5096 = vmatprep.subr.bf16.mxu0 0
    %5097 = vmatpush1.bf16.msra.mxu0 %v4320
    %5098 = vmatprep.subr.bf16.mxu0 0
    %5099 = vmatpush1.bf16.msra.mxu0 %v4321
    %5100 = vmatprep.subr.bf16.mxu0 0
    %5101 = vmatpush1.bf16.msra.mxu0 %v4322
    %5102 = vmatprep.subr.bf16.mxu0 0
    %5103 = vmatpush1.bf16.msra.mxu0 %v4323
    %5104 = vmatprep.subr.bf16.mxu0 0
    %5105 = vmatpush1.bf16.msra.mxu0 0
    %5106 = vmatprep.subr.bf16.mxu0 0
    %5107 = vmatpush1.bf16.msra.mxu0 0
    %5108 = vmatprep.subr.bf16.mxu0 0
    %5109 = vmatpush1.bf16.msra.mxu0 0
    %5110 = vmatprep.subr.bf16.mxu0 0
    %5111 = vmatpush1.bf16.msra.mxu0 0
    %5112 = vmatprep.subr.bf16.mxu0 0
    %5113 = vmatpush1.bf16.msra.mxu0 0
    %5114 = vmatprep.subr.bf16.mxu0 0
    %5115 = vmatpush1.bf16.msra.mxu0 0
    %5116 = vmatprep.subr.bf16.mxu0 0
    %5117 = vmatpush1.bf16.msra.mxu0 0
    %5118 = vmatprep.subr.bf16.mxu0 0
    %5119 = vmatpush1.bf16.msra.mxu0 0
    %5120 = vmatprep.subr.bf16.mxu0 0
    %5121 = vmatpush1.bf16.msra.mxu0 0
    %5122 = vmatprep.subr.bf16.mxu0 0
    %5123 = vmatpush1.bf16.msra.mxu0 0
    %5124 = vmatprep.subr.bf16.mxu0 0
    %5125 = vmatpush1.bf16.msra.mxu0 0
    %5126 = vmatprep.subr.bf16.mxu0 0
    %5127 = vmatpush1.bf16.msra.mxu0 0
    %5128 = vmatprep.mubr.bf16.mxu0 0
    %5129 = vmatmul.mubr.bf16.gmra.mrb[0].mxu0 %v5094
    %v5130 = vpop.f32.mrb[0].mxu0
    %v5131 = vadd.f32 %v4303, %v5130
    %v5132 = vpop.f32.mrb[0].mxu0
    %v5133 = vpop.f32.mrb[0].mxu0
    %v5134 = vpop.f32.mrb[0].mxu0
    %5135 = vdwg.mxu0
    %v5136 = vxor.u32 %v5131, 2147483648
    %v5137 = vmul.f32 %v5136, 1.442695
    %v5138 = vpow.pop %v5137
    %v5139 = vadd.f32 %v5138, 1.0
    %v5140 = vrcp.pop %v5139
    %v5141 = vmul.f32 1.0, %v5140
    %v5142 = vtanh.pop %v5131
    %v5143 = vmul.f32 %v5141, %v5000
    %5145 = vrot.lane.b32.xlu0 %v5142, 64
    %v5146 = vpop.permute.xlu0 %5145
    %v5148 = vmul.f32 %v5141, %v5146
    %5150 = vrot.lane.b32.xlu0 %v5148, 32
    %v5151 = vpop.permute.xlu0 %5150
    %v5153 = vadd.f32 %v5143, %v5151
    %v5154 = vtanh.pop %v5153
    %5156 = vrot.lane.b32.xlu0 %v5154, 64
    %v5157 = vpop.permute.xlu0 %5156
    %v5159 = vmul.f32 %v5141, %v5157
    %5161 = vrot.lane.b32.xlu0 %v5159, 32
    %v5162 = vpop.permute.xlu0 %5161
    %5164 = vst.msk [vmem:[#allocation6 + $0x28] sm:$0xff] %vm977, %v5162
    %v5165 = vpack.c.bf16 %v5083, %v5083
    %5167 = vrot.lane.b32.xlu0 %v5165, 32
    %v5168 = vpop.permute.xlu0 %5167
    %v5170 = vsel %vm977, %v5168, 0
    %5172 = vmatprep.subr.bf16.mxu0 0
    %5173 = vmatpush1.bf16.msra.mxu0 %v4221
    %5174 = vmatprep.subr.bf16.mxu0 0
    %5175 = vmatpush1.bf16.msra.mxu0 %v4222
    %5176 = vmatprep.subr.bf16.mxu0 0
    %5177 = vmatpush1.bf16.msra.mxu0 0
    %5178 = vmatprep.subr.bf16.mxu0 0
    %5179 = vmatpush1.bf16.msra.mxu0 0
    %5180 = vmatprep.subr.bf16.mxu0 0
    %5181 = vmatpush1.bf16.msra.mxu0 0
    %5182 = vmatprep.subr.bf16.mxu0 0
    %5183 = vmatpush1.bf16.msra.mxu0 0
    %5184 = vmatprep.subr.bf16.mxu0 0
    %5185 = vmatpush1.bf16.msra.mxu0 0
    %5186 = vmatprep.subr.bf16.mxu0 0
    %5187 = vmatpush1.bf16.msra.mxu0 0
    %5188 = vmatprep.subr.bf16.mxu0 0
    %5189 = vmatpush1.bf16.msra.mxu0 0
    %5190 = vmatprep.subr.bf16.mxu0 0
    %5191 = vmatpush1.bf16.msra.mxu0 0
    %5192 = vmatprep.subr.bf16.mxu0 0
    %5193 = vmatpush1.bf16.msra.mxu0 0
    %5194 = vmatprep.subr.bf16.mxu0 0
    %5195 = vmatpush1.bf16.msra.mxu0 0
    %5196 = vmatprep.subr.bf16.mxu0 0
    %5197 = vmatpush1.bf16.msra.mxu0 0
    %5198 = vmatprep.subr.bf16.mxu0 0
    %5199 = vmatpush1.bf16.msra.mxu0 0
    %5200 = vmatprep.subr.bf16.mxu0 0
    %5201 = vmatpush1.bf16.msra.mxu0 0
    %5202 = vmatprep.subr.bf16.mxu0 0
    %5203 = vmatpush1.bf16.msra.mxu0 0
    %5204 = vmatprep.mubr.bf16.mxu0 0
    %5205 = vmatmul.mubr.bf16.gmra.mrb[0].mxu0 %v5170
    %v5206 = vpop.f32.mrb[0].mxu0
    %v5207 = vadd.f32 0.0, %v5206
    %v5208 = vpop.f32.mrb[0].mxu0
    %v5209 = vpop.f32.mrb[0].mxu0
    %v5210 = vpop.f32.mrb[0].mxu0
    %5211 = vdwg.mxu0
    %v5212 = vadd.f32 %v4207, %v5207
    %v5213 = vxor.u32 %v5212, 2147483648
    %v5214 = vmul.f32 %v5213, 1.442695
    %v5215 = vpow.pop %v5214
    %v5216 = vadd.f32 %v5215, 1.0
    %v5217 = vrcp.pop %v5216
    %v5218 = vmul.f32 1.0, %v5217
    %v5219 = vtanh.pop %v5212
    %v5220 = vmul.f32 %v5218, %v5077
    %5222 = vrot.lane.b32.xlu0 %v5219, 64
    %v5223 = vpop.permute.xlu0 %5222
    %v5225 = vmul.f32 %v5218, %v5223
    %5227 = vrot.lane.b32.xlu0 %v5225, 32
    %v5228 = vpop.permute.xlu0 %5227
    %v5230 = vadd.f32 %v5220, %v5228
    %v5231 = vtanh.pop %v5230
    %5233 = vrot.lane.b32.xlu0 %v5231, 64
    %v5234 = vpop.permute.xlu0 %5233
    %v5236 = vmul.f32 %v5218, %v5234
    %5238 = vrot.lane.b32.xlu0 %v5236, 32
    %v5239 = vpop.permute.xlu0 %5238
    %5241 = vrot.lane.b32.xlu0 %v5159, 64
    %v5242 = vpop.permute.xlu0 %5241
    %v5244 = vsel %vm977, %v5239, %v5242
    %v5245 = vpack.c.bf16 %v5244, %v5244
    %v5247 = vsel %vm3690, %v5245, 0
    %5249 = vmatprep.subr.bf16.mxu0 0
    %5250 = vmatpush1.bf16.msra.mxu0 %v4320
    %5251 = vmatprep.subr.bf16.mxu0 0
    %5252 = vmatpush1.bf16.msra.mxu0 %v4321
    %5253 = vmatprep.subr.bf16.mxu0 0
    %5254 = vmatpush1.bf16.msra.mxu0 %v4322
    %5255 = vmatprep.subr.bf16.mxu0 0
    %5256 = vmatpush1.bf16.msra.mxu0 %v4323
    %5257 = vmatprep.subr.bf16.mxu0 0
    %5258 = vmatpush1.bf16.msra.mxu0 0
    %5259 = vmatprep.subr.bf16.mxu0 0
    %5260 = vmatpush1.bf16.msra.mxu0 0
    %5261 = vmatprep.subr.bf16.mxu0 0
    %5262 = vmatpush1.bf16.msra.mxu0 0
    %5263 = vmatprep.subr.bf16.mxu0 0
    %5264 = vmatpush1.bf16.msra.mxu0 0
    %5265 = vmatprep.subr.bf16.mxu0 0
    %5266 = vmatpush1.bf16.msra.mxu0 0
    %5267 = vmatprep.subr.bf16.mxu0 0
    %5268 = vmatpush1.bf16.msra.mxu0 0
    %5269 = vmatprep.subr.bf16.mxu0 0
    %5270 = vmatpush1.bf16.msra.mxu0 0
    %5271 = vmatprep.subr.bf16.mxu0 0
    %5272 = vmatpush1.bf16.msra.mxu0 0
    %5273 = vmatprep.subr.bf16.mxu0 0
    %5274 = vmatpush1.bf16.msra.mxu0 0
    %5275 = vmatprep.subr.bf16.mxu0 0
    %5276 = vmatpush1.bf16.msra.mxu0 0
    %5277 = vmatprep.subr.bf16.mxu0 0
    %5278 = vmatpush1.bf16.msra.mxu0 0
    %5279 = vmatprep.subr.bf16.mxu0 0
    %5280 = vmatpush1.bf16.msra.mxu0 0
    %5281 = vmatprep.mubr.bf16.mxu0 0
    %5282 = vmatmul.mubr.bf16.gmra.mrb[0].mxu0 %v5247
    %v5283 = vpop.f32.mrb[0].mxu0
    %v5284 = vadd.f32 %v4303, %v5283
    %v5285 = vpop.f32.mrb[0].mxu0
    %v5286 = vpop.f32.mrb[0].mxu0
    %v5287 = vpop.f32.mrb[0].mxu0
    %5288 = vdwg.mxu0
    %v5289 = vxor.u32 %v5284, 2147483648
    %v5290 = vmul.f32 %v5289, 1.442695
    %v5291 = vpow.pop %v5290
    %v5292 = vadd.f32 %v5291, 1.0
    %v5293 = vrcp.pop %v5292
    %v5294 = vmul.f32 1.0, %v5293
    %v5295 = vtanh.pop %v5284
    %v5296 = vmul.f32 %v5294, %v5153
    %5298 = vrot.lane.b32.xlu0 %v5295, 64
    %v5299 = vpop.permute.xlu0 %5298
    %v5301 = vmul.f32 %v5294, %v5299
    %5303 = vrot.lane.b32.xlu0 %v5301, 32
    %v5304 = vpop.permute.xlu0 %5303
    %v5306 = vadd.f32 %v5296, %v5304
    %v5307 = vtanh.pop %v5306
    %5309 = vrot.lane.b32.xlu0 %v5307, 64
    %v5310 = vpop.permute.xlu0 %5309
    %v5312 = vmul.f32 %v5294, %v5310
    %5314 = vrot.lane.b32.xlu0 %v5312, 32
    %v5315 = vpop.permute.xlu0 %5314
    %5317 = vst.msk [vmem:[#allocation6 + $0x30] sm:$0xff] %vm977, %v5315
    %v5318 = vpack.c.bf16 %v5236, %v5236
    %5320 = vrot.lane.b32.xlu0 %v5318, 32
    %v5321 = vpop.permute.xlu0 %5320
    %v5323 = vsel %vm977, %v5321, 0
    %5325 = vmatprep.subr.bf16.mxu0 0
    %5326 = vmatpush1.bf16.msra.mxu0 %v4221
    %5327 = vmatprep.subr.bf16.mxu0 0
    %5328 = vmatpush1.bf16.msra.mxu0 %v4222
    %5329 = vmatprep.subr.bf16.mxu0 0
    %5330 = vmatpush1.bf16.msra.mxu0 0
    %5331 = vmatprep.subr.bf16.mxu0 0
    %5332 = vmatpush1.bf16.msra.mxu0 0
    %5333 = vmatprep.subr.bf16.mxu0 0
    %5334 = vmatpush1.bf16.msra.mxu0 0
    %5335 = vmatprep.subr.bf16.mxu0 0
    %5336 = vmatpush1.bf16.msra.mxu0 0
    %5337 = vmatprep.subr.bf16.mxu0 0
    %5338 = vmatpush1.bf16.msra.mxu0 0
    %5339 = vmatprep.subr.bf16.mxu0 0
    %5340 = vmatpush1.bf16.msra.mxu0 0
    %5341 = vmatprep.subr.bf16.mxu0 0
    %5342 = vmatpush1.bf16.msra.mxu0 0
    %5343 = vmatprep.subr.bf16.mxu0 0
    %5344 = vmatpush1.bf16.msra.mxu0 0
    %5345 = vmatprep.subr.bf16.mxu0 0
    %5346 = vmatpush1.bf16.msra.mxu0 0
    %5347 = vmatprep.subr.bf16.mxu0 0
    %5348 = vmatpush1.bf16.msra.mxu0 0
    %5349 = vmatprep.subr.bf16.mxu0 0
    %5350 = vmatpush1.bf16.msra.mxu0 0
    %5351 = vmatprep.subr.bf16.mxu0 0
    %5352 = vmatpush1.bf16.msra.mxu0 0
    %5353 = vmatprep.subr.bf16.mxu0 0
    %5354 = vmatpush1.bf16.msra.mxu0 0
    %5355 = vmatprep.subr.bf16.mxu0 0
    %5356 = vmatpush1.bf16.msra.mxu0 0
    %5357 = vmatprep.mubr.bf16.mxu0 0
    %5358 = vmatmul.mubr.bf16.gmra.mrb[0].mxu0 %v5323
    %v5359 = vpop.f32.mrb[0].mxu0
    %v5360 = vadd.f32 0.0, %v5359
    %v5361 = vpop.f32.mrb[0].mxu0
    %v5362 = vpop.f32.mrb[0].mxu0
    %v5363 = vpop.f32.mrb[0].mxu0
    %5364 = vdwg.mxu0
    %v5365 = vadd.f32 %v4210, %v5360
    %v5366 = vxor.u32 %v5365, 2147483648
    %v5367 = vmul.f32 %v5366, 1.442695
    %v5368 = vpow.pop %v5367
    %v5369 = vadd.f32 %v5368, 1.0
    %v5370 = vrcp.pop %v5369
    %v5371 = vmul.f32 1.0, %v5370
    %v5372 = vtanh.pop %v5365
    %v5373 = vmul.f32 %v5371, %v5230
    %5375 = vrot.lane.b32.xlu0 %v5372, 64
    %v5376 = vpop.permute.xlu0 %5375
    %v5378 = vmul.f32 %v5371, %v5376
    %5380 = vrot.lane.b32.xlu0 %v5378, 32
    %v5381 = vpop.permute.xlu0 %5380
    %v5383 = vadd.f32 %v5373, %v5381
    %v5384 = vtanh.pop %v5383
    %5386 = vrot.lane.b32.xlu0 %v5384, 64
    %v5387 = vpop.permute.xlu0 %5386
    %v5389 = vmul.f32 %v5371, %v5387
    %5391 = vrot.lane.b32.xlu0 %v5389, 32
    %v5392 = vpop.permute.xlu0 %5391
    %5394 = vrot.lane.b32.xlu0 %v5312, 64
    %v5395 = vpop.permute.xlu0 %5394
    %v5397 = vsel %vm977, %v5392, %v5395
    %v5398 = vpack.c.bf16 %v5397, %v5397
    %v5400 = vsel %vm3690, %v5398, 0
    %5402 = vmatprep.subr.bf16.mxu0 0
    %5403 = vmatpush1.bf16.msra.mxu0 %v4320
    %5404 = vmatprep.subr.bf16.mxu0 0
    %5405 = vmatpush1.bf16.msra.mxu0 %v4321
    %5406 = vmatprep.subr.bf16.mxu0 0
    %5407 = vmatpush1.bf16.msra.mxu0 %v4322
    %5408 = vmatprep.subr.bf16.mxu0 0
    %5409 = vmatpush1.bf16.msra.mxu0 %v4323
    %5410 = vmatprep.subr.bf16.mxu0 0
    %5411 = vmatpush1.bf16.msra.mxu0 0
    %5412 = vmatprep.subr.bf16.mxu0 0
    %5413 = vmatpush1.bf16.msra.mxu0 0
    %5414 = vmatprep.subr.bf16.mxu0 0
    %5415 = vmatpush1.bf16.msra.mxu0 0
    %5416 = vmatprep.subr.bf16.mxu0 0
    %5417 = vmatpush1.bf16.msra.mxu0 0
    %5418 = vmatprep.subr.bf16.mxu0 0
    %5419 = vmatpush1.bf16.msra.mxu0 0
    %5420 = vmatprep.subr.bf16.mxu0 0
    %5421 = vmatpush1.bf16.msra.mxu0 0
    %5422 = vmatprep.subr.bf16.mxu0 0
    %5423 = vmatpush1.bf16.msra.mxu0 0
    %5424 = vmatprep.subr.bf16.mxu0 0
    %5425 = vmatpush1.bf16.msra.mxu0 0
    %5426 = vmatprep.subr.bf16.mxu0 0
    %5427 = vmatpush1.bf16.msra.mxu0 0
    %5428 = vmatprep.subr.bf16.mxu0 0
    %5429 = vmatpush1.bf16.msra.mxu0 0
    %5430 = vmatprep.subr.bf16.mxu0 0
    %5431 = vmatpush1.bf16.msra.mxu0 0
    %5432 = vmatprep.subr.bf16.mxu0 0
    %5433 = vmatpush1.bf16.msra.mxu0 0
    %5434 = vmatprep.mubr.bf16.mxu0 0
    %5435 = vmatmul.mubr.bf16.gmra.mrb[0].mxu0 %v5400
    %v5436 = vpop.f32.mrb[0].mxu0
    %v5437 = vadd.f32 %v4303, %v5436
    %v5438 = vpop.f32.mrb[0].mxu0
    %v5439 = vpop.f32.mrb[0].mxu0
    %v5440 = vpop.f32.mrb[0].mxu0
    %5441 = vdwg.mxu0
    %v5442 = vxor.u32 %v5437, 2147483648
    %v5443 = vmul.f32 %v5442, 1.442695
    %v5444 = vpow.pop %v5443
    %v5445 = vadd.f32 %v5444, 1.0
    %v5446 = vrcp.pop %v5445
    %v5447 = vmul.f32 1.0, %v5446
    %v5448 = vtanh.pop %v5437
    %v5449 = vmul.f32 %v5447, %v5306
    %5451 = vrot.lane.b32.xlu0 %v5448, 64
    %v5452 = vpop.permute.xlu0 %5451
    %v5454 = vmul.f32 %v5447, %v5452
    %5456 = vrot.lane.b32.xlu0 %v5454, 32
    %v5457 = vpop.permute.xlu0 %5456
    %v5459 = vadd.f32 %v5449, %v5457
    %v5460 = vtanh.pop %v5459
    %5462 = vrot.lane.b32.xlu0 %v5460, 64
    %v5463 = vpop.permute.xlu0 %5462
    %v5465 = vmul.f32 %v5447, %v5463
    %5467 = vrot.lane.b32.xlu0 %v5465, 32
    %v5468 = vpop.permute.xlu0 %5467
    %5470 = vst.msk [vmem:[#allocation6 + $0x38] sm:$0xff] %vm977, %v5468
    %v5471 = vld [vmem:[#allocation6] sm:$0xff]
    %v5472 = vld [vmem:[#allocation6 + $0x8] sm:$0xff]
    %v5473 = vld [vmem:[#allocation6 + $0x10] sm:$0xff]
    %v5474 = vld [vmem:[#allocation6 + $0x18] sm:$0xff]
    %v5475 = vld [vmem:[#allocation6 + $0x20] sm:$0xff]
    %v5476 = vld [vmem:[#allocation6 + $0x28] sm:$0xff]
    %v5477 = vld [vmem:[#allocation6 + $0x30] sm:$0xff]
    %v5478 = vld [vmem:[#allocation6 + $0x38] sm:$0xff]
    %v5479 = vld [vmem:[%s8] sm:$0xf]
    %v5480 = vld [vmem:[%s8 + $0x4] sm:$0xf]
    %v5481 = vld [vmem:[%s8 + $0x8] sm:$0xf]
    %v5482 = vld [vmem:[%s8 + $0xc] sm:$0xf]
    %v5483 = vpack.c.bf16 %v5472, %v5471
    %v5484 = vpack.c.bf16 %v5474, %v5473
    %v5485 = vpack.c.bf16 %v5476, %v5475
    %v5486 = vpack.c.bf16 %v5478, %v5477
    %v5491 = vunpack.c.l.b16 %v5479
    %v5492 = vunpack.c.l.b16 %v5480
    %v5493 = vunpack.c.l.b16 %v5481
    %v5494 = vunpack.c.l.b16 %v5482
    %v5495 = vpack.c.b16 %v5492, %v5491
    %v5496 = vpack.c.b16 %v5494, %v5493
    %v5500 = vsel %vm977, %v5483, 0
    %v5503 = vsel %vm977, %v5484, 0
    %v5506 = vsel %vm977, %v5485, 0
    %v5509 = vsel %vm977, %v5486, 0
    %5511 = vmatprep.subr.bf16.mxu0 0
    %5512 = vmatpush1.bf16.msra.mxu0 %v5495
    %5513 = vmatprep.subr.bf16.mxu0 0
    %5514 = vmatpush1.bf16.msra.mxu0 %v5496
    %5515 = vmatprep.subr.bf16.mxu0 0
    %5516 = vmatpush1.bf16.msra.mxu0 0
    %5517 = vmatprep.subr.bf16.mxu0 0
    %5518 = vmatpush1.bf16.msra.mxu0 0
    %5519 = vmatprep.subr.bf16.mxu0 0
    %5520 = vmatpush1.bf16.msra.mxu0 0
    %5521 = vmatprep.subr.bf16.mxu0 0
    %5522 = vmatpush1.bf16.msra.mxu0 0
    %5523 = vmatprep.subr.bf16.mxu0 0
    %5524 = vmatpush1.bf16.msra.mxu0 0
    %5525 = vmatprep.subr.bf16.mxu0 0
    %5526 = vmatpush1.bf16.msra.mxu0 0
    %5527 = vmatprep.subr.bf16.mxu0 0
    %5528 = vmatpush1.bf16.msra.mxu0 0
    %5529 = vmatprep.subr.bf16.mxu0 0
    %5530 = vmatpush1.bf16.msra.mxu0 0
    %5531 = vmatprep.subr.bf16.mxu0 0
    %5532 = vmatpush1.bf16.msra.mxu0 0
    %5533 = vmatprep.subr.bf16.mxu0 0
    %5534 = vmatpush1.bf16.msra.mxu0 0
    %5535 = vmatprep.subr.bf16.mxu0 0
    %5536 = vmatpush1.bf16.msra.mxu0 0
    %5537 = vmatprep.subr.bf16.mxu0 0
    %5538 = vmatpush1.bf16.msra.mxu0 0
    %5539 = vmatprep.subr.bf16.mxu0 0
    %5540 = vmatpush1.bf16.msra.mxu0 0
    %5541 = vmatprep.subr.bf16.mxu0 0
    %5542 = vmatpush1.bf16.msra.mxu0 0
    %5543 = vmatprep.mubr.bf16.mxu0 0
    %5544 = vmatmul.mubr.bf16.gmra.mrb[0].mxu0 %v5500
    %v5545 = vpop.f32.mrb[0].mxu0
    %v5546 = vadd.f32 0.0, %v5545
    %v5547 = vpop.f32.mrb[0].mxu0
    %v5548 = vpop.f32.mrb[0].mxu0
    %v5549 = vadd.f32 0.0, %v5548
    %v5550 = vpop.f32.mrb[0].mxu0
    %5551 = vmatprep.mubr.bf16.mxu0 0
    %5552 = vmatmul.mubr.bf16.gmra.mrb[0].mxu0 %v5503
    %v5553 = vpop.f32.mrb[0].mxu0
    %v5554 = vadd.f32 0.0, %v5553
    %v5555 = vpop.f32.mrb[0].mxu0
    %v5556 = vpop.f32.mrb[0].mxu0
    %v5557 = vadd.f32 0.0, %v5556
    %v5558 = vpop.f32.mrb[0].mxu0
    %5559 = vmatprep.mubr.bf16.mxu0 0
    %5560 = vmatmul.mubr.bf16.gmra.mrb[0].mxu0 %v5506
    %v5561 = vpop.f32.mrb[0].mxu0
    %v5562 = vadd.f32 0.0, %v5561
    %v5563 = vpop.f32.mrb[0].mxu0
    %v5564 = vpop.f32.mrb[0].mxu0
    %v5565 = vadd.f32 0.0, %v5564
    %v5566 = vpop.f32.mrb[0].mxu0
    %5567 = vmatprep.mubr.bf16.mxu0 0
    %5568 = vmatmul.mubr.bf16.gmra.mrb[0].mxu0 %v5509
    %v5569 = vpop.f32.mrb[0].mxu0
    %v5570 = vadd.f32 0.0, %v5569
    %v5571 = vpop.f32.mrb[0].mxu0
    %v5572 = vpop.f32.mrb[0].mxu0
    %v5573 = vadd.f32 0.0, %v5572
    %v5574 = vpop.f32.mrb[0].mxu0
    %5575 = vdwg.mxu0
    %v5576 = vlaneseq
    %v5577 = vand.u32 %v5576, 127
    %vm5578 = vcmp.lt.s32.totalorder %v5577, 64
    %v5579 = vsel %vm5578, %v5546, -1e+30
    %v5580 = vsel %vm5578, %v5549, -1e+30
    %v5581 = vsel %vm5578, %v5554, -1e+30
    %v5582 = vsel %vm5578, %v5557, -1e+30
    %v5583 = vsel %vm5578, %v5562, -1e+30
    %v5584 = vsel %vm5578, %v5565, -1e+30
    %v5585 = vsel %vm5578, %v5570, -1e+30
    %v5586 = vsel %vm5578, %v5573, -1e+30
    %5587 = vmax.xlane.f32.xlu0 %v5579
    %v5588 = vpop.xlane.xlu0 %5587
    %5589 = vmax.xlane.f32.xlu0 %v5580
    %v5590 = vpop.xlane.xlu0 %5589
    %5591 = vmax.xlane.f32.xlu0 %v5581
    %v5592 = vpop.xlane.xlu0 %5591
    %5593 = vmax.xlane.f32.xlu0 %v5582
    %v5594 = vpop.xlane.xlu0 %5593
    %5595 = vmax.xlane.f32.xlu0 %v5583
    %v5596 = vpop.xlane.xlu0 %5595
    %5597 = vmax.xlane.f32.xlu0 %v5584
    %v5598 = vpop.xlane.xlu0 %5597
    %5599 = vmax.xlane.f32.xlu0 %v5585
    %v5600 = vpop.xlane.xlu0 %5599
    %5601 = vmax.xlane.f32.xlu0 %v5586
    %v5602 = vpop.xlane.xlu0 %5601
    %v5603 = vsub.f32 %v5579, %v5588
    %v5604 = vsub.f32 %v5580, %v5590
    %v5605 = vsub.f32 %v5581, %v5592
    %v5606 = vsub.f32 %v5582, %v5594
    %v5607 = vsub.f32 %v5583, %v5596
    %v5608 = vsub.f32 %v5584, %v5598
    %v5609 = vsub.f32 %v5585, %v5600
    %v5610 = vsub.f32 %v5586, %v5602
    %v5611 = vmul.f32 %v5603, 1.442695
    %v5612 = vpow.pop %v5611
    %v5613 = vmul.f32 %v5604, 1.442695
    %v5614 = vpow.pop %v5613
    %v5615 = vmul.f32 %v5605, 1.442695
    %v5616 = vpow.pop %v5615
    %v5617 = vmul.f32 %v5606, 1.442695
    %v5618 = vpow.pop %v5617
    %v5619 = vmul.f32 %v5607, 1.442695
    %v5620 = vpow.pop %v5619
    %v5621 = vmul.f32 %v5608, 1.442695
    %v5622 = vpow.pop %v5621
    %v5623 = vmul.f32 %v5609, 1.442695
    %v5624 = vpow.pop %v5623
    %v5625 = vmul.f32 %v5610, 1.442695
    %v5626 = vpow.pop %v5625
    %5627 = vadd.xlane.f32.xlu0 %v5612
    %v5628 = vpop.xlane.xlu0 %5627
    %5629 = vadd.xlane.f32.xlu0 %v5614
    %v5630 = vpop.xlane.xlu0 %5629
    %5631 = vadd.xlane.f32.xlu0 %v5616
    %v5632 = vpop.xlane.xlu0 %5631
    %5633 = vadd.xlane.f32.xlu0 %v5618
    %v5634 = vpop.xlane.xlu0 %5633
    %5635 = vadd.xlane.f32.xlu0 %v5620
    %v5636 = vpop.xlane.xlu0 %5635
    %5637 = vadd.xlane.f32.xlu0 %v5622
    %v5638 = vpop.xlane.xlu0 %5637
    %5639 = vadd.xlane.f32.xlu0 %v5624
    %v5640 = vpop.xlane.xlu0 %5639
    %5641 = vadd.xlane.f32.xlu0 %v5626
    %v5642 = vpop.xlane.xlu0 %5641
    %v5643 = vlog2.pop %v5628
    %v5644 = vmul.f32 %v5643, 0.6931472
    %v5645 = vlog2.pop %v5630
    %v5646 = vmul.f32 %v5645, 0.6931472
    %v5647 = vlog2.pop %v5632
    %v5648 = vmul.f32 %v5647, 0.6931472
    %v5649 = vlog2.pop %v5634
    %v5650 = vmul.f32 %v5649, 0.6931472
    %v5651 = vlog2.pop %v5636
    %v5652 = vmul.f32 %v5651, 0.6931472
    %v5653 = vlog2.pop %v5638
    %v5654 = vmul.f32 %v5653, 0.6931472
    %v5655 = vlog2.pop %v5640
    %v5656 = vmul.f32 %v5655, 0.6931472
    %v5657 = vlog2.pop %v5642
    %v5658 = vmul.f32 %v5657, 0.6931472
    %v5659 = vsub.f32 %v5603, %v5644
    %v5660 = vsub.f32 %v5604, %v5646
    %v5661 = vsub.f32 %v5605, %v5648
    %v5662 = vsub.f32 %v5606, %v5650
    %v5663 = vsub.f32 %v5607, %v5652
    %v5664 = vsub.f32 %v5608, %v5654
    %v5665 = vsub.f32 %v5609, %v5656
    %v5666 = vsub.f32 %v5610, %v5658
    %5667 = vst [vmem:[%s11] sm:$0xff] %v5659
    %5668 = vst [vmem:[%s11 + $0x8] sm:$0xff] %v5660
    %5669 = vst [vmem:[%s11 + $0x10] sm:$0xff] %v5661
    %5670 = vst [vmem:[%s11 + $0x18] sm:$0xff] %v5662
    %5671 = vst [vmem:[%s11 + $0x20] sm:$0xff] %v5663
    %5672 = vst [vmem:[%s11 + $0x28] sm:$0xff] %v5664
    %5673 = vst [vmem:[%s11 + $0x30] sm:$0xff] %v5665
    %5674 = vst [vmem:[%s11 + $0x38] sm:$0xff] %v5666
    // Predicated region
    $region54: #{seq2seq_forward.1} parent=1 // pred_check
      _
    $region55: #{seq2seq_forward.1} parent=1 // pred_check_branch
      %5676 = sbr.rel (0) target = $region57
    $region56: #{seq2seq_forward.1} parent=1 // pred_region
      _
    $region57: #{seq2seq_forward.1} parent=1 // pred_fallthru
      _
    // Predicated region
    $region58: #{seq2seq_forward.1} parent=1 // pred_check
      _
    $region59: #{seq2seq_forward.1} parent=1 // pred_check_branch
      %5678 = sbr.rel (0) target = $region61
    $region60: #{seq2seq_forward.1} parent=1 // pred_region
      _
    $region61: #{seq2seq_forward.1} parent=1 // pred_fallthru
      _
    %5679 = vsyncpa [#allocation11], 1
    %5680 = vsyncpa [#allocation13], 1
    %5681 = vsyncpa [#allocation16], 1

</llo_original>
